<compile_context>
chip_gen: v7x
topology: tpu7x:2x2x1
jax: 0.10.0
libtpu: 0.0.40
codegen_flags: <defaults>
</compile_context>

<pallas_src>
import functools
import math

import jax
import jax.numpy as jnp
from jax import lax
from jax.experimental import pallas as pl
from jax.experimental.pallas import tpu as pltpu

IMG_DIM = 1024  # hard-coded img_dim in the PyTorch module


# ---------------------------------------------------------------------------
# Elementwise helpers (VPU / EUP only)
# ---------------------------------------------------------------------------

def _erf(x):
    # Abramowitz & Stegun 7.1.26 rational approximation (max abs err ~1.5e-7).
    a1, a2, a3, a4, a5 = 0.254829592, -0.284496736, 1.421413741, -1.453152027, 1.061405429
    p = 0.3275911
    ax = jnp.abs(x)
    t = 1.0 / (1.0 + p * ax)
    poly = ((((a5 * t + a4) * t + a3) * t + a2) * t + a1) * t
    y = 1.0 - poly * jnp.exp(-ax * ax)
    return jnp.where(x >= 0.0, y, -y)


def _gelu_exact(x):
    # matches torch.nn.GELU() (erf form) up to the erf approximation above
    return 0.5 * x * (1.0 + _erf(x * 0.7071067811865476))


def _layernorm(y, gamma, beta, eps):
    mu = jnp.mean(y, axis=-1, keepdims=True)
    yc = y - mu
    var = jnp.mean(yc * yc, axis=-1, keepdims=True)   # biased variance, like torch
    return yc * lax.rsqrt(var + eps) * gamma + beta


# ---------------------------------------------------------------------------
# 1) Prologue: cls projection + embedding gather + pos add + LayerNorm(1e-5)
# ---------------------------------------------------------------------------

def _prologue_kernel(ids_ref, cls_ref, dw_ref, db_ref, table_ref, pos_ref,
                     g_ref, b_ref, o_ref, *, batch, ltok, eps):
    V = table_ref.shape[0]
    # c = decoder_embed(cls)  -- (B, D), single MXU pass, K = 1024
    c = jnp.dot(cls_ref[...], dw_ref[...],
                preferred_element_type=jnp.float32) + db_ref[...]
    pos = pos_ref[...]
    gamma = g_ref[...]
    beta = b_ref[...]
    for b in range(batch):                     # static unroll (B is tiny)
        rows = [c[b:b + 1, :]]
        for i in range(ltok):
            idx = jnp.clip(ids_ref[b * ltok + i], 0, V - 1)   # SMEM scalar, clamped
            rows.append(table_ref[pl.ds(idx, 1), :])          # in-VMEM row gather
        zb = jnp.concatenate(rows, axis=0)                    # (S, D)
        o_ref[b] = _layernorm(zb + pos, gamma, beta, eps)


def prologue(ids, cls_feat, dec_w, dec_b, table, pos, ln_g, ln_b, *, eps=1e-5):
    B = cls_feat.shape[0]
    L = ids.shape[0] // B
    S = L + 1
    V, D = table.shape
    kernel = functools.partial(_prologue_kernel, batch=B, ltok=L, eps=eps)

    def full2(a):
        return pl.BlockSpec(a.shape, lambda i, ids_ref: (0, 0))

    return pl.pallas_call(
        kernel,
        out_shape=jax.ShapeDtypeStruct((B, S, D), jnp.float32),
        grid_spec=pltpu.PrefetchScalarGridSpec(
            num_scalar_prefetch=1,
            grid=(1,),
            in_specs=[full2(cls_feat), full2(dec_w), full2(dec_b),
                      full2(table), full2(pos), full2(ln_g), full2(ln_b)],
            out_specs=pl.BlockSpec((B, S, D), lambda i, ids_ref: (0, 0, 0)),
        ),
        compiler_params=pltpu.CompilerParams(dimension_semantics=("arbitrary",)),
    )(ids, cls_feat, dec_w, dec_b, table, pos, ln_g, ln_b)


# ---------------------------------------------------------------------------
# 2) One fused decoder layer:  MHSA + proj + res + norm1 + MLP + res + norm2
# ---------------------------------------------------------------------------

def _layer_kernel(z_ref, wq_ref, bq_ref, wk_ref, bk_ref, wv_ref, bv_ref,
                  wp_ref, bp_ref, n1g_ref, n1b_ref,
                  w1_ref, b1_ref, w2_ref, b2_ref, n2g_ref, n2b_ref,
                  o_ref, *, nheads, scale, eps):
    z = z_ref[0]                               # (S, D)
    S, D = z.shape

    # Per-head attention; all head slices are on the LEADING axis of the
    # (H, D, Dh) / (H, Dh, D) weight layouts -> no lane relayouts, no concat.
    acc = jnp.zeros((S, D), jnp.float32)
    for h in range(nheads):                    # static unroll over heads
        qh = jnp.dot(z, wq_ref[h], preferred_element_type=jnp.float32) + bq_ref[h]
        kh = jnp.dot(z, wk_ref[h], preferred_element_type=jnp.float32) + bk_ref[h]
        vh = jnp.dot(z, wv_ref[h], preferred_element_type=jnp.float32) + bv_ref[h]
        s = lax.dot_general(qh, kh, (((1,), (1,)), ((), ())),
                            preferred_element_type=jnp.float32) * scale
        m = jnp.max(s, axis=-1, keepdims=True)
        p = jnp.exp(s - m)
        p = p / jnp.sum(p, axis=-1, keepdims=True)     # exact softmax (torch parity)
        head = jnp.dot(p, vh, preferred_element_type=jnp.float32)          # (S, Dh)
        acc = acc + jnp.dot(head, wp_ref[h], preferred_element_type=jnp.float32)

    # output projection bias + residual + norm1 (eps=1e-12)
    src = _layernorm(z + acc + bp_ref[...], n1g_ref[...], n1b_ref[...], eps)

    # MLP: linear1 + GELU + linear2 + residual + norm2, all in registers
    h1 = _gelu_exact(jnp.dot(src, w1_ref[...],
                             preferred_element_type=jnp.float32) + b1_ref[...])
    h2 = jnp.dot(h1, w2_ref[...], preferred_element_type=jnp.float32) + b2_ref[...]
    o_ref[0] = _layernorm(src + h2, n2g_ref[...], n2b_ref[...], eps)


def decoder_layer(z3, blk, *, nheads, eps=1e-12):
    B, S, D = z3.shape
    Dh = D // nheads
    scale = 1.0 / math.sqrt(Dh)
    kernel = functools.partial(_layer_kernel, nheads=nheads, scale=scale, eps=eps)

    def rep(a):
        if a.ndim == 2:
            return pl.BlockSpec(a.shape, lambda b: (0, 0))
        return pl.BlockSpec(a.shape, lambda b: (0, 0, 0))

    args = [blk["wq"], blk["bq"], blk["wk"], blk["bk"], blk["wv"], blk["bv"],
            blk["wp"], blk["bp"], blk["n1g"], blk["n1b"],
            blk["w1"], blk["b1"], blk["w2"], blk["b2"], blk["n2g"], blk["n2b"]]
    in_specs = [pl.BlockSpec((1, S, D), lambda b: (b, 0, 0))] + [rep(a) for a in args]

    return pl.pallas_call(
        kernel,
        out_shape=jax.ShapeDtypeStruct((B, S, D), jnp.float32),
        grid=(B,),
        in_specs=in_specs,
        out_specs=pl.BlockSpec((1, S, D), lambda b: (b, 0, 0)),
        compiler_params=pltpu.CompilerParams(
            dimension_semantics=("parallel",)),        # megacore split on v7x
    )(z3, *args)


# ---------------------------------------------------------------------------
# 3) Head: mlps (Linear+GELU+LN 1e-12) fused with classifier matmul (+bias)
# ---------------------------------------------------------------------------

def _head_kernel(z_ref, mw_ref, mb_ref, g_ref, b_ref, cw_ref, cb_ref, o_ref, *, eps):
    z = z_ref[...]
    emb = jnp.dot(z, mw_ref[...], preferred_element_type=jnp.float32) + mb_ref[...]
    emb = _layernorm(_gelu_exact(emb), g_ref[...], b_ref[...], eps)
    # logits = emb @ token_emb[:num_codebook].T  (transpose folded into MXU contraction)
    logits = lax.dot_general(emb, cw_ref[...], (((1,), (1,)), ((), ())),
                             preferred_element_type=jnp.float32)
    o_ref[...] = logits + cb_ref[...]


def mlps_classifier(zf, mw, mb, g, beta, cw, cb, *, eps=1e-12):
    M, D = zf.shape
    NP = cw.shape[0]
    kernel = functools.partial(_head_kernel, eps=eps)

    def full(a):
        return pl.BlockSpec(a.shape, lambda i: (0, 0))

    return pl.pallas_call(
        kernel,
        out_shape=jax.ShapeDtypeStruct((M, NP), jnp.float32),
        grid=(1,),
        in_specs=[full(zf), full(mw), full(mb), full(g), full(beta), full(cw), full(cb)],
        out_specs=pl.BlockSpec((M, NP), lambda i: (0, 0)),
        compiler_params=pltpu.CompilerParams(dimension_semantics=("arbitrary",)),
    )(zf, mw, mb, g, beta, cw, cb)


# ---------------------------------------------------------------------------
# Parameters (deterministic synthetic init, kernel-friendly layouts)
# ---------------------------------------------------------------------------

def init_params(key, cfg):
    D = cfg["decoder_embed_dim"]
    H = cfg["num_heads"]
    Dh = D // H
    V = cfg["num_codebook"] + 1000 + 1
    S = (cfg["resolution"] // cfg["patch_size"]) ** 2 + 1

    keys = iter(jax.random.split(key, 64))

    def w(shape):
        # trunc_normal_(0, 0.02) with bound >> std  ~  normal * 0.02
        return 0.02 * jax.random.normal(next(keys), shape, jnp.float32)

    zeros = lambda *s: jnp.zeros(s, jnp.float32)
    ones = lambda *s: jnp.ones(s, jnp.float32)

    params = {
        "decoder_embed_w": w((IMG_DIM, D)),
        "decoder_embed_b": zeros(1, D),
        "token_emb": w((V, D)),
        "de_pos_emb": w((S, D)),
        "ln_g": ones(1, D), "ln_b": zeros(1, D),        # self.ln (eps=1e-5)
        "mlps_w": w((D, D)), "mlps_b": zeros(1, D),     # mlps Linear
        "mlps_ln_g": ones(1, D), "mlps_ln_b": zeros(1, D),
        "mlps_bias": zeros(V),
        "blocks": [],
    }
    for _ in range(cfg["decoder_depth"]):
        params["blocks"].append({
            # per-head layouts: leading head axis -> free slicing in-kernel
            "wq": w((H, D, Dh)), "bq": zeros(H, 1, Dh),
            "wk": w((H, D, Dh)), "bk": zeros(H, 1, Dh),
            "wv": w((H, D, Dh)), "bv": zeros(H, 1, Dh),
            "wp": w((H, Dh, D)), "bp": zeros(1, D),
            "n1g": ones(1, D), "n1b": zeros(1, D),
            "w1": w((D, 4 * D)), "b1": zeros(1, 4 * D),
            "w2": w((4 * D, D)), "b2": zeros(1, D),
            "n2g": ones(1, D), "n2b": zeros(1, D),
        })
    return params


# ---------------------------------------------------------------------------
# Forward pass (thin JAX glue; all compute lives in the 4 kernels)
# ---------------------------------------------------------------------------

def maskgit_image2rgb_forward(params, x_tokens, cls_feat, cfg):
    B, L = x_tokens.shape
    D = cfg["decoder_embed_dim"]
    H = cfg["num_heads"]
    num_embed = cfg["num_codebook"]
    S = L + 1

    # Prologue: decoder_embed(cls) + token_emb gather + pos add + LN(1e-5)
    ids = x_tokens.reshape(-1).astype(jnp.int32)
    z3 = prologue(ids, cls_feat,
                  params["decoder_embed_w"], params["decoder_embed_b"],
                  params["token_emb"], params["de_pos_emb"],
                  params["ln_g"], params["ln_b"], eps=1e-5)

    # Decoder: one fused kernel per layer
    for blk in params["blocks"]:
        z3 = decoder_layer(z3, blk, nheads=H, eps=1e-12)

    # Head: only the first num_embed vocab rows are kept by the module's final
    # slice, so contract only against those; pad rows to x8 and cols to x128
    # so every store in the head kernel is unmasked (lane/sublane dense).
    M = B * S
    MPAD = ((M + 7) // 8) * 8
    NPAD = ((num_embed + 127) // 128) * 128
    zf = jnp.pad(z3.reshape(M, D), ((0, MPAD - M), (0, 0)))
    cw = jnp.pad(params["token_emb"][:num_embed], ((0, NPAD - num_embed), (0, 0)))
    cb = jnp.pad(params["mlps_bias"][:num_embed], (0, NPAD - num_embed)).reshape(1, NPAD)

    logits = mlps_classifier(zf, params["mlps_w"], params["mlps_b"],
                             params["mlps_ln_g"], params["mlps_ln_b"],
                             cw, cb, eps=1e-12)
    logits = logits[:M].reshape(B, S, NPAD)
    return logits[:, 1:, :num_embed]


# ---------------------------------------------------------------------------

if __name__ == "__main__":
    cfg = dict(
        decoder_embed_dim=128,   # lane-dense feature dim
        num_heads=4,             # head_dim = 32
        resolution=16,
        patch_size=4,            # -> num_latent_size=4, seq_length=17
        num_codebook=32,         # -> vocab = 32 + 1000 + 1 = 1033
        decoder_depth=2,
        drop_rate=0.1,           # dropout is identity at inference
    )
    key = jax.random.PRNGKey(0)
    kp, kx, kc = jax.random.split(key, 3)

    params = init_params(kp, cfg)

    B = 2
    L = (cfg["resolution"] // cfg["patch_size"]) ** 2        # 16 tokens
    V = cfg["num_codebook"] + 1000 + 1

    x = jax.random.randint(kx, (B, L), 0, V, dtype=jnp.int32)    # token ids
    cls_feat = jax.random.normal(kc, (B, IMG_DIM), jnp.float32)  # image feature

    fwd = jax.jit(functools.partial(maskgit_image2rgb_forward, cfg=cfg))
    out = jax.block_until_ready(fwd(params, x, cls_feat))

    assert out.shape == (B, L, cfg["num_codebook"]), out.shape
    assert out.dtype == jnp.float32
    print("KERNEL_OK")
</pallas_src>

<mosaic_0001>
module attributes {stable_mosaic.version = 11 : i64} {
  func.func @_prologue_kernel(%arg0: i32, %arg1: memref<32xi32, #tpu.memory_space<smem>>, %arg2: memref<2x1024xf32, #tpu.memory_space<vmem>>, %arg3: memref<1024x128xf32, #tpu.memory_space<vmem>>, %arg4: memref<1x128xf32, #tpu.memory_space<vmem>>, %arg5: memref<1033x128xf32, #tpu.memory_space<vmem>>, %arg6: memref<17x128xf32, #tpu.memory_space<vmem>>, %arg7: memref<1x128xf32, #tpu.memory_space<vmem>>, %arg8: memref<1x128xf32, #tpu.memory_space<vmem>>, %arg9: memref<2x17x128xf32, #tpu.memory_space<vmem>>) attributes {dimension_semantics = [#tpu.dimension_semantics<arbitrary>], iteration_bounds = array<i64: 1>, scalar_prefetch = 1 : i64, scratch_operands = 0 : i64, tpu.core_type = #tpu.core_type<tc>, window_params = [{pipeline_mode = #tpu.pipeline_mode<synchronous>, transform_indices = @transform_0, window_bounds = array<i64: 2, 1024>}, {pipeline_mode = #tpu.pipeline_mode<synchronous>, transform_indices = @transform_1, window_bounds = array<i64: 1024, 128>}, {pipeline_mode = #tpu.pipeline_mode<synchronous>, transform_indices = @transform_2, window_bounds = array<i64: 1, 128>}, {pipeline_mode = #tpu.pipeline_mode<synchronous>, transform_indices = @transform_3, window_bounds = array<i64: 1033, 128>}, {pipeline_mode = #tpu.pipeline_mode<synchronous>, transform_indices = @transform_4, window_bounds = array<i64: 17, 128>}, {pipeline_mode = #tpu.pipeline_mode<synchronous>, transform_indices = @transform_5, window_bounds = array<i64: 1, 128>}, {pipeline_mode = #tpu.pipeline_mode<synchronous>, transform_indices = @transform_6, window_bounds = array<i64: 1, 128>}, {pipeline_mode = #tpu.pipeline_mode<synchronous>, transform_indices = @transform_7, window_bounds = array<i64: 2, 17, 128>}]} {
    %c0 = arith.constant 0 : index
    %c0_0 = arith.constant 0 : index
    %0 = vector.load %arg2[%c0, %c0_0] : memref<2x1024xf32, #tpu.memory_space<vmem>>, vector<2x1024xf32>
    %c0_1 = arith.constant 0 : index
    %c0_2 = arith.constant 0 : index
    %1 = vector.load %arg3[%c0_1, %c0_2] : memref<1024x128xf32, #tpu.memory_space<vmem>>, vector<1024x128xf32>
    %cst = arith.constant dense<0.000000e+00> : vector<2x128xf32>
    %2 = tpu.matmul %0, %1, %cst {dimension_numbers = #tpu.dot_dimension_numbers<[1], [0], [0], [1], [0, 0, 1, 1], [], []>} : vector<2x1024xf32>, vector<1024x128xf32>, vector<2x128xf32> -> vector<2x128xf32>
    %c0_3 = arith.constant 0 : index
    %c0_4 = arith.constant 0 : index
    %3 = vector.load %arg4[%c0_3, %c0_4] : memref<1x128xf32, #tpu.memory_space<vmem>>, vector<1x128xf32>
    %4 = vector.broadcast %3 : vector<1x128xf32> to vector<2x128xf32>
    %5 = arith.addf %2, %4 : vector<2x128xf32>
    %c0_5 = arith.constant 0 : index
    %c0_6 = arith.constant 0 : index
    %6 = vector.load %arg6[%c0_5, %c0_6] : memref<17x128xf32, #tpu.memory_space<vmem>>, vector<17x128xf32>
    %c0_7 = arith.constant 0 : index
    %c0_8 = arith.constant 0 : index
    %7 = vector.load %arg7[%c0_7, %c0_8] : memref<1x128xf32, #tpu.memory_space<vmem>>, vector<1x128xf32>
    %c0_9 = arith.constant 0 : index
    %c0_10 = arith.constant 0 : index
    %8 = vector.load %arg8[%c0_9, %c0_10] : memref<1x128xf32, #tpu.memory_space<vmem>>, vector<1x128xf32>
    %9 = vector.extract_strided_slice %5 {offsets = [0, 0], sizes = [1, 128], strides = [1, 1]} : vector<2x128xf32> to vector<1x128xf32>
    %c0_11 = arith.constant 0 : index
    %10 = memref.load %arg1[%c0_11] : memref<32xi32, #tpu.memory_space<smem>>
    %c0_i32 = arith.constant 0 : i32
    %c1032_i32 = arith.constant 1032 : i32
    %11 = arith.maxsi %c0_i32, %10 : i32
    %12 = arith.minsi %c1032_i32, %11 : i32
    %13 = arith.index_cast %12 : i32 to index
    %c0_12 = arith.constant 0 : index
    %14 = vector.load %arg5[%13, %c0_12] : memref<1033x128xf32, #tpu.memory_space<vmem>>, vector<1x128xf32>
    %c1 = arith.constant 1 : index
    %15 = memref.load %arg1[%c1] : memref<32xi32, #tpu.memory_space<smem>>
    %c0_i32_13 = arith.constant 0 : i32
    %c1032_i32_14 = arith.constant 1032 : i32
    %16 = arith.maxsi %c0_i32_13, %15 : i32
    %17 = arith.minsi %c1032_i32_14, %16 : i32
    %18 = arith.index_cast %17 : i32 to index
    %c0_15 = arith.constant 0 : index
    %19 = vector.load %arg5[%18, %c0_15] : memref<1033x128xf32, #tpu.memory_space<vmem>>, vector<1x128xf32>
    %c2 = arith.constant 2 : index
    %20 = memref.load %arg1[%c2] : memref<32xi32, #tpu.memory_space<smem>>
    %c0_i32_16 = arith.constant 0 : i32
    %c1032_i32_17 = arith.constant 1032 : i32
    %21 = arith.maxsi %c0_i32_16, %20 : i32
    %22 = arith.minsi %c1032_i32_17, %21 : i32
    %23 = arith.index_cast %22 : i32 to index
    %c0_18 = arith.constant 0 : index
    %24 = vector.load %arg5[%23, %c0_18] : memref<1033x128xf32, #tpu.memory_space<vmem>>, vector<1x128xf32>
    %c3 = arith.constant 3 : index
    %25 = memref.load %arg1[%c3] : memref<32xi32, #tpu.memory_space<smem>>
    %c0_i32_19 = arith.constant 0 : i32
    %c1032_i32_20 = arith.constant 1032 : i32
    %26 = arith.maxsi %c0_i32_19, %25 : i32
    %27 = arith.minsi %c1032_i32_20, %26 : i32
    %28 = arith.index_cast %27 : i32 to index
    %c0_21 = arith.constant 0 : index
    %29 = vector.load %arg5[%28, %c0_21] : memref<1033x128xf32, #tpu.memory_space<vmem>>, vector<1x128xf32>
    %c4 = arith.constant 4 : index
    %30 = memref.load %arg1[%c4] : memref<32xi32, #tpu.memory_space<smem>>
    %c0_i32_22 = arith.constant 0 : i32
    %c1032_i32_23 = arith.constant 1032 : i32
    %31 = arith.maxsi %c0_i32_22, %30 : i32
    %32 = arith.minsi %c1032_i32_23, %31 : i32
    %33 = arith.index_cast %32 : i32 to index
    %c0_24 = arith.constant 0 : index
    %34 = vector.load %arg5[%33, %c0_24] : memref<1033x128xf32, #tpu.memory_space<vmem>>, vector<1x128xf32>
    %c5 = arith.constant 5 : index
    %35 = memref.load %arg1[%c5] : memref<32xi32, #tpu.memory_space<smem>>
    %c0_i32_25 = arith.constant 0 : i32
    %c1032_i32_26 = arith.constant 1032 : i32
    %36 = arith.maxsi %c0_i32_25, %35 : i32
    %37 = arith.minsi %c1032_i32_26, %36 : i32
    %38 = arith.index_cast %37 : i32 to index
    %c0_27 = arith.constant 0 : index
    %39 = vector.load %arg5[%38, %c0_27] : memref<1033x128xf32, #tpu.memory_space<vmem>>, vector<1x128xf32>
    %c6 = arith.constant 6 : index
    %40 = memref.load %arg1[%c6] : memref<32xi32, #tpu.memory_space<smem>>
    %c0_i32_28 = arith.constant 0 : i32
    %c1032_i32_29 = arith.constant 1032 : i32
    %41 = arith.maxsi %c0_i32_28, %40 : i32
    %42 = arith.minsi %c1032_i32_29, %41 : i32
    %43 = arith.index_cast %42 : i32 to index
    %c0_30 = arith.constant 0 : index
    %44 = vector.load %arg5[%43, %c0_30] : memref<1033x128xf32, #tpu.memory_space<vmem>>, vector<1x128xf32>
    %c7 = arith.constant 7 : index
    %45 = memref.load %arg1[%c7] : memref<32xi32, #tpu.memory_space<smem>>
    %c0_i32_31 = arith.constant 0 : i32
    %c1032_i32_32 = arith.constant 1032 : i32
    %46 = arith.maxsi %c0_i32_31, %45 : i32
    %47 = arith.minsi %c1032_i32_32, %46 : i32
    %48 = arith.index_cast %47 : i32 to index
    %c0_33 = arith.constant 0 : index
    %49 = vector.load %arg5[%48, %c0_33] : memref<1033x128xf32, #tpu.memory_space<vmem>>, vector<1x128xf32>
    %c8 = arith.constant 8 : index
    %50 = memref.load %arg1[%c8] : memref<32xi32, #tpu.memory_space<smem>>
    %c0_i32_34 = arith.constant 0 : i32
    %c1032_i32_35 = arith.constant 1032 : i32
    %51 = arith.maxsi %c0_i32_34, %50 : i32
    %52 = arith.minsi %c1032_i32_35, %51 : i32
    %53 = arith.index_cast %52 : i32 to index
    %c0_36 = arith.constant 0 : index
    %54 = vector.load %arg5[%53, %c0_36] : memref<1033x128xf32, #tpu.memory_space<vmem>>, vector<1x128xf32>
    %c9 = arith.constant 9 : index
    %55 = memref.load %arg1[%c9] : memref<32xi32, #tpu.memory_space<smem>>
    %c0_i32_37 = arith.constant 0 : i32
    %c1032_i32_38 = arith.constant 1032 : i32
    %56 = arith.maxsi %c0_i32_37, %55 : i32
    %57 = arith.minsi %c1032_i32_38, %56 : i32
    %58 = arith.index_cast %57 : i32 to index
    %c0_39 = arith.constant 0 : index
    %59 = vector.load %arg5[%58, %c0_39] : memref<1033x128xf32, #tpu.memory_space<vmem>>, vector<1x128xf32>
    %c10 = arith.constant 10 : index
    %60 = memref.load %arg1[%c10] : memref<32xi32, #tpu.memory_space<smem>>
    %c0_i32_40 = arith.constant 0 : i32
    %c1032_i32_41 = arith.constant 1032 : i32
    %61 = arith.maxsi %c0_i32_40, %60 : i32
    %62 = arith.minsi %c1032_i32_41, %61 : i32
    %63 = arith.index_cast %62 : i32 to index
    %c0_42 = arith.constant 0 : index
    %64 = vector.load %arg5[%63, %c0_42] : memref<1033x128xf32, #tpu.memory_space<vmem>>, vector<1x128xf32>
    %c11 = arith.constant 11 : index
    %65 = memref.load %arg1[%c11] : memref<32xi32, #tpu.memory_space<smem>>
    %c0_i32_43 = arith.constant 0 : i32
    %c1032_i32_44 = arith.constant 1032 : i32
    %66 = arith.maxsi %c0_i32_43, %65 : i32
    %67 = arith.minsi %c1032_i32_44, %66 : i32
    %68 = arith.index_cast %67 : i32 to index
    %c0_45 = arith.constant 0 : index
    %69 = vector.load %arg5[%68, %c0_45] : memref<1033x128xf32, #tpu.memory_space<vmem>>, vector<1x128xf32>
    %c12 = arith.constant 12 : index
    %70 = memref.load %arg1[%c12] : memref<32xi32, #tpu.memory_space<smem>>
    %c0_i32_46 = arith.constant 0 : i32
    %c1032_i32_47 = arith.constant 1032 : i32
    %71 = arith.maxsi %c0_i32_46, %70 : i32
    %72 = arith.minsi %c1032_i32_47, %71 : i32
    %73 = arith.index_cast %72 : i32 to index
    %c0_48 = arith.constant 0 : index
    %74 = vector.load %arg5[%73, %c0_48] : memref<1033x128xf32, #tpu.memory_space<vmem>>, vector<1x128xf32>
    %c13 = arith.constant 13 : index
    %75 = memref.load %arg1[%c13] : memref<32xi32, #tpu.memory_space<smem>>
    %c0_i32_49 = arith.constant 0 : i32
    %c1032_i32_50 = arith.constant 1032 : i32
    %76 = arith.maxsi %c0_i32_49, %75 : i32
    %77 = arith.minsi %c1032_i32_50, %76 : i32
    %78 = arith.index_cast %77 : i32 to index
    %c0_51 = arith.constant 0 : index
    %79 = vector.load %arg5[%78, %c0_51] : memref<1033x128xf32, #tpu.memory_space<vmem>>, vector<1x128xf32>
    %c14 = arith.constant 14 : index
    %80 = memref.load %arg1[%c14] : memref<32xi32, #tpu.memory_space<smem>>
    %c0_i32_52 = arith.constant 0 : i32
    %c1032_i32_53 = arith.constant 1032 : i32
    %81 = arith.maxsi %c0_i32_52, %80 : i32
    %82 = arith.minsi %c1032_i32_53, %81 : i32
    %83 = arith.index_cast %82 : i32 to index
    %c0_54 = arith.constant 0 : index
    %84 = vector.load %arg5[%83, %c0_54] : memref<1033x128xf32, #tpu.memory_space<vmem>>, vector<1x128xf32>
    %c15 = arith.constant 15 : index
    %85 = memref.load %arg1[%c15] : memref<32xi32, #tpu.memory_space<smem>>
    %c0_i32_55 = arith.constant 0 : i32
    %c1032_i32_56 = arith.constant 1032 : i32
    %86 = arith.maxsi %c0_i32_55, %85 : i32
    %87 = arith.minsi %c1032_i32_56, %86 : i32
    %88 = arith.index_cast %87 : i32 to index
    %c0_57 = arith.constant 0 : index
    %89 = vector.load %arg5[%88, %c0_57] : memref<1033x128xf32, #tpu.memory_space<vmem>>, vector<1x128xf32>
    %90 = tpu.concatenate %9, %14, %19, %24, %29, %34, %39, %44, %49, %54, %59, %64, %69, %74, %79, %84 in 0 : vector<1x128xf32>, vector<1x128xf32>, vector<1x128xf32>, vector<1x128xf32>, vector<1x128xf32>, vector<1x128xf32>, vector<1x128xf32>, vector<1x128xf32>, vector<1x128xf32>, vector<1x128xf32>, vector<1x128xf32>, vector<1x128xf32>, vector<1x128xf32>, vector<1x128xf32>, vector<1x128xf32>, vector<1x128xf32> -> vector<16x128xf32>
    %91 = tpu.concatenate %90, %89 in 0 : vector<16x128xf32>, vector<1x128xf32> -> vector<17x128xf32>
    %92 = arith.addf %91, %6 : vector<17x128xf32>
    %cst_58 = arith.constant dense<0.000000e+00> : vector<17xf32>
    %93 = vector.multi_reduction <add>, %92, %cst_58 [1] : vector<17x128xf32> to vector<17xf32>
    %94 = vector.shape_cast %93 : vector<17xf32> to vector<17x1xf32>
    %cst_59 = arith.constant 1.280000e+02 : f32
    %95 = vector.broadcast %cst_59 : f32 to vector<17x1xf32>
    %96 = arith.divf %94, %95 : vector<17x1xf32>
    %97 = vector.broadcast %96 : vector<17x1xf32> to vector<17x128xf32>
    %98 = arith.subf %92, %97 : vector<17x128xf32>
    %99 = arith.mulf %98, %98 : vector<17x128xf32>
    %cst_60 = arith.constant dense<0.000000e+00> : vector<17xf32>
    %100 = vector.multi_reduction <add>, %99, %cst_60 [1] : vector<17x128xf32> to vector<17xf32>
    %101 = vector.shape_cast %100 : vector<17xf32> to vector<17x1xf32>
    %cst_61 = arith.constant 1.280000e+02 : f32
    %102 = vector.broadcast %cst_61 : f32 to vector<17x1xf32>
    %103 = arith.divf %101, %102 : vector<17x1xf32>
    %cst_62 = arith.constant 9.99999974E-6 : f32
    %104 = vector.broadcast %cst_62 : f32 to vector<17x1xf32>
    %105 = arith.addf %103, %104 : vector<17x1xf32>
    %106 = math.rsqrt %105 : vector<17x1xf32>
    %107 = vector.broadcast %106 : vector<17x1xf32> to vector<17x128xf32>
    %108 = arith.mulf %98, %107 : vector<17x128xf32>
    %109 = vector.broadcast %7 : vector<1x128xf32> to vector<17x128xf32>
    %110 = arith.mulf %108, %109 : vector<17x128xf32>
    %111 = vector.broadcast %8 : vector<1x128xf32> to vector<17x128xf32>
    %112 = arith.addf %110, %111 : vector<17x128xf32>
    %c0_63 = arith.constant 0 : index
    %c0_64 = arith.constant 0 : index
    %c0_65 = arith.constant 0 : index
    %113 = vector.load %arg9[%c0_63, %c0_64, %c0_65] : memref<2x17x128xf32, #tpu.memory_space<vmem>>, vector<1x17x128xf32>
    %114 = vector.shape_cast %113 : vector<1x17x128xf32> to vector<17x128xf32>
    %115 = vector.shape_cast %112 : vector<17x128xf32> to vector<1x17x128xf32>
    tpu.vector_store %arg9[%c0_63, %c0_64, %c0_65], %115 {strides = array<i32>} : memref<2x17x128xf32, #tpu.memory_space<vmem>>, vector<1x17x128xf32>,
    %116 = vector.extract_strided_slice %5 {offsets = [1, 0], sizes = [1, 128], strides = [1, 1]} : vector<2x128xf32> to vector<1x128xf32>
    %c16 = arith.constant 16 : index
    %117 = memref.load %arg1[%c16] : memref<32xi32, #tpu.memory_space<smem>>
    %c0_i32_66 = arith.constant 0 : i32
    %c1032_i32_67 = arith.constant 1032 : i32
    %118 = arith.maxsi %c0_i32_66, %117 : i32
    %119 = arith.minsi %c1032_i32_67, %118 : i32
    %120 = arith.index_cast %119 : i32 to index
    %c0_68 = arith.constant 0 : index
    %121 = vector.load %arg5[%120, %c0_68] : memref<1033x128xf32, #tpu.memory_space<vmem>>, vector<1x128xf32>
    %c17 = arith.constant 17 : index
    %122 = memref.load %arg1[%c17] : memref<32xi32, #tpu.memory_space<smem>>
    %c0_i32_69 = arith.constant 0 : i32
    %c1032_i32_70 = arith.constant 1032 : i32
    %123 = arith.maxsi %c0_i32_69, %122 : i32
    %124 = arith.minsi %c1032_i32_70, %123 : i32
    %125 = arith.index_cast %124 : i32 to index
    %c0_71 = arith.constant 0 : index
    %126 = vector.load %arg5[%125, %c0_71] : memref<1033x128xf32, #tpu.memory_space<vmem>>, vector<1x128xf32>
    %c18 = arith.constant 18 : index
    %127 = memref.load %arg1[%c18] : memref<32xi32, #tpu.memory_space<smem>>
    %c0_i32_72 = arith.constant 0 : i32
    %c1032_i32_73 = arith.constant 1032 : i32
    %128 = arith.maxsi %c0_i32_72, %127 : i32
    %129 = arith.minsi %c1032_i32_73, %128 : i32
    %130 = arith.index_cast %129 : i32 to index
    %c0_74 = arith.constant 0 : index
    %131 = vector.load %arg5[%130, %c0_74] : memref<1033x128xf32, #tpu.memory_space<vmem>>, vector<1x128xf32>
    %c19 = arith.constant 19 : index
    %132 = memref.load %arg1[%c19] : memref<32xi32, #tpu.memory_space<smem>>
    %c0_i32_75 = arith.constant 0 : i32
    %c1032_i32_76 = arith.constant 1032 : i32
    %133 = arith.maxsi %c0_i32_75, %132 : i32
    %134 = arith.minsi %c1032_i32_76, %133 : i32
    %135 = arith.index_cast %134 : i32 to index
    %c0_77 = arith.constant 0 : index
    %136 = vector.load %arg5[%135, %c0_77] : memref<1033x128xf32, #tpu.memory_space<vmem>>, vector<1x128xf32>
    %c20 = arith.constant 20 : index
    %137 = memref.load %arg1[%c20] : memref<32xi32, #tpu.memory_space<smem>>
    %c0_i32_78 = arith.constant 0 : i32
    %c1032_i32_79 = arith.constant 1032 : i32
    %138 = arith.maxsi %c0_i32_78, %137 : i32
    %139 = arith.minsi %c1032_i32_79, %138 : i32
    %140 = arith.index_cast %139 : i32 to index
    %c0_80 = arith.constant 0 : index
    %141 = vector.load %arg5[%140, %c0_80] : memref<1033x128xf32, #tpu.memory_space<vmem>>, vector<1x128xf32>
    %c21 = arith.constant 21 : index
    %142 = memref.load %arg1[%c21] : memref<32xi32, #tpu.memory_space<smem>>
    %c0_i32_81 = arith.constant 0 : i32
    %c1032_i32_82 = arith.constant 1032 : i32
    %143 = arith.maxsi %c0_i32_81, %142 : i32
    %144 = arith.minsi %c1032_i32_82, %143 : i32
    %145 = arith.index_cast %144 : i32 to index
    %c0_83 = arith.constant 0 : index
    %146 = vector.load %arg5[%145, %c0_83] : memref<1033x128xf32, #tpu.memory_space<vmem>>, vector<1x128xf32>
    %c22 = arith.constant 22 : index
    %147 = memref.load %arg1[%c22] : memref<32xi32, #tpu.memory_space<smem>>
    %c0_i32_84 = arith.constant 0 : i32
    %c1032_i32_85 = arith.constant 1032 : i32
    %148 = arith.maxsi %c0_i32_84, %147 : i32
    %149 = arith.minsi %c1032_i32_85, %148 : i32
    %150 = arith.index_cast %149 : i32 to index
    %c0_86 = arith.constant 0 : index
    %151 = vector.load %arg5[%150, %c0_86] : memref<1033x128xf32, #tpu.memory_space<vmem>>, vector<1x128xf32>
    %c23 = arith.constant 23 : index
    %152 = memref.load %arg1[%c23] : memref<32xi32, #tpu.memory_space<smem>>
    %c0_i32_87 = arith.constant 0 : i32
    %c1032_i32_88 = arith.constant 1032 : i32
    %153 = arith.maxsi %c0_i32_87, %152 : i32
    %154 = arith.minsi %c1032_i32_88, %153 : i32
    %155 = arith.index_cast %154 : i32 to index
    %c0_89 = arith.constant 0 : index
    %156 = vector.load %arg5[%155, %c0_89] : memref<1033x128xf32, #tpu.memory_space<vmem>>, vector<1x128xf32>
    %c24 = arith.constant 24 : index
    %157 = memref.load %arg1[%c24] : memref<32xi32, #tpu.memory_space<smem>>
    %c0_i32_90 = arith.constant 0 : i32
    %c1032_i32_91 = arith.constant 1032 : i32
    %158 = arith.maxsi %c0_i32_90, %157 : i32
    %159 = arith.minsi %c1032_i32_91, %158 : i32
    %160 = arith.index_cast %159 : i32 to index
    %c0_92 = arith.constant 0 : index
    %161 = vector.load %arg5[%160, %c0_92] : memref<1033x128xf32, #tpu.memory_space<vmem>>, vector<1x128xf32>
    %c25 = arith.constant 25 : index
    %162 = memref.load %arg1[%c25] : memref<32xi32, #tpu.memory_space<smem>>
    %c0_i32_93 = arith.constant 0 : i32
    %c1032_i32_94 = arith.constant 1032 : i32
    %163 = arith.maxsi %c0_i32_93, %162 : i32
    %164 = arith.minsi %c1032_i32_94, %163 : i32
    %165 = arith.index_cast %164 : i32 to index
    %c0_95 = arith.constant 0 : index
    %166 = vector.load %arg5[%165, %c0_95] : memref<1033x128xf32, #tpu.memory_space<vmem>>, vector<1x128xf32>
    %c26 = arith.constant 26 : index
    %167 = memref.load %arg1[%c26] : memref<32xi32, #tpu.memory_space<smem>>
    %c0_i32_96 = arith.constant 0 : i32
    %c1032_i32_97 = arith.constant 1032 : i32
    %168 = arith.maxsi %c0_i32_96, %167 : i32
    %169 = arith.minsi %c1032_i32_97, %168 : i32
    %170 = arith.index_cast %169 : i32 to index
    %c0_98 = arith.constant 0 : index
    %171 = vector.load %arg5[%170, %c0_98] : memref<1033x128xf32, #tpu.memory_space<vmem>>, vector<1x128xf32>
    %c27 = arith.constant 27 : index
    %172 = memref.load %arg1[%c27] : memref<32xi32, #tpu.memory_space<smem>>
    %c0_i32_99 = arith.constant 0 : i32
    %c1032_i32_100 = arith.constant 1032 : i32
    %173 = arith.maxsi %c0_i32_99, %172 : i32
    %174 = arith.minsi %c1032_i32_100, %173 : i32
    %175 = arith.index_cast %174 : i32 to index
    %c0_101 = arith.constant 0 : index
    %176 = vector.load %arg5[%175, %c0_101] : memref<1033x128xf32, #tpu.memory_space<vmem>>, vector<1x128xf32>
    %c28 = arith.constant 28 : index
    %177 = memref.load %arg1[%c28] : memref<32xi32, #tpu.memory_space<smem>>
    %c0_i32_102 = arith.constant 0 : i32
    %c1032_i32_103 = arith.constant 1032 : i32
    %178 = arith.maxsi %c0_i32_102, %177 : i32
    %179 = arith.minsi %c1032_i32_103, %178 : i32
    %180 = arith.index_cast %179 : i32 to index
    %c0_104 = arith.constant 0 : index
    %181 = vector.load %arg5[%180, %c0_104] : memref<1033x128xf32, #tpu.memory_space<vmem>>, vector<1x128xf32>
    %c29 = arith.constant 29 : index
    %182 = memref.load %arg1[%c29] : memref<32xi32, #tpu.memory_space<smem>>
    %c0_i32_105 = arith.constant 0 : i32
    %c1032_i32_106 = arith.constant 1032 : i32
    %183 = arith.maxsi %c0_i32_105, %182 : i32
    %184 = arith.minsi %c1032_i32_106, %183 : i32
    %185 = arith.index_cast %184 : i32 to index
    %c0_107 = arith.constant 0 : index
    %186 = vector.load %arg5[%185, %c0_107] : memref<1033x128xf32, #tpu.memory_space<vmem>>, vector<1x128xf32>
    %c30 = arith.constant 30 : index
    %187 = memref.load %arg1[%c30] : memref<32xi32, #tpu.memory_space<smem>>
    %c0_i32_108 = arith.constant 0 : i32
    %c1032_i32_109 = arith.constant 1032 : i32
    %188 = arith.maxsi %c0_i32_108, %187 : i32
    %189 = arith.minsi %c1032_i32_109, %188 : i32
    %190 = arith.index_cast %189 : i32 to index
    %c0_110 = arith.constant 0 : index
    %191 = vector.load %arg5[%190, %c0_110] : memref<1033x128xf32, #tpu.memory_space<vmem>>, vector<1x128xf32>
    %c31 = arith.constant 31 : index
    %192 = memref.load %arg1[%c31] : memref<32xi32, #tpu.memory_space<smem>>
    %c0_i32_111 = arith.constant 0 : i32
    %c1032_i32_112 = arith.constant 1032 : i32
    %193 = arith.maxsi %c0_i32_111, %192 : i32
    %194 = arith.minsi %c1032_i32_112, %193 : i32
    %195 = arith.index_cast %194 : i32 to index
    %c0_113 = arith.constant 0 : index
    %196 = vector.load %arg5[%195, %c0_113] : memref<1033x128xf32, #tpu.memory_space<vmem>>, vector<1x128xf32>
    %197 = tpu.concatenate %116, %121, %126, %131, %136, %141, %146, %151, %156, %161, %166, %171, %176, %181, %186, %191 in 0 : vector<1x128xf32>, vector<1x128xf32>, vector<1x128xf32>, vector<1x128xf32>, vector<1x128xf32>, vector<1x128xf32>, vector<1x128xf32>, vector<1x128xf32>, vector<1x128xf32>, vector<1x128xf32>, vector<1x128xf32>, vector<1x128xf32>, vector<1x128xf32>, vector<1x128xf32>, vector<1x128xf32>, vector<1x128xf32> -> vector<16x128xf32>
    %198 = tpu.concatenate %197, %196 in 0 : vector<16x128xf32>, vector<1x128xf32> -> vector<17x128xf32>
    %199 = arith.addf %198, %6 : vector<17x128xf32>
    %cst_114 = arith.constant dense<0.000000e+00> : vector<17xf32>
    %200 = vector.multi_reduction <add>, %199, %cst_114 [1] : vector<17x128xf32> to vector<17xf32>
    %201 = vector.shape_cast %200 : vector<17xf32> to vector<17x1xf32>
    %cst_115 = arith.constant 1.280000e+02 : f32
    %202 = vector.broadcast %cst_115 : f32 to vector<17x1xf32>
    %203 = arith.divf %201, %202 : vector<17x1xf32>
    %204 = vector.broadcast %203 : vector<17x1xf32> to vector<17x128xf32>
    %205 = arith.subf %199, %204 : vector<17x128xf32>
    %206 = arith.mulf %205, %205 : vector<17x128xf32>
    %cst_116 = arith.constant dense<0.000000e+00> : vector<17xf32>
    %207 = vector.multi_reduction <add>, %206, %cst_116 [1] : vector<17x128xf32> to vector<17xf32>
    %208 = vector.shape_cast %207 : vector<17xf32> to vector<17x1xf32>
    %cst_117 = arith.constant 1.280000e+02 : f32
    %209 = vector.broadcast %cst_117 : f32 to vector<17x1xf32>
    %210 = arith.divf %208, %209 : vector<17x1xf32>
    %cst_118 = arith.constant 9.99999974E-6 : f32
    %211 = vector.broadcast %cst_118 : f32 to vector<17x1xf32>
    %212 = arith.addf %210, %211 : vector<17x1xf32>
    %213 = math.rsqrt %212 : vector<17x1xf32>
    %214 = vector.broadcast %213 : vector<17x1xf32> to vector<17x128xf32>
    %215 = arith.mulf %205, %214 : vector<17x128xf32>
    %216 = vector.broadcast %7 : vector<1x128xf32> to vector<17x128xf32>
    %217 = arith.mulf %215, %216 : vector<17x128xf32>
    %218 = vector.broadcast %8 : vector<1x128xf32> to vector<17x128xf32>
    %219 = arith.addf %217, %218 : vector<17x128xf32>
    %c1_119 = arith.constant 1 : index
    %c0_120 = arith.constant 0 : index
    %c0_121 = arith.constant 0 : index
    %220 = vector.load %arg9[%c1_119, %c0_120, %c0_121] : memref<2x17x128xf32, #tpu.memory_space<vmem>>, vector<1x17x128xf32>
    %221 = vector.shape_cast %220 : vector<1x17x128xf32> to vector<17x128xf32>
    %222 = vector.shape_cast %219 : vector<17x128xf32> to vector<1x17x128xf32>
    tpu.vector_store %arg9[%c1_119, %c0_120, %c0_121], %222 {strides = array<i32>} : memref<2x17x128xf32, #tpu.memory_space<vmem>>, vector<1x17x128xf32>,
    return
  }
  func.func @transform_0(%arg0: i32, %arg1: memref<32xi32, #tpu.memory_space<smem>>) -> (i32, i32) {
    %c0_i32 = arith.constant 0 : i32
    %c0_i32_0 = arith.constant 0 : i32
    %c0_i32_1 = arith.constant 0 : i32
    return %c0_i32, %c0_i32_0 : i32, i32
  }
  func.func @transform_1(%arg0: i32, %arg1: memref<32xi32, #tpu.memory_space<smem>>) -> (i32, i32) {
    %c0_i32 = arith.constant 0 : i32
    %c0_i32_0 = arith.constant 0 : i32
    %c0_i32_1 = arith.constant 0 : i32
    return %c0_i32, %c0_i32_0 : i32, i32
  }
  func.func @transform_2(%arg0: i32, %arg1: memref<32xi32, #tpu.memory_space<smem>>) -> (i32, i32) {
    %c0_i32 = arith.constant 0 : i32
    %c0_i32_0 = arith.constant 0 : i32
    %c0_i32_1 = arith.constant 0 : i32
    return %c0_i32, %c0_i32_0 : i32, i32
  }
  func.func @transform_3(%arg0: i32, %arg1: memref<32xi32, #tpu.memory_space<smem>>) -> (i32, i32) {
    %c0_i32 = arith.constant 0 : i32
    %c0_i32_0 = arith.constant 0 : i32
    %c0_i32_1 = arith.constant 0 : i32
    return %c0_i32, %c0_i32_0 : i32, i32
  }
  func.func @transform_4(%arg0: i32, %arg1: memref<32xi32, #tpu.memory_space<smem>>) -> (i32, i32) {
    %c0_i32 = arith.constant 0 : i32
    %c0_i32_0 = arith.constant 0 : i32
    %c0_i32_1 = arith.constant 0 : i32
    return %c0_i32, %c0_i32_0 : i32, i32
  }
  func.func @transform_5(%arg0: i32, %arg1: memref<32xi32, #tpu.memory_space<smem>>) -> (i32, i32) {
    %c0_i32 = arith.constant 0 : i32
    %c0_i32_0 = arith.constant 0 : i32
    %c0_i32_1 = arith.constant 0 : i32
    return %c0_i32, %c0_i32_0 : i32, i32
  }
  func.func @transform_6(%arg0: i32, %arg1: memref<32xi32, #tpu.memory_space<smem>>) -> (i32, i32) {
    %c0_i32 = arith.constant 0 : i32
    %c0_i32_0 = arith.constant 0 : i32
    %c0_i32_1 = arith.constant 0 : i32
    return %c0_i32, %c0_i32_0 : i32, i32
  }
  func.func @transform_7(%arg0: i32, %arg1: memref<32xi32, #tpu.memory_space<smem>>) -> (i32, i32, i32) {
    %c0_i32 = arith.constant 0 : i32
    %c0_i32_0 = arith.constant 0 : i32
    %c0_i32_1 = arith.constant 0 : i32
    %c0_i32_2 = arith.constant 0 : i32
    return %c0_i32, %c0_i32_0, %c0_i32_1 : i32, i32, i32
  }
}

module attributes {stable_mosaic.version = 11 : i64} {
  func.func @_layer_kernel(%arg0: i32, %arg1: memref<1x17x128xf32, #tpu.memory_space<vmem>>, %arg2: memref<4x128x32xf32, #tpu.memory_space<vmem>>, %arg3: memref<4x1x32xf32, #tpu.memory_space<vmem>>, %arg4: memref<4x128x32xf32, #tpu.memory_space<vmem>>, %arg5: memref<4x1x32xf32, #tpu.memory_space<vmem>>, %arg6: memref<4x128x32xf32, #tpu.memory_space<vmem>>, %arg7: memref<4x1x32xf32, #tpu.memory_space<vmem>>, %arg8: memref<4x32x128xf32, #tpu.memory_space<vmem>>, %arg9: memref<1x128xf32, #tpu.memory_space<vmem>>, %arg10: memref<1x128xf32, #tpu.memory_space<vmem>>, %arg11: memref<1x128xf32, #tpu.memory_space<vmem>>, %arg12: memref<128x512xf32, #tpu.memory_space<vmem>>, %arg13: memref<1x512xf32, #tpu.memory_space<vmem>>, %arg14: memref<512x128xf32, #tpu.memory_space<vmem>>, %arg15: memref<1x128xf32, #tpu.memory_space<vmem>>, %arg16: memref<1x128xf32, #tpu.memory_space<vmem>>, %arg17: memref<1x128xf32, #tpu.memory_space<vmem>>, %arg18: memref<1x17x128xf32, #tpu.memory_space<vmem>>) attributes {dimension_semantics = [#tpu.dimension_semantics<parallel>], iteration_bounds = array<i64: 2>, scalar_prefetch = 0 : i64, scratch_operands = 0 : i64, tpu.core_type = #tpu.core_type<tc>, window_params = [{transform_indices = @transform_0, window_bounds = array<i64: 1, 17, 128>}, {pipeline_mode = #tpu.pipeline_mode<synchronous>, transform_indices = @transform_1, window_bounds = array<i64: 4, 128, 32>}, {pipeline_mode = #tpu.pipeline_mode<synchronous>, transform_indices = @transform_2, window_bounds = array<i64: 4, 1, 32>}, {pipeline_mode = #tpu.pipeline_mode<synchronous>, transform_indices = @transform_3, window_bounds = array<i64: 4, 128, 32>}, {pipeline_mode = #tpu.pipeline_mode<synchronous>, transform_indices = @transform_4, window_bounds = array<i64: 4, 1, 32>}, {pipeline_mode = #tpu.pipeline_mode<synchronous>, transform_indices = @transform_5, window_bounds = array<i64: 4, 128, 32>}, {pipeline_mode = #tpu.pipeline_mode<synchronous>, transform_indices = @transform_6, window_bounds = array<i64: 4, 1, 32>}, {pipeline_mode = #tpu.pipeline_mode<synchronous>, transform_indices = @transform_7, window_bounds = array<i64: 4, 32, 128>}, {pipeline_mode = #tpu.pipeline_mode<synchronous>, transform_indices = @transform_8, window_bounds = array<i64: 1, 128>}, {pipeline_mode = #tpu.pipeline_mode<synchronous>, transform_indices = @transform_9, window_bounds = array<i64: 1, 128>}, {pipeline_mode = #tpu.pipeline_mode<synchronous>, transform_indices = @transform_10, window_bounds = array<i64: 1, 128>}, {pipeline_mode = #tpu.pipeline_mode<synchronous>, transform_indices = @transform_11, window_bounds = array<i64: 128, 512>}, {pipeline_mode = #tpu.pipeline_mode<synchronous>, transform_indices = @transform_12, window_bounds = array<i64: 1, 512>}, {pipeline_mode = #tpu.pipeline_mode<synchronous>, transform_indices = @transform_13, window_bounds = array<i64: 512, 128>}, {pipeline_mode = #tpu.pipeline_mode<synchronous>, transform_indices = @transform_14, window_bounds = array<i64: 1, 128>}, {pipeline_mode = #tpu.pipeline_mode<synchronous>, transform_indices = @transform_15, window_bounds = array<i64: 1, 128>}, {pipeline_mode = #tpu.pipeline_mode<synchronous>, transform_indices = @transform_16, window_bounds = array<i64: 1, 128>}, {transform_indices = @transform_17, window_bounds = array<i64: 1, 17, 128>}]} {
    %c0 = arith.constant 0 : index
    %c0_0 = arith.constant 0 : index
    %c0_1 = arith.constant 0 : index
    %0 = vector.load %arg1[%c0, %c0_0, %c0_1] : memref<1x17x128xf32, #tpu.memory_space<vmem>>, vector<1x17x128xf32>
    %1 = vector.shape_cast %0 : vector<1x17x128xf32> to vector<17x128xf32>
    %cst = arith.constant 0.000000e+00 : f32
    %2 = vector.broadcast %cst : f32 to vector<17x128xf32>
    %c0_2 = arith.constant 0 : index
    %c0_3 = arith.constant 0 : index
    %c0_4 = arith.constant 0 : index
    %3 = vector.load %arg2[%c0_2, %c0_3, %c0_4] : memref<4x128x32xf32, #tpu.memory_space<vmem>>, vector<1x128x32xf32>
    %4 = vector.shape_cast %3 : vector<1x128x32xf32> to vector<128x32xf32>
    %cst_5 = arith.constant dense<0.000000e+00> : vector<17x32xf32>
    %5 = tpu.matmul %1, %4, %cst_5 {dimension_numbers = #tpu.dot_dimension_numbers<[1], [0], [0], [1], [0, 0, 1, 1], [], []>} : vector<17x128xf32>, vector<128x32xf32>, vector<17x32xf32> -> vector<17x32xf32>
    %c0_6 = arith.constant 0 : index
    %c0_7 = arith.constant 0 : index
    %c0_8 = arith.constant 0 : index
    %6 = vector.load %arg3[%c0_6, %c0_7, %c0_8] : memref<4x1x32xf32, #tpu.memory_space<vmem>>, vector<1x1x32xf32>
    %7 = vector.shape_cast %6 : vector<1x1x32xf32> to vector<1x32xf32>
    %8 = vector.broadcast %7 : vector<1x32xf32> to vector<17x32xf32>
    %9 = arith.addf %5, %8 : vector<17x32xf32>
    %c0_9 = arith.constant 0 : index
    %c0_10 = arith.constant 0 : index
    %c0_11 = arith.constant 0 : index
    %10 = vector.load %arg4[%c0_9, %c0_10, %c0_11] : memref<4x128x32xf32, #tpu.memory_space<vmem>>, vector<1x128x32xf32>
    %11 = vector.shape_cast %10 : vector<1x128x32xf32> to vector<128x32xf32>
    %cst_12 = arith.constant dense<0.000000e+00> : vector<17x32xf32>
    %12 = tpu.matmul %1, %11, %cst_12 {dimension_numbers = #tpu.dot_dimension_numbers<[1], [0], [0], [1], [0, 0, 1, 1], [], []>} : vector<17x128xf32>, vector<128x32xf32>, vector<17x32xf32> -> vector<17x32xf32>
    %c0_13 = arith.constant 0 : index
    %c0_14 = arith.constant 0 : index
    %c0_15 = arith.constant 0 : index
    %13 = vector.load %arg5[%c0_13, %c0_14, %c0_15] : memref<4x1x32xf32, #tpu.memory_space<vmem>>, vector<1x1x32xf32>
    %14 = vector.shape_cast %13 : vector<1x1x32xf32> to vector<1x32xf32>
    %15 = vector.broadcast %14 : vector<1x32xf32> to vector<17x32xf32>
    %16 = arith.addf %12, %15 : vector<17x32xf32>
    %c0_16 = arith.constant 0 : index
    %c0_17 = arith.constant 0 : index
    %c0_18 = arith.constant 0 : index
    %17 = vector.load %arg6[%c0_16, %c0_17, %c0_18] : memref<4x128x32xf32, #tpu.memory_space<vmem>>, vector<1x128x32xf32>
    %18 = vector.shape_cast %17 : vector<1x128x32xf32> to vector<128x32xf32>
    %cst_19 = arith.constant dense<0.000000e+00> : vector<17x32xf32>
    %19 = tpu.matmul %1, %18, %cst_19 {dimension_numbers = #tpu.dot_dimension_numbers<[1], [0], [0], [1], [0, 0, 1, 1], [], []>} : vector<17x128xf32>, vector<128x32xf32>, vector<17x32xf32> -> vector<17x32xf32>
    %c0_20 = arith.constant 0 : index
    %c0_21 = arith.constant 0 : index
    %c0_22 = arith.constant 0 : index
    %20 = vector.load %arg7[%c0_20, %c0_21, %c0_22] : memref<4x1x32xf32, #tpu.memory_space<vmem>>, vector<1x1x32xf32>
    %21 = vector.shape_cast %20 : vector<1x1x32xf32> to vector<1x32xf32>
    %22 = vector.broadcast %21 : vector<1x32xf32> to vector<17x32xf32>
    %23 = arith.addf %19, %22 : vector<17x32xf32>
    %cst_23 = arith.constant dense<0.000000e+00> : vector<17x17xf32>
    %24 = tpu.matmul %9, %16, %cst_23 {dimension_numbers = #tpu.dot_dimension_numbers<[1], [1], [0], [0], [0, 0, 1, 0], [], []>} : vector<17x32xf32>, vector<17x32xf32>, vector<17x17xf32> -> vector<17x17xf32>
    %cst_24 = arith.constant 0.176776692 : f32
    %25 = vector.broadcast %cst_24 : f32 to vector<17x17xf32>
    %26 = arith.mulf %24, %25 : vector<17x17xf32>
    %cst_25 = arith.constant dense<0xFF800000> : vector<17xf32>
    %27 = vector.multi_reduction <maximumf>, %26, %cst_25 [1] : vector<17x17xf32> to vector<17xf32>
    %28 = vector.shape_cast %27 : vector<17xf32> to vector<17x1xf32>
    %29 = vector.broadcast %28 : vector<17x1xf32> to vector<17x17xf32>
    %30 = arith.subf %26, %29 : vector<17x17xf32>
    %31 = math.exp %30 : vector<17x17xf32>
    %cst_26 = arith.constant dense<0.000000e+00> : vector<17xf32>
    %32 = vector.multi_reduction <add>, %31, %cst_26 [1] : vector<17x17xf32> to vector<17xf32>
    %33 = vector.shape_cast %32 : vector<17xf32> to vector<17x1xf32>
    %34 = vector.broadcast %33 : vector<17x1xf32> to vector<17x17xf32>
    %35 = arith.divf %31, %34 : vector<17x17xf32>
    %cst_27 = arith.constant dense<0.000000e+00> : vector<17x32xf32>
    %36 = tpu.matmul %35, %23, %cst_27 {dimension_numbers = #tpu.dot_dimension_numbers<[1], [0], [0], [1], [0, 0, 1, 1], [], []>} : vector<17x17xf32>, vector<17x32xf32>, vector<17x32xf32> -> vector<17x32xf32>
    %c0_28 = arith.constant 0 : index
    %c0_29 = arith.constant 0 : index
    %c0_30 = arith.constant 0 : index
    %37 = vector.load %arg8[%c0_28, %c0_29, %c0_30] : memref<4x32x128xf32, #tpu.memory_space<vmem>>, vector<1x32x128xf32>
    %38 = vector.shape_cast %37 : vector<1x32x128xf32> to vector<32x128xf32>
    %cst_31 = arith.constant dense<0.000000e+00> : vector<17x128xf32>
    %39 = tpu.matmul %36, %38, %cst_31 {dimension_numbers = #tpu.dot_dimension_numbers<[1], [0], [0], [1], [0, 0, 1, 1], [], []>} : vector<17x32xf32>, vector<32x128xf32>, vector<17x128xf32> -> vector<17x128xf32>
    %40 = arith.addf %2, %39 : vector<17x128xf32>
    %c1 = arith.constant 1 : index
    %c0_32 = arith.constant 0 : index
    %c0_33 = arith.constant 0 : index
    %41 = vector.load %arg2[%c1, %c0_32, %c0_33] : memref<4x128x32xf32, #tpu.memory_space<vmem>>, vector<1x128x32xf32>
    %42 = vector.shape_cast %41 : vector<1x128x32xf32> to vector<128x32xf32>
    %cst_34 = arith.constant dense<0.000000e+00> : vector<17x32xf32>
    %43 = tpu.matmul %1, %42, %cst_34 {dimension_numbers = #tpu.dot_dimension_numbers<[1], [0], [0], [1], [0, 0, 1, 1], [], []>} : vector<17x128xf32>, vector<128x32xf32>, vector<17x32xf32> -> vector<17x32xf32>
    %c1_35 = arith.constant 1 : index
    %c0_36 = arith.constant 0 : index
    %c0_37 = arith.constant 0 : index
    %44 = vector.load %arg3[%c1_35, %c0_36, %c0_37] : memref<4x1x32xf32, #tpu.memory_space<vmem>>, vector<1x1x32xf32>
    %45 = vector.shape_cast %44 : vector<1x1x32xf32> to vector<1x32xf32>
    %46 = vector.broadcast %45 : vector<1x32xf32> to vector<17x32xf32>
    %47 = arith.addf %43, %46 : vector<17x32xf32>
    %c1_38 = arith.constant 1 : index
    %c0_39 = arith.constant 0 : index
    %c0_40 = arith.constant 0 : index
    %48 = vector.load %arg4[%c1_38, %c0_39, %c0_40] : memref<4x128x32xf32, #tpu.memory_space<vmem>>, vector<1x128x32xf32>
    %49 = vector.shape_cast %48 : vector<1x128x32xf32> to vector<128x32xf32>
    %cst_41 = arith.constant dense<0.000000e+00> : vector<17x32xf32>
    %50 = tpu.matmul %1, %49, %cst_41 {dimension_numbers = #tpu.dot_dimension_numbers<[1], [0], [0], [1], [0, 0, 1, 1], [], []>} : vector<17x128xf32>, vector<128x32xf32>, vector<17x32xf32> -> vector<17x32xf32>
    %c1_42 = arith.constant 1 : index
    %c0_43 = arith.constant 0 : index
    %c0_44 = arith.constant 0 : index
    %51 = vector.load %arg5[%c1_42, %c0_43, %c0_44] : memref<4x1x32xf32, #tpu.memory_space<vmem>>, vector<1x1x32xf32>
    %52 = vector.shape_cast %51 : vector<1x1x32xf32> to vector<1x32xf32>
    %53 = vector.broadcast %52 : vector<1x32xf32> to vector<17x32xf32>
    %54 = arith.addf %50, %53 : vector<17x32xf32>
    %c1_45 = arith.constant 1 : index
    %c0_46 = arith.constant 0 : index
    %c0_47 = arith.constant 0 : index
    %55 = vector.load %arg6[%c1_45, %c0_46, %c0_47] : memref<4x128x32xf32, #tpu.memory_space<vmem>>, vector<1x128x32xf32>
    %56 = vector.shape_cast %55 : vector<1x128x32xf32> to vector<128x32xf32>
    %cst_48 = arith.constant dense<0.000000e+00> : vector<17x32xf32>
    %57 = tpu.matmul %1, %56, %cst_48 {dimension_numbers = #tpu.dot_dimension_numbers<[1], [0], [0], [1], [0, 0, 1, 1], [], []>} : vector<17x128xf32>, vector<128x32xf32>, vector<17x32xf32> -> vector<17x32xf32>
    %c1_49 = arith.constant 1 : index
    %c0_50 = arith.constant 0 : index
    %c0_51 = arith.constant 0 : index
    %58 = vector.load %arg7[%c1_49, %c0_50, %c0_51] : memref<4x1x32xf32, #tpu.memory_space<vmem>>, vector<1x1x32xf32>
    %59 = vector.shape_cast %58 : vector<1x1x32xf32> to vector<1x32xf32>
    %60 = vector.broadcast %59 : vector<1x32xf32> to vector<17x32xf32>
    %61 = arith.addf %57, %60 : vector<17x32xf32>
    %cst_52 = arith.constant dense<0.000000e+00> : vector<17x17xf32>
    %62 = tpu.matmul %47, %54, %cst_52 {dimension_numbers = #tpu.dot_dimension_numbers<[1], [1], [0], [0], [0, 0, 1, 0], [], []>} : vector<17x32xf32>, vector<17x32xf32>, vector<17x17xf32> -> vector<17x17xf32>
    %cst_53 = arith.constant 0.176776692 : f32
    %63 = vector.broadcast %cst_53 : f32 to vector<17x17xf32>
    %64 = arith.mulf %62, %63 : vector<17x17xf32>
    %cst_54 = arith.constant dense<0xFF800000> : vector<17xf32>
    %65 = vector.multi_reduction <maximumf>, %64, %cst_54 [1] : vector<17x17xf32> to vector<17xf32>
    %66 = vector.shape_cast %65 : vector<17xf32> to vector<17x1xf32>
    %67 = vector.broadcast %66 : vector<17x1xf32> to vector<17x17xf32>
    %68 = arith.subf %64, %67 : vector<17x17xf32>
    %69 = math.exp %68 : vector<17x17xf32>
    %cst_55 = arith.constant dense<0.000000e+00> : vector<17xf32>
    %70 = vector.multi_reduction <add>, %69, %cst_55 [1] : vector<17x17xf32> to vector<17xf32>
    %71 = vector.shape_cast %70 : vector<17xf32> to vector<17x1xf32>
    %72 = vector.broadcast %71 : vector<17x1xf32> to vector<17x17xf32>
    %73 = arith.divf %69, %72 : vector<17x17xf32>
    %cst_56 = arith.constant dense<0.000000e+00> : vector<17x32xf32>
    %74 = tpu.matmul %73, %61, %cst_56 {dimension_numbers = #tpu.dot_dimension_numbers<[1], [0], [0], [1], [0, 0, 1, 1], [], []>} : vector<17x17xf32>, vector<17x32xf32>, vector<17x32xf32> -> vector<17x32xf32>
    %c1_57 = arith.constant 1 : index
    %c0_58 = arith.constant 0 : index
    %c0_59 = arith.constant 0 : index
    %75 = vector.load %arg8[%c1_57, %c0_58, %c0_59] : memref<4x32x128xf32, #tpu.memory_space<vmem>>, vector<1x32x128xf32>
    %76 = vector.shape_cast %75 : vector<1x32x128xf32> to vector<32x128xf32>
    %cst_60 = arith.constant dense<0.000000e+00> : vector<17x128xf32>
    %77 = tpu.matmul %74, %76, %cst_60 {dimension_numbers = #tpu.dot_dimension_numbers<[1], [0], [0], [1], [0, 0, 1, 1], [], []>} : vector<17x32xf32>, vector<32x128xf32>, vector<17x128xf32> -> vector<17x128xf32>
    %78 = arith.addf %40, %77 : vector<17x128xf32>
    %c2 = arith.constant 2 : index
    %c0_61 = arith.constant 0 : index
    %c0_62 = arith.constant 0 : index
    %79 = vector.load %arg2[%c2, %c0_61, %c0_62] : memref<4x128x32xf32, #tpu.memory_space<vmem>>, vector<1x128x32xf32>
    %80 = vector.shape_cast %79 : vector<1x128x32xf32> to vector<128x32xf32>
    %cst_63 = arith.constant dense<0.000000e+00> : vector<17x32xf32>
    %81 = tpu.matmul %1, %80, %cst_63 {dimension_numbers = #tpu.dot_dimension_numbers<[1], [0], [0], [1], [0, 0, 1, 1], [], []>} : vector<17x128xf32>, vector<128x32xf32>, vector<17x32xf32> -> vector<17x32xf32>
    %c2_64 = arith.constant 2 : index
    %c0_65 = arith.constant 0 : index
    %c0_66 = arith.constant 0 : index
    %82 = vector.load %arg3[%c2_64, %c0_65, %c0_66] : memref<4x1x32xf32, #tpu.memory_space<vmem>>, vector<1x1x32xf32>
    %83 = vector.shape_cast %82 : vector<1x1x32xf32> to vector<1x32xf32>
    %84 = vector.broadcast %83 : vector<1x32xf32> to vector<17x32xf32>
    %85 = arith.addf %81, %84 : vector<17x32xf32>
    %c2_67 = arith.constant 2 : index
    %c0_68 = arith.constant 0 : index
    %c0_69 = arith.constant 0 : index
    %86 = vector.load %arg4[%c2_67, %c0_68, %c0_69] : memref<4x128x32xf32, #tpu.memory_space<vmem>>, vector<1x128x32xf32>
    %87 = vector.shape_cast %86 : vector<1x128x32xf32> to vector<128x32xf32>
    %cst_70 = arith.constant dense<0.000000e+00> : vector<17x32xf32>
    %88 = tpu.matmul %1, %87, %cst_70 {dimension_numbers = #tpu.dot_dimension_numbers<[1], [0], [0], [1], [0, 0, 1, 1], [], []>} : vector<17x128xf32>, vector<128x32xf32>, vector<17x32xf32> -> vector<17x32xf32>
    %c2_71 = arith.constant 2 : index
    %c0_72 = arith.constant 0 : index
    %c0_73 = arith.constant 0 : index
    %89 = vector.load %arg5[%c2_71, %c0_72, %c0_73] : memref<4x1x32xf32, #tpu.memory_space<vmem>>, vector<1x1x32xf32>
    %90 = vector.shape_cast %89 : vector<1x1x32xf32> to vector<1x32xf32>
    %91 = vector.broadcast %90 : vector<1x32xf32> to vector<17x32xf32>
    %92 = arith.addf %88, %91 : vector<17x32xf32>
    %c2_74 = arith.constant 2 : index
    %c0_75 = arith.constant 0 : index
    %c0_76 = arith.constant 0 : index
    %93 = vector.load %arg6[%c2_74, %c0_75, %c0_76] : memref<4x128x32xf32, #tpu.memory_space<vmem>>, vector<1x128x32xf32>
    %94 = vector.shape_cast %93 : vector<1x128x32xf32> to vector<128x32xf32>
    %cst_77 = arith.constant dense<0.000000e+00> : vector<17x32xf32>
    %95 = tpu.matmul %1, %94, %cst_77 {dimension_numbers = #tpu.dot_dimension_numbers<[1], [0], [0], [1], [0, 0, 1, 1], [], []>} : vector<17x128xf32>, vector<128x32xf32>, vector<17x32xf32> -> vector<17x32xf32>
    %c2_78 = arith.constant 2 : index
    %c0_79 = arith.constant 0 : index
    %c0_80 = arith.constant 0 : index
    %96 = vector.load %arg7[%c2_78, %c0_79, %c0_80] : memref<4x1x32xf32, #tpu.memory_space<vmem>>, vector<1x1x32xf32>
    %97 = vector.shape_cast %96 : vector<1x1x32xf32> to vector<1x32xf32>
    %98 = vector.broadcast %97 : vector<1x32xf32> to vector<17x32xf32>
    %99 = arith.addf %95, %98 : vector<17x32xf32>
    %cst_81 = arith.constant dense<0.000000e+00> : vector<17x17xf32>
    %100 = tpu.matmul %85, %92, %cst_81 {dimension_numbers = #tpu.dot_dimension_numbers<[1], [1], [0], [0], [0, 0, 1, 0], [], []>} : vector<17x32xf32>, vector<17x32xf32>, vector<17x17xf32> -> vector<17x17xf32>
    %cst_82 = arith.constant 0.176776692 : f32
    %101 = vector.broadcast %cst_82 : f32 to vector<17x17xf32>
    %102 = arith.mulf %100, %101 : vector<17x17xf32>
    %cst_83 = arith.constant dense<0xFF800000> : vector<17xf32>
    %103 = vector.multi_reduction <maximumf>, %102, %cst_83 [1] : vector<17x17xf32> to vector<17xf32>
    %104 = vector.shape_cast %103 : vector<17xf32> to vector<17x1xf32>
    %105 = vector.broadcast %104 : vector<17x1xf32> to vector<17x17xf32>
    %106 = arith.subf %102, %105 : vector<17x17xf32>
    %107 = math.exp %106 : vector<17x17xf32>
    %cst_84 = arith.constant dense<0.000000e+00> : vector<17xf32>
    %108 = vector.multi_reduction <add>, %107, %cst_84 [1] : vector<17x17xf32> to vector<17xf32>
    %109 = vector.shape_cast %108 : vector<17xf32> to vector<17x1xf32>
    %110 = vector.broadcast %109 : vector<17x1xf32> to vector<17x17xf32>
    %111 = arith.divf %107, %110 : vector<17x17xf32>
    %cst_85 = arith.constant dense<0.000000e+00> : vector<17x32xf32>
    %112 = tpu.matmul %111, %99, %cst_85 {dimension_numbers = #tpu.dot_dimension_numbers<[1], [0], [0], [1], [0, 0, 1, 1], [], []>} : vector<17x17xf32>, vector<17x32xf32>, vector<17x32xf32> -> vector<17x32xf32>
    %c2_86 = arith.constant 2 : index
    %c0_87 = arith.constant 0 : index
    %c0_88 = arith.constant 0 : index
    %113 = vector.load %arg8[%c2_86, %c0_87, %c0_88] : memref<4x32x128xf32, #tpu.memory_space<vmem>>, vector<1x32x128xf32>
    %114 = vector.shape_cast %113 : vector<1x32x128xf32> to vector<32x128xf32>
    %cst_89 = arith.constant dense<0.000000e+00> : vector<17x128xf32>
    %115 = tpu.matmul %112, %114, %cst_89 {dimension_numbers = #tpu.dot_dimension_numbers<[1], [0], [0], [1], [0, 0, 1, 1], [], []>} : vector<17x32xf32>, vector<32x128xf32>, vector<17x128xf32> -> vector<17x128xf32>
    %116 = arith.addf %78, %115 : vector<17x128xf32>
    %c3 = arith.constant 3 : index
    %c0_90 = arith.constant 0 : index
    %c0_91 = arith.constant 0 : index
    %117 = vector.load %arg2[%c3, %c0_90, %c0_91] : memref<4x128x32xf32, #tpu.memory_space<vmem>>, vector<1x128x32xf32>
    %118 = vector.shape_cast %117 : vector<1x128x32xf32> to vector<128x32xf32>
    %cst_92 = arith.constant dense<0.000000e+00> : vector<17x32xf32>
    %119 = tpu.matmul %1, %118, %cst_92 {dimension_numbers = #tpu.dot_dimension_numbers<[1], [0], [0], [1], [0, 0, 1, 1], [], []>} : vector<17x128xf32>, vector<128x32xf32>, vector<17x32xf32> -> vector<17x32xf32>
    %c3_93 = arith.constant 3 : index
    %c0_94 = arith.constant 0 : index
    %c0_95 = arith.constant 0 : index
    %120 = vector.load %arg3[%c3_93, %c0_94, %c0_95] : memref<4x1x32xf32, #tpu.memory_space<vmem>>, vector<1x1x32xf32>
    %121 = vector.shape_cast %120 : vector<1x1x32xf32> to vector<1x32xf32>
    %122 = vector.broadcast %121 : vector<1x32xf32> to vector<17x32xf32>
    %123 = arith.addf %119, %122 : vector<17x32xf32>
    %c3_96 = arith.constant 3 : index
    %c0_97 = arith.constant 0 : index
    %c0_98 = arith.constant 0 : index
    %124 = vector.load %arg4[%c3_96, %c0_97, %c0_98] : memref<4x128x32xf32, #tpu.memory_space<vmem>>, vector<1x128x32xf32>
    %125 = vector.shape_cast %124 : vector<1x128x32xf32> to vector<128x32xf32>
    %cst_99 = arith.constant dense<0.000000e+00> : vector<17x32xf32>
    %126 = tpu.matmul %1, %125, %cst_99 {dimension_numbers = #tpu.dot_dimension_numbers<[1], [0], [0], [1], [0, 0, 1, 1], [], []>} : vector<17x128xf32>, vector<128x32xf32>, vector<17x32xf32> -> vector<17x32xf32>
    %c3_100 = arith.constant 3 : index
    %c0_101 = arith.constant 0 : index
    %c0_102 = arith.constant 0 : index
    %127 = vector.load %arg5[%c3_100, %c0_101, %c0_102] : memref<4x1x32xf32, #tpu.memory_space<vmem>>, vector<1x1x32xf32>
    %128 = vector.shape_cast %127 : vector<1x1x32xf32> to vector<1x32xf32>
    %129 = vector.broadcast %128 : vector<1x32xf32> to vector<17x32xf32>
    %130 = arith.addf %126, %129 : vector<17x32xf32>
    %c3_103 = arith.constant 3 : index
    %c0_104 = arith.constant 0 : index
    %c0_105 = arith.constant 0 : index
    %131 = vector.load %arg6[%c3_103, %c0_104, %c0_105] : memref<4x128x32xf32, #tpu.memory_space<vmem>>, vector<1x128x32xf32>
    %132 = vector.shape_cast %131 : vector<1x128x32xf32> to vector<128x32xf32>
    %cst_106 = arith.constant dense<0.000000e+00> : vector<17x32xf32>
    %133 = tpu.matmul %1, %132, %cst_106 {dimension_numbers = #tpu.dot_dimension_numbers<[1], [0], [0], [1], [0, 0, 1, 1], [], []>} : vector<17x128xf32>, vector<128x32xf32>, vector<17x32xf32> -> vector<17x32xf32>
    %c3_107 = arith.constant 3 : index
    %c0_108 = arith.constant 0 : index
    %c0_109 = arith.constant 0 : index
    %134 = vector.load %arg7[%c3_107, %c0_108, %c0_109] : memref<4x1x32xf32, #tpu.memory_space<vmem>>, vector<1x1x32xf32>
    %135 = vector.shape_cast %134 : vector<1x1x32xf32> to vector<1x32xf32>
    %136 = vector.broadcast %135 : vector<1x32xf32> to vector<17x32xf32>
    %137 = arith.addf %133, %136 : vector<17x32xf32>
    %cst_110 = arith.constant dense<0.000000e+00> : vector<17x17xf32>
    %138 = tpu.matmul %123, %130, %cst_110 {dimension_numbers = #tpu.dot_dimension_numbers<[1], [1], [0], [0], [0, 0, 1, 0], [], []>} : vector<17x32xf32>, vector<17x32xf32>, vector<17x17xf32> -> vector<17x17xf32>
    %cst_111 = arith.constant 0.176776692 : f32
    %139 = vector.broadcast %cst_111 : f32 to vector<17x17xf32>
    %140 = arith.mulf %138, %139 : vector<17x17xf32>
    %cst_112 = arith.constant dense<0xFF800000> : vector<17xf32>
    %141 = vector.multi_reduction <maximumf>, %140, %cst_112 [1] : vector<17x17xf32> to vector<17xf32>
    %142 = vector.shape_cast %141 : vector<17xf32> to vector<17x1xf32>
    %143 = vector.broadcast %142 : vector<17x1xf32> to vector<17x17xf32>
    %144 = arith.subf %140, %143 : vector<17x17xf32>
    %145 = math.exp %144 : vector<17x17xf32>
    %cst_113 = arith.constant dense<0.000000e+00> : vector<17xf32>
    %146 = vector.multi_reduction <add>, %145, %cst_113 [1] : vector<17x17xf32> to vector<17xf32>
    %147 = vector.shape_cast %146 : vector<17xf32> to vector<17x1xf32>
    %148 = vector.broadcast %147 : vector<17x1xf32> to vector<17x17xf32>
    %149 = arith.divf %145, %148 : vector<17x17xf32>
    %cst_114 = arith.constant dense<0.000000e+00> : vector<17x32xf32>
    %150 = tpu.matmul %149, %137, %cst_114 {dimension_numbers = #tpu.dot_dimension_numbers<[1], [0], [0], [1], [0, 0, 1, 1], [], []>} : vector<17x17xf32>, vector<17x32xf32>, vector<17x32xf32> -> vector<17x32xf32>
    %c3_115 = arith.constant 3 : index
    %c0_116 = arith.constant 0 : index
    %c0_117 = arith.constant 0 : index
    %151 = vector.load %arg8[%c3_115, %c0_116, %c0_117] : memref<4x32x128xf32, #tpu.memory_space<vmem>>, vector<1x32x128xf32>
    %152 = vector.shape_cast %151 : vector<1x32x128xf32> to vector<32x128xf32>
    %cst_118 = arith.constant dense<0.000000e+00> : vector<17x128xf32>
    %153 = tpu.matmul %150, %152, %cst_118 {dimension_numbers = #tpu.dot_dimension_numbers<[1], [0], [0], [1], [0, 0, 1, 1], [], []>} : vector<17x32xf32>, vector<32x128xf32>, vector<17x128xf32> -> vector<17x128xf32>
    %154 = arith.addf %116, %153 : vector<17x128xf32>
    %155 = arith.addf %1, %154 : vector<17x128xf32>
    %c0_119 = arith.constant 0 : index
    %c0_120 = arith.constant 0 : index
    %156 = vector.load %arg9[%c0_119, %c0_120] : memref<1x128xf32, #tpu.memory_space<vmem>>, vector<1x128xf32>
    %157 = vector.broadcast %156 : vector<1x128xf32> to vector<17x128xf32>
    %158 = arith.addf %155, %157 : vector<17x128xf32>
    %c0_121 = arith.constant 0 : index
    %c0_122 = arith.constant 0 : index
    %159 = vector.load %arg10[%c0_121, %c0_122] : memref<1x128xf32, #tpu.memory_space<vmem>>, vector<1x128xf32>
    %c0_123 = arith.constant 0 : index
    %c0_124 = arith.constant 0 : index
    %160 = vector.load %arg11[%c0_123, %c0_124] : memref<1x128xf32, #tpu.memory_space<vmem>>, vector<1x128xf32>
    %cst_125 = arith.constant dense<0.000000e+00> : vector<17xf32>
    %161 = vector.multi_reduction <add>, %158, %cst_125 [1] : vector<17x128xf32> to vector<17xf32>
    %162 = vector.shape_cast %161 : vector<17xf32> to vector<17x1xf32>
    %cst_126 = arith.constant 1.280000e+02 : f32
    %163 = vector.broadcast %cst_126 : f32 to vector<17x1xf32>
    %164 = arith.divf %162, %163 : vector<17x1xf32>
    %165 = vector.broadcast %164 : vector<17x1xf32> to vector<17x128xf32>
    %166 = arith.subf %158, %165 : vector<17x128xf32>
    %167 = arith.mulf %166, %166 : vector<17x128xf32>
    %cst_127 = arith.constant dense<0.000000e+00> : vector<17xf32>
    %168 = vector.multi_reduction <add>, %167, %cst_127 [1] : vector<17x128xf32> to vector<17xf32>
    %169 = vector.shape_cast %168 : vector<17xf32> to vector<17x1xf32>
    %cst_128 = arith.constant 1.280000e+02 : f32
    %170 = vector.broadcast %cst_128 : f32 to vector<17x1xf32>
    %171 = arith.divf %169, %170 : vector<17x1xf32>
    %cst_129 = arith.constant 9.99999996E-13 : f32
    %172 = vector.broadcast %cst_129 : f32 to vector<17x1xf32>
    %173 = arith.addf %171, %172 : vector<17x1xf32>
    %174 = math.rsqrt %173 : vector<17x1xf32>
    %175 = vector.broadcast %174 : vector<17x1xf32> to vector<17x128xf32>
    %176 = arith.mulf %166, %175 : vector<17x128xf32>
    %177 = vector.broadcast %159 : vector<1x128xf32> to vector<17x128xf32>
    %178 = arith.mulf %176, %177 : vector<17x128xf32>
    %179 = vector.broadcast %160 : vector<1x128xf32> to vector<17x128xf32>
    %180 = arith.addf %178, %179 : vector<17x128xf32>
    %c0_130 = arith.constant 0 : index
    %c0_131 = arith.constant 0 : index
    %181 = vector.load %arg12[%c0_130, %c0_131] : memref<128x512xf32, #tpu.memory_space<vmem>>, vector<128x512xf32>
    %cst_132 = arith.constant dense<0.000000e+00> : vector<17x512xf32>
    %182 = tpu.matmul %180, %181, %cst_132 {dimension_numbers = #tpu.dot_dimension_numbers<[1], [0], [0], [1], [0, 0, 1, 1], [], []>} : vector<17x128xf32>, vector<128x512xf32>, vector<17x512xf32> -> vector<17x512xf32>
    %c0_133 = arith.constant 0 : index
    %c0_134 = arith.constant 0 : index
    %183 = vector.load %arg13[%c0_133, %c0_134] : memref<1x512xf32, #tpu.memory_space<vmem>>, vector<1x512xf32>
    %184 = vector.broadcast %183 : vector<1x512xf32> to vector<17x512xf32>
    %185 = arith.addf %182, %184 : vector<17x512xf32>
    %cst_135 = arith.constant 5.000000e-01 : f32
    %186 = vector.broadcast %cst_135 : f32 to vector<17x512xf32>
    %187 = arith.mulf %186, %185 : vector<17x512xf32>
    %cst_136 = arith.constant 0.707106769 : f32
    %188 = vector.broadcast %cst_136 : f32 to vector<17x512xf32>
    %189 = arith.mulf %185, %188 : vector<17x512xf32>
    %190 = math.absf %189 : vector<17x512xf32>
    %cst_137 = arith.constant 0.327591091 : f32
    %191 = vector.broadcast %cst_137 : f32 to vector<17x512xf32>
    %192 = arith.mulf %191, %190 : vector<17x512xf32>
    %cst_138 = arith.constant 1.000000e+00 : f32
    %193 = vector.broadcast %cst_138 : f32 to vector<17x512xf32>
    %194 = arith.addf %193, %192 : vector<17x512xf32>
    %cst_139 = arith.constant 1.000000e+00 : f32
    %195 = vector.broadcast %cst_139 : f32 to vector<17x512xf32>
    %196 = arith.divf %195, %194 : vector<17x512xf32>
    %cst_140 = arith.constant 1.06140542 : f32
    %197 = vector.broadcast %cst_140 : f32 to vector<17x512xf32>
    %198 = arith.mulf %197, %196 : vector<17x512xf32>
    %cst_141 = arith.constant -1.45315206 : f32
    %199 = vector.broadcast %cst_141 : f32 to vector<17x512xf32>
    %200 = arith.addf %198, %199 : vector<17x512xf32>
    %201 = arith.mulf %200, %196 : vector<17x512xf32>
    %cst_142 = arith.constant 1.42141378 : f32
    %202 = vector.broadcast %cst_142 : f32 to vector<17x512xf32>
    %203 = arith.addf %201, %202 : vector<17x512xf32>
    %204 = arith.mulf %203, %196 : vector<17x512xf32>
    %cst_143 = arith.constant -0.284496725 : f32
    %205 = vector.broadcast %cst_143 : f32 to vector<17x512xf32>
    %206 = arith.addf %204, %205 : vector<17x512xf32>
    %207 = arith.mulf %206, %196 : vector<17x512xf32>
    %cst_144 = arith.constant 0.254829586 : f32
    %208 = vector.broadcast %cst_144 : f32 to vector<17x512xf32>
    %209 = arith.addf %207, %208 : vector<17x512xf32>
    %210 = arith.mulf %209, %196 : vector<17x512xf32>
    %cst_145 = arith.constant 0.000000e+00 : f32
    %211 = vector.broadcast %cst_145 : f32 to vector<17x512xf32>
    %212 = arith.subf %211, %190 : vector<17x512xf32>
    %213 = arith.mulf %212, %190 : vector<17x512xf32>
    %214 = math.exp %213 : vector<17x512xf32>
    %215 = arith.mulf %210, %214 : vector<17x512xf32>
    %cst_146 = arith.constant 1.000000e+00 : f32
    %216 = vector.broadcast %cst_146 : f32 to vector<17x512xf32>
    %217 = arith.subf %216, %215 : vector<17x512xf32>
    %cst_147 = arith.constant 0.000000e+00 : f32
    %218 = vector.broadcast %cst_147 : f32 to vector<17x512xf32>
    %219 = arith.cmpf oge, %189, %218 : vector<17x512xf32>
    %cst_148 = arith.constant 0.000000e+00 : f32
    %220 = vector.broadcast %cst_148 : f32 to vector<17x512xf32>
    %221 = arith.subf %220, %217 : vector<17x512xf32>
    %222 = arith.select %219, %217, %221 : vector<17x512xi1>, vector<17x512xf32>
    %cst_149 = arith.constant 1.000000e+00 : f32
    %223 = vector.broadcast %cst_149 : f32 to vector<17x512xf32>
    %224 = arith.addf %223, %222 : vector<17x512xf32>
    %225 = arith.mulf %187, %224 : vector<17x512xf32>
    %c0_150 = arith.constant 0 : index
    %c0_151 = arith.constant 0 : index
    %226 = vector.load %arg14[%c0_150, %c0_151] : memref<512x128xf32, #tpu.memory_space<vmem>>, vector<512x128xf32>
    %cst_152 = arith.constant dense<0.000000e+00> : vector<17x128xf32>
    %227 = tpu.matmul %225, %226, %cst_152 {dimension_numbers = #tpu.dot_dimension_numbers<[1], [0], [0], [1], [0, 0, 1, 1], [], []>} : vector<17x512xf32>, vector<512x128xf32>, vector<17x128xf32> -> vector<17x128xf32>
    %c0_153 = arith.constant 0 : index
    %c0_154 = arith.constant 0 : index
    %228 = vector.load %arg15[%c0_153, %c0_154] : memref<1x128xf32, #tpu.memory_space<vmem>>, vector<1x128xf32>
    %229 = vector.broadcast %228 : vector<1x128xf32> to vector<17x128xf32>
    %230 = arith.addf %227, %229 : vector<17x128xf32>
    %231 = arith.addf %180, %230 : vector<17x128xf32>
    %c0_155 = arith.constant 0 : index
    %c0_156 = arith.constant 0 : index
    %232 = vector.load %arg16[%c0_155, %c0_156] : memref<1x128xf32, #tpu.memory_space<vmem>>, vector<1x128xf32>
    %c0_157 = arith.constant 0 : index
    %c0_158 = arith.constant 0 : index
    %233 = vector.load %arg17[%c0_157, %c0_158] : memref<1x128xf32, #tpu.memory_space<vmem>>, vector<1x128xf32>
    %cst_159 = arith.constant dense<0.000000e+00> : vector<17xf32>
    %234 = vector.multi_reduction <add>, %231, %cst_159 [1] : vector<17x128xf32> to vector<17xf32>
    %235 = vector.shape_cast %234 : vector<17xf32> to vector<17x1xf32>
    %cst_160 = arith.constant 1.280000e+02 : f32
    %236 = vector.broadcast %cst_160 : f32 to vector<17x1xf32>
    %237 = arith.divf %235, %236 : vector<17x1xf32>
    %238 = vector.broadcast %237 : vector<17x1xf32> to vector<17x128xf32>
    %239 = arith.subf %231, %238 : vector<17x128xf32>
    %240 = arith.mulf %239, %239 : vector<17x128xf32>
    %cst_161 = arith.constant dense<0.000000e+00> : vector<17xf32>
    %241 = vector.multi_reduction <add>, %240, %cst_161 [1] : vector<17x128xf32> to vector<17xf32>
    %242 = vector.shape_cast %241 : vector<17xf32> to vector<17x1xf32>
    %cst_162 = arith.constant 1.280000e+02 : f32
    %243 = vector.broadcast %cst_162 : f32 to vector<17x1xf32>
    %244 = arith.divf %242, %243 : vector<17x1xf32>
    %cst_163 = arith.constant 9.99999996E-13 : f32
    %245 = vector.broadcast %cst_163 : f32 to vector<17x1xf32>
    %246 = arith.addf %244, %245 : vector<17x1xf32>
    %247 = math.rsqrt %246 : vector<17x1xf32>
    %248 = vector.broadcast %247 : vector<17x1xf32> to vector<17x128xf32>
    %249 = arith.mulf %239, %248 : vector<17x128xf32>
    %250 = vector.broadcast %232 : vector<1x128xf32> to vector<17x128xf32>
    %251 = arith.mulf %249, %250 : vector<17x128xf32>
    %252 = vector.broadcast %233 : vector<1x128xf32> to vector<17x128xf32>
    %253 = arith.addf %251, %252 : vector<17x128xf32>
    %c0_164 = arith.constant 0 : index
    %c0_165 = arith.constant 0 : index
    %c0_166 = arith.constant 0 : index
    %254 = vector.load %arg18[%c0_164, %c0_165, %c0_166] : memref<1x17x128xf32, #tpu.memory_space<vmem>>, vector<1x17x128xf32>
    %255 = vector.shape_cast %254 : vector<1x17x128xf32> to vector<17x128xf32>
    %256 = vector.shape_cast %253 : vector<17x128xf32> to vector<1x17x128xf32>
    tpu.vector_store %arg18[%c0_164, %c0_165, %c0_166], %256 {strides = array<i32>} : memref<1x17x128xf32, #tpu.memory_space<vmem>>, vector<1x17x128xf32>,
    return
  }
  func.func @transform_0(%arg0: i32) -> (i32, i32, i32) {
    %c0_i32 = arith.constant 0 : i32
    %c0_i32_0 = arith.constant 0 : i32
    %c0_i32_1 = arith.constant 0 : i32
    return %arg0, %c0_i32, %c0_i32_0 : i32, i32, i32
  }
  func.func @transform_1(%arg0: i32) -> (i32, i32, i32) {
    %c0_i32 = arith.constant 0 : i32
    %c0_i32_0 = arith.constant 0 : i32
    %c0_i32_1 = arith.constant 0 : i32
    %c0_i32_2 = arith.constant 0 : i32
    return %c0_i32, %c0_i32_0, %c0_i32_1 : i32, i32, i32
  }
  func.func @transform_2(%arg0: i32) -> (i32, i32, i32) {
    %c0_i32 = arith.constant 0 : i32
    %c0_i32_0 = arith.constant 0 : i32
    %c0_i32_1 = arith.constant 0 : i32
    %c0_i32_2 = arith.constant 0 : i32
    return %c0_i32, %c0_i32_0, %c0_i32_1 : i32, i32, i32
  }
  func.func @transform_3(%arg0: i32) -> (i32, i32, i32) {
    %c0_i32 = arith.constant 0 : i32
    %c0_i32_0 = arith.constant 0 : i32
    %c0_i32_1 = arith.constant 0 : i32
    %c0_i32_2 = arith.constant 0 : i32
    return %c0_i32, %c0_i32_0, %c0_i32_1 : i32, i32, i32
  }
  func.func @transform_4(%arg0: i32) -> (i32, i32, i32) {
    %c0_i32 = arith.constant 0 : i32
    %c0_i32_0 = arith.constant 0 : i32
    %c0_i32_1 = arith.constant 0 : i32
    %c0_i32_2 = arith.constant 0 : i32
    return %c0_i32, %c0_i32_0, %c0_i32_1 : i32, i32, i32
  }
  func.func @transform_5(%arg0: i32) -> (i32, i32, i32) {
    %c0_i32 = arith.constant 0 : i32
    %c0_i32_0 = arith.constant 0 : i32
    %c0_i32_1 = arith.constant 0 : i32
    %c0_i32_2 = arith.constant 0 : i32
    return %c0_i32, %c0_i32_0, %c0_i32_1 : i32, i32, i32
  }
  func.func @transform_6(%arg0: i32) -> (i32, i32, i32) {
    %c0_i32 = arith.constant 0 : i32
    %c0_i32_0 = arith.constant 0 : i32
    %c0_i32_1 = arith.constant 0 : i32
    %c0_i32_2 = arith.constant 0 : i32
    return %c0_i32, %c0_i32_0, %c0_i32_1 : i32, i32, i32
  }
  func.func @transform_7(%arg0: i32) -> (i32, i32, i32) {
    %c0_i32 = arith.constant 0 : i32
    %c0_i32_0 = arith.constant 0 : i32
    %c0_i32_1 = arith.constant 0 : i32
    %c0_i32_2 = arith.constant 0 : i32
    return %c0_i32, %c0_i32_0, %c0_i32_1 : i32, i32, i32
  }
  func.func @transform_8(%arg0: i32) -> (i32, i32) {
    %c0_i32 = arith.constant 0 : i32
    %c0_i32_0 = arith.constant 0 : i32
    %c0_i32_1 = arith.constant 0 : i32
    return %c0_i32, %c0_i32_0 : i32, i32
  }
  func.func @transform_9(%arg0: i32) -> (i32, i32) {
    %c0_i32 = arith.constant 0 : i32
    %c0_i32_0 = arith.constant 0 : i32
    %c0_i32_1 = arith.constant 0 : i32
    return %c0_i32, %c0_i32_0 : i32, i32
  }
  func.func @transform_10(%arg0: i32) -> (i32, i32) {
    %c0_i32 = arith.constant 0 : i32
    %c0_i32_0 = arith.constant 0 : i32
    %c0_i32_1 = arith.constant 0 : i32
    return %c0_i32, %c0_i32_0 : i32, i32
  }
  func.func @transform_11(%arg0: i32) -> (i32, i32) {
    %c0_i32 = arith.constant 0 : i32
    %c0_i32_0 = arith.constant 0 : i32
    %c0_i32_1 = arith.constant 0 : i32
    return %c0_i32, %c0_i32_0 : i32, i32
  }
  func.func @transform_12(%arg0: i32) -> (i32, i32) {
    %c0_i32 = arith.constant 0 : i32
    %c0_i32_0 = arith.constant 0 : i32
    %c0_i32_1 = arith.constant 0 : i32
    return %c0_i32, %c0_i32_0 : i32, i32
  }
  func.func @transform_13(%arg0: i32) -> (i32, i32) {
    %c0_i32 = arith.constant 0 : i32
    %c0_i32_0 = arith.constant 0 : i32
    %c0_i32_1 = arith.constant 0 : i32
    return %c0_i32, %c0_i32_0 : i32, i32
  }
  func.func @transform_14(%arg0: i32) -> (i32, i32) {
    %c0_i32 = arith.constant 0 : i32
    %c0_i32_0 = arith.constant 0 : i32
    %c0_i32_1 = arith.constant 0 : i32
    return %c0_i32, %c0_i32_0 : i32, i32
  }
  func.func @transform_15(%arg0: i32) -> (i32, i32) {
    %c0_i32 = arith.constant 0 : i32
    %c0_i32_0 = arith.constant 0 : i32
    %c0_i32_1 = arith.constant 0 : i32
    return %c0_i32, %c0_i32_0 : i32, i32
  }
  func.func @transform_16(%arg0: i32) -> (i32, i32) {
    %c0_i32 = arith.constant 0 : i32
    %c0_i32_0 = arith.constant 0 : i32
    %c0_i32_1 = arith.constant 0 : i32
    return %c0_i32, %c0_i32_0 : i32, i32
  }
  func.func @transform_17(%arg0: i32) -> (i32, i32, i32) {
    %c0_i32 = arith.constant 0 : i32
    %c0_i32_0 = arith.constant 0 : i32
    %c0_i32_1 = arith.constant 0 : i32
    return %arg0, %c0_i32, %c0_i32_0 : i32, i32, i32
  }
}

module attributes {stable_mosaic.version = 11 : i64} {
  func.func @_head_kernel(%arg0: i32, %arg1: memref<40x128xf32, #tpu.memory_space<vmem>>, %arg2: memref<128x128xf32, #tpu.memory_space<vmem>>, %arg3: memref<1x128xf32, #tpu.memory_space<vmem>>, %arg4: memref<1x128xf32, #tpu.memory_space<vmem>>, %arg5: memref<1x128xf32, #tpu.memory_space<vmem>>, %arg6: memref<128x128xf32, #tpu.memory_space<vmem>>, %arg7: memref<1x128xf32, #tpu.memory_space<vmem>>, %arg8: memref<40x128xf32, #tpu.memory_space<vmem>>) attributes {dimension_semantics = [#tpu.dimension_semantics<arbitrary>], iteration_bounds = array<i64: 1>, scalar_prefetch = 0 : i64, scratch_operands = 0 : i64, tpu.core_type = #tpu.core_type<tc>, window_params = [{pipeline_mode = #tpu.pipeline_mode<synchronous>, transform_indices = @transform_0, window_bounds = array<i64: 40, 128>}, {pipeline_mode = #tpu.pipeline_mode<synchronous>, transform_indices = @transform_1, window_bounds = array<i64: 128, 128>}, {pipeline_mode = #tpu.pipeline_mode<synchronous>, transform_indices = @transform_2, window_bounds = array<i64: 1, 128>}, {pipeline_mode = #tpu.pipeline_mode<synchronous>, transform_indices = @transform_3, window_bounds = array<i64: 1, 128>}, {pipeline_mode = #tpu.pipeline_mode<synchronous>, transform_indices = @transform_4, window_bounds = array<i64: 1, 128>}, {pipeline_mode = #tpu.pipeline_mode<synchronous>, transform_indices = @transform_5, window_bounds = array<i64: 128, 128>}, {pipeline_mode = #tpu.pipeline_mode<synchronous>, transform_indices = @transform_6, window_bounds = array<i64: 1, 128>}, {pipeline_mode = #tpu.pipeline_mode<synchronous>, transform_indices = @transform_7, window_bounds = array<i64: 40, 128>}]} {
    %c0 = arith.constant 0 : index
    %c0_0 = arith.constant 0 : index
    %0 = vector.load %arg1[%c0, %c0_0] : memref<40x128xf32, #tpu.memory_space<vmem>>, vector<40x128xf32>
    %c0_1 = arith.constant 0 : index
    %c0_2 = arith.constant 0 : index
    %1 = vector.load %arg2[%c0_1, %c0_2] : memref<128x128xf32, #tpu.memory_space<vmem>>, vector<128x128xf32>
    %cst = arith.constant dense<0.000000e+00> : vector<40x128xf32>
    %2 = tpu.matmul %0, %1, %cst {dimension_numbers = #tpu.dot_dimension_numbers<[1], [0], [0], [1], [0, 0, 1, 1], [], []>} : vector<40x128xf32>, vector<128x128xf32>, vector<40x128xf32> -> vector<40x128xf32>
    %c0_3 = arith.constant 0 : index
    %c0_4 = arith.constant 0 : index
    %3 = vector.load %arg3[%c0_3, %c0_4] : memref<1x128xf32, #tpu.memory_space<vmem>>, vector<1x128xf32>
    %4 = vector.broadcast %3 : vector<1x128xf32> to vector<40x128xf32>
    %5 = arith.addf %2, %4 : vector<40x128xf32>
    %cst_5 = arith.constant 5.000000e-01 : f32
    %6 = vector.broadcast %cst_5 : f32 to vector<40x128xf32>
    %7 = arith.mulf %6, %5 : vector<40x128xf32>
    %cst_6 = arith.constant 0.707106769 : f32
    %8 = vector.broadcast %cst_6 : f32 to vector<40x128xf32>
    %9 = arith.mulf %5, %8 : vector<40x128xf32>
    %10 = math.absf %9 : vector<40x128xf32>
    %cst_7 = arith.constant 0.327591091 : f32
    %11 = vector.broadcast %cst_7 : f32 to vector<40x128xf32>
    %12 = arith.mulf %11, %10 : vector<40x128xf32>
    %cst_8 = arith.constant 1.000000e+00 : f32
    %13 = vector.broadcast %cst_8 : f32 to vector<40x128xf32>
    %14 = arith.addf %13, %12 : vector<40x128xf32>
    %cst_9 = arith.constant 1.000000e+00 : f32
    %15 = vector.broadcast %cst_9 : f32 to vector<40x128xf32>
    %16 = arith.divf %15, %14 : vector<40x128xf32>
    %cst_10 = arith.constant 1.06140542 : f32
    %17 = vector.broadcast %cst_10 : f32 to vector<40x128xf32>
    %18 = arith.mulf %17, %16 : vector<40x128xf32>
    %cst_11 = arith.constant -1.45315206 : f32
    %19 = vector.broadcast %cst_11 : f32 to vector<40x128xf32>
    %20 = arith.addf %18, %19 : vector<40x128xf32>
    %21 = arith.mulf %20, %16 : vector<40x128xf32>
    %cst_12 = arith.constant 1.42141378 : f32
    %22 = vector.broadcast %cst_12 : f32 to vector<40x128xf32>
    %23 = arith.addf %21, %22 : vector<40x128xf32>
    %24 = arith.mulf %23, %16 : vector<40x128xf32>
    %cst_13 = arith.constant -0.284496725 : f32
    %25 = vector.broadcast %cst_13 : f32 to vector<40x128xf32>
    %26 = arith.addf %24, %25 : vector<40x128xf32>
    %27 = arith.mulf %26, %16 : vector<40x128xf32>
    %cst_14 = arith.constant 0.254829586 : f32
    %28 = vector.broadcast %cst_14 : f32 to vector<40x128xf32>
    %29 = arith.addf %27, %28 : vector<40x128xf32>
    %30 = arith.mulf %29, %16 : vector<40x128xf32>
    %cst_15 = arith.constant 0.000000e+00 : f32
    %31 = vector.broadcast %cst_15 : f32 to vector<40x128xf32>
    %32 = arith.subf %31, %10 : vector<40x128xf32>
    %33 = arith.mulf %32, %10 : vector<40x128xf32>
    %34 = math.exp %33 : vector<40x128xf32>
    %35 = arith.mulf %30, %34 : vector<40x128xf32>
    %cst_16 = arith.constant 1.000000e+00 : f32
    %36 = vector.broadcast %cst_16 : f32 to vector<40x128xf32>
    %37 = arith.subf %36, %35 : vector<40x128xf32>
    %cst_17 = arith.constant 0.000000e+00 : f32
    %38 = vector.broadcast %cst_17 : f32 to vector<40x128xf32>
    %39 = arith.cmpf oge, %9, %38 : vector<40x128xf32>
    %cst_18 = arith.constant 0.000000e+00 : f32
    %40 = vector.broadcast %cst_18 : f32 to vector<40x128xf32>
    %41 = arith.subf %40, %37 : vector<40x128xf32>
    %42 = arith.select %39, %37, %41 : vector<40x128xi1>, vector<40x128xf32>
    %cst_19 = arith.constant 1.000000e+00 : f32
    %43 = vector.broadcast %cst_19 : f32 to vector<40x128xf32>
    %44 = arith.addf %43, %42 : vector<40x128xf32>
    %45 = arith.mulf %7, %44 : vector<40x128xf32>
    %c0_20 = arith.constant 0 : index
    %c0_21 = arith.constant 0 : index
    %46 = vector.load %arg4[%c0_20, %c0_21] : memref<1x128xf32, #tpu.memory_space<vmem>>, vector<1x128xf32>
    %c0_22 = arith.constant 0 : index
    %c0_23 = arith.constant 0 : index
    %47 = vector.load %arg5[%c0_22, %c0_23] : memref<1x128xf32, #tpu.memory_space<vmem>>, vector<1x128xf32>
    %cst_24 = arith.constant dense<0.000000e+00> : vector<40xf32>
    %48 = vector.multi_reduction <add>, %45, %cst_24 [1] : vector<40x128xf32> to vector<40xf32>
    %49 = vector.shape_cast %48 : vector<40xf32> to vector<40x1xf32>
    %cst_25 = arith.constant 1.280000e+02 : f32
    %50 = vector.broadcast %cst_25 : f32 to vector<40x1xf32>
    %51 = arith.divf %49, %50 : vector<40x1xf32>
    %52 = vector.broadcast %51 : vector<40x1xf32> to vector<40x128xf32>
    %53 = arith.subf %45, %52 : vector<40x128xf32>
    %54 = arith.mulf %53, %53 : vector<40x128xf32>
    %cst_26 = arith.constant dense<0.000000e+00> : vector<40xf32>
    %55 = vector.multi_reduction <add>, %54, %cst_26 [1] : vector<40x128xf32> to vector<40xf32>
    %56 = vector.shape_cast %55 : vector<40xf32> to vector<40x1xf32>
    %cst_27 = arith.constant 1.280000e+02 : f32
    %57 = vector.broadcast %cst_27 : f32 to vector<40x1xf32>
    %58 = arith.divf %56, %57 : vector<40x1xf32>
    %cst_28 = arith.constant 9.99999996E-13 : f32
    %59 = vector.broadcast %cst_28 : f32 to vector<40x1xf32>
    %60 = arith.addf %58, %59 : vector<40x1xf32>
    %61 = math.rsqrt %60 : vector<40x1xf32>
    %62 = vector.broadcast %61 : vector<40x1xf32> to vector<40x128xf32>
    %63 = arith.mulf %53, %62 : vector<40x128xf32>
    %64 = vector.broadcast %46 : vector<1x128xf32> to vector<40x128xf32>
    %65 = arith.mulf %63, %64 : vector<40x128xf32>
    %66 = vector.broadcast %47 : vector<1x128xf32> to vector<40x128xf32>
    %67 = arith.addf %65, %66 : vector<40x128xf32>
    %c0_29 = arith.constant 0 : index
    %c0_30 = arith.constant 0 : index
    %68 = vector.load %arg6[%c0_29, %c0_30] : memref<128x128xf32, #tpu.memory_space<vmem>>, vector<128x128xf32>
    %cst_31 = arith.constant dense<0.000000e+00> : vector<40x128xf32>
    %69 = tpu.matmul %67, %68, %cst_31 {dimension_numbers = #tpu.dot_dimension_numbers<[1], [1], [0], [0], [0, 0, 1, 0], [], []>} : vector<40x128xf32>, vector<128x128xf32>, vector<40x128xf32> -> vector<40x128xf32>
    %c0_32 = arith.constant 0 : index
    %c0_33 = arith.constant 0 : index
    %70 = vector.load %arg7[%c0_32, %c0_33] : memref<1x128xf32, #tpu.memory_space<vmem>>, vector<1x128xf32>
    %71 = vector.broadcast %70 : vector<1x128xf32> to vector<40x128xf32>
    %72 = arith.addf %69, %71 : vector<40x128xf32>
    %c0_34 = arith.constant 0 : index
    %c0_35 = arith.constant 0 : index
    %73 = vector.load %arg8[%c0_34, %c0_35] : memref<40x128xf32, #tpu.memory_space<vmem>>, vector<40x128xf32>
    tpu.vector_store %arg8[%c0_34, %c0_35], %72 {strides = array<i32>} : memref<40x128xf32, #tpu.memory_space<vmem>>, vector<40x128xf32>,
    return
  }
  func.func @transform_0(%arg0: i32) -> (i32, i32) {
    %c0_i32 = arith.constant 0 : i32
    %c0_i32_0 = arith.constant 0 : i32
    %c0_i32_1 = arith.constant 0 : i32
    return %c0_i32, %c0_i32_0 : i32, i32
  }
  func.func @transform_1(%arg0: i32) -> (i32, i32) {
    %c0_i32 = arith.constant 0 : i32
    %c0_i32_0 = arith.constant 0 : i32
    %c0_i32_1 = arith.constant 0 : i32
    return %c0_i32, %c0_i32_0 : i32, i32
  }
  func.func @transform_2(%arg0: i32) -> (i32, i32) {
    %c0_i32 = arith.constant 0 : i32
    %c0_i32_0 = arith.constant 0 : i32
    %c0_i32_1 = arith.constant 0 : i32
    return %c0_i32, %c0_i32_0 : i32, i32
  }
  func.func @transform_3(%arg0: i32) -> (i32, i32) {
    %c0_i32 = arith.constant 0 : i32
    %c0_i32_0 = arith.constant 0 : i32
    %c0_i32_1 = arith.constant 0 : i32
    return %c0_i32, %c0_i32_0 : i32, i32
  }
  func.func @transform_4(%arg0: i32) -> (i32, i32) {
    %c0_i32 = arith.constant 0 : i32
    %c0_i32_0 = arith.constant 0 : i32
    %c0_i32_1 = arith.constant 0 : i32
    return %c0_i32, %c0_i32_0 : i32, i32
  }
  func.func @transform_5(%arg0: i32) -> (i32, i32) {
    %c0_i32 = arith.constant 0 : i32
    %c0_i32_0 = arith.constant 0 : i32
    %c0_i32_1 = arith.constant 0 : i32
    return %c0_i32, %c0_i32_0 : i32, i32
  }
  func.func @transform_6(%arg0: i32) -> (i32, i32) {
    %c0_i32 = arith.constant 0 : i32
    %c0_i32_0 = arith.constant 0 : i32
    %c0_i32_1 = arith.constant 0 : i32
    return %c0_i32, %c0_i32_0 : i32, i32
  }
  func.func @transform_7(%arg0: i32) -> (i32, i32) {
    %c0_i32 = arith.constant 0 : i32
    %c0_i32_0 = arith.constant 0 : i32
    %c0_i32_1 = arith.constant 0 : i32
    return %c0_i32, %c0_i32_0 : i32, i32
  }
}

</mosaic_0001>

<llo_original>
// kernel: maskgit_image2rgb_forward.4
$region0: #{maskgit_image2rgb_forward.4}
  #allocation0 [shape = 'u32[]', space=smem, size = 0x4, offset = 0x4, fixed_abs, tag = 'smem constant byte address 0x4 - core index']
  #allocation1 [shape = 'u32[144,128]{1,0:T(1,128)}', space=vmem, size = 0x12000, scoped, tag = 'internal scratch']
  #allocation2 [shape = 's32[1]{0}', space=sflag, size = 0x4, scoped, tag = 'scoped memory for maskgit_image2rgb_forward.4']
  #allocation3 [shape = 'u8[512]{0}', space=smem, size = 0x200, scoped, tag = 'prefetched SMEM operand 0']
  %s0 = inlined_call_operand.vmem [shape: s32[32], index: 0, kind: input, shape index: {}]
  %s1 = inlined_call_operand.vmem [shape: f32[2,1024], index: 1, kind: input, shape index: {}]
  %s2 = inlined_call_operand.hbm [shape: f32[1024,128], index: 2, kind: input, shape index: {}]
  %s3 = inlined_call_operand.vmem [shape: f32[1,128], index: 3, kind: input, shape index: {}]
  %s4 = inlined_call_operand.vmem [shape: f32[1033,128], index: 4, kind: input, shape index: {}]
  %s5 = inlined_call_operand.vmem [shape: f32[17,128], index: 5, kind: input, shape index: {}]
  %s6 = inlined_call_operand.vmem [shape: f32[1,128], index: 6, kind: input, shape index: {}]
  %s7 = inlined_call_operand.vmem [shape: f32[1,128], index: 7, kind: input, shape index: {}]
  %s8 = inlined_call_operand.vmem [shape: f32[2,17,128], index: 8, kind: output, shape index: {}]
  %s9 = sld [smem:[#allocation0]]
  $region42: #{maskgit_image2rgb_forward.4} parent=0
    _
  %s11 = ssub.s32 1, %s9
  %s12 = scalar_select 0, %s11, %s9
  %s13 = sshll.u32 %s0, 4
  %s14 = int_to_ptr.vmem [resolvable:$true] %s13
  %16 = dma.vmem_to_smem %s14, 16, [#allocation3], [#allocation2]
  %17 = dma.done [#allocation2], 16
  %18 = sfence
  $region1: #{maskgit_image2rgb_forward.4} parent=0
    #allocation4 [shape = 'u8[524288]{0}', space=vmem, size = 0x80000, scoped, tag = 'input window, operand 2, single buffered']
    #allocation5 [shape = 's32[1]{0}', space=sflag, size = 0x4, scoped, tag = 'scoped memory for maskgit_image2rgb_forward.4']
    %19 = vsyncpa [#allocation5], 0
    // Predicated region
    $region2: #{maskgit_image2rgb_forward.4} parent=1 // pred_check
      _
    $region3: #{maskgit_image2rgb_forward.4} parent=1 // pred_check_branch
      %21 = sbr.rel (0) target = $region5
    $region4: #{maskgit_image2rgb_forward.4} parent=1 // pred_region
      _
    $region5: #{maskgit_image2rgb_forward.4} parent=1 // pred_fallthru
      _
    // Predicated region
    $region6: #{maskgit_image2rgb_forward.4} parent=1 // pred_check
      _
    $region7: #{maskgit_image2rgb_forward.4} parent=1 // pred_check_branch
      %23 = sbr.rel (0) target = $region9
    $region8: #{maskgit_image2rgb_forward.4} parent=1 // pred_region
      %s25 = ssub.s32 16384, 16384
      %26 = vsyncadd [#allocation5], %s25
      %s27 = sshll.u32 [#allocation4], 4
      %s28 = int_to_ptr.vmem [resolvable:$true] %s27
      %33 = dma.hbm_to_vmem [thread:$0]  %s2, 16384, %s28, [#allocation5], 128, 128, 8
    $region9: #{maskgit_image2rgb_forward.4} parent=1 // pred_fallthru
      _
    // Predicated region
    $region10: #{maskgit_image2rgb_forward.4} parent=1 // pred_check
      _
    $region11: #{maskgit_image2rgb_forward.4} parent=1 // pred_check_branch
      %35 = sbr.rel (0) target = $region13
    $region12: #{maskgit_image2rgb_forward.4} parent=1 // pred_region
      _
    $region13: #{maskgit_image2rgb_forward.4} parent=1 // pred_fallthru
      _
    // Predicated region
    $region14: #{maskgit_image2rgb_forward.4} parent=1 // pred_check
      _
    $region15: #{maskgit_image2rgb_forward.4} parent=1 // pred_check_branch
      %37 = sbr.rel (0) target = $region17
    $region16: #{maskgit_image2rgb_forward.4} parent=1 // pred_region
      _
    $region17: #{maskgit_image2rgb_forward.4} parent=1 // pred_fallthru
      _
    // Predicated region
    $region18: #{maskgit_image2rgb_forward.4} parent=1 // pred_check
      _
    $region19: #{maskgit_image2rgb_forward.4} parent=1 // pred_check_branch
      %39 = sbr.rel (0) target = $region21
    $region20: #{maskgit_image2rgb_forward.4} parent=1 // pred_region
      _
    $region21: #{maskgit_image2rgb_forward.4} parent=1 // pred_fallthru
      _
    // Predicated region
    $region22: #{maskgit_image2rgb_forward.4} parent=1 // pred_check
      _
    $region23: #{maskgit_image2rgb_forward.4} parent=1 // pred_check_branch
      %41 = sbr.rel (0) target = $region25
    $region24: #{maskgit_image2rgb_forward.4} parent=1 // pred_region
      _
    $region25: #{maskgit_image2rgb_forward.4} parent=1 // pred_fallthru
      _
    // Predicated region
    $region26: #{maskgit_image2rgb_forward.4} parent=1 // pred_check
      _
    $region27: #{maskgit_image2rgb_forward.4} parent=1 // pred_check_branch
      %43 = sbr.rel (0) target = $region29
    $region28: #{maskgit_image2rgb_forward.4} parent=1 // pred_region
      _
    $region29: #{maskgit_image2rgb_forward.4} parent=1 // pred_fallthru
      _
    // Predicated region
    $region30: #{maskgit_image2rgb_forward.4} parent=1 // pred_check
      _
    $region31: #{maskgit_image2rgb_forward.4} parent=1 // pred_check_branch
      %45 = sbr.rel (0) target = $region33
    $region32: #{maskgit_image2rgb_forward.4} parent=1 // pred_region
      %46 = dma.done [#allocation5], 16384
    $region33: #{maskgit_image2rgb_forward.4} parent=1 // pred_fallthru
      _
    %v47 = vld [vmem:[%s1] sm:$0xff]
    %v48 = vld [vmem:[%s1 + $0x8] sm:$0xff]
    %v49 = vld [vmem:[#allocation4] sm:$0xff]
    %v50 = vld [vmem:[#allocation4 + $0x8] sm:$0xff]
    %v51 = vld [vmem:[#allocation4 + $0x10] sm:$0xff]
    %v52 = vld [vmem:[#allocation4 + $0x18] sm:$0xff]
    %v53 = vld [vmem:[#allocation4 + $0x20] sm:$0xff]
    %v54 = vld [vmem:[#allocation4 + $0x28] sm:$0xff]
    %v55 = vld [vmem:[#allocation4 + $0x30] sm:$0xff]
    %v56 = vld [vmem:[#allocation4 + $0x38] sm:$0xff]
    %v57 = vld [vmem:[#allocation4 + $0x40] sm:$0xff]
    %v58 = vld [vmem:[#allocation4 + $0x48] sm:$0xff]
    %v59 = vld [vmem:[#allocation4 + $0x50] sm:$0xff]
    %v60 = vld [vmem:[#allocation4 + $0x58] sm:$0xff]
    %v61 = vld [vmem:[#allocation4 + $0x60] sm:$0xff]
    %v62 = vld [vmem:[#allocation4 + $0x68] sm:$0xff]
    %v63 = vld [vmem:[#allocation4 + $0x70] sm:$0xff]
    %v64 = vld [vmem:[#allocation4 + $0x78] sm:$0xff]
    %v65 = vld [vmem:[#allocation4 + $0x80] sm:$0xff]
    %v66 = vld [vmem:[#allocation4 + $0x88] sm:$0xff]
    %v67 = vld [vmem:[#allocation4 + $0x90] sm:$0xff]
    %v68 = vld [vmem:[#allocation4 + $0x98] sm:$0xff]
    %v69 = vld [vmem:[#allocation4 + $0xa0] sm:$0xff]
    %v70 = vld [vmem:[#allocation4 + $0xa8] sm:$0xff]
    %v71 = vld [vmem:[#allocation4 + $0xb0] sm:$0xff]
    %v72 = vld [vmem:[#allocation4 + $0xb8] sm:$0xff]
    %v73 = vld [vmem:[#allocation4 + $0xc0] sm:$0xff]
    %v74 = vld [vmem:[#allocation4 + $0xc8] sm:$0xff]
    %v75 = vld [vmem:[#allocation4 + $0xd0] sm:$0xff]
    %v76 = vld [vmem:[#allocation4 + $0xd8] sm:$0xff]
    %v77 = vld [vmem:[#allocation4 + $0xe0] sm:$0xff]
    %v78 = vld [vmem:[#allocation4 + $0xe8] sm:$0xff]
    %v79 = vld [vmem:[#allocation4 + $0xf0] sm:$0xff]
    %v80 = vld [vmem:[#allocation4 + $0xf8] sm:$0xff]
    %v81 = vld [vmem:[#allocation4 + $0x100] sm:$0xff]
    %v82 = vld [vmem:[#allocation4 + $0x108] sm:$0xff]
    %v83 = vld [vmem:[#allocation4 + $0x110] sm:$0xff]
    %v84 = vld [vmem:[#allocation4 + $0x118] sm:$0xff]
    %v85 = vld [vmem:[#allocation4 + $0x120] sm:$0xff]
    %v86 = vld [vmem:[#allocation4 + $0x128] sm:$0xff]
    %v87 = vld [vmem:[#allocation4 + $0x130] sm:$0xff]
    %v88 = vld [vmem:[#allocation4 + $0x138] sm:$0xff]
    %v89 = vld [vmem:[#allocation4 + $0x140] sm:$0xff]
    %v90 = vld [vmem:[#allocation4 + $0x148] sm:$0xff]
    %v91 = vld [vmem:[#allocation4 + $0x150] sm:$0xff]
    %v92 = vld [vmem:[#allocation4 + $0x158] sm:$0xff]
    %v93 = vld [vmem:[#allocation4 + $0x160] sm:$0xff]
    %v94 = vld [vmem:[#allocation4 + $0x168] sm:$0xff]
    %v95 = vld [vmem:[#allocation4 + $0x170] sm:$0xff]
    %v96 = vld [vmem:[#allocation4 + $0x178] sm:$0xff]
    %v97 = vld [vmem:[#allocation4 + $0x180] sm:$0xff]
    %v98 = vld [vmem:[#allocation4 + $0x188] sm:$0xff]
    %v99 = vld [vmem:[#allocation4 + $0x190] sm:$0xff]
    %v100 = vld [vmem:[#allocation4 + $0x198] sm:$0xff]
    %v101 = vld [vmem:[#allocation4 + $0x1a0] sm:$0xff]
    %v102 = vld [vmem:[#allocation4 + $0x1a8] sm:$0xff]
    %v103 = vld [vmem:[#allocation4 + $0x1b0] sm:$0xff]
    %v104 = vld [vmem:[#allocation4 + $0x1b8] sm:$0xff]
    %v105 = vld [vmem:[#allocation4 + $0x1c0] sm:$0xff]
    %v106 = vld [vmem:[#allocation4 + $0x1c8] sm:$0xff]
    %v107 = vld [vmem:[#allocation4 + $0x1d0] sm:$0xff]
    %v108 = vld [vmem:[#allocation4 + $0x1d8] sm:$0xff]
    %v109 = vld [vmem:[#allocation4 + $0x1e0] sm:$0xff]
    %v110 = vld [vmem:[#allocation4 + $0x1e8] sm:$0xff]
    %v111 = vld [vmem:[#allocation4 + $0x1f0] sm:$0xff]
    %v112 = vld [vmem:[#allocation4 + $0x1f8] sm:$0xff]
    %v113 = vld [vmem:[#allocation4 + $0x200] sm:$0xff]
    %v114 = vld [vmem:[#allocation4 + $0x208] sm:$0xff]
    %v115 = vld [vmem:[#allocation4 + $0x210] sm:$0xff]
    %v116 = vld [vmem:[#allocation4 + $0x218] sm:$0xff]
    %v117 = vld [vmem:[#allocation4 + $0x220] sm:$0xff]
    %v118 = vld [vmem:[#allocation4 + $0x228] sm:$0xff]
    %v119 = vld [vmem:[#allocation4 + $0x230] sm:$0xff]
    %v120 = vld [vmem:[#allocation4 + $0x238] sm:$0xff]
    %v121 = vld [vmem:[#allocation4 + $0x240] sm:$0xff]
    %v122 = vld [vmem:[#allocation4 + $0x248] sm:$0xff]
    %v123 = vld [vmem:[#allocation4 + $0x250] sm:$0xff]
    %v124 = vld [vmem:[#allocation4 + $0x258] sm:$0xff]
    %v125 = vld [vmem:[#allocation4 + $0x260] sm:$0xff]
    %v126 = vld [vmem:[#allocation4 + $0x268] sm:$0xff]
    %v127 = vld [vmem:[#allocation4 + $0x270] sm:$0xff]
    %v128 = vld [vmem:[#allocation4 + $0x278] sm:$0xff]
    %v129 = vld [vmem:[#allocation4 + $0x280] sm:$0xff]
    %v130 = vld [vmem:[#allocation4 + $0x288] sm:$0xff]
    %v131 = vld [vmem:[#allocation4 + $0x290] sm:$0xff]
    %v132 = vld [vmem:[#allocation4 + $0x298] sm:$0xff]
    %v133 = vld [vmem:[#allocation4 + $0x2a0] sm:$0xff]
    %v134 = vld [vmem:[#allocation4 + $0x2a8] sm:$0xff]
    %v135 = vld [vmem:[#allocation4 + $0x2b0] sm:$0xff]
    %v136 = vld [vmem:[#allocation4 + $0x2b8] sm:$0xff]
    %v137 = vld [vmem:[#allocation4 + $0x2c0] sm:$0xff]
    %v138 = vld [vmem:[#allocation4 + $0x2c8] sm:$0xff]
    %v139 = vld [vmem:[#allocation4 + $0x2d0] sm:$0xff]
    %v140 = vld [vmem:[#allocation4 + $0x2d8] sm:$0xff]
    %v141 = vld [vmem:[#allocation4 + $0x2e0] sm:$0xff]
    %v142 = vld [vmem:[#allocation4 + $0x2e8] sm:$0xff]
    %v143 = vld [vmem:[#allocation4 + $0x2f0] sm:$0xff]
    %v144 = vld [vmem:[#allocation4 + $0x2f8] sm:$0xff]
    %v145 = vld [vmem:[#allocation4 + $0x300] sm:$0xff]
    %v146 = vld [vmem:[#allocation4 + $0x308] sm:$0xff]
    %v147 = vld [vmem:[#allocation4 + $0x310] sm:$0xff]
    %v148 = vld [vmem:[#allocation4 + $0x318] sm:$0xff]
    %v149 = vld [vmem:[#allocation4 + $0x320] sm:$0xff]
    %v150 = vld [vmem:[#allocation4 + $0x328] sm:$0xff]
    %v151 = vld [vmem:[#allocation4 + $0x330] sm:$0xff]
    %v152 = vld [vmem:[#allocation4 + $0x338] sm:$0xff]
    %v153 = vld [vmem:[#allocation4 + $0x340] sm:$0xff]
    %v154 = vld [vmem:[#allocation4 + $0x348] sm:$0xff]
    %v155 = vld [vmem:[#allocation4 + $0x350] sm:$0xff]
    %v156 = vld [vmem:[#allocation4 + $0x358] sm:$0xff]
    %v157 = vld [vmem:[#allocation4 + $0x360] sm:$0xff]
    %v158 = vld [vmem:[#allocation4 + $0x368] sm:$0xff]
    %v159 = vld [vmem:[#allocation4 + $0x370] sm:$0xff]
    %v160 = vld [vmem:[#allocation4 + $0x378] sm:$0xff]
    %v161 = vld [vmem:[#allocation4 + $0x380] sm:$0xff]
    %v162 = vld [vmem:[#allocation4 + $0x388] sm:$0xff]
    %v163 = vld [vmem:[#allocation4 + $0x390] sm:$0xff]
    %v164 = vld [vmem:[#allocation4 + $0x398] sm:$0xff]
    %v165 = vld [vmem:[#allocation4 + $0x3a0] sm:$0xff]
    %v166 = vld [vmem:[#allocation4 + $0x3a8] sm:$0xff]
    %v167 = vld [vmem:[#allocation4 + $0x3b0] sm:$0xff]
    %v168 = vld [vmem:[#allocation4 + $0x3b8] sm:$0xff]
    %v169 = vld [vmem:[#allocation4 + $0x3c0] sm:$0xff]
    %v170 = vld [vmem:[#allocation4 + $0x3c8] sm:$0xff]
    %v171 = vld [vmem:[#allocation4 + $0x3d0] sm:$0xff]
    %v172 = vld [vmem:[#allocation4 + $0x3d8] sm:$0xff]
    %v173 = vld [vmem:[#allocation4 + $0x3e0] sm:$0xff]
    %v174 = vld [vmem:[#allocation4 + $0x3e8] sm:$0xff]
    %v175 = vld [vmem:[#allocation4 + $0x3f0] sm:$0xff]
    %v176 = vld [vmem:[#allocation4 + $0x3f8] sm:$0xff]
    %v177 = vld [vmem:[%s3] sm:$0x1]
    %v179 = vlaneseq
    %v180 = vshrl.u32 %v179, 7
    %v181 = vsub.s32 0, %v180
    %v182 = vrot.slane %v177, %v181
    %v186 = vcombine.high %v47, %v47
    %v188 = vunpack.c.l.s4 1983009808
    %v189 = vunpack.c.0.s8 %v188
    %v190 = vlaneseq
    %v191 = vshrl.u32 %v190, 7
    %v192 = vsub.s32 %v189, %v191
    %v193 = vrot.slane %v47, %v192
    %v195 = vunpack.c.l.s4 1983009808
    %v196 = vunpack.c.0.s8 %v195
    %v197 = vlaneseq
    %v198 = vshrl.u32 %v197, 7
    %v199 = vsub.s32 %v196, %v198
    %v200 = vrot.slane %v186, %v199
    %v201 = vcombine.high %v193, %v193
    %v202 = vcombine.high %v200, %v200
    %v203 = vcombine.high %v48, %v48
    %v205 = vunpack.c.l.s4 1983009808
    %v206 = vunpack.c.0.s8 %v205
    %v207 = vlaneseq
    %v208 = vshrl.u32 %v207, 7
    %v209 = vsub.s32 %v206, %v208
    %v210 = vrot.slane %v48, %v209
    %v212 = vunpack.c.l.s4 1983009808
    %v213 = vunpack.c.0.s8 %v212
    %v214 = vlaneseq
    %v215 = vshrl.u32 %v214, 7
    %v216 = vsub.s32 %v213, %v215
    %v217 = vrot.slane %v203, %v216
    %v218 = vcombine.high %v210, %v210
    %v219 = vcombine.high %v217, %v217
    %228 = vmatprep.subr.mxu0 0.0
    %229 = vmatpush1.msra.mxu0 %v49
    %230 = vmatprep.subr.mxu0 0.0
    %231 = vmatpush1.msra.mxu0 %v50
    %232 = vmatprep.subr.mxu0 0.0
    %233 = vmatpush1.msra.mxu0 %v51
    %234 = vmatprep.subr.mxu0 0.0
    %235 = vmatpush1.msra.mxu0 %v52
    %236 = vmatprep.subr.mxu0 0.0
    %237 = vmatpush1.msra.mxu0 %v53
    %238 = vmatprep.subr.mxu0 0.0
    %239 = vmatpush1.msra.mxu0 %v54
    %240 = vmatprep.subr.mxu0 0.0
    %241 = vmatpush1.msra.mxu0 %v55
    %242 = vmatprep.subr.mxu0 0.0
    %243 = vmatpush1.msra.mxu0 %v56
    %244 = vmatprep.subr.mxu0 0.0
    %245 = vmatpush1.msra.mxu0 %v57
    %246 = vmatprep.subr.mxu0 0.0
    %247 = vmatpush1.msra.mxu0 %v58
    %248 = vmatprep.subr.mxu0 0.0
    %249 = vmatpush1.msra.mxu0 %v59
    %250 = vmatprep.subr.mxu0 0.0
    %251 = vmatpush1.msra.mxu0 %v60
    %252 = vmatprep.subr.mxu0 0.0
    %253 = vmatpush1.msra.mxu0 %v61
    %254 = vmatprep.subr.mxu0 0.0
    %255 = vmatpush1.msra.mxu0 %v62
    %256 = vmatprep.subr.mxu0 0.0
    %257 = vmatpush1.msra.mxu0 %v63
    %258 = vmatprep.subr.mxu0 0.0
    %259 = vmatpush1.msra.mxu0 %v64
    %260 = vmatprep.subr.mxu0 0.0
    %261 = vmatpush1.msra.mxu0 %v65
    %262 = vmatprep.subr.mxu0 0.0
    %263 = vmatpush1.msra.mxu0 %v66
    %264 = vmatprep.subr.mxu0 0.0
    %265 = vmatpush1.msra.mxu0 %v67
    %266 = vmatprep.subr.mxu0 0.0
    %267 = vmatpush1.msra.mxu0 %v68
    %268 = vmatprep.subr.mxu0 0.0
    %269 = vmatpush1.msra.mxu0 %v69
    %270 = vmatprep.subr.mxu0 0.0
    %271 = vmatpush1.msra.mxu0 %v70
    %272 = vmatprep.subr.mxu0 0.0
    %273 = vmatpush1.msra.mxu0 %v71
    %274 = vmatprep.subr.mxu0 0.0
    %275 = vmatpush1.msra.mxu0 %v72
    %276 = vmatprep.subr.mxu0 0.0
    %277 = vmatpush1.msra.mxu0 %v73
    %278 = vmatprep.subr.mxu0 0.0
    %279 = vmatpush1.msra.mxu0 %v74
    %280 = vmatprep.subr.mxu0 0.0
    %281 = vmatpush1.msra.mxu0 %v75
    %282 = vmatprep.subr.mxu0 0.0
    %283 = vmatpush1.msra.mxu0 %v76
    %284 = vmatprep.subr.mxu0 0.0
    %285 = vmatpush1.msra.mxu0 %v77
    %286 = vmatprep.subr.mxu0 0.0
    %287 = vmatpush1.msra.mxu0 %v78
    %288 = vmatprep.subr.mxu0 0.0
    %289 = vmatpush1.msra.mxu0 %v79
    %290 = vmatprep.subr.mxu0 0.0
    %291 = vmatpush1.msra.mxu0 %v80
    %292 = vmatprep.mubr.f32.mxu0 %v201
    %293 = vmatmul.mubr.f32.gmra.mrb[0].mxu0 %v193
    %v294 = vpop.f32.mrb[0].mxu0
    %v295 = vadd.f32 %v182, %v294
    %v296 = vpop.f32.mrb[0].mxu0
    %297 = vdwg.mxu0
    %298 = vmatprep.subr.mxu0 0.0
    %299 = vmatpush1.msra.mxu0 %v81
    %300 = vmatprep.subr.mxu0 0.0
    %301 = vmatpush1.msra.mxu0 %v82
    %302 = vmatprep.subr.mxu0 0.0
    %303 = vmatpush1.msra.mxu0 %v83
    %304 = vmatprep.subr.mxu0 0.0
    %305 = vmatpush1.msra.mxu0 %v84
    %306 = vmatprep.subr.mxu0 0.0
    %307 = vmatpush1.msra.mxu0 %v85
    %308 = vmatprep.subr.mxu0 0.0
    %309 = vmatpush1.msra.mxu0 %v86
    %310 = vmatprep.subr.mxu0 0.0
    %311 = vmatpush1.msra.mxu0 %v87
    %312 = vmatprep.subr.mxu0 0.0
    %313 = vmatpush1.msra.mxu0 %v88
    %314 = vmatprep.subr.mxu0 0.0
    %315 = vmatpush1.msra.mxu0 %v89
    %316 = vmatprep.subr.mxu0 0.0
    %317 = vmatpush1.msra.mxu0 %v90
    %318 = vmatprep.subr.mxu0 0.0
    %319 = vmatpush1.msra.mxu0 %v91
    %320 = vmatprep.subr.mxu0 0.0
    %321 = vmatpush1.msra.mxu0 %v92
    %322 = vmatprep.subr.mxu0 0.0
    %323 = vmatpush1.msra.mxu0 %v93
    %324 = vmatprep.subr.mxu0 0.0
    %325 = vmatpush1.msra.mxu0 %v94
    %326 = vmatprep.subr.mxu0 0.0
    %327 = vmatpush1.msra.mxu0 %v95
    %328 = vmatprep.subr.mxu0 0.0
    %329 = vmatpush1.msra.mxu0 %v96
    %330 = vmatprep.subr.mxu0 0.0
    %331 = vmatpush1.msra.mxu0 %v97
    %332 = vmatprep.subr.mxu0 0.0
    %333 = vmatpush1.msra.mxu0 %v98
    %334 = vmatprep.subr.mxu0 0.0
    %335 = vmatpush1.msra.mxu0 %v99
    %336 = vmatprep.subr.mxu0 0.0
    %337 = vmatpush1.msra.mxu0 %v100
    %338 = vmatprep.subr.mxu0 0.0
    %339 = vmatpush1.msra.mxu0 %v101
    %340 = vmatprep.subr.mxu0 0.0
    %341 = vmatpush1.msra.mxu0 %v102
    %342 = vmatprep.subr.mxu0 0.0
    %343 = vmatpush1.msra.mxu0 %v103
    %344 = vmatprep.subr.mxu0 0.0
    %345 = vmatpush1.msra.mxu0 %v104
    %346 = vmatprep.subr.mxu0 0.0
    %347 = vmatpush1.msra.mxu0 %v105
    %348 = vmatprep.subr.mxu0 0.0
    %349 = vmatpush1.msra.mxu0 %v106
    %350 = vmatprep.subr.mxu0 0.0
    %351 = vmatpush1.msra.mxu0 %v107
    %352 = vmatprep.subr.mxu0 0.0
    %353 = vmatpush1.msra.mxu0 %v108
    %354 = vmatprep.subr.mxu0 0.0
    %355 = vmatpush1.msra.mxu0 %v109
    %356 = vmatprep.subr.mxu0 0.0
    %357 = vmatpush1.msra.mxu0 %v110
    %358 = vmatprep.subr.mxu0 0.0
    %359 = vmatpush1.msra.mxu0 %v111
    %360 = vmatprep.subr.mxu0 0.0
    %361 = vmatpush1.msra.mxu0 %v112
    %362 = vmatprep.mubr.f32.mxu0 %v202
    %363 = vmatmul.mubr.f32.gmra.mrb[0].mxu0 %v200
    %v364 = vpop.f32.mrb[0].mxu0
    %v365 = vadd.f32 %v295, %v364
    %v366 = vpop.f32.mrb[0].mxu0
    %367 = vdwg.mxu0
    %368 = vmatprep.subr.mxu0 0.0
    %369 = vmatpush1.msra.mxu0 %v113
    %370 = vmatprep.subr.mxu0 0.0
    %371 = vmatpush1.msra.mxu0 %v114
    %372 = vmatprep.subr.mxu0 0.0
    %373 = vmatpush1.msra.mxu0 %v115
    %374 = vmatprep.subr.mxu0 0.0
    %375 = vmatpush1.msra.mxu0 %v116
    %376 = vmatprep.subr.mxu0 0.0
    %377 = vmatpush1.msra.mxu0 %v117
    %378 = vmatprep.subr.mxu0 0.0
    %379 = vmatpush1.msra.mxu0 %v118
    %380 = vmatprep.subr.mxu0 0.0
    %381 = vmatpush1.msra.mxu0 %v119
    %382 = vmatprep.subr.mxu0 0.0
    %383 = vmatpush1.msra.mxu0 %v120
    %384 = vmatprep.subr.mxu0 0.0
    %385 = vmatpush1.msra.mxu0 %v121
    %386 = vmatprep.subr.mxu0 0.0
    %387 = vmatpush1.msra.mxu0 %v122
    %388 = vmatprep.subr.mxu0 0.0
    %389 = vmatpush1.msra.mxu0 %v123
    %390 = vmatprep.subr.mxu0 0.0
    %391 = vmatpush1.msra.mxu0 %v124
    %392 = vmatprep.subr.mxu0 0.0
    %393 = vmatpush1.msra.mxu0 %v125
    %394 = vmatprep.subr.mxu0 0.0
    %395 = vmatpush1.msra.mxu0 %v126
    %396 = vmatprep.subr.mxu0 0.0
    %397 = vmatpush1.msra.mxu0 %v127
    %398 = vmatprep.subr.mxu0 0.0
    %399 = vmatpush1.msra.mxu0 %v128
    %400 = vmatprep.subr.mxu0 0.0
    %401 = vmatpush1.msra.mxu0 %v129
    %402 = vmatprep.subr.mxu0 0.0
    %403 = vmatpush1.msra.mxu0 %v130
    %404 = vmatprep.subr.mxu0 0.0
    %405 = vmatpush1.msra.mxu0 %v131
    %406 = vmatprep.subr.mxu0 0.0
    %407 = vmatpush1.msra.mxu0 %v132
    %408 = vmatprep.subr.mxu0 0.0
    %409 = vmatpush1.msra.mxu0 %v133
    %410 = vmatprep.subr.mxu0 0.0
    %411 = vmatpush1.msra.mxu0 %v134
    %412 = vmatprep.subr.mxu0 0.0
    %413 = vmatpush1.msra.mxu0 %v135
    %414 = vmatprep.subr.mxu0 0.0
    %415 = vmatpush1.msra.mxu0 %v136
    %416 = vmatprep.subr.mxu0 0.0
    %417 = vmatpush1.msra.mxu0 %v137
    %418 = vmatprep.subr.mxu0 0.0
    %419 = vmatpush1.msra.mxu0 %v138
    %420 = vmatprep.subr.mxu0 0.0
    %421 = vmatpush1.msra.mxu0 %v139
    %422 = vmatprep.subr.mxu0 0.0
    %423 = vmatpush1.msra.mxu0 %v140
    %424 = vmatprep.subr.mxu0 0.0
    %425 = vmatpush1.msra.mxu0 %v141
    %426 = vmatprep.subr.mxu0 0.0
    %427 = vmatpush1.msra.mxu0 %v142
    %428 = vmatprep.subr.mxu0 0.0
    %429 = vmatpush1.msra.mxu0 %v143
    %430 = vmatprep.subr.mxu0 0.0
    %431 = vmatpush1.msra.mxu0 %v144
    %432 = vmatprep.mubr.f32.mxu0 %v218
    %433 = vmatmul.mubr.f32.gmra.mrb[0].mxu0 %v210
    %v434 = vpop.f32.mrb[0].mxu0
    %v435 = vadd.f32 %v365, %v434
    %v436 = vpop.f32.mrb[0].mxu0
    %437 = vdwg.mxu0
    %438 = vmatprep.subr.mxu0 0.0
    %439 = vmatpush1.msra.mxu0 %v145
    %440 = vmatprep.subr.mxu0 0.0
    %441 = vmatpush1.msra.mxu0 %v146
    %442 = vmatprep.subr.mxu0 0.0
    %443 = vmatpush1.msra.mxu0 %v147
    %444 = vmatprep.subr.mxu0 0.0
    %445 = vmatpush1.msra.mxu0 %v148
    %446 = vmatprep.subr.mxu0 0.0
    %447 = vmatpush1.msra.mxu0 %v149
    %448 = vmatprep.subr.mxu0 0.0
    %449 = vmatpush1.msra.mxu0 %v150
    %450 = vmatprep.subr.mxu0 0.0
    %451 = vmatpush1.msra.mxu0 %v151
    %452 = vmatprep.subr.mxu0 0.0
    %453 = vmatpush1.msra.mxu0 %v152
    %454 = vmatprep.subr.mxu0 0.0
    %455 = vmatpush1.msra.mxu0 %v153
    %456 = vmatprep.subr.mxu0 0.0
    %457 = vmatpush1.msra.mxu0 %v154
    %458 = vmatprep.subr.mxu0 0.0
    %459 = vmatpush1.msra.mxu0 %v155
    %460 = vmatprep.subr.mxu0 0.0
    %461 = vmatpush1.msra.mxu0 %v156
    %462 = vmatprep.subr.mxu0 0.0
    %463 = vmatpush1.msra.mxu0 %v157
    %464 = vmatprep.subr.mxu0 0.0
    %465 = vmatpush1.msra.mxu0 %v158
    %466 = vmatprep.subr.mxu0 0.0
    %467 = vmatpush1.msra.mxu0 %v159
    %468 = vmatprep.subr.mxu0 0.0
    %469 = vmatpush1.msra.mxu0 %v160
    %470 = vmatprep.subr.mxu0 0.0
    %471 = vmatpush1.msra.mxu0 %v161
    %472 = vmatprep.subr.mxu0 0.0
    %473 = vmatpush1.msra.mxu0 %v162
    %474 = vmatprep.subr.mxu0 0.0
    %475 = vmatpush1.msra.mxu0 %v163
    %476 = vmatprep.subr.mxu0 0.0
    %477 = vmatpush1.msra.mxu0 %v164
    %478 = vmatprep.subr.mxu0 0.0
    %479 = vmatpush1.msra.mxu0 %v165
    %480 = vmatprep.subr.mxu0 0.0
    %481 = vmatpush1.msra.mxu0 %v166
    %482 = vmatprep.subr.mxu0 0.0
    %483 = vmatpush1.msra.mxu0 %v167
    %484 = vmatprep.subr.mxu0 0.0
    %485 = vmatpush1.msra.mxu0 %v168
    %486 = vmatprep.subr.mxu0 0.0
    %487 = vmatpush1.msra.mxu0 %v169
    %488 = vmatprep.subr.mxu0 0.0
    %489 = vmatpush1.msra.mxu0 %v170
    %490 = vmatprep.subr.mxu0 0.0
    %491 = vmatpush1.msra.mxu0 %v171
    %492 = vmatprep.subr.mxu0 0.0
    %493 = vmatpush1.msra.mxu0 %v172
    %494 = vmatprep.subr.mxu0 0.0
    %495 = vmatpush1.msra.mxu0 %v173
    %496 = vmatprep.subr.mxu0 0.0
    %497 = vmatpush1.msra.mxu0 %v174
    %498 = vmatprep.subr.mxu0 0.0
    %499 = vmatpush1.msra.mxu0 %v175
    %500 = vmatprep.subr.mxu0 0.0
    %501 = vmatpush1.msra.mxu0 %v176
    %502 = vmatprep.mubr.f32.mxu0 %v219
    %503 = vmatmul.mubr.f32.gmra.mrb[0].mxu0 %v217
    %v504 = vpop.f32.mrb[0].mxu0
    %v505 = vadd.f32 %v435, %v504
    %v506 = vpop.f32.mrb[0].mxu0
    %507 = vdwg.mxu0
    %v508 = vld [vmem:[%s5] sm:$0xff]
    %v509 = vld [vmem:[%s5 + $0x8] sm:$0xff]
    %v510 = vld [vmem:[%s5 + $0x10] sm:$0x1]
    %v511 = vld [vmem:[%s6] sm:$0x1]
    %v512 = vld [vmem:[%s7] sm:$0x1]
    %s513 = sld [smem:[#allocation3]]
    %p514 = scmp.gt.s32.totalorder %s513, 0
    %s515 = scalar_select %p514, %s513, 0
    %p516 = scmp.lt.s32.totalorder %s515, 1032
    %s517 = scalar_select %p516, %s515, 1032
    %s518 = scalar_lea.vmem %s4, %s517
    %v519 = vld [vmem:[%s518] sm:$0x1]
    %s520 = sld [smem:[#allocation3 + $0x1]]
    %p521 = scmp.gt.s32.totalorder %s520, 0
    %s522 = scalar_select %p521, %s520, 0
    %p523 = scmp.lt.s32.totalorder %s522, 1032
    %s524 = scalar_select %p523, %s522, 1032
    %s525 = scalar_lea.vmem %s4, %s524
    %v526 = vld [vmem:[%s525] sm:$0x1]
    %s527 = sld [smem:[#allocation3 + $0x2]]
    %p528 = scmp.gt.s32.totalorder %s527, 0
    %s529 = scalar_select %p528, %s527, 0
    %p530 = scmp.lt.s32.totalorder %s529, 1032
    %s531 = scalar_select %p530, %s529, 1032
    %s532 = scalar_lea.vmem %s4, %s531
    %v533 = vld [vmem:[%s532] sm:$0x1]
    %s534 = sld [smem:[#allocation3 + $0x3]]
    %p535 = scmp.gt.s32.totalorder %s534, 0
    %s536 = scalar_select %p535, %s534, 0
    %p537 = scmp.lt.s32.totalorder %s536, 1032
    %s538 = scalar_select %p537, %s536, 1032
    %s539 = scalar_lea.vmem %s4, %s538
    %v540 = vld [vmem:[%s539] sm:$0x1]
    %s541 = sld [smem:[#allocation3 + $0x4]]
    %p542 = scmp.gt.s32.totalorder %s541, 0
    %s543 = scalar_select %p542, %s541, 0
    %p544 = scmp.lt.s32.totalorder %s543, 1032
    %s545 = scalar_select %p544, %s543, 1032
    %s546 = scalar_lea.vmem %s4, %s545
    %v547 = vld [vmem:[%s546] sm:$0x1]
    %s548 = sld [smem:[#allocation3 + $0x5]]
    %p549 = scmp.gt.s32.totalorder %s548, 0
    %s550 = scalar_select %p549, %s548, 0
    %p551 = scmp.lt.s32.totalorder %s550, 1032
    %s552 = scalar_select %p551, %s550, 1032
    %s553 = scalar_lea.vmem %s4, %s552
    %v554 = vld [vmem:[%s553] sm:$0x1]
    %s555 = sld [smem:[#allocation3 + $0x6]]
    %p556 = scmp.gt.s32.totalorder %s555, 0
    %s557 = scalar_select %p556, %s555, 0
    %p558 = scmp.lt.s32.totalorder %s557, 1032
    %s559 = scalar_select %p558, %s557, 1032
    %s560 = scalar_lea.vmem %s4, %s559
    %v561 = vld [vmem:[%s560] sm:$0x1]
    %s562 = sld [smem:[#allocation3 + $0x7]]
    %p563 = scmp.gt.s32.totalorder %s562, 0
    %s564 = scalar_select %p563, %s562, 0
    %p565 = scmp.lt.s32.totalorder %s564, 1032
    %s566 = scalar_select %p565, %s564, 1032
    %s567 = scalar_lea.vmem %s4, %s566
    %v568 = vld [vmem:[%s567] sm:$0x1]
    %s569 = sld [smem:[#allocation3 + $0x8]]
    %p570 = scmp.gt.s32.totalorder %s569, 0
    %s571 = scalar_select %p570, %s569, 0
    %p572 = scmp.lt.s32.totalorder %s571, 1032
    %s573 = scalar_select %p572, %s571, 1032
    %s574 = scalar_lea.vmem %s4, %s573
    %v575 = vld [vmem:[%s574] sm:$0x1]
    %s576 = sld [smem:[#allocation3 + $0x9]]
    %p577 = scmp.gt.s32.totalorder %s576, 0
    %s578 = scalar_select %p577, %s576, 0
    %p579 = scmp.lt.s32.totalorder %s578, 1032
    %s580 = scalar_select %p579, %s578, 1032
    %s581 = scalar_lea.vmem %s4, %s580
    %v582 = vld [vmem:[%s581] sm:$0x1]
    %s583 = sld [smem:[#allocation3 + $0xa]]
    %p584 = scmp.gt.s32.totalorder %s583, 0
    %s585 = scalar_select %p584, %s583, 0
    %p586 = scmp.lt.s32.totalorder %s585, 1032
    %s587 = scalar_select %p586, %s585, 1032
    %s588 = scalar_lea.vmem %s4, %s587
    %v589 = vld [vmem:[%s588] sm:$0x1]
    %s590 = sld [smem:[#allocation3 + $0xb]]
    %p591 = scmp.gt.s32.totalorder %s590, 0
    %s592 = scalar_select %p591, %s590, 0
    %p593 = scmp.lt.s32.totalorder %s592, 1032
    %s594 = scalar_select %p593, %s592, 1032
    %s595 = scalar_lea.vmem %s4, %s594
    %v596 = vld [vmem:[%s595] sm:$0x1]
    %s597 = sld [smem:[#allocation3 + $0xc]]
    %p598 = scmp.gt.s32.totalorder %s597, 0
    %s599 = scalar_select %p598, %s597, 0
    %p600 = scmp.lt.s32.totalorder %s599, 1032
    %s601 = scalar_select %p600, %s599, 1032
    %s602 = scalar_lea.vmem %s4, %s601
    %v603 = vld [vmem:[%s602] sm:$0x1]
    %s604 = sld [smem:[#allocation3 + $0xd]]
    %p605 = scmp.gt.s32.totalorder %s604, 0
    %s606 = scalar_select %p605, %s604, 0
    %p607 = scmp.lt.s32.totalorder %s606, 1032
    %s608 = scalar_select %p607, %s606, 1032
    %s609 = scalar_lea.vmem %s4, %s608
    %v610 = vld [vmem:[%s609] sm:$0x1]
    %s611 = sld [smem:[#allocation3 + $0xe]]
    %p612 = scmp.gt.s32.totalorder %s611, 0
    %s613 = scalar_select %p612, %s611, 0
    %p614 = scmp.lt.s32.totalorder %s613, 1032
    %s615 = scalar_select %p614, %s613, 1032
    %s616 = scalar_lea.vmem %s4, %s615
    %v617 = vld [vmem:[%s616] sm:$0x1]
    %s618 = sld [smem:[#allocation3 + $0xf]]
    %p619 = scmp.gt.s32.totalorder %s618, 0
    %s620 = scalar_select %p619, %s618, 0
    %p621 = scmp.lt.s32.totalorder %s620, 1032
    %s622 = scalar_select %p621, %s620, 1032
    %s623 = scalar_lea.vmem %s4, %s622
    %v624 = vld [vmem:[%s623] sm:$0x1]
    %v626 = vrot.slane %v519, 7
    %v629 = vrot.slane %v526, 6
    %v632 = vrot.slane %v533, 5
    %v635 = vrot.slane %v540, 4
    %v638 = vrot.slane %v547, 3
    %v641 = vrot.slane %v554, 2
    %v644 = vrot.slane %v561, 1
    %v647 = vrot.slane %v575, 7
    %v650 = vrot.slane %v582, 6
    %v653 = vrot.slane %v589, 5
    %v656 = vrot.slane %v596, 4
    %v659 = vrot.slane %v603, 3
    %v662 = vrot.slane %v610, 2
    %v665 = vrot.slane %v617, 1
    %vm667 = vcmask 1040384
    %v668 = vsel %vm667, %v505, %v626
    %vm669 = vcmask 1041408
    %v670 = vsel %vm669, %v668, %v629
    %vm671 = vcmask 1042432
    %v672 = vsel %vm671, %v670, %v632
    %vm673 = vcmask 1043456
    %v674 = vsel %vm673, %v672, %v635
    %vm675 = vcmask 1044480
    %v676 = vsel %vm675, %v674, %v638
    %vm677 = vcmask 1045504
    %v678 = vsel %vm677, %v676, %v641
    %vm679 = vcmask 1046528
    %v680 = vsel %vm679, %v678, %v644
    %v681 = vsel %vm667, %v568, %v647
    %v682 = vsel %vm669, %v681, %v650
    %v683 = vsel %vm671, %v682, %v653
    %v684 = vsel %vm673, %v683, %v656
    %v685 = vsel %vm675, %v684, %v659
    %v686 = vsel %vm677, %v685, %v662
    %v687 = vsel %vm679, %v686, %v665
    %v688 = vadd.f32 %v680, %v508
    %v689 = vadd.f32 %v687, %v509
    %v690 = vadd.f32 %v624, %v510
    %691 = vadd.xlane.f32.xlu0 %v688
    %v692 = vpop.xlane.xlu0 %691
    %693 = vadd.xlane.f32.xlu0 %v689
    %v694 = vpop.xlane.xlu0 %693
    %v695 = vsel %vm667, %v690, 0.0
    %696 = vadd.xlane.f32.xlu0 %v695
    %v697 = vpop.xlane.xlu0 %696
    %v698 = vrcp.pop 128.0
    %v699 = vmul.f32 %v692, %v698
    %v700 = vmul.f32 %v694, %v698
    %v701 = vmul.f32 %v697, %v698
    %v702 = vsub.f32 %v688, %v699
    %v703 = vsub.f32 %v689, %v700
    %v704 = vsub.f32 %v690, %v701
    %v705 = vmul.f32 %v702, %v702
    %v706 = vmul.f32 %v703, %v703
    %v707 = vmul.f32 %v704, %v704
    %708 = vadd.xlane.f32.xlu0 %v705
    %v709 = vpop.xlane.xlu0 %708
    %710 = vadd.xlane.f32.xlu0 %v706
    %v711 = vpop.xlane.xlu0 %710
    %v712 = vsel %vm667, %v707, 0.0
    %713 = vadd.xlane.f32.xlu0 %v712
    %v714 = vpop.xlane.xlu0 %713
    %v715 = vmul.f32 %v709, %v698
    %v716 = vmul.f32 %v711, %v698
    %v717 = vmul.f32 %v714, %v698
    %v718 = vadd.f32 %v715, 1e-05
    %v719 = vadd.f32 %v716, 1e-05
    %v720 = vadd.f32 %v717, 1e-05
    %v721 = vrsqrt.pop %v718
    %v722 = vrsqrt.pop %v719
    %v723 = vrsqrt.pop %v720
    %v724 = vmul.f32 %v702, %v721
    %v725 = vmul.f32 %v703, %v722
    %v726 = vmul.f32 %v704, %v723
    %v728 = vlaneseq
    %v729 = vshrl.u32 %v728, 7
    %v730 = vsub.s32 0, %v729
    %v731 = vrot.slane %v511, %v730
    %v733 = vmul.f32 %v724, %v731
    %v734 = vmul.f32 %v725, %v731
    %v735 = vmul.f32 %v726, %v731
    %v737 = vlaneseq
    %v738 = vshrl.u32 %v737, 7
    %v739 = vsub.s32 0, %v738
    %v740 = vrot.slane %v512, %v739
    %v742 = vadd.f32 %v733, %v740
    %v743 = vadd.f32 %v734, %v740
    %v744 = vadd.f32 %v735, %v740
    %745 = vst [vmem:[%s8] sm:$0xff] %v742
    %746 = vst [vmem:[%s8 + $0x8] sm:$0xff] %v743
    %747 = vst [vmem:[%s8 + $0x10] sm:$0x1] %v744
    %s748 = sld [smem:[#allocation3 + $0x10]]
    %p749 = scmp.gt.s32.totalorder %s748, 0
    %s750 = scalar_select %p749, %s748, 0
    %p751 = scmp.lt.s32.totalorder %s750, 1032
    %s752 = scalar_select %p751, %s750, 1032
    %s753 = scalar_lea.vmem %s4, %s752
    %v754 = vld [vmem:[%s753] sm:$0x1]
    %s755 = sld [smem:[#allocation3 + $0x11]]
    %p756 = scmp.gt.s32.totalorder %s755, 0
    %s757 = scalar_select %p756, %s755, 0
    %p758 = scmp.lt.s32.totalorder %s757, 1032
    %s759 = scalar_select %p758, %s757, 1032
    %s760 = scalar_lea.vmem %s4, %s759
    %v761 = vld [vmem:[%s760] sm:$0x1]
    %s762 = sld [smem:[#allocation3 + $0x12]]
    %p763 = scmp.gt.s32.totalorder %s762, 0
    %s764 = scalar_select %p763, %s762, 0
    %p765 = scmp.lt.s32.totalorder %s764, 1032
    %s766 = scalar_select %p765, %s764, 1032
    %s767 = scalar_lea.vmem %s4, %s766
    %v768 = vld [vmem:[%s767] sm:$0x1]
    %s769 = sld [smem:[#allocation3 + $0x13]]
    %p770 = scmp.gt.s32.totalorder %s769, 0
    %s771 = scalar_select %p770, %s769, 0
    %p772 = scmp.lt.s32.totalorder %s771, 1032
    %s773 = scalar_select %p772, %s771, 1032
    %s774 = scalar_lea.vmem %s4, %s773
    %v775 = vld [vmem:[%s774] sm:$0x1]
    %s776 = sld [smem:[#allocation3 + $0x14]]
    %p777 = scmp.gt.s32.totalorder %s776, 0
    %s778 = scalar_select %p777, %s776, 0
    %p779 = scmp.lt.s32.totalorder %s778, 1032
    %s780 = scalar_select %p779, %s778, 1032
    %s781 = scalar_lea.vmem %s4, %s780
    %v782 = vld [vmem:[%s781] sm:$0x1]
    %s783 = sld [smem:[#allocation3 + $0x15]]
    %p784 = scmp.gt.s32.totalorder %s783, 0
    %s785 = scalar_select %p784, %s783, 0
    %p786 = scmp.lt.s32.totalorder %s785, 1032
    %s787 = scalar_select %p786, %s785, 1032
    %s788 = scalar_lea.vmem %s4, %s787
    %v789 = vld [vmem:[%s788] sm:$0x1]
    %s790 = sld [smem:[#allocation3 + $0x16]]
    %p791 = scmp.gt.s32.totalorder %s790, 0
    %s792 = scalar_select %p791, %s790, 0
    %p793 = scmp.lt.s32.totalorder %s792, 1032
    %s794 = scalar_select %p793, %s792, 1032
    %s795 = scalar_lea.vmem %s4, %s794
    %v796 = vld [vmem:[%s795] sm:$0x1]
    %s797 = sld [smem:[#allocation3 + $0x17]]
    %p798 = scmp.gt.s32.totalorder %s797, 0
    %s799 = scalar_select %p798, %s797, 0
    %p800 = scmp.lt.s32.totalorder %s799, 1032
    %s801 = scalar_select %p800, %s799, 1032
    %s802 = scalar_lea.vmem %s4, %s801
    %v803 = vld [vmem:[%s802] sm:$0x1]
    %s804 = sld [smem:[#allocation3 + $0x18]]
    %p805 = scmp.gt.s32.totalorder %s804, 0
    %s806 = scalar_select %p805, %s804, 0
    %p807 = scmp.lt.s32.totalorder %s806, 1032
    %s808 = scalar_select %p807, %s806, 1032
    %s809 = scalar_lea.vmem %s4, %s808
    %v810 = vld [vmem:[%s809] sm:$0x1]
    %s811 = sld [smem:[#allocation3 + $0x19]]
    %p812 = scmp.gt.s32.totalorder %s811, 0
    %s813 = scalar_select %p812, %s811, 0
    %p814 = scmp.lt.s32.totalorder %s813, 1032
    %s815 = scalar_select %p814, %s813, 1032
    %s816 = scalar_lea.vmem %s4, %s815
    %v817 = vld [vmem:[%s816] sm:$0x1]
    %s818 = sld [smem:[#allocation3 + $0x1a]]
    %p819 = scmp.gt.s32.totalorder %s818, 0
    %s820 = scalar_select %p819, %s818, 0
    %p821 = scmp.lt.s32.totalorder %s820, 1032
    %s822 = scalar_select %p821, %s820, 1032
    %s823 = scalar_lea.vmem %s4, %s822
    %v824 = vld [vmem:[%s823] sm:$0x1]
    %s825 = sld [smem:[#allocation3 + $0x1b]]
    %p826 = scmp.gt.s32.totalorder %s825, 0
    %s827 = scalar_select %p826, %s825, 0
    %p828 = scmp.lt.s32.totalorder %s827, 1032
    %s829 = scalar_select %p828, %s827, 1032
    %s830 = scalar_lea.vmem %s4, %s829
    %v831 = vld [vmem:[%s830] sm:$0x1]
    %s832 = sld [smem:[#allocation3 + $0x1c]]
    %p833 = scmp.gt.s32.totalorder %s832, 0
    %s834 = scalar_select %p833, %s832, 0
    %p835 = scmp.lt.s32.totalorder %s834, 1032
    %s836 = scalar_select %p835, %s834, 1032
    %s837 = scalar_lea.vmem %s4, %s836
    %v838 = vld [vmem:[%s837] sm:$0x1]
    %s839 = sld [smem:[#allocation3 + $0x1d]]
    %p840 = scmp.gt.s32.totalorder %s839, 0
    %s841 = scalar_select %p840, %s839, 0
    %p842 = scmp.lt.s32.totalorder %s841, 1032
    %s843 = scalar_select %p842, %s841, 1032
    %s844 = scalar_lea.vmem %s4, %s843
    %v845 = vld [vmem:[%s844] sm:$0x1]
    %s846 = sld [smem:[#allocation3 + $0x1e]]
    %p847 = scmp.gt.s32.totalorder %s846, 0
    %s848 = scalar_select %p847, %s846, 0
    %p849 = scmp.lt.s32.totalorder %s848, 1032
    %s850 = scalar_select %p849, %s848, 1032
    %s851 = scalar_lea.vmem %s4, %s850
    %v852 = vld [vmem:[%s851] sm:$0x1]
    %s853 = sld [smem:[#allocation3 + $0x1f]]
    %p854 = scmp.gt.s32.totalorder %s853, 0
    %s855 = scalar_select %p854, %s853, 0
    %p856 = scmp.lt.s32.totalorder %s855, 1032
    %s857 = scalar_select %p856, %s855, 1032
    %s858 = scalar_lea.vmem %s4, %s857
    %v859 = vld [vmem:[%s858] sm:$0x1]
    %v861 = vrot.slane %v505, 1
    %v864 = vrot.slane %v754, 7
    %v867 = vrot.slane %v761, 6
    %v870 = vrot.slane %v768, 5
    %v873 = vrot.slane %v775, 4
    %v876 = vrot.slane %v782, 3
    %v879 = vrot.slane %v789, 2
    %v882 = vrot.slane %v796, 1
    %v885 = vrot.slane %v810, 7
    %v888 = vrot.slane %v817, 6
    %v891 = vrot.slane %v824, 5
    %v894 = vrot.slane %v831, 4
    %v897 = vrot.slane %v838, 3
    %v900 = vrot.slane %v845, 2
    %v903 = vrot.slane %v852, 1
    %v905 = vsel %vm667, %v861, %v864
    %v906 = vsel %vm669, %v905, %v867
    %v907 = vsel %vm671, %v906, %v870
    %v908 = vsel %vm673, %v907, %v873
    %v909 = vsel %vm675, %v908, %v876
    %v910 = vsel %vm677, %v909, %v879
    %v911 = vsel %vm679, %v910, %v882
    %v912 = vsel %vm667, %v803, %v885
    %v913 = vsel %vm669, %v912, %v888
    %v914 = vsel %vm671, %v913, %v891
    %v915 = vsel %vm673, %v914, %v894
    %v916 = vsel %vm675, %v915, %v897
    %v917 = vsel %vm677, %v916, %v900
    %v918 = vsel %vm679, %v917, %v903
    %v919 = vadd.f32 %v911, %v508
    %v920 = vadd.f32 %v918, %v509
    %v921 = vadd.f32 %v859, %v510
    %922 = vadd.xlane.f32.xlu0 %v919
    %v923 = vpop.xlane.xlu0 %922
    %924 = vadd.xlane.f32.xlu0 %v920
    %v925 = vpop.xlane.xlu0 %924
    %v926 = vsel %vm667, %v921, 0.0
    %927 = vadd.xlane.f32.xlu0 %v926
    %v928 = vpop.xlane.xlu0 %927
    %v929 = vmul.f32 %v923, %v698
    %v930 = vmul.f32 %v925, %v698
    %v931 = vmul.f32 %v928, %v698
    %v932 = vsub.f32 %v919, %v929
    %v933 = vsub.f32 %v920, %v930
    %v934 = vsub.f32 %v921, %v931
    %v935 = vmul.f32 %v932, %v932
    %v936 = vmul.f32 %v933, %v933
    %v937 = vmul.f32 %v934, %v934
    %938 = vadd.xlane.f32.xlu0 %v935
    %v939 = vpop.xlane.xlu0 %938
    %940 = vadd.xlane.f32.xlu0 %v936
    %v941 = vpop.xlane.xlu0 %940
    %v942 = vsel %vm667, %v937, 0.0
    %943 = vadd.xlane.f32.xlu0 %v942
    %v944 = vpop.xlane.xlu0 %943
    %v945 = vmul.f32 %v939, %v698
    %v946 = vmul.f32 %v941, %v698
    %v947 = vmul.f32 %v944, %v698
    %v948 = vadd.f32 %v945, 1e-05
    %v949 = vadd.f32 %v946, 1e-05
    %v950 = vadd.f32 %v947, 1e-05
    %v951 = vrsqrt.pop %v948
    %v952 = vrsqrt.pop %v949
    %v953 = vrsqrt.pop %v950
    %v954 = vmul.f32 %v932, %v951
    %v955 = vmul.f32 %v933, %v952
    %v956 = vmul.f32 %v934, %v953
    %v957 = vmul.f32 %v954, %v731
    %v958 = vmul.f32 %v955, %v731
    %v959 = vmul.f32 %v956, %v731
    %v960 = vadd.f32 %v957, %v740
    %v961 = vadd.f32 %v958, %v740
    %v962 = vadd.f32 %v959, %v740
    %s963 = scalar_lea.vmem %s8, 24
    %964 = vst [vmem:[%s963] sm:$0xff] %v960
    %965 = vst [vmem:[%s963 + $0x8] sm:$0xff] %v961
    %966 = vst [vmem:[%s963 + $0x10] sm:$0x1] %v962
    // Predicated region
    $region34: #{maskgit_image2rgb_forward.4} parent=1 // pred_check
      _
    $region35: #{maskgit_image2rgb_forward.4} parent=1 // pred_check_branch
      %968 = sbr.rel (0) target = $region37
    $region36: #{maskgit_image2rgb_forward.4} parent=1 // pred_region
      _
    $region37: #{maskgit_image2rgb_forward.4} parent=1 // pred_fallthru
      _
    // Predicated region
    $region38: #{maskgit_image2rgb_forward.4} parent=1 // pred_check
      _
    $region39: #{maskgit_image2rgb_forward.4} parent=1 // pred_check_branch
      %970 = sbr.rel (0) target = $region41
    $region40: #{maskgit_image2rgb_forward.4} parent=1 // pred_region
      _
    $region41: #{maskgit_image2rgb_forward.4} parent=1 // pred_fallthru
      _
    %971 = vsyncpa [#allocation5], 1

// kernel: maskgit_image2rgb_forward.7
$region0: #{maskgit_image2rgb_forward.7}
  #allocation0 [shape = 'u32[]', space=smem, size = 0x4, offset = 0x4, fixed_abs, tag = 'smem constant byte address 0x4 - core index']
  #allocation1 [shape = 'u32[144,128]{1,0:T(1,128)}', space=vmem, size = 0x12000, scoped, tag = 'internal scratch']
  %s0 = inlined_call_operand.vmem [shape: f32[40,128], index: 0, kind: input, shape index: {}]
  %s1 = inlined_call_operand.vmem [shape: f32[128,128], index: 1, kind: input, shape index: {}]
  %s2 = inlined_call_operand.vmem [shape: f32[1,128], index: 2, kind: input, shape index: {}]
  %s3 = inlined_call_operand.vmem [shape: f32[1,128], index: 3, kind: input, shape index: {}]
  %s4 = inlined_call_operand.vmem [shape: f32[1,128], index: 4, kind: input, shape index: {}]
  %s5 = inlined_call_operand.vmem [shape: f32[128,128], index: 5, kind: input, shape index: {}]
  %s6 = inlined_call_operand.vmem [shape: f32[1,128], index: 6, kind: input, shape index: {}]
  %s7 = inlined_call_operand.vmem [shape: f32[40,128], index: 7, kind: output, shape index: {}]
  %s8 = sld [smem:[#allocation0]]
  $region38: #{maskgit_image2rgb_forward.7} parent=0
    _
  %s10 = ssub.s32 1, %s8
  %s11 = scalar_select 0, %s10, %s8
  // Predicated region
  $region2: #{maskgit_image2rgb_forward.7} parent=0 // pred_check
    _
  $region3: #{maskgit_image2rgb_forward.7} parent=0 // pred_check_branch
    %13 = sbr.rel (0) target = $region5
  $region4: #{maskgit_image2rgb_forward.7} parent=0 // pred_region
    _
  $region5: #{maskgit_image2rgb_forward.7} parent=0 // pred_fallthru
    _
  // Predicated region
  $region6: #{maskgit_image2rgb_forward.7} parent=0 // pred_check
    _
  $region7: #{maskgit_image2rgb_forward.7} parent=0 // pred_check_branch
    %15 = sbr.rel (0) target = $region9
  $region8: #{maskgit_image2rgb_forward.7} parent=0 // pred_region
    _
  $region9: #{maskgit_image2rgb_forward.7} parent=0 // pred_fallthru
    _
  // Predicated region
  $region10: #{maskgit_image2rgb_forward.7} parent=0 // pred_check
    _
  $region11: #{maskgit_image2rgb_forward.7} parent=0 // pred_check_branch
    %17 = sbr.rel (0) target = $region13
  $region12: #{maskgit_image2rgb_forward.7} parent=0 // pred_region
    _
  $region13: #{maskgit_image2rgb_forward.7} parent=0 // pred_fallthru
    _
  // Predicated region
  $region14: #{maskgit_image2rgb_forward.7} parent=0 // pred_check
    _
  $region15: #{maskgit_image2rgb_forward.7} parent=0 // pred_check_branch
    %19 = sbr.rel (0) target = $region17
  $region16: #{maskgit_image2rgb_forward.7} parent=0 // pred_region
    _
  $region17: #{maskgit_image2rgb_forward.7} parent=0 // pred_fallthru
    _
  // Predicated region
  $region18: #{maskgit_image2rgb_forward.7} parent=0 // pred_check
    _
  $region19: #{maskgit_image2rgb_forward.7} parent=0 // pred_check_branch
    %21 = sbr.rel (0) target = $region21
  $region20: #{maskgit_image2rgb_forward.7} parent=0 // pred_region
    _
  $region21: #{maskgit_image2rgb_forward.7} parent=0 // pred_fallthru
    _
  // Predicated region
  $region22: #{maskgit_image2rgb_forward.7} parent=0 // pred_check
    _
  $region23: #{maskgit_image2rgb_forward.7} parent=0 // pred_check_branch
    %23 = sbr.rel (0) target = $region25
  $region24: #{maskgit_image2rgb_forward.7} parent=0 // pred_region
    _
  $region25: #{maskgit_image2rgb_forward.7} parent=0 // pred_fallthru
    _
  // Predicated region
  $region26: #{maskgit_image2rgb_forward.7} parent=0 // pred_check
    _
  $region27: #{maskgit_image2rgb_forward.7} parent=0 // pred_check_branch
    %25 = sbr.rel (0) target = $region29
  $region28: #{maskgit_image2rgb_forward.7} parent=0 // pred_region
    _
  $region29: #{maskgit_image2rgb_forward.7} parent=0 // pred_fallthru
    _
  %v26 = vld [vmem:[%s0] sm:$0xff]
  %v27 = vld [vmem:[%s0 + $0x8] sm:$0xff]
  %v28 = vld [vmem:[%s0 + $0x10] sm:$0xff]
  %v29 = vld [vmem:[%s0 + $0x18] sm:$0xff]
  %v30 = vld [vmem:[%s0 + $0x20] sm:$0xff]
  %v31 = vld [vmem:[%s1] sm:$0xff]
  %v32 = vld [vmem:[%s1 + $0x8] sm:$0xff]
  %v33 = vld [vmem:[%s1 + $0x10] sm:$0xff]
  %v34 = vld [vmem:[%s1 + $0x18] sm:$0xff]
  %v35 = vld [vmem:[%s1 + $0x20] sm:$0xff]
  %v36 = vld [vmem:[%s1 + $0x28] sm:$0xff]
  %v37 = vld [vmem:[%s1 + $0x30] sm:$0xff]
  %v38 = vld [vmem:[%s1 + $0x38] sm:$0xff]
  %v39 = vld [vmem:[%s1 + $0x40] sm:$0xff]
  %v40 = vld [vmem:[%s1 + $0x48] sm:$0xff]
  %v41 = vld [vmem:[%s1 + $0x50] sm:$0xff]
  %v42 = vld [vmem:[%s1 + $0x58] sm:$0xff]
  %v43 = vld [vmem:[%s1 + $0x60] sm:$0xff]
  %v44 = vld [vmem:[%s1 + $0x68] sm:$0xff]
  %v45 = vld [vmem:[%s1 + $0x70] sm:$0xff]
  %v46 = vld [vmem:[%s1 + $0x78] sm:$0xff]
  %v47 = vld [vmem:[%s2] sm:$0x1]
  %v49 = vlaneseq
  %v50 = vshrl.u32 %v49, 7
  %v51 = vsub.s32 0, %v50
  %v52 = vrot.slane %v47, %v51
  %54 = vmatprep.subr.mxu0 0.0
  %55 = vmatpush1.msra.mxu0 %v31
  %56 = vmatprep.subr.mxu0 0.0
  %57 = vmatpush1.msra.mxu0 %v32
  %58 = vmatprep.subr.mxu0 0.0
  %59 = vmatpush1.msra.mxu0 %v33
  %60 = vmatprep.subr.mxu0 0.0
  %61 = vmatpush1.msra.mxu0 %v34
  %62 = vmatprep.subr.mxu0 0.0
  %63 = vmatpush1.msra.mxu0 %v35
  %64 = vmatprep.subr.mxu0 0.0
  %65 = vmatpush1.msra.mxu0 %v36
  %66 = vmatprep.subr.mxu0 0.0
  %67 = vmatpush1.msra.mxu0 %v37
  %68 = vmatprep.subr.mxu0 0.0
  %69 = vmatpush1.msra.mxu0 %v38
  %70 = vmatprep.subr.mxu0 0.0
  %71 = vmatpush1.msra.mxu0 %v39
  %72 = vmatprep.subr.mxu0 0.0
  %73 = vmatpush1.msra.mxu0 %v40
  %74 = vmatprep.subr.mxu0 0.0
  %75 = vmatpush1.msra.mxu0 %v41
  %76 = vmatprep.subr.mxu0 0.0
  %77 = vmatpush1.msra.mxu0 %v42
  %78 = vmatprep.subr.mxu0 0.0
  %79 = vmatpush1.msra.mxu0 %v43
  %80 = vmatprep.subr.mxu0 0.0
  %81 = vmatpush1.msra.mxu0 %v44
  %82 = vmatprep.subr.mxu0 0.0
  %83 = vmatpush1.msra.mxu0 %v45
  %84 = vmatprep.subr.mxu0 0.0
  %85 = vmatpush1.msra.mxu0 %v46
  %86 = vmatprep.subr.mxu0 0.0
  %87 = vmatpush1.msra.mxu0 0.0
  %88 = vmatprep.subr.mxu0 0.0
  %89 = vmatpush1.msra.mxu0 0.0
  %90 = vmatprep.subr.mxu0 0.0
  %91 = vmatpush1.msra.mxu0 0.0
  %92 = vmatprep.subr.mxu0 0.0
  %93 = vmatpush1.msra.mxu0 0.0
  %94 = vmatprep.subr.mxu0 0.0
  %95 = vmatpush1.msra.mxu0 0.0
  %96 = vmatprep.subr.mxu0 0.0
  %97 = vmatpush1.msra.mxu0 0.0
  %98 = vmatprep.subr.mxu0 0.0
  %99 = vmatpush1.msra.mxu0 0.0
  %100 = vmatprep.subr.mxu0 0.0
  %101 = vmatpush1.msra.mxu0 0.0
  %102 = vmatprep.subr.mxu0 0.0
  %103 = vmatpush1.msra.mxu0 0.0
  %104 = vmatprep.subr.mxu0 0.0
  %105 = vmatpush1.msra.mxu0 0.0
  %106 = vmatprep.subr.mxu0 0.0
  %107 = vmatpush1.msra.mxu0 0.0
  %108 = vmatprep.subr.mxu0 0.0
  %109 = vmatpush1.msra.mxu0 0.0
  %110 = vmatprep.subr.mxu0 0.0
  %111 = vmatpush1.msra.mxu0 0.0
  %112 = vmatprep.subr.mxu0 0.0
  %113 = vmatpush1.msra.mxu0 0.0
  %114 = vmatprep.subr.mxu0 0.0
  %115 = vmatpush1.msra.mxu0 0.0
  %116 = vmatprep.subr.mxu0 0.0
  %117 = vmatpush1.msra.mxu0 0.0
  %118 = vmatprep.mubr.f32.mxu0 0.0
  %119 = vmatmul.mubr.f32.gmra.mrb[0].mxu0 %v26
  %v120 = vpop.f32.mrb[0].mxu0
  %v121 = vadd.f32 %v52, %v120
  %v122 = vpop.f32.mrb[0].mxu0
  %123 = vmatprep.mubr.f32.mxu0 0.0
  %124 = vmatmul.mubr.f32.gmra.mrb[0].mxu0 %v27
  %v125 = vpop.f32.mrb[0].mxu0
  %v126 = vadd.f32 %v52, %v125
  %v127 = vpop.f32.mrb[0].mxu0
  %128 = vmatprep.mubr.f32.mxu0 0.0
  %129 = vmatmul.mubr.f32.gmra.mrb[0].mxu0 %v28
  %v130 = vpop.f32.mrb[0].mxu0
  %v131 = vadd.f32 %v52, %v130
  %v132 = vpop.f32.mrb[0].mxu0
  %133 = vmatprep.mubr.f32.mxu0 0.0
  %134 = vmatmul.mubr.f32.gmra.mrb[0].mxu0 %v29
  %v135 = vpop.f32.mrb[0].mxu0
  %v136 = vadd.f32 %v52, %v135
  %v137 = vpop.f32.mrb[0].mxu0
  %138 = vmatprep.mubr.f32.mxu0 0.0
  %139 = vmatmul.mubr.f32.gmra.mrb[0].mxu0 %v30
  %v140 = vpop.f32.mrb[0].mxu0
  %v141 = vadd.f32 %v52, %v140
  %v142 = vpop.f32.mrb[0].mxu0
  %143 = vdwg.mxu0
  %v144 = vmul.f32 %v121, 0.5
  %v145 = vmul.f32 %v126, 0.5
  %v146 = vmul.f32 %v131, 0.5
  %v147 = vmul.f32 %v136, 0.5
  %v148 = vmul.f32 %v141, 0.5
  %v149 = vmul.f32 %v121, 0.70710677
  %v150 = vmul.f32 %v126, 0.70710677
  %v151 = vmul.f32 %v131, 0.70710677
  %v152 = vmul.f32 %v136, 0.70710677
  %v153 = vmul.f32 %v141, 0.70710677
  %v154 = vand.u32 2147483647, %v149
  %v155 = vand.u32 2147483647, %v150
  %v156 = vand.u32 2147483647, %v151
  %v157 = vand.u32 2147483647, %v152
  %v158 = vand.u32 2147483647, %v153
  %v159 = vmul.f32 %v154, 0.3275911
  %v160 = vmul.f32 %v155, 0.3275911
  %v161 = vmul.f32 %v156, 0.3275911
  %v162 = vmul.f32 %v157, 0.3275911
  %v163 = vmul.f32 %v158, 0.3275911
  %v164 = vadd.f32 %v159, 1.0
  %v165 = vadd.f32 %v160, 1.0
  %v166 = vadd.f32 %v161, 1.0
  %v167 = vadd.f32 %v162, 1.0
  %v168 = vadd.f32 %v163, 1.0
  %v169 = vrcp.pop %v164
  %v170 = vmul.f32 1.0, %v169
  %v171 = vrcp.pop %v165
  %v172 = vmul.f32 1.0, %v171
  %v173 = vrcp.pop %v166
  %v174 = vmul.f32 1.0, %v173
  %v175 = vrcp.pop %v167
  %v176 = vmul.f32 1.0, %v175
  %v177 = vrcp.pop %v168
  %v178 = vmul.f32 1.0, %v177
  %v179 = vmul.f32 %v170, 1.0614054
  %v180 = vmul.f32 %v172, 1.0614054
  %v181 = vmul.f32 %v174, 1.0614054
  %v182 = vmul.f32 %v176, 1.0614054
  %v183 = vmul.f32 %v178, 1.0614054
  %v184 = vadd.f32 %v179, -1.4531521
  %v185 = vadd.f32 %v180, -1.4531521
  %v186 = vadd.f32 %v181, -1.4531521
  %v187 = vadd.f32 %v182, -1.4531521
  %v188 = vadd.f32 %v183, -1.4531521
  %v189 = vmul.f32 %v184, %v170
  %v190 = vmul.f32 %v185, %v172
  %v191 = vmul.f32 %v186, %v174
  %v192 = vmul.f32 %v187, %v176
  %v193 = vmul.f32 %v188, %v178
  %v194 = vadd.f32 %v189, 1.4214138
  %v195 = vadd.f32 %v190, 1.4214138
  %v196 = vadd.f32 %v191, 1.4214138
  %v197 = vadd.f32 %v192, 1.4214138
  %v198 = vadd.f32 %v193, 1.4214138
  %v199 = vmul.f32 %v194, %v170
  %v200 = vmul.f32 %v195, %v172
  %v201 = vmul.f32 %v196, %v174
  %v202 = vmul.f32 %v197, %v176
  %v203 = vmul.f32 %v198, %v178
  %v204 = vadd.f32 %v199, -0.28449672
  %v205 = vadd.f32 %v200, -0.28449672
  %v206 = vadd.f32 %v201, -0.28449672
  %v207 = vadd.f32 %v202, -0.28449672
  %v208 = vadd.f32 %v203, -0.28449672
  %v209 = vmul.f32 %v204, %v170
  %v210 = vmul.f32 %v205, %v172
  %v211 = vmul.f32 %v206, %v174
  %v212 = vmul.f32 %v207, %v176
  %v213 = vmul.f32 %v208, %v178
  %v214 = vadd.f32 %v209, 0.2548296
  %v215 = vadd.f32 %v210, 0.2548296
  %v216 = vadd.f32 %v211, 0.2548296
  %v217 = vadd.f32 %v212, 0.2548296
  %v218 = vadd.f32 %v213, 0.2548296
  %v219 = vmul.f32 %v214, %v170
  %v220 = vmul.f32 %v215, %v172
  %v221 = vmul.f32 %v216, %v174
  %v222 = vmul.f32 %v217, %v176
  %v223 = vmul.f32 %v218, %v178
  %v224 = vsub.f32 0.0, %v154
  %v225 = vsub.f32 0.0, %v155
  %v226 = vsub.f32 0.0, %v156
  %v227 = vsub.f32 0.0, %v157
  %v228 = vsub.f32 0.0, %v158
  %v229 = vmul.f32 %v224, %v154
  %v230 = vmul.f32 %v225, %v155
  %v231 = vmul.f32 %v226, %v156
  %v232 = vmul.f32 %v227, %v157
  %v233 = vmul.f32 %v228, %v158
  %v234 = vmul.f32 %v229, 1.442695
  %v235 = vpow.pop %v234
  %v236 = vmul.f32 %v230, 1.442695
  %v237 = vpow.pop %v236
  %v238 = vmul.f32 %v231, 1.442695
  %v239 = vpow.pop %v238
  %v240 = vmul.f32 %v232, 1.442695
  %v241 = vpow.pop %v240
  %v242 = vmul.f32 %v233, 1.442695
  %v243 = vpow.pop %v242
  %v244 = vmul.f32 %v219, %v235
  %v245 = vmul.f32 %v220, %v237
  %v246 = vmul.f32 %v221, %v239
  %v247 = vmul.f32 %v222, %v241
  %v248 = vmul.f32 %v223, %v243
  %v249 = vsub.f32 1.0, %v244
  %v250 = vsub.f32 1.0, %v245
  %v251 = vsub.f32 1.0, %v246
  %v252 = vsub.f32 1.0, %v247
  %v253 = vsub.f32 1.0, %v248
  %vm254 = vcmp.ge.f32.partialorder %v149, 0.0
  %vm255 = vcmp.ge.f32.partialorder %v150, 0.0
  %vm256 = vcmp.ge.f32.partialorder %v151, 0.0
  %vm257 = vcmp.ge.f32.partialorder %v152, 0.0
  %vm258 = vcmp.ge.f32.partialorder %v153, 0.0
  %v259 = vsub.f32 0.0, %v249
  %v260 = vsub.f32 0.0, %v250
  %v261 = vsub.f32 0.0, %v251
  %v262 = vsub.f32 0.0, %v252
  %v263 = vsub.f32 0.0, %v253
  %v264 = vsel %vm254, %v249, %v259
  %v265 = vsel %vm255, %v250, %v260
  %v266 = vsel %vm256, %v251, %v261
  %v267 = vsel %vm257, %v252, %v262
  %v268 = vsel %vm258, %v253, %v263
  %v269 = vadd.f32 %v264, 1.0
  %v270 = vadd.f32 %v265, 1.0
  %v271 = vadd.f32 %v266, 1.0
  %v272 = vadd.f32 %v267, 1.0
  %v273 = vadd.f32 %v268, 1.0
  %v274 = vmul.f32 %v144, %v269
  %v275 = vmul.f32 %v145, %v270
  %v276 = vmul.f32 %v146, %v271
  %v277 = vmul.f32 %v147, %v272
  %v278 = vmul.f32 %v148, %v273
  %v279 = vld [vmem:[%s3] sm:$0x1]
  %v280 = vld [vmem:[%s4] sm:$0x1]
  %281 = vadd.xlane.f32.xlu0 %v274
  %v282 = vpop.xlane.xlu0 %281
  %283 = vadd.xlane.f32.xlu0 %v275
  %v284 = vpop.xlane.xlu0 %283
  %285 = vadd.xlane.f32.xlu0 %v276
  %v286 = vpop.xlane.xlu0 %285
  %287 = vadd.xlane.f32.xlu0 %v277
  %v288 = vpop.xlane.xlu0 %287
  %289 = vadd.xlane.f32.xlu0 %v278
  %v290 = vpop.xlane.xlu0 %289
  %v291 = vrcp.pop 128.0
  %v292 = vmul.f32 %v282, %v291
  %v293 = vmul.f32 %v284, %v291
  %v294 = vmul.f32 %v286, %v291
  %v295 = vmul.f32 %v288, %v291
  %v296 = vmul.f32 %v290, %v291
  %v297 = vsub.f32 %v274, %v292
  %v298 = vsub.f32 %v275, %v293
  %v299 = vsub.f32 %v276, %v294
  %v300 = vsub.f32 %v277, %v295
  %v301 = vsub.f32 %v278, %v296
  %v302 = vmul.f32 %v297, %v297
  %v303 = vmul.f32 %v298, %v298
  %v304 = vmul.f32 %v299, %v299
  %v305 = vmul.f32 %v300, %v300
  %v306 = vmul.f32 %v301, %v301
  %307 = vadd.xlane.f32.xlu0 %v302
  %v308 = vpop.xlane.xlu0 %307
  %309 = vadd.xlane.f32.xlu0 %v303
  %v310 = vpop.xlane.xlu0 %309
  %311 = vadd.xlane.f32.xlu0 %v304
  %v312 = vpop.xlane.xlu0 %311
  %313 = vadd.xlane.f32.xlu0 %v305
  %v314 = vpop.xlane.xlu0 %313
  %315 = vadd.xlane.f32.xlu0 %v306
  %v316 = vpop.xlane.xlu0 %315
  %v317 = vmul.f32 %v308, %v291
  %v318 = vmul.f32 %v310, %v291
  %v319 = vmul.f32 %v312, %v291
  %v320 = vmul.f32 %v314, %v291
  %v321 = vmul.f32 %v316, %v291
  %v322 = vadd.f32 %v317, 1e-12
  %v323 = vadd.f32 %v318, 1e-12
  %v324 = vadd.f32 %v319, 1e-12
  %v325 = vadd.f32 %v320, 1e-12
  %v326 = vadd.f32 %v321, 1e-12
  %v327 = vrsqrt.pop %v322
  %v328 = vrsqrt.pop %v323
  %v329 = vrsqrt.pop %v324
  %v330 = vrsqrt.pop %v325
  %v331 = vrsqrt.pop %v326
  %v332 = vmul.f32 %v297, %v327
  %v333 = vmul.f32 %v298, %v328
  %v334 = vmul.f32 %v299, %v329
  %v335 = vmul.f32 %v300, %v330
  %v336 = vmul.f32 %v301, %v331
  %v338 = vlaneseq
  %v339 = vshrl.u32 %v338, 7
  %v340 = vsub.s32 0, %v339
  %v341 = vrot.slane %v279, %v340
  %v343 = vmul.f32 %v332, %v341
  %v344 = vmul.f32 %v333, %v341
  %v345 = vmul.f32 %v334, %v341
  %v346 = vmul.f32 %v335, %v341
  %v347 = vmul.f32 %v336, %v341
  %v349 = vlaneseq
  %v350 = vshrl.u32 %v349, 7
  %v351 = vsub.s32 0, %v350
  %v352 = vrot.slane %v280, %v351
  %v354 = vadd.f32 %v343, %v352
  %v355 = vadd.f32 %v344, %v352
  %v356 = vadd.f32 %v345, %v352
  %v357 = vadd.f32 %v346, %v352
  %v358 = vadd.f32 %v347, %v352
  %v359 = vld [vmem:[%s5] sm:$0xff]
  %v360 = vld [vmem:[%s5 + $0x8] sm:$0xff]
  %v361 = vld [vmem:[%s5 + $0x10] sm:$0xff]
  %v362 = vld [vmem:[%s5 + $0x18] sm:$0xff]
  %v363 = vld [vmem:[%s5 + $0x20] sm:$0xff]
  %v364 = vld [vmem:[%s5 + $0x28] sm:$0xff]
  %v365 = vld [vmem:[%s5 + $0x30] sm:$0xff]
  %v366 = vld [vmem:[%s5 + $0x38] sm:$0xff]
  %v367 = vld [vmem:[%s5 + $0x40] sm:$0xff]
  %v368 = vld [vmem:[%s5 + $0x48] sm:$0xff]
  %v369 = vld [vmem:[%s5 + $0x50] sm:$0xff]
  %v370 = vld [vmem:[%s5 + $0x58] sm:$0xff]
  %v371 = vld [vmem:[%s5 + $0x60] sm:$0xff]
  %v372 = vld [vmem:[%s5 + $0x68] sm:$0xff]
  %v373 = vld [vmem:[%s5 + $0x70] sm:$0xff]
  %v374 = vld [vmem:[%s5 + $0x78] sm:$0xff]
  %v375 = vld [vmem:[%s6] sm:$0x1]
  %v377 = vlaneseq
  %v378 = vshrl.u32 %v377, 7
  %v379 = vsub.s32 0, %v378
  %v380 = vrot.slane %v375, %v379
  %382 = vmatprep.subr.mxu0 0.0
  %383 = vmatpush1.xpose.msra.mxu0 %v359
  %384 = vmatprep.subr.mxu0 0.0
  %385 = vmatpush1.xpose.msra.mxu0 %v360
  %386 = vmatprep.subr.mxu0 0.0
  %387 = vmatpush1.xpose.msra.mxu0 %v361
  %388 = vmatprep.subr.mxu0 0.0
  %389 = vmatpush1.xpose.msra.mxu0 %v362
  %390 = vmatprep.subr.mxu0 0.0
  %391 = vmatpush1.xpose.msra.mxu0 %v363
  %392 = vmatprep.subr.mxu0 0.0
  %393 = vmatpush1.xpose.msra.mxu0 %v364
  %394 = vmatprep.subr.mxu0 0.0
  %395 = vmatpush1.xpose.msra.mxu0 %v365
  %396 = vmatprep.subr.mxu0 0.0
  %397 = vmatpush1.xpose.msra.mxu0 %v366
  %398 = vmatprep.subr.mxu0 0.0
  %399 = vmatpush1.xpose.msra.mxu0 %v367
  %400 = vmatprep.subr.mxu0 0.0
  %401 = vmatpush1.xpose.msra.mxu0 %v368
  %402 = vmatprep.subr.mxu0 0.0
  %403 = vmatpush1.xpose.msra.mxu0 %v369
  %404 = vmatprep.subr.mxu0 0.0
  %405 = vmatpush1.xpose.msra.mxu0 %v370
  %406 = vmatprep.subr.mxu0 0.0
  %407 = vmatpush1.xpose.msra.mxu0 %v371
  %408 = vmatprep.subr.mxu0 0.0
  %409 = vmatpush1.xpose.msra.mxu0 %v372
  %410 = vmatprep.subr.mxu0 0.0
  %411 = vmatpush1.xpose.msra.mxu0 %v373
  %412 = vmatprep.subr.mxu0 0.0
  %413 = vmatpush1.xpose.msra.mxu0 %v374
  %414 = vmatprep.subr.mxu0 0.0
  %415 = vmatpush1.xpose.msra.mxu0 0.0
  %416 = vmatprep.subr.mxu0 0.0
  %417 = vmatpush1.xpose.msra.mxu0 0.0
  %418 = vmatprep.subr.mxu0 0.0
  %419 = vmatpush1.xpose.msra.mxu0 0.0
  %420 = vmatprep.subr.mxu0 0.0
  %421 = vmatpush1.xpose.msra.mxu0 0.0
  %422 = vmatprep.subr.mxu0 0.0
  %423 = vmatpush1.xpose.msra.mxu0 0.0
  %424 = vmatprep.subr.mxu0 0.0
  %425 = vmatpush1.xpose.msra.mxu0 0.0
  %426 = vmatprep.subr.mxu0 0.0
  %427 = vmatpush1.xpose.msra.mxu0 0.0
  %428 = vmatprep.subr.mxu0 0.0
  %429 = vmatpush1.xpose.msra.mxu0 0.0
  %430 = vmatprep.subr.mxu0 0.0
  %431 = vmatpush1.xpose.msra.mxu0 0.0
  %432 = vmatprep.subr.mxu0 0.0
  %433 = vmatpush1.xpose.msra.mxu0 0.0
  %434 = vmatprep.subr.mxu0 0.0
  %435 = vmatpush1.xpose.msra.mxu0 0.0
  %436 = vmatprep.subr.mxu0 0.0
  %437 = vmatpush1.xpose.msra.mxu0 0.0
  %438 = vmatprep.subr.mxu0 0.0
  %439 = vmatpush1.xpose.msra.mxu0 0.0
  %440 = vmatprep.subr.mxu0 0.0
  %441 = vmatpush1.xpose.msra.mxu0 0.0
  %442 = vmatprep.subr.mxu0 0.0
  %443 = vmatpush1.xpose.msra.mxu0 0.0
  %444 = vmatprep.subr.mxu0 0.0
  %445 = vmatpush1.xpose.msra.mxu0 0.0
  %446 = vmatprep.mubr.f32.mxu0 0.0
  %447 = vmatmul.mubr.f32.gmra.mrb[0].mxu0 %v354
  %v448 = vpop.f32.mrb[0].mxu0
  %v449 = vadd.f32 %v380, %v448
  %v450 = vpop.f32.mrb[0].mxu0
  %451 = vmatprep.mubr.f32.mxu0 0.0
  %452 = vmatmul.mubr.f32.gmra.mrb[0].mxu0 %v355
  %v453 = vpop.f32.mrb[0].mxu0
  %v454 = vadd.f32 %v380, %v453
  %v455 = vpop.f32.mrb[0].mxu0
  %456 = vmatprep.mubr.f32.mxu0 0.0
  %457 = vmatmul.mubr.f32.gmra.mrb[0].mxu0 %v356
  %v458 = vpop.f32.mrb[0].mxu0
  %v459 = vadd.f32 %v380, %v458
  %v460 = vpop.f32.mrb[0].mxu0
  %461 = vmatprep.mubr.f32.mxu0 0.0
  %462 = vmatmul.mubr.f32.gmra.mrb[0].mxu0 %v357
  %v463 = vpop.f32.mrb[0].mxu0
  %v464 = vadd.f32 %v380, %v463
  %v465 = vpop.f32.mrb[0].mxu0
  %466 = vmatprep.mubr.f32.mxu0 0.0
  %467 = vmatmul.mubr.f32.gmra.mrb[0].mxu0 %v358
  %v468 = vpop.f32.mrb[0].mxu0
  %v469 = vadd.f32 %v380, %v468
  %v470 = vpop.f32.mrb[0].mxu0
  %471 = vdwg.mxu0
  %472 = vst [vmem:[%s7] sm:$0xff] %v449
  %473 = vst [vmem:[%s7 + $0x8] sm:$0xff] %v454
  %474 = vst [vmem:[%s7 + $0x10] sm:$0xff] %v459
  %475 = vst [vmem:[%s7 + $0x18] sm:$0xff] %v464
  %476 = vst [vmem:[%s7 + $0x20] sm:$0xff] %v469
  // Predicated region
  $region30: #{maskgit_image2rgb_forward.7} parent=0 // pred_check
    _
  $region31: #{maskgit_image2rgb_forward.7} parent=0 // pred_check_branch
    %478 = sbr.rel (0) target = $region33
  $region32: #{maskgit_image2rgb_forward.7} parent=0 // pred_region
    _
  $region33: #{maskgit_image2rgb_forward.7} parent=0 // pred_fallthru
    _
  // Predicated region
  $region34: #{maskgit_image2rgb_forward.7} parent=0 // pred_check
    _
  $region35: #{maskgit_image2rgb_forward.7} parent=0 // pred_check_branch
    %480 = sbr.rel (0) target = $region37
  $region36: #{maskgit_image2rgb_forward.7} parent=0 // pred_region
    _
  $region37: #{maskgit_image2rgb_forward.7} parent=0 // pred_fallthru
    _

// kernel: maskgit_image2rgb_forward.5
$region0: #{maskgit_image2rgb_forward.5}
  #allocation0 [shape = 'u32[]', space=smem, size = 0x4, offset = 0x4, fixed_abs, tag = 'smem constant byte address 0x4 - core index']
  #allocation1 [shape = 'u32[144,128]{1,0:T(1,128)}', space=vmem, size = 0x12000, scoped, tag = 'internal scratch']
  %s0 = inlined_call_operand.vmem [shape: f32[2,17,128], index: 0, kind: input, shape index: {}]
  %s1 = inlined_call_operand.vmem [shape: f32[4,128,32], index: 1, kind: input, shape index: {}]
  %s2 = inlined_call_operand.vmem [shape: f32[4,1,32], index: 2, kind: input, shape index: {}]
  %s3 = inlined_call_operand.vmem [shape: f32[4,128,32], index: 3, kind: input, shape index: {}]
  %s4 = inlined_call_operand.vmem [shape: f32[4,1,32], index: 4, kind: input, shape index: {}]
  %s5 = inlined_call_operand.vmem [shape: f32[4,128,32], index: 5, kind: input, shape index: {}]
  %s6 = inlined_call_operand.vmem [shape: f32[4,1,32], index: 6, kind: input, shape index: {}]
  %s7 = inlined_call_operand.vmem [shape: f32[4,32,128], index: 7, kind: input, shape index: {}]
  %s8 = inlined_call_operand.vmem [shape: f32[1,128], index: 8, kind: input, shape index: {}]
  %s9 = inlined_call_operand.vmem [shape: f32[1,128], index: 9, kind: input, shape index: {}]
  %s10 = inlined_call_operand.vmem [shape: f32[1,128], index: 10, kind: input, shape index: {}]
  %s11 = inlined_call_operand.vmem [shape: f32[128,512], index: 11, kind: input, shape index: {}]
  %s12 = inlined_call_operand.vmem [shape: f32[1,512], index: 12, kind: input, shape index: {}]
  %s13 = inlined_call_operand.vmem [shape: f32[512,128], index: 13, kind: input, shape index: {}]
  %s14 = inlined_call_operand.vmem [shape: f32[1,128], index: 14, kind: input, shape index: {}]
  %s15 = inlined_call_operand.vmem [shape: f32[1,128], index: 15, kind: input, shape index: {}]
  %s16 = inlined_call_operand.vmem [shape: f32[1,128], index: 16, kind: input, shape index: {}]
  %s17 = inlined_call_operand.vmem [shape: f32[2,17,128], index: 17, kind: output, shape index: {}]
  %s18 = sld [smem:[#allocation0]]
  $region101: #{maskgit_image2rgb_forward.5} parent=0
    _
  %s20 = ssub.s32 1, %s18
  %s21 = scalar_select 0, %s20, %s18
  loop: start=0, step=1, limit=4
  $region2: #{maskgit_image2rgb_forward.5} parent=0 // loop_pre_header
    _
  $region3: #{maskgit_image2rgb_forward.5} parent=0 // loop_header
    %s23 = sphi 0, %s27
    %p24 = scmp.ge.s32.totalorder %s23, 4
    %s33 = sphi 0, %s35
    %s36 = sphi 0, %s33
    %s37 = sphi 0, %s36
    %s53 = sphi 0, %s37
    %s57 = sphi 0, %s57
    %s59 = sphi 0, %s57
    %s60 = sphi 0, %s59
    %s74 = sphi 0, %s60
    %s78 = sphi 0, %s78
    %s80 = sphi 0, %s78
    %s81 = sphi 0, %s80
    %s95 = sphi 0, %s81
    %s99 = sphi 0, %s99
    %s101 = sphi 0, %s99
    %s102 = sphi 0, %s101
    %s116 = sphi 0, %s102
    %s120 = sphi 0, %s120
    %s122 = sphi 0, %s120
    %s123 = sphi 0, %s122
    %s137 = sphi 0, %s123
    %s141 = sphi 0, %s141
    %s143 = sphi 0, %s141
    %s144 = sphi 0, %s143
    %s158 = sphi 0, %s144
    %s162 = sphi 0, %s162
    %s164 = sphi 0, %s162
    %s165 = sphi 0, %s164
    %s179 = sphi 0, %s165
    %s183 = sphi 0, %s183
    %s185 = sphi 0, %s183
    %s186 = sphi 0, %s185
    %s200 = sphi 0, %s186
    %s204 = sphi 0, %s204
    %s206 = sphi 0, %s204
    %s207 = sphi 0, %s206
    %s221 = sphi 0, %s207
    %s225 = sphi 0, %s225
    %s227 = sphi 0, %s225
    %s228 = sphi 0, %s227
    %s242 = sphi 0, %s228
    %s246 = sphi 0, %s246
    %s248 = sphi 0, %s246
    %s249 = sphi 0, %s248
    %s263 = sphi 0, %s249
    %s267 = sphi 0, %s267
    %s269 = sphi 0, %s267
    %s270 = sphi 0, %s269
    %s284 = sphi 0, %s270
    %s288 = sphi 0, %s288
    %s290 = sphi 0, %s288
    %s291 = sphi 0, %s290
    %s305 = sphi 0, %s291
    %s309 = sphi 0, %s309
    %s311 = sphi 0, %s309
    %s312 = sphi 0, %s311
    %s326 = sphi 0, %s312
    %s330 = sphi 0, %s330
    %s332 = sphi 0, %s330
    %s333 = sphi 0, %s332
    %s347 = sphi 0, %s333
    %s351 = sphi 0, %s351
    %s353 = sphi 0, %s351
    %s354 = sphi 0, %s353
    %s368 = sphi 0, %s354
    %s372 = sphi 0, %s372
    %s374 = sphi 0, %s372
    %s375 = sphi 0, %s374
    %s389 = sphi 0, %s375
    %s395 = sphi 0, %s397
    %s398 = sphi 0, %s395
    %s399 = sphi 0, %s398
    %s415 = sphi 0, %s399
  $region4: #{maskgit_image2rgb_forward.5} parent=0 // loop_header_branch
    %26 = sbr.rel (%p24) target = $region8
  $region5: #{maskgit_image2rgb_forward.5} parent=0 // loop_body
    %s28 = ssub.s32 %s23, 1
    %s29 = ssub.s32 %s23, 2
    %s30 = sadd.s32 %s23, 1
    %s31 = ssub.s32 %s23, %s30
    %p32 = scmp.eq.s32.totalorder %s31, 0
    %s34 = sadd.s32 %s33, 1
    %s35 = scalar_select %p32, %s33, %s34
    %p38 = pneg %p32
    %p39 = scmp.eq.s32.totalorder %s23, 1
    %p40 = por %p38, %p39
    %p41 = scmp.ne.s32.totalorder %s33, %s36
    %p42 = scmp.eq.s32.totalorder %s23, 0
    %p43 = por %p41, %p42
    %p44 = scmp.ne.s32.totalorder %s33, %s36
    %p45 = scmp.eq.s32.totalorder %s28, 1
    %p46 = por %p44, %p45
    %p47 = scmp.ne.s32.totalorder %s36, %s37
    %p48 = scmp.eq.s32.totalorder %s28, 0
    %p49 = por %p47, %p48
    %p50 = scmp.ne.s32.totalorder %s36, %s37
    %p51 = scmp.eq.s32.totalorder %s29, 1
    %p52 = por %p50, %p51
    %p54 = scmp.ne.s32.totalorder %s37, %s53
    %p55 = scmp.eq.s32.totalorder %s29, 0
    %p56 = por %p54, %p55
    %s58 = sadd.s32 %s57, 1
    %p61 = scmp.eq.s32.totalorder %s23, 1
    %p62 = scmp.ne.s32.totalorder %s57, %s59
    %p63 = scmp.eq.s32.totalorder %s23, 0
    %p64 = por %p62, %p63
    %p65 = scmp.ne.s32.totalorder %s57, %s59
    %p66 = scmp.eq.s32.totalorder %s28, 1
    %p67 = por %p65, %p66
    %p68 = scmp.ne.s32.totalorder %s59, %s60
    %p69 = scmp.eq.s32.totalorder %s28, 0
    %p70 = por %p68, %p69
    %p71 = scmp.ne.s32.totalorder %s59, %s60
    %p72 = scmp.eq.s32.totalorder %s29, 1
    %p73 = por %p71, %p72
    %p75 = scmp.ne.s32.totalorder %s60, %s74
    %p76 = scmp.eq.s32.totalorder %s29, 0
    %p77 = por %p75, %p76
    %s79 = sadd.s32 %s78, 1
    %p82 = scmp.eq.s32.totalorder %s23, 1
    %p83 = scmp.ne.s32.totalorder %s78, %s80
    %p84 = scmp.eq.s32.totalorder %s23, 0
    %p85 = por %p83, %p84
    %p86 = scmp.ne.s32.totalorder %s78, %s80
    %p87 = scmp.eq.s32.totalorder %s28, 1
    %p88 = por %p86, %p87
    %p89 = scmp.ne.s32.totalorder %s80, %s81
    %p90 = scmp.eq.s32.totalorder %s28, 0
    %p91 = por %p89, %p90
    %p92 = scmp.ne.s32.totalorder %s80, %s81
    %p93 = scmp.eq.s32.totalorder %s29, 1
    %p94 = por %p92, %p93
    %p96 = scmp.ne.s32.totalorder %s81, %s95
    %p97 = scmp.eq.s32.totalorder %s29, 0
    %p98 = por %p96, %p97
    %s100 = sadd.s32 %s99, 1
    %p103 = scmp.eq.s32.totalorder %s23, 1
    %p104 = scmp.ne.s32.totalorder %s99, %s101
    %p105 = scmp.eq.s32.totalorder %s23, 0
    %p106 = por %p104, %p105
    %p107 = scmp.ne.s32.totalorder %s99, %s101
    %p108 = scmp.eq.s32.totalorder %s28, 1
    %p109 = por %p107, %p108
    %p110 = scmp.ne.s32.totalorder %s101, %s102
    %p111 = scmp.eq.s32.totalorder %s28, 0
    %p112 = por %p110, %p111
    %p113 = scmp.ne.s32.totalorder %s101, %s102
    %p114 = scmp.eq.s32.totalorder %s29, 1
    %p115 = por %p113, %p114
    %p117 = scmp.ne.s32.totalorder %s102, %s116
    %p118 = scmp.eq.s32.totalorder %s29, 0
    %p119 = por %p117, %p118
    %s121 = sadd.s32 %s120, 1
    %p124 = scmp.eq.s32.totalorder %s23, 1
    %p125 = scmp.ne.s32.totalorder %s120, %s122
    %p126 = scmp.eq.s32.totalorder %s23, 0
    %p127 = por %p125, %p126
    %p128 = scmp.ne.s32.totalorder %s120, %s122
    %p129 = scmp.eq.s32.totalorder %s28, 1
    %p130 = por %p128, %p129
    %p131 = scmp.ne.s32.totalorder %s122, %s123
    %p132 = scmp.eq.s32.totalorder %s28, 0
    %p133 = por %p131, %p132
    %p134 = scmp.ne.s32.totalorder %s122, %s123
    %p135 = scmp.eq.s32.totalorder %s29, 1
    %p136 = por %p134, %p135
    %p138 = scmp.ne.s32.totalorder %s123, %s137
    %p139 = scmp.eq.s32.totalorder %s29, 0
    %p140 = por %p138, %p139
    %s142 = sadd.s32 %s141, 1
    %p145 = scmp.eq.s32.totalorder %s23, 1
    %p146 = scmp.ne.s32.totalorder %s141, %s143
    %p147 = scmp.eq.s32.totalorder %s23, 0
    %p148 = por %p146, %p147
    %p149 = scmp.ne.s32.totalorder %s141, %s143
    %p150 = scmp.eq.s32.totalorder %s28, 1
    %p151 = por %p149, %p150
    %p152 = scmp.ne.s32.totalorder %s143, %s144
    %p153 = scmp.eq.s32.totalorder %s28, 0
    %p154 = por %p152, %p153
    %p155 = scmp.ne.s32.totalorder %s143, %s144
    %p156 = scmp.eq.s32.totalorder %s29, 1
    %p157 = por %p155, %p156
    %p159 = scmp.ne.s32.totalorder %s144, %s158
    %p160 = scmp.eq.s32.totalorder %s29, 0
    %p161 = por %p159, %p160
    %s163 = sadd.s32 %s162, 1
    %p166 = scmp.eq.s32.totalorder %s23, 1
    %p167 = scmp.ne.s32.totalorder %s162, %s164
    %p168 = scmp.eq.s32.totalorder %s23, 0
    %p169 = por %p167, %p168
    %p170 = scmp.ne.s32.totalorder %s162, %s164
    %p171 = scmp.eq.s32.totalorder %s28, 1
    %p172 = por %p170, %p171
    %p173 = scmp.ne.s32.totalorder %s164, %s165
    %p174 = scmp.eq.s32.totalorder %s28, 0
    %p175 = por %p173, %p174
    %p176 = scmp.ne.s32.totalorder %s164, %s165
    %p177 = scmp.eq.s32.totalorder %s29, 1
    %p178 = por %p176, %p177
    %p180 = scmp.ne.s32.totalorder %s165, %s179
    %p181 = scmp.eq.s32.totalorder %s29, 0
    %p182 = por %p180, %p181
    %s184 = sadd.s32 %s183, 1
    %p187 = scmp.eq.s32.totalorder %s23, 1
    %p188 = scmp.ne.s32.totalorder %s183, %s185
    %p189 = scmp.eq.s32.totalorder %s23, 0
    %p190 = por %p188, %p189
    %p191 = scmp.ne.s32.totalorder %s183, %s185
    %p192 = scmp.eq.s32.totalorder %s28, 1
    %p193 = por %p191, %p192
    %p194 = scmp.ne.s32.totalorder %s185, %s186
    %p195 = scmp.eq.s32.totalorder %s28, 0
    %p196 = por %p194, %p195
    %p197 = scmp.ne.s32.totalorder %s185, %s186
    %p198 = scmp.eq.s32.totalorder %s29, 1
    %p199 = por %p197, %p198
    %p201 = scmp.ne.s32.totalorder %s186, %s200
    %p202 = scmp.eq.s32.totalorder %s29, 0
    %p203 = por %p201, %p202
    %s205 = sadd.s32 %s204, 1
    %p208 = scmp.eq.s32.totalorder %s23, 1
    %p209 = scmp.ne.s32.totalorder %s204, %s206
    %p210 = scmp.eq.s32.totalorder %s23, 0
    %p211 = por %p209, %p210
    %p212 = scmp.ne.s32.totalorder %s204, %s206
    %p213 = scmp.eq.s32.totalorder %s28, 1
    %p214 = por %p212, %p213
    %p215 = scmp.ne.s32.totalorder %s206, %s207
    %p216 = scmp.eq.s32.totalorder %s28, 0
    %p217 = por %p215, %p216
    %p218 = scmp.ne.s32.totalorder %s206, %s207
    %p219 = scmp.eq.s32.totalorder %s29, 1
    %p220 = por %p218, %p219
    %p222 = scmp.ne.s32.totalorder %s207, %s221
    %p223 = scmp.eq.s32.totalorder %s29, 0
    %p224 = por %p222, %p223
    %s226 = sadd.s32 %s225, 1
    %p229 = scmp.eq.s32.totalorder %s23, 1
    %p230 = scmp.ne.s32.totalorder %s225, %s227
    %p231 = scmp.eq.s32.totalorder %s23, 0
    %p232 = por %p230, %p231
    %p233 = scmp.ne.s32.totalorder %s225, %s227
    %p234 = scmp.eq.s32.totalorder %s28, 1
    %p235 = por %p233, %p234
    %p236 = scmp.ne.s32.totalorder %s227, %s228
    %p237 = scmp.eq.s32.totalorder %s28, 0
    %p238 = por %p236, %p237
    %p239 = scmp.ne.s32.totalorder %s227, %s228
    %p240 = scmp.eq.s32.totalorder %s29, 1
    %p241 = por %p239, %p240
    %p243 = scmp.ne.s32.totalorder %s228, %s242
    %p244 = scmp.eq.s32.totalorder %s29, 0
    %p245 = por %p243, %p244
    %s247 = sadd.s32 %s246, 1
    %p250 = scmp.eq.s32.totalorder %s23, 1
    %p251 = scmp.ne.s32.totalorder %s246, %s248
    %p252 = scmp.eq.s32.totalorder %s23, 0
    %p253 = por %p251, %p252
    %p254 = scmp.ne.s32.totalorder %s246, %s248
    %p255 = scmp.eq.s32.totalorder %s28, 1
    %p256 = por %p254, %p255
    %p257 = scmp.ne.s32.totalorder %s248, %s249
    %p258 = scmp.eq.s32.totalorder %s28, 0
    %p259 = por %p257, %p258
    %p260 = scmp.ne.s32.totalorder %s248, %s249
    %p261 = scmp.eq.s32.totalorder %s29, 1
    %p262 = por %p260, %p261
    %p264 = scmp.ne.s32.totalorder %s249, %s263
    %p265 = scmp.eq.s32.totalorder %s29, 0
    %p266 = por %p264, %p265
    %s268 = sadd.s32 %s267, 1
    %p271 = scmp.eq.s32.totalorder %s23, 1
    %p272 = scmp.ne.s32.totalorder %s267, %s269
    %p273 = scmp.eq.s32.totalorder %s23, 0
    %p274 = por %p272, %p273
    %p275 = scmp.ne.s32.totalorder %s267, %s269
    %p276 = scmp.eq.s32.totalorder %s28, 1
    %p277 = por %p275, %p276
    %p278 = scmp.ne.s32.totalorder %s269, %s270
    %p279 = scmp.eq.s32.totalorder %s28, 0
    %p280 = por %p278, %p279
    %p281 = scmp.ne.s32.totalorder %s269, %s270
    %p282 = scmp.eq.s32.totalorder %s29, 1
    %p283 = por %p281, %p282
    %p285 = scmp.ne.s32.totalorder %s270, %s284
    %p286 = scmp.eq.s32.totalorder %s29, 0
    %p287 = por %p285, %p286
    %s289 = sadd.s32 %s288, 1
    %p292 = scmp.eq.s32.totalorder %s23, 1
    %p293 = scmp.ne.s32.totalorder %s288, %s290
    %p294 = scmp.eq.s32.totalorder %s23, 0
    %p295 = por %p293, %p294
    %p296 = scmp.ne.s32.totalorder %s288, %s290
    %p297 = scmp.eq.s32.totalorder %s28, 1
    %p298 = por %p296, %p297
    %p299 = scmp.ne.s32.totalorder %s290, %s291
    %p300 = scmp.eq.s32.totalorder %s28, 0
    %p301 = por %p299, %p300
    %p302 = scmp.ne.s32.totalorder %s290, %s291
    %p303 = scmp.eq.s32.totalorder %s29, 1
    %p304 = por %p302, %p303
    %p306 = scmp.ne.s32.totalorder %s291, %s305
    %p307 = scmp.eq.s32.totalorder %s29, 0
    %p308 = por %p306, %p307
    %s310 = sadd.s32 %s309, 1
    %p313 = scmp.eq.s32.totalorder %s23, 1
    %p314 = scmp.ne.s32.totalorder %s309, %s311
    %p315 = scmp.eq.s32.totalorder %s23, 0
    %p316 = por %p314, %p315
    %p317 = scmp.ne.s32.totalorder %s309, %s311
    %p318 = scmp.eq.s32.totalorder %s28, 1
    %p319 = por %p317, %p318
    %p320 = scmp.ne.s32.totalorder %s311, %s312
    %p321 = scmp.eq.s32.totalorder %s28, 0
    %p322 = por %p320, %p321
    %p323 = scmp.ne.s32.totalorder %s311, %s312
    %p324 = scmp.eq.s32.totalorder %s29, 1
    %p325 = por %p323, %p324
    %p327 = scmp.ne.s32.totalorder %s312, %s326
    %p328 = scmp.eq.s32.totalorder %s29, 0
    %p329 = por %p327, %p328
    %s331 = sadd.s32 %s330, 1
    %p334 = scmp.eq.s32.totalorder %s23, 1
    %p335 = scmp.ne.s32.totalorder %s330, %s332
    %p336 = scmp.eq.s32.totalorder %s23, 0
    %p337 = por %p335, %p336
    %p338 = scmp.ne.s32.totalorder %s330, %s332
    %p339 = scmp.eq.s32.totalorder %s28, 1
    %p340 = por %p338, %p339
    %p341 = scmp.ne.s32.totalorder %s332, %s333
    %p342 = scmp.eq.s32.totalorder %s28, 0
    %p343 = por %p341, %p342
    %p344 = scmp.ne.s32.totalorder %s332, %s333
    %p345 = scmp.eq.s32.totalorder %s29, 1
    %p346 = por %p344, %p345
    %p348 = scmp.ne.s32.totalorder %s333, %s347
    %p349 = scmp.eq.s32.totalorder %s29, 0
    %p350 = por %p348, %p349
    %s352 = sadd.s32 %s351, 1
    %p355 = scmp.eq.s32.totalorder %s23, 1
    %p356 = scmp.ne.s32.totalorder %s351, %s353
    %p357 = scmp.eq.s32.totalorder %s23, 0
    %p358 = por %p356, %p357
    %p359 = scmp.ne.s32.totalorder %s351, %s353
    %p360 = scmp.eq.s32.totalorder %s28, 1
    %p361 = por %p359, %p360
    %p362 = scmp.ne.s32.totalorder %s353, %s354
    %p363 = scmp.eq.s32.totalorder %s28, 0
    %p364 = por %p362, %p363
    %p365 = scmp.ne.s32.totalorder %s353, %s354
    %p366 = scmp.eq.s32.totalorder %s29, 1
    %p367 = por %p365, %p366
    %p369 = scmp.ne.s32.totalorder %s354, %s368
    %p370 = scmp.eq.s32.totalorder %s29, 0
    %p371 = por %p369, %p370
    %s373 = sadd.s32 %s372, 1
    %p376 = scmp.eq.s32.totalorder %s23, 1
    %p377 = scmp.ne.s32.totalorder %s372, %s374
    %p378 = scmp.eq.s32.totalorder %s23, 0
    %p379 = por %p377, %p378
    %p380 = scmp.ne.s32.totalorder %s372, %s374
    %p381 = scmp.eq.s32.totalorder %s28, 1
    %p382 = por %p380, %p381
    %p383 = scmp.ne.s32.totalorder %s374, %s375
    %p384 = scmp.eq.s32.totalorder %s28, 0
    %p385 = por %p383, %p384
    %p386 = scmp.ne.s32.totalorder %s374, %s375
    %p387 = scmp.eq.s32.totalorder %s29, 1
    %p388 = por %p386, %p387
    %p390 = scmp.ne.s32.totalorder %s375, %s389
    %p391 = scmp.eq.s32.totalorder %s29, 0
    %p392 = por %p390, %p391
    %s393 = ssub.s32 %s23, %s30
    %p394 = scmp.eq.s32.totalorder %s393, 0
    %s396 = sadd.s32 %s395, 1
    %s397 = scalar_select %p394, %s395, %s396
    %p400 = pneg %p394
    %p401 = scmp.eq.s32.totalorder %s23, 1
    %p402 = por %p400, %p401
    %p403 = scmp.ne.s32.totalorder %s395, %s398
    %p404 = scmp.eq.s32.totalorder %s23, 0
    %p405 = por %p403, %p404
    %p406 = scmp.ne.s32.totalorder %s395, %s398
    %p407 = scmp.eq.s32.totalorder %s28, 1
    %p408 = por %p406, %p407
    %p409 = scmp.ne.s32.totalorder %s398, %s399
    %p410 = scmp.eq.s32.totalorder %s28, 0
    %p411 = por %p409, %p410
    %p412 = scmp.ne.s32.totalorder %s398, %s399
    %p413 = scmp.eq.s32.totalorder %s29, 1
    %p414 = por %p412, %p413
    %p416 = scmp.ne.s32.totalorder %s399, %s415
    %p417 = scmp.eq.s32.totalorder %s29, 0
    %p418 = por %p416, %p417
    %p419 = scmp.le.s32.totalorder 1, %s23
    %p420 = scmp.lt.s32.totalorder %s23, 3
    %p421 = pnand %p419, %p420
    %p422 = pneg %p421
    // Predicated region
    $region9: #{maskgit_image2rgb_forward.5} parent=5 // pred_check
      _
    $region10: #{maskgit_image2rgb_forward.5} parent=5 // pred_check_branch
      %424 = sbr.rel (%p421) target = $region12
    $region11: #{maskgit_image2rgb_forward.5} parent=5 // pred_region
      %s425 = ssub.s32 %s23, 1
      // Predicated region
      $region13: #{maskgit_image2rgb_forward.5} parent=11 // pred_check
        %p426 = pneg %p70
      $region14: #{maskgit_image2rgb_forward.5} parent=11 // pred_check_branch
        %428 = sbr.rel (%p426) target = $region16
      $region15: #{maskgit_image2rgb_forward.5} parent=11 // pred_region
        _
      $region16: #{maskgit_image2rgb_forward.5} parent=11 // pred_fallthru
        _
      // Predicated region
      $region17: #{maskgit_image2rgb_forward.5} parent=11 // pred_check
        %p429 = pneg %p91
      $region18: #{maskgit_image2rgb_forward.5} parent=11 // pred_check_branch
        %431 = sbr.rel (%p429) target = $region20
      $region19: #{maskgit_image2rgb_forward.5} parent=11 // pred_region
        _
      $region20: #{maskgit_image2rgb_forward.5} parent=11 // pred_fallthru
        _
      // Predicated region
      $region21: #{maskgit_image2rgb_forward.5} parent=11 // pred_check
        %p432 = pneg %p112
      $region22: #{maskgit_image2rgb_forward.5} parent=11 // pred_check_branch
        %434 = sbr.rel (%p432) target = $region24
      $region23: #{maskgit_image2rgb_forward.5} parent=11 // pred_region
        _
      $region24: #{maskgit_image2rgb_forward.5} parent=11 // pred_fallthru
        _
      // Predicated region
      $region25: #{maskgit_image2rgb_forward.5} parent=11 // pred_check
        %p435 = pneg %p133
      $region26: #{maskgit_image2rgb_forward.5} parent=11 // pred_check_branch
        %437 = sbr.rel (%p435) target = $region28
      $region27: #{maskgit_image2rgb_forward.5} parent=11 // pred_region
        _
      $region28: #{maskgit_image2rgb_forward.5} parent=11 // pred_fallthru
        _
      // Predicated region
      $region29: #{maskgit_image2rgb_forward.5} parent=11 // pred_check
        %p438 = pneg %p154
      $region30: #{maskgit_image2rgb_forward.5} parent=11 // pred_check_branch
        %440 = sbr.rel (%p438) target = $region32
      $region31: #{maskgit_image2rgb_forward.5} parent=11 // pred_region
        _
      $region32: #{maskgit_image2rgb_forward.5} parent=11 // pred_fallthru
        _
      // Predicated region
      $region33: #{maskgit_image2rgb_forward.5} parent=11 // pred_check
        %p441 = pneg %p175
      $region34: #{maskgit_image2rgb_forward.5} parent=11 // pred_check_branch
        %443 = sbr.rel (%p441) target = $region36
      $region35: #{maskgit_image2rgb_forward.5} parent=11 // pred_region
        _
      $region36: #{maskgit_image2rgb_forward.5} parent=11 // pred_fallthru
        _
      // Predicated region
      $region37: #{maskgit_image2rgb_forward.5} parent=11 // pred_check
        %p444 = pneg %p196
      $region38: #{maskgit_image2rgb_forward.5} parent=11 // pred_check_branch
        %446 = sbr.rel (%p444) target = $region40
      $region39: #{maskgit_image2rgb_forward.5} parent=11 // pred_region
        _
      $region40: #{maskgit_image2rgb_forward.5} parent=11 // pred_fallthru
        _
      // Predicated region
      $region41: #{maskgit_image2rgb_forward.5} parent=11 // pred_check
        %p447 = pneg %p217
      $region42: #{maskgit_image2rgb_forward.5} parent=11 // pred_check_branch
        %449 = sbr.rel (%p447) target = $region44
      $region43: #{maskgit_image2rgb_forward.5} parent=11 // pred_region
        _
      $region44: #{maskgit_image2rgb_forward.5} parent=11 // pred_fallthru
        _
      // Predicated region
      $region45: #{maskgit_image2rgb_forward.5} parent=11 // pred_check
        %p450 = pneg %p238
      $region46: #{maskgit_image2rgb_forward.5} parent=11 // pred_check_branch
        %452 = sbr.rel (%p450) target = $region48
      $region47: #{maskgit_image2rgb_forward.5} parent=11 // pred_region
        _
      $region48: #{maskgit_image2rgb_forward.5} parent=11 // pred_fallthru
        _
      // Predicated region
      $region49: #{maskgit_image2rgb_forward.5} parent=11 // pred_check
        %p453 = pneg %p259
      $region50: #{maskgit_image2rgb_forward.5} parent=11 // pred_check_branch
        %455 = sbr.rel (%p453) target = $region52
      $region51: #{maskgit_image2rgb_forward.5} parent=11 // pred_region
        _
      $region52: #{maskgit_image2rgb_forward.5} parent=11 // pred_fallthru
        _
      // Predicated region
      $region53: #{maskgit_image2rgb_forward.5} parent=11 // pred_check
        %p456 = pneg %p280
      $region54: #{maskgit_image2rgb_forward.5} parent=11 // pred_check_branch
        %458 = sbr.rel (%p456) target = $region56
      $region55: #{maskgit_image2rgb_forward.5} parent=11 // pred_region
        _
      $region56: #{maskgit_image2rgb_forward.5} parent=11 // pred_fallthru
        _
      // Predicated region
      $region57: #{maskgit_image2rgb_forward.5} parent=11 // pred_check
        %p459 = pneg %p301
      $region58: #{maskgit_image2rgb_forward.5} parent=11 // pred_check_branch
        %461 = sbr.rel (%p459) target = $region60
      $region59: #{maskgit_image2rgb_forward.5} parent=11 // pred_region
        _
      $region60: #{maskgit_image2rgb_forward.5} parent=11 // pred_fallthru
        _
      // Predicated region
      $region61: #{maskgit_image2rgb_forward.5} parent=11 // pred_check
        %p462 = pneg %p322
      $region62: #{maskgit_image2rgb_forward.5} parent=11 // pred_check_branch
        %464 = sbr.rel (%p462) target = $region64
      $region63: #{maskgit_image2rgb_forward.5} parent=11 // pred_region
        _
      $region64: #{maskgit_image2rgb_forward.5} parent=11 // pred_fallthru
        _
      // Predicated region
      $region65: #{maskgit_image2rgb_forward.5} parent=11 // pred_check
        %p465 = pneg %p343
      $region66: #{maskgit_image2rgb_forward.5} parent=11 // pred_check_branch
        %467 = sbr.rel (%p465) target = $region68
      $region67: #{maskgit_image2rgb_forward.5} parent=11 // pred_region
        _
      $region68: #{maskgit_image2rgb_forward.5} parent=11 // pred_fallthru
        _
      // Predicated region
      $region69: #{maskgit_image2rgb_forward.5} parent=11 // pred_check
        %p468 = pneg %p364
      $region70: #{maskgit_image2rgb_forward.5} parent=11 // pred_check_branch
        %470 = sbr.rel (%p468) target = $region72
      $region71: #{maskgit_image2rgb_forward.5} parent=11 // pred_region
        _
      $region72: #{maskgit_image2rgb_forward.5} parent=11 // pred_fallthru
        _
      // Predicated region
      $region73: #{maskgit_image2rgb_forward.5} parent=11 // pred_check
        %p471 = pneg %p385
      $region74: #{maskgit_image2rgb_forward.5} parent=11 // pred_check_branch
        %473 = sbr.rel (%p471) target = $region76
      $region75: #{maskgit_image2rgb_forward.5} parent=11 // pred_region
        _
      $region76: #{maskgit_image2rgb_forward.5} parent=11 // pred_fallthru
        _
    $region12: #{maskgit_image2rgb_forward.5} parent=5 // pred_fallthru
      _
    %p474 = scmp.lt.s32.totalorder %s23, 2
    // Predicated region
    $region77: #{maskgit_image2rgb_forward.5} parent=5 // pred_check
      %p475 = pneg %p474
    $region78: #{maskgit_image2rgb_forward.5} parent=5 // pred_check_branch
      %477 = sbr.rel (%p475) target = $region80
    $region79: #{maskgit_image2rgb_forward.5} parent=5 // pred_region
      // Predicated region
      $region81: #{maskgit_image2rgb_forward.5} parent=79 // pred_check
        %p478 = pneg %p43
      $region82: #{maskgit_image2rgb_forward.5} parent=79 // pred_check_branch
        %480 = sbr.rel (%p478) target = $region84
      $region83: #{maskgit_image2rgb_forward.5} parent=79 // pred_region
        %p481 = scmp.lt.s32.totalorder %s23, 1
        %s482 = scalar_select %p481, %s23, 1
        %s483 = smul.addr %s482, 3
        %s484 = smul.addr %s483, 8
        %s485 = scalar_lea.vmem %s0, %s484
      $region84: #{maskgit_image2rgb_forward.5} parent=79 // pred_fallthru
        _
    $region80: #{maskgit_image2rgb_forward.5} parent=5 // pred_fallthru
      _
    %p486 = scmp.le.s32.totalorder 1, %s23
    %p487 = scmp.lt.s32.totalorder %s23, 3
    %p488 = pnand %p486, %p487
    %p489 = pneg %p488
    // Predicated region
    $region85: #{maskgit_image2rgb_forward.5} parent=5 // pred_check
      _
    $region86: #{maskgit_image2rgb_forward.5} parent=5 // pred_check_branch
      %491 = sbr.rel (%p488) target = $region88
    $region87: #{maskgit_image2rgb_forward.5} parent=5 // pred_region
      %s492 = ssub.s32 %s23, 1
      %p493 = scmp.lt.s32.totalorder %s28, 1
      %s494 = scalar_select %p493, %s28, 1
      %s495 = smul.addr %s494, 3
      %s496 = smul.addr %s495, 8
      %s497 = scalar_lea.vmem %s0, %s496
      %p498 = pneg %p49
      %p499 = pneg %p46
      %p500 = pneg %p70
      %p501 = pneg %p67
      %p502 = pneg %p91
      %p503 = pneg %p88
      %p504 = pneg %p112
      %p505 = pneg %p109
      %p506 = pneg %p133
      %p507 = pneg %p130
      %p508 = pneg %p154
      %p509 = pneg %p151
      %p510 = pneg %p175
      %p511 = pneg %p172
      %p512 = pneg %p196
      %p513 = pneg %p193
      %p514 = pneg %p217
      %p515 = pneg %p214
      %p516 = pneg %p238
      %p517 = pneg %p235
      %p518 = pneg %p259
      %p519 = pneg %p256
      %p520 = pneg %p280
      %p521 = pneg %p277
      %p522 = pneg %p301
      %p523 = pneg %p298
      %p524 = pneg %p322
      %p525 = pneg %p319
      %p526 = pneg %p343
      %p527 = pneg %p340
      %p528 = pneg %p364
      %p529 = pneg %p361
      %p530 = pneg %p385
      %p531 = pneg %p382
      %p532 = pneg %p411
      %p533 = pneg %p408
      %p534 = scmp.lt.s32.totalorder %s28, 1
      %s535 = scalar_select %p534, %s28, 1
      %s536 = smul.addr %s535, 3
      %s537 = smul.addr %s536, 8
      %s538 = scalar_lea.vmem %s17, %s537
      %p539 = scmp.lt.s32.totalorder %s28, 1
      %s540 = scalar_select %p539, %s28, 1
      %s541 = smul.addr %s540, 3
      %s542 = smul.addr %s541, 8
      %s543 = scalar_lea.vmem %s0, %s542
      %p544 = scmp.lt.s32.totalorder %s28, 1
      %s545 = scalar_select %p544, %s28, 1
      %s546 = smul.addr %s545, 3
      %s547 = smul.addr %s546, 8
      %s548 = scalar_lea.vmem %s17, %s547
      %v549 = vld [vmem:[%s543] sm:$0xff]
      %v550 = vld [vmem:[%s543 + $0x8] sm:$0xff]
      %v551 = vld [vmem:[%s543 + $0x10] sm:$0x1]
      %v552 = vld [vmem:[%s1] sm:$0xff]
      %v553 = vld [vmem:[%s1 + $0x8] sm:$0xff]
      %v554 = vld [vmem:[%s1 + $0x10] sm:$0xff]
      %v555 = vld [vmem:[%s1 + $0x18] sm:$0xff]
      %v556 = vld [vmem:[%s1 + $0x20] sm:$0xff]
      %v557 = vld [vmem:[%s1 + $0x28] sm:$0xff]
      %v558 = vld [vmem:[%s1 + $0x30] sm:$0xff]
      %v559 = vld [vmem:[%s1 + $0x38] sm:$0xff]
      %v560 = vld [vmem:[%s1 + $0x40] sm:$0xff]
      %v561 = vld [vmem:[%s1 + $0x48] sm:$0xff]
      %v562 = vld [vmem:[%s1 + $0x50] sm:$0xff]
      %v563 = vld [vmem:[%s1 + $0x58] sm:$0xff]
      %v564 = vld [vmem:[%s1 + $0x60] sm:$0xff]
      %v565 = vld [vmem:[%s1 + $0x68] sm:$0xff]
      %v566 = vld [vmem:[%s1 + $0x70] sm:$0xff]
      %v567 = vld [vmem:[%s1 + $0x78] sm:$0xff]
      %v568 = vld [vmem:[%s2] sm:$0x1]
      %v570 = vlaneseq
      %v571 = vshrl.u32 %v570, 7
      %v572 = vsub.s32 0, %v571
      %v573 = vrot.slane %v568, %v572
      %575 = vmatprep.subr.mxu0 0.0
      %576 = vmatpush1.msra.mxu0 %v552
      %577 = vmatprep.subr.mxu0 0.0
      %578 = vmatpush1.msra.mxu0 %v553
      %579 = vmatprep.subr.mxu0 0.0
      %580 = vmatpush1.msra.mxu0 %v554
      %581 = vmatprep.subr.mxu0 0.0
      %582 = vmatpush1.msra.mxu0 %v555
      %583 = vmatprep.subr.mxu0 0.0
      %584 = vmatpush1.msra.mxu0 %v556
      %585 = vmatprep.subr.mxu0 0.0
      %586 = vmatpush1.msra.mxu0 %v557
      %587 = vmatprep.subr.mxu0 0.0
      %588 = vmatpush1.msra.mxu0 %v558
      %589 = vmatprep.subr.mxu0 0.0
      %590 = vmatpush1.msra.mxu0 %v559
      %591 = vmatprep.subr.mxu0 0.0
      %592 = vmatpush1.msra.mxu0 %v560
      %593 = vmatprep.subr.mxu0 0.0
      %594 = vmatpush1.msra.mxu0 %v561
      %595 = vmatprep.subr.mxu0 0.0
      %596 = vmatpush1.msra.mxu0 %v562
      %597 = vmatprep.subr.mxu0 0.0
      %598 = vmatpush1.msra.mxu0 %v563
      %599 = vmatprep.subr.mxu0 0.0
      %600 = vmatpush1.msra.mxu0 %v564
      %601 = vmatprep.subr.mxu0 0.0
      %602 = vmatpush1.msra.mxu0 %v565
      %603 = vmatprep.subr.mxu0 0.0
      %604 = vmatpush1.msra.mxu0 %v566
      %605 = vmatprep.subr.mxu0 0.0
      %606 = vmatpush1.msra.mxu0 %v567
      %607 = vmatprep.subr.mxu0 0.0
      %608 = vmatpush1.msra.mxu0 0.0
      %609 = vmatprep.subr.mxu0 0.0
      %610 = vmatpush1.msra.mxu0 0.0
      %611 = vmatprep.subr.mxu0 0.0
      %612 = vmatpush1.msra.mxu0 0.0
      %613 = vmatprep.subr.mxu0 0.0
      %614 = vmatpush1.msra.mxu0 0.0
      %615 = vmatprep.subr.mxu0 0.0
      %616 = vmatpush1.msra.mxu0 0.0
      %617 = vmatprep.subr.mxu0 0.0
      %618 = vmatpush1.msra.mxu0 0.0
      %619 = vmatprep.subr.mxu0 0.0
      %620 = vmatpush1.msra.mxu0 0.0
      %621 = vmatprep.subr.mxu0 0.0
      %622 = vmatpush1.msra.mxu0 0.0
      %623 = vmatprep.subr.mxu0 0.0
      %624 = vmatpush1.msra.mxu0 0.0
      %625 = vmatprep.subr.mxu0 0.0
      %626 = vmatpush1.msra.mxu0 0.0
      %627 = vmatprep.subr.mxu0 0.0
      %628 = vmatpush1.msra.mxu0 0.0
      %629 = vmatprep.subr.mxu0 0.0
      %630 = vmatpush1.msra.mxu0 0.0
      %631 = vmatprep.subr.mxu0 0.0
      %632 = vmatpush1.msra.mxu0 0.0
      %633 = vmatprep.subr.mxu0 0.0
      %634 = vmatpush1.msra.mxu0 0.0
      %635 = vmatprep.subr.mxu0 0.0
      %636 = vmatpush1.msra.mxu0 0.0
      %637 = vmatprep.subr.mxu0 0.0
      %638 = vmatpush1.msra.mxu0 0.0
      %639 = vmatprep.mubr.f32.mxu0 0.0
      %640 = vmatmul.mubr.f32.gmra.mrb[0].mxu0 %v549
      %v641 = vpop.f32.mrb[0].mxu0
      %v642 = vadd.f32 %v573, %v641
      %v643 = vpop.f32.mrb[0].mxu0
      %644 = vmatprep.mubr.f32.mxu0 0.0
      %645 = vmatmul.mubr.f32.gmra.mrb[0].mxu0 %v550
      %v646 = vpop.f32.mrb[0].mxu0
      %v647 = vadd.f32 %v573, %v646
      %v648 = vpop.f32.mrb[0].mxu0
      %649 = vmatprep.mubr.f32.mxu0 0.0
      %650 = vmatmul.mubr.f32.gmra.mrb[0].mxu0 %v551
      %v651 = vpop.f32.mrb[0].mxu0
      %v652 = vadd.f32 %v573, %v651
      %v653 = vpop.f32.mrb[0].mxu0
      %654 = vdwg.mxu0
      %v655 = vld [vmem:[%s3] sm:$0xff]
      %v656 = vld [vmem:[%s3 + $0x8] sm:$0xff]
      %v657 = vld [vmem:[%s3 + $0x10] sm:$0xff]
      %v658 = vld [vmem:[%s3 + $0x18] sm:$0xff]
      %v659 = vld [vmem:[%s3 + $0x20] sm:$0xff]
      %v660 = vld [vmem:[%s3 + $0x28] sm:$0xff]
      %v661 = vld [vmem:[%s3 + $0x30] sm:$0xff]
      %v662 = vld [vmem:[%s3 + $0x38] sm:$0xff]
      %v663 = vld [vmem:[%s3 + $0x40] sm:$0xff]
      %v664 = vld [vmem:[%s3 + $0x48] sm:$0xff]
      %v665 = vld [vmem:[%s3 + $0x50] sm:$0xff]
      %v666 = vld [vmem:[%s3 + $0x58] sm:$0xff]
      %v667 = vld [vmem:[%s3 + $0x60] sm:$0xff]
      %v668 = vld [vmem:[%s3 + $0x68] sm:$0xff]
      %v669 = vld [vmem:[%s3 + $0x70] sm:$0xff]
      %v670 = vld [vmem:[%s3 + $0x78] sm:$0xff]
      %v671 = vld [vmem:[%s4] sm:$0x1]
      %v673 = vlaneseq
      %v674 = vshrl.u32 %v673, 7
      %v675 = vsub.s32 0, %v674
      %v676 = vrot.slane %v671, %v675
      %678 = vmatprep.subr.mxu0 0.0
      %679 = vmatpush1.msra.mxu0 %v655
      %680 = vmatprep.subr.mxu0 0.0
      %681 = vmatpush1.msra.mxu0 %v656
      %682 = vmatprep.subr.mxu0 0.0
      %683 = vmatpush1.msra.mxu0 %v657
      %684 = vmatprep.subr.mxu0 0.0
      %685 = vmatpush1.msra.mxu0 %v658
      %686 = vmatprep.subr.mxu0 0.0
      %687 = vmatpush1.msra.mxu0 %v659
      %688 = vmatprep.subr.mxu0 0.0
      %689 = vmatpush1.msra.mxu0 %v660
      %690 = vmatprep.subr.mxu0 0.0
      %691 = vmatpush1.msra.mxu0 %v661
      %692 = vmatprep.subr.mxu0 0.0
      %693 = vmatpush1.msra.mxu0 %v662
      %694 = vmatprep.subr.mxu0 0.0
      %695 = vmatpush1.msra.mxu0 %v663
      %696 = vmatprep.subr.mxu0 0.0
      %697 = vmatpush1.msra.mxu0 %v664
      %698 = vmatprep.subr.mxu0 0.0
      %699 = vmatpush1.msra.mxu0 %v665
      %700 = vmatprep.subr.mxu0 0.0
      %701 = vmatpush1.msra.mxu0 %v666
      %702 = vmatprep.subr.mxu0 0.0
      %703 = vmatpush1.msra.mxu0 %v667
      %704 = vmatprep.subr.mxu0 0.0
      %705 = vmatpush1.msra.mxu0 %v668
      %706 = vmatprep.subr.mxu0 0.0
      %707 = vmatpush1.msra.mxu0 %v669
      %708 = vmatprep.subr.mxu0 0.0
      %709 = vmatpush1.msra.mxu0 %v670
      %710 = vmatprep.subr.mxu0 0.0
      %711 = vmatpush1.msra.mxu0 0.0
      %712 = vmatprep.subr.mxu0 0.0
      %713 = vmatpush1.msra.mxu0 0.0
      %714 = vmatprep.subr.mxu0 0.0
      %715 = vmatpush1.msra.mxu0 0.0
      %716 = vmatprep.subr.mxu0 0.0
      %717 = vmatpush1.msra.mxu0 0.0
      %718 = vmatprep.subr.mxu0 0.0
      %719 = vmatpush1.msra.mxu0 0.0
      %720 = vmatprep.subr.mxu0 0.0
      %721 = vmatpush1.msra.mxu0 0.0
      %722 = vmatprep.subr.mxu0 0.0
      %723 = vmatpush1.msra.mxu0 0.0
      %724 = vmatprep.subr.mxu0 0.0
      %725 = vmatpush1.msra.mxu0 0.0
      %726 = vmatprep.subr.mxu0 0.0
      %727 = vmatpush1.msra.mxu0 0.0
      %728 = vmatprep.subr.mxu0 0.0
      %729 = vmatpush1.msra.mxu0 0.0
      %730 = vmatprep.subr.mxu0 0.0
      %731 = vmatpush1.msra.mxu0 0.0
      %732 = vmatprep.subr.mxu0 0.0
      %733 = vmatpush1.msra.mxu0 0.0
      %734 = vmatprep.subr.mxu0 0.0
      %735 = vmatpush1.msra.mxu0 0.0
      %736 = vmatprep.subr.mxu0 0.0
      %737 = vmatpush1.msra.mxu0 0.0
      %738 = vmatprep.subr.mxu0 0.0
      %739 = vmatpush1.msra.mxu0 0.0
      %740 = vmatprep.subr.mxu0 0.0
      %741 = vmatpush1.msra.mxu0 0.0
      %742 = vmatprep.mubr.f32.mxu0 0.0
      %743 = vmatmul.mubr.f32.gmra.mrb[0].mxu0 %v549
      %v744 = vpop.f32.mrb[0].mxu0
      %v745 = vadd.f32 %v676, %v744
      %v746 = vpop.f32.mrb[0].mxu0
      %747 = vmatprep.mubr.f32.mxu0 0.0
      %748 = vmatmul.mubr.f32.gmra.mrb[0].mxu0 %v550
      %v749 = vpop.f32.mrb[0].mxu0
      %v750 = vadd.f32 %v676, %v749
      %v751 = vpop.f32.mrb[0].mxu0
      %752 = vmatprep.mubr.f32.mxu0 0.0
      %753 = vmatmul.mubr.f32.gmra.mrb[0].mxu0 %v551
      %v754 = vpop.f32.mrb[0].mxu0
      %v755 = vadd.f32 %v676, %v754
      %v756 = vpop.f32.mrb[0].mxu0
      %757 = vdwg.mxu0
      %v758 = vld [vmem:[%s5] sm:$0xff]
      %v759 = vld [vmem:[%s5 + $0x8] sm:$0xff]
      %v760 = vld [vmem:[%s5 + $0x10] sm:$0xff]
      %v761 = vld [vmem:[%s5 + $0x18] sm:$0xff]
      %v762 = vld [vmem:[%s5 + $0x20] sm:$0xff]
      %v763 = vld [vmem:[%s5 + $0x28] sm:$0xff]
      %v764 = vld [vmem:[%s5 + $0x30] sm:$0xff]
      %v765 = vld [vmem:[%s5 + $0x38] sm:$0xff]
      %v766 = vld [vmem:[%s5 + $0x40] sm:$0xff]
      %v767 = vld [vmem:[%s5 + $0x48] sm:$0xff]
      %v768 = vld [vmem:[%s5 + $0x50] sm:$0xff]
      %v769 = vld [vmem:[%s5 + $0x58] sm:$0xff]
      %v770 = vld [vmem:[%s5 + $0x60] sm:$0xff]
      %v771 = vld [vmem:[%s5 + $0x68] sm:$0xff]
      %v772 = vld [vmem:[%s5 + $0x70] sm:$0xff]
      %v773 = vld [vmem:[%s5 + $0x78] sm:$0xff]
      %v774 = vld [vmem:[%s6] sm:$0x1]
      %v776 = vlaneseq
      %v777 = vshrl.u32 %v776, 7
      %v778 = vsub.s32 0, %v777
      %v779 = vrot.slane %v774, %v778
      %781 = vmatprep.subr.mxu0 0.0
      %782 = vmatpush1.msra.mxu0 %v758
      %783 = vmatprep.subr.mxu0 0.0
      %784 = vmatpush1.msra.mxu0 %v759
      %785 = vmatprep.subr.mxu0 0.0
      %786 = vmatpush1.msra.mxu0 %v760
      %787 = vmatprep.subr.mxu0 0.0
      %788 = vmatpush1.msra.mxu0 %v761
      %789 = vmatprep.subr.mxu0 0.0
      %790 = vmatpush1.msra.mxu0 %v762
      %791 = vmatprep.subr.mxu0 0.0
      %792 = vmatpush1.msra.mxu0 %v763
      %793 = vmatprep.subr.mxu0 0.0
      %794 = vmatpush1.msra.mxu0 %v764
      %795 = vmatprep.subr.mxu0 0.0
      %796 = vmatpush1.msra.mxu0 %v765
      %797 = vmatprep.subr.mxu0 0.0
      %798 = vmatpush1.msra.mxu0 %v766
      %799 = vmatprep.subr.mxu0 0.0
      %800 = vmatpush1.msra.mxu0 %v767
      %801 = vmatprep.subr.mxu0 0.0
      %802 = vmatpush1.msra.mxu0 %v768
      %803 = vmatprep.subr.mxu0 0.0
      %804 = vmatpush1.msra.mxu0 %v769
      %805 = vmatprep.subr.mxu0 0.0
      %806 = vmatpush1.msra.mxu0 %v770
      %807 = vmatprep.subr.mxu0 0.0
      %808 = vmatpush1.msra.mxu0 %v771
      %809 = vmatprep.subr.mxu0 0.0
      %810 = vmatpush1.msra.mxu0 %v772
      %811 = vmatprep.subr.mxu0 0.0
      %812 = vmatpush1.msra.mxu0 %v773
      %813 = vmatprep.subr.mxu0 0.0
      %814 = vmatpush1.msra.mxu0 0.0
      %815 = vmatprep.subr.mxu0 0.0
      %816 = vmatpush1.msra.mxu0 0.0
      %817 = vmatprep.subr.mxu0 0.0
      %818 = vmatpush1.msra.mxu0 0.0
      %819 = vmatprep.subr.mxu0 0.0
      %820 = vmatpush1.msra.mxu0 0.0
      %821 = vmatprep.subr.mxu0 0.0
      %822 = vmatpush1.msra.mxu0 0.0
      %823 = vmatprep.subr.mxu0 0.0
      %824 = vmatpush1.msra.mxu0 0.0
      %825 = vmatprep.subr.mxu0 0.0
      %826 = vmatpush1.msra.mxu0 0.0
      %827 = vmatprep.subr.mxu0 0.0
      %828 = vmatpush1.msra.mxu0 0.0
      %829 = vmatprep.subr.mxu0 0.0
      %830 = vmatpush1.msra.mxu0 0.0
      %831 = vmatprep.subr.mxu0 0.0
      %832 = vmatpush1.msra.mxu0 0.0
      %833 = vmatprep.subr.mxu0 0.0
      %834 = vmatpush1.msra.mxu0 0.0
      %835 = vmatprep.subr.mxu0 0.0
      %836 = vmatpush1.msra.mxu0 0.0
      %837 = vmatprep.subr.mxu0 0.0
      %838 = vmatpush1.msra.mxu0 0.0
      %839 = vmatprep.subr.mxu0 0.0
      %840 = vmatpush1.msra.mxu0 0.0
      %841 = vmatprep.subr.mxu0 0.0
      %842 = vmatpush1.msra.mxu0 0.0
      %843 = vmatprep.subr.mxu0 0.0
      %844 = vmatpush1.msra.mxu0 0.0
      %845 = vmatprep.mubr.f32.mxu0 0.0
      %846 = vmatmul.mubr.f32.gmra.mrb[0].mxu0 %v549
      %v847 = vpop.f32.mrb[0].mxu0
      %v848 = vadd.f32 %v779, %v847
      %v849 = vpop.f32.mrb[0].mxu0
      %850 = vmatprep.mubr.f32.mxu0 0.0
      %851 = vmatmul.mubr.f32.gmra.mrb[0].mxu0 %v550
      %v852 = vpop.f32.mrb[0].mxu0
      %v853 = vadd.f32 %v779, %v852
      %v854 = vpop.f32.mrb[0].mxu0
      %855 = vmatprep.mubr.f32.mxu0 0.0
      %856 = vmatmul.mubr.f32.gmra.mrb[0].mxu0 %v551
      %v857 = vpop.f32.mrb[0].mxu0
      %v858 = vadd.f32 %v779, %v857
      %v859 = vpop.f32.mrb[0].mxu0
      %860 = vdwg.mxu0
      %vm861 = vcmask 261120
      %v863 = vsel %vm861, %v642, 0
      %v866 = vsel %vm861, %v647, 0
      %v869 = vsel %vm861, %v652, 0
      %v872 = vsel %vm861, %v745, 0
      %v875 = vsel %vm861, %v750, 0
      %v878 = vsel %vm861, %v755, 0
      %880 = vmatprep.subr.mxu0 0.0
      %881 = vmatpush1.xpose.msra.mxu0 %v872
      %882 = vmatprep.subr.mxu0 0.0
      %883 = vmatpush1.xpose.msra.mxu0 %v875
      %884 = vmatprep.subr.mxu0 0.0
      %885 = vmatpush1.xpose.msra.mxu0 %v878
      %886 = vmatprep.subr.mxu0 0.0
      %887 = vmatpush1.xpose.msra.mxu0 0.0
      %888 = vmatprep.subr.mxu0 0.0
      %889 = vmatpush1.xpose.msra.mxu0 0.0
      %890 = vmatprep.subr.mxu0 0.0
      %891 = vmatpush1.xpose.msra.mxu0 0.0
      %892 = vmatprep.subr.mxu0 0.0
      %893 = vmatpush1.xpose.msra.mxu0 0.0
      %894 = vmatprep.subr.mxu0 0.0
      %895 = vmatpush1.xpose.msra.mxu0 0.0
      %896 = vmatprep.subr.mxu0 0.0
      %897 = vmatpush1.xpose.msra.mxu0 0.0
      %898 = vmatprep.subr.mxu0 0.0
      %899 = vmatpush1.xpose.msra.mxu0 0.0
      %900 = vmatprep.subr.mxu0 0.0
      %901 = vmatpush1.xpose.msra.mxu0 0.0
      %902 = vmatprep.subr.mxu0 0.0
      %903 = vmatpush1.xpose.msra.mxu0 0.0
      %904 = vmatprep.subr.mxu0 0.0
      %905 = vmatpush1.xpose.msra.mxu0 0.0
      %906 = vmatprep.subr.mxu0 0.0
      %907 = vmatpush1.xpose.msra.mxu0 0.0
      %908 = vmatprep.subr.mxu0 0.0
      %909 = vmatpush1.xpose.msra.mxu0 0.0
      %910 = vmatprep.subr.mxu0 0.0
      %911 = vmatpush1.xpose.msra.mxu0 0.0
      %912 = vmatprep.subr.mxu0 0.0
      %913 = vmatpush1.xpose.msra.mxu0 0.0
      %914 = vmatprep.subr.mxu0 0.0
      %915 = vmatpush1.xpose.msra.mxu0 0.0
      %916 = vmatprep.subr.mxu0 0.0
      %917 = vmatpush1.xpose.msra.mxu0 0.0
      %918 = vmatprep.subr.mxu0 0.0
      %919 = vmatpush1.xpose.msra.mxu0 0.0
      %920 = vmatprep.subr.mxu0 0.0
      %921 = vmatpush1.xpose.msra.mxu0 0.0
      %922 = vmatprep.subr.mxu0 0.0
      %923 = vmatpush1.xpose.msra.mxu0 0.0
      %924 = vmatprep.subr.mxu0 0.0
      %925 = vmatpush1.xpose.msra.mxu0 0.0
      %926 = vmatprep.subr.mxu0 0.0
      %927 = vmatpush1.xpose.msra.mxu0 0.0
      %928 = vmatprep.subr.mxu0 0.0
      %929 = vmatpush1.xpose.msra.mxu0 0.0
      %930 = vmatprep.subr.mxu0 0.0
      %931 = vmatpush1.xpose.msra.mxu0 0.0
      %932 = vmatprep.subr.mxu0 0.0
      %933 = vmatpush1.xpose.msra.mxu0 0.0
      %934 = vmatprep.subr.mxu0 0.0
      %935 = vmatpush1.xpose.msra.mxu0 0.0
      %936 = vmatprep.subr.mxu0 0.0
      %937 = vmatpush1.xpose.msra.mxu0 0.0
      %938 = vmatprep.subr.mxu0 0.0
      %939 = vmatpush1.xpose.msra.mxu0 0.0
      %940 = vmatprep.subr.mxu0 0.0
      %941 = vmatpush1.xpose.msra.mxu0 0.0
      %942 = vmatprep.subr.mxu0 0.0
      %943 = vmatpush1.xpose.msra.mxu0 0.0
      %944 = vmatprep.mubr.f32.mxu0 0.0
      %945 = vmatmul.mubr.f32.gmra.mrb[0].mxu0 %v863
      %v946 = vpop.f32.mrb[0].mxu0
      %v947 = vadd.f32 0.0, %v946
      %v948 = vpop.f32.mrb[0].mxu0
      %949 = vmatprep.mubr.f32.mxu0 0.0
      %950 = vmatmul.mubr.f32.gmra.mrb[0].mxu0 %v866
      %v951 = vpop.f32.mrb[0].mxu0
      %v952 = vadd.f32 0.0, %v951
      %v953 = vpop.f32.mrb[0].mxu0
      %954 = vmatprep.mubr.f32.mxu0 0.0
      %955 = vmatmul.mubr.f32.gmra.mrb[0].mxu0 %v869
      %v956 = vpop.f32.mrb[0].mxu0
      %v957 = vadd.f32 0.0, %v956
      %v958 = vpop.f32.mrb[0].mxu0
      %959 = vdwg.mxu0
      %v960 = vmul.f32 %v947, 0.17677669
      %v961 = vmul.f32 %v952, 0.17677669
      %v962 = vmul.f32 %v957, 0.17677669
      %vm963 = vcmask 138240
      %v964 = vsel %vm963, %v960, -inf
      %965 = vmax.xlane.f32.xlu0 %v964
      %v966 = vpop.xlane.xlu0 %965
      %v967 = vsel %vm963, %v961, -inf
      %968 = vmax.xlane.f32.xlu0 %v967
      %v969 = vpop.xlane.xlu0 %968
      %vm970 = vcmask 131072
      %v971 = vsel %vm970, %v962, -inf
      %972 = vmax.xlane.f32.xlu0 %v971
      %v973 = vpop.xlane.xlu0 %972
      %v974 = vsub.f32 %v960, %v966
      %v975 = vsub.f32 %v961, %v969
      %v976 = vsub.f32 %v962, %v973
      %v977 = vmul.f32 %v974, 1.442695
      %v978 = vpow.pop %v977
      %v979 = vmul.f32 %v975, 1.442695
      %v980 = vpow.pop %v979
      %v981 = vmul.f32 %v976, 1.442695
      %v982 = vpow.pop %v981
      %v983 = vsel %vm963, %v978, 0.0
      %984 = vadd.xlane.f32.xlu0 %v983
      %v985 = vpop.xlane.xlu0 %984
      %v986 = vsel %vm963, %v980, 0.0
      %987 = vadd.xlane.f32.xlu0 %v986
      %v988 = vpop.xlane.xlu0 %987
      %v989 = vsel %vm970, %v982, 0.0
      %990 = vadd.xlane.f32.xlu0 %v989
      %v991 = vpop.xlane.xlu0 %990
      %v992 = vrcp.pop %v985
      %v993 = vmul.f32 %v978, %v992
      %v994 = vrcp.pop %v988
      %v995 = vmul.f32 %v980, %v994
      %v996 = vrcp.pop %v991
      %v997 = vmul.f32 %v982, %v996
      %v999 = vsel %vm963, %v993, 0
      %v1002 = vsel %vm963, %v995, 0
      %v1005 = vsel %vm963, %v997, 0
      %vm1007 = vcmask 1040384
      %v1009 = vsel %vm1007, %v858, 0
      %1011 = vmatprep.subr.mxu0 0.0
      %1012 = vmatpush1.msra.mxu0 %v848
      %1013 = vmatprep.subr.mxu0 0.0
      %1014 = vmatpush1.msra.mxu0 %v853
      %1015 = vmatprep.subr.mxu0 0.0
      %1016 = vmatpush1.msra.mxu0 %v1009
      %1017 = vmatprep.subr.mxu0 0.0
      %1018 = vmatpush1.msra.mxu0 0.0
      %1019 = vmatprep.subr.mxu0 0.0
      %1020 = vmatpush1.msra.mxu0 0.0
      %1021 = vmatprep.subr.mxu0 0.0
      %1022 = vmatpush1.msra.mxu0 0.0
      %1023 = vmatprep.subr.mxu0 0.0
      %1024 = vmatpush1.msra.mxu0 0.0
      %1025 = vmatprep.subr.mxu0 0.0
      %1026 = vmatpush1.msra.mxu0 0.0
      %1027 = vmatprep.subr.mxu0 0.0
      %1028 = vmatpush1.msra.mxu0 0.0
      %1029 = vmatprep.subr.mxu0 0.0
      %1030 = vmatpush1.msra.mxu0 0.0
      %1031 = vmatprep.subr.mxu0 0.0
      %1032 = vmatpush1.msra.mxu0 0.0
      %1033 = vmatprep.subr.mxu0 0.0
      %1034 = vmatpush1.msra.mxu0 0.0
      %1035 = vmatprep.subr.mxu0 0.0
      %1036 = vmatpush1.msra.mxu0 0.0
      %1037 = vmatprep.subr.mxu0 0.0
      %1038 = vmatpush1.msra.mxu0 0.0
      %1039 = vmatprep.subr.mxu0 0.0
      %1040 = vmatpush1.msra.mxu0 0.0
      %1041 = vmatprep.subr.mxu0 0.0
      %1042 = vmatpush1.msra.mxu0 0.0
      %1043 = vmatprep.subr.mxu0 0.0
      %1044 = vmatpush1.msra.mxu0 0.0
      %1045 = vmatprep.subr.mxu0 0.0
      %1046 = vmatpush1.msra.mxu0 0.0
      %1047 = vmatprep.subr.mxu0 0.0
      %1048 = vmatpush1.msra.mxu0 0.0
      %1049 = vmatprep.subr.mxu0 0.0
      %1050 = vmatpush1.msra.mxu0 0.0
      %1051 = vmatprep.subr.mxu0 0.0
      %1052 = vmatpush1.msra.mxu0 0.0
      %1053 = vmatprep.subr.mxu0 0.0
      %1054 = vmatpush1.msra.mxu0 0.0
      %1055 = vmatprep.subr.mxu0 0.0
      %1056 = vmatpush1.msra.mxu0 0.0
      %1057 = vmatprep.subr.mxu0 0.0
      %1058 = vmatpush1.msra.mxu0 0.0
      %1059 = vmatprep.subr.mxu0 0.0
      %1060 = vmatpush1.msra.mxu0 0.0
      %1061 = vmatprep.subr.mxu0 0.0
      %1062 = vmatpush1.msra.mxu0 0.0
      %1063 = vmatprep.subr.mxu0 0.0
      %1064 = vmatpush1.msra.mxu0 0.0
      %1065 = vmatprep.subr.mxu0 0.0
      %1066 = vmatpush1.msra.mxu0 0.0
      %1067 = vmatprep.subr.mxu0 0.0
      %1068 = vmatpush1.msra.mxu0 0.0
      %1069 = vmatprep.subr.mxu0 0.0
      %1070 = vmatpush1.msra.mxu0 0.0
      %1071 = vmatprep.subr.mxu0 0.0
      %1072 = vmatpush1.msra.mxu0 0.0
      %1073 = vmatprep.subr.mxu0 0.0
      %1074 = vmatpush1.msra.mxu0 0.0
      %1075 = vmatprep.mubr.f32.mxu0 0.0
      %1076 = vmatmul.mubr.f32.gmra.mrb[0].mxu0 %v999
      %v1077 = vpop.f32.mrb[0].mxu0
      %v1078 = vadd.f32 0.0, %v1077
      %v1079 = vpop.f32.mrb[0].mxu0
      %1080 = vmatprep.mubr.f32.mxu0 0.0
      %1081 = vmatmul.mubr.f32.gmra.mrb[0].mxu0 %v1002
      %v1082 = vpop.f32.mrb[0].mxu0
      %v1083 = vadd.f32 0.0, %v1082
      %v1084 = vpop.f32.mrb[0].mxu0
      %1085 = vmatprep.mubr.f32.mxu0 0.0
      %1086 = vmatmul.mubr.f32.gmra.mrb[0].mxu0 %v1005
      %v1087 = vpop.f32.mrb[0].mxu0
      %v1088 = vadd.f32 0.0, %v1087
      %v1089 = vpop.f32.mrb[0].mxu0
      %1090 = vdwg.mxu0
      %v1091 = vld [vmem:[%s7] sm:$0xff]
      %v1092 = vld [vmem:[%s7 + $0x8] sm:$0xff]
      %v1093 = vld [vmem:[%s7 + $0x10] sm:$0xff]
      %v1094 = vld [vmem:[%s7 + $0x18] sm:$0xff]
      %s1095 = scalar_lea.vmem %s1, 128
      %v1096 = vld [vmem:[%s1095] sm:$0xff]
      %v1097 = vld [vmem:[%s1095 + $0x8] sm:$0xff]
      %v1098 = vld [vmem:[%s1095 + $0x10] sm:$0xff]
      %v1099 = vld [vmem:[%s1095 + $0x18] sm:$0xff]
      %v1100 = vld [vmem:[%s1095 + $0x20] sm:$0xff]
      %v1101 = vld [vmem:[%s1095 + $0x28] sm:$0xff]
      %v1102 = vld [vmem:[%s1095 + $0x30] sm:$0xff]
      %v1103 = vld [vmem:[%s1095 + $0x38] sm:$0xff]
      %v1104 = vld [vmem:[%s1095 + $0x40] sm:$0xff]
      %v1105 = vld [vmem:[%s1095 + $0x48] sm:$0xff]
      %v1106 = vld [vmem:[%s1095 + $0x50] sm:$0xff]
      %v1107 = vld [vmem:[%s1095 + $0x58] sm:$0xff]
      %v1108 = vld [vmem:[%s1095 + $0x60] sm:$0xff]
      %v1109 = vld [vmem:[%s1095 + $0x68] sm:$0xff]
      %v1110 = vld [vmem:[%s1095 + $0x70] sm:$0xff]
      %v1111 = vld [vmem:[%s1095 + $0x78] sm:$0xff]
      %s1112 = scalar_lea.vmem %s2, 1
      %v1113 = vld [vmem:[%s1112] sm:$0x1]
      %v1115 = vlaneseq
      %v1116 = vshrl.u32 %v1115, 7
      %v1117 = vsub.s32 0, %v1116
      %v1118 = vrot.slane %v1113, %v1117
      %1120 = vmatprep.subr.mxu0 0.0
      %1121 = vmatpush1.msra.mxu0 %v1096
      %1122 = vmatprep.subr.mxu0 0.0
      %1123 = vmatpush1.msra.mxu0 %v1097
      %1124 = vmatprep.subr.mxu0 0.0
      %1125 = vmatpush1.msra.mxu0 %v1098
      %1126 = vmatprep.subr.mxu0 0.0
      %1127 = vmatpush1.msra.mxu0 %v1099
      %1128 = vmatprep.subr.mxu0 0.0
      %1129 = vmatpush1.msra.mxu0 %v1100
      %1130 = vmatprep.subr.mxu0 0.0
      %1131 = vmatpush1.msra.mxu0 %v1101
      %1132 = vmatprep.subr.mxu0 0.0
      %1133 = vmatpush1.msra.mxu0 %v1102
      %1134 = vmatprep.subr.mxu0 0.0
      %1135 = vmatpush1.msra.mxu0 %v1103
      %1136 = vmatprep.subr.mxu0 0.0
      %1137 = vmatpush1.msra.mxu0 %v1104
      %1138 = vmatprep.subr.mxu0 0.0
      %1139 = vmatpush1.msra.mxu0 %v1105
      %1140 = vmatprep.subr.mxu0 0.0
      %1141 = vmatpush1.msra.mxu0 %v1106
      %1142 = vmatprep.subr.mxu0 0.0
      %1143 = vmatpush1.msra.mxu0 %v1107
      %1144 = vmatprep.subr.mxu0 0.0
      %1145 = vmatpush1.msra.mxu0 %v1108
      %1146 = vmatprep.subr.mxu0 0.0
      %1147 = vmatpush1.msra.mxu0 %v1109
      %1148 = vmatprep.subr.mxu0 0.0
      %1149 = vmatpush1.msra.mxu0 %v1110
      %1150 = vmatprep.subr.mxu0 0.0
      %1151 = vmatpush1.msra.mxu0 %v1111
      %1152 = vmatprep.subr.mxu0 0.0
      %1153 = vmatpush1.msra.mxu0 0.0
      %1154 = vmatprep.subr.mxu0 0.0
      %1155 = vmatpush1.msra.mxu0 0.0
      %1156 = vmatprep.subr.mxu0 0.0
      %1157 = vmatpush1.msra.mxu0 0.0
      %1158 = vmatprep.subr.mxu0 0.0
      %1159 = vmatpush1.msra.mxu0 0.0
      %1160 = vmatprep.subr.mxu0 0.0
      %1161 = vmatpush1.msra.mxu0 0.0
      %1162 = vmatprep.subr.mxu0 0.0
      %1163 = vmatpush1.msra.mxu0 0.0
      %1164 = vmatprep.subr.mxu0 0.0
      %1165 = vmatpush1.msra.mxu0 0.0
      %1166 = vmatprep.subr.mxu0 0.0
      %1167 = vmatpush1.msra.mxu0 0.0
      %1168 = vmatprep.subr.mxu0 0.0
      %1169 = vmatpush1.msra.mxu0 0.0
      %1170 = vmatprep.subr.mxu0 0.0
      %1171 = vmatpush1.msra.mxu0 0.0
      %1172 = vmatprep.subr.mxu0 0.0
      %1173 = vmatpush1.msra.mxu0 0.0
      %1174 = vmatprep.subr.mxu0 0.0
      %1175 = vmatpush1.msra.mxu0 0.0
      %1176 = vmatprep.subr.mxu0 0.0
      %1177 = vmatpush1.msra.mxu0 0.0
      %1178 = vmatprep.subr.mxu0 0.0
      %1179 = vmatpush1.msra.mxu0 0.0
      %1180 = vmatprep.subr.mxu0 0.0
      %1181 = vmatpush1.msra.mxu0 0.0
      %1182 = vmatprep.subr.mxu0 0.0
      %1183 = vmatpush1.msra.mxu0 0.0
      %1184 = vmatprep.mubr.f32.mxu0 0.0
      %1185 = vmatmul.mubr.f32.gmra.mrb[0].mxu0 %v549
      %v1186 = vpop.f32.mrb[0].mxu0
      %v1187 = vadd.f32 %v1118, %v1186
      %v1188 = vpop.f32.mrb[0].mxu0
      %1189 = vmatprep.mubr.f32.mxu0 0.0
      %1190 = vmatmul.mubr.f32.gmra.mrb[0].mxu0 %v550
      %v1191 = vpop.f32.mrb[0].mxu0
      %v1192 = vadd.f32 %v1118, %v1191
      %v1193 = vpop.f32.mrb[0].mxu0
      %1194 = vmatprep.mubr.f32.mxu0 0.0
      %1195 = vmatmul.mubr.f32.gmra.mrb[0].mxu0 %v551
      %v1196 = vpop.f32.mrb[0].mxu0
      %v1197 = vadd.f32 %v1118, %v1196
      %v1198 = vpop.f32.mrb[0].mxu0
      %1199 = vdwg.mxu0
      %s1200 = scalar_lea.vmem %s3, 128
      %v1201 = vld [vmem:[%s1200] sm:$0xff]
      %v1202 = vld [vmem:[%s1200 + $0x8] sm:$0xff]
      %v1203 = vld [vmem:[%s1200 + $0x10] sm:$0xff]
      %v1204 = vld [vmem:[%s1200 + $0x18] sm:$0xff]
      %v1205 = vld [vmem:[%s1200 + $0x20] sm:$0xff]
      %v1206 = vld [vmem:[%s1200 + $0x28] sm:$0xff]
      %v1207 = vld [vmem:[%s1200 + $0x30] sm:$0xff]
      %v1208 = vld [vmem:[%s1200 + $0x38] sm:$0xff]
      %v1209 = vld [vmem:[%s1200 + $0x40] sm:$0xff]
      %v1210 = vld [vmem:[%s1200 + $0x48] sm:$0xff]
      %v1211 = vld [vmem:[%s1200 + $0x50] sm:$0xff]
      %v1212 = vld [vmem:[%s1200 + $0x58] sm:$0xff]
      %v1213 = vld [vmem:[%s1200 + $0x60] sm:$0xff]
      %v1214 = vld [vmem:[%s1200 + $0x68] sm:$0xff]
      %v1215 = vld [vmem:[%s1200 + $0x70] sm:$0xff]
      %v1216 = vld [vmem:[%s1200 + $0x78] sm:$0xff]
      %s1217 = scalar_lea.vmem %s4, 1
      %v1218 = vld [vmem:[%s1217] sm:$0x1]
      %v1220 = vlaneseq
      %v1221 = vshrl.u32 %v1220, 7
      %v1222 = vsub.s32 0, %v1221
      %v1223 = vrot.slane %v1218, %v1222
      %1225 = vmatprep.subr.mxu0 0.0
      %1226 = vmatpush1.msra.mxu0 %v1201
      %1227 = vmatprep.subr.mxu0 0.0
      %1228 = vmatpush1.msra.mxu0 %v1202
      %1229 = vmatprep.subr.mxu0 0.0
      %1230 = vmatpush1.msra.mxu0 %v1203
      %1231 = vmatprep.subr.mxu0 0.0
      %1232 = vmatpush1.msra.mxu0 %v1204
      %1233 = vmatprep.subr.mxu0 0.0
      %1234 = vmatpush1.msra.mxu0 %v1205
      %1235 = vmatprep.subr.mxu0 0.0
      %1236 = vmatpush1.msra.mxu0 %v1206
      %1237 = vmatprep.subr.mxu0 0.0
      %1238 = vmatpush1.msra.mxu0 %v1207
      %1239 = vmatprep.subr.mxu0 0.0
      %1240 = vmatpush1.msra.mxu0 %v1208
      %1241 = vmatprep.subr.mxu0 0.0
      %1242 = vmatpush1.msra.mxu0 %v1209
      %1243 = vmatprep.subr.mxu0 0.0
      %1244 = vmatpush1.msra.mxu0 %v1210
      %1245 = vmatprep.subr.mxu0 0.0
      %1246 = vmatpush1.msra.mxu0 %v1211
      %1247 = vmatprep.subr.mxu0 0.0
      %1248 = vmatpush1.msra.mxu0 %v1212
      %1249 = vmatprep.subr.mxu0 0.0
      %1250 = vmatpush1.msra.mxu0 %v1213
      %1251 = vmatprep.subr.mxu0 0.0
      %1252 = vmatpush1.msra.mxu0 %v1214
      %1253 = vmatprep.subr.mxu0 0.0
      %1254 = vmatpush1.msra.mxu0 %v1215
      %1255 = vmatprep.subr.mxu0 0.0
      %1256 = vmatpush1.msra.mxu0 %v1216
      %1257 = vmatprep.subr.mxu0 0.0
      %1258 = vmatpush1.msra.mxu0 0.0
      %1259 = vmatprep.subr.mxu0 0.0
      %1260 = vmatpush1.msra.mxu0 0.0
      %1261 = vmatprep.subr.mxu0 0.0
      %1262 = vmatpush1.msra.mxu0 0.0
      %1263 = vmatprep.subr.mxu0 0.0
      %1264 = vmatpush1.msra.mxu0 0.0
      %1265 = vmatprep.subr.mxu0 0.0
      %1266 = vmatpush1.msra.mxu0 0.0
      %1267 = vmatprep.subr.mxu0 0.0
      %1268 = vmatpush1.msra.mxu0 0.0
      %1269 = vmatprep.subr.mxu0 0.0
      %1270 = vmatpush1.msra.mxu0 0.0
      %1271 = vmatprep.subr.mxu0 0.0
      %1272 = vmatpush1.msra.mxu0 0.0
      %1273 = vmatprep.subr.mxu0 0.0
      %1274 = vmatpush1.msra.mxu0 0.0
      %1275 = vmatprep.subr.mxu0 0.0
      %1276 = vmatpush1.msra.mxu0 0.0
      %1277 = vmatprep.subr.mxu0 0.0
      %1278 = vmatpush1.msra.mxu0 0.0
      %1279 = vmatprep.subr.mxu0 0.0
      %1280 = vmatpush1.msra.mxu0 0.0
      %1281 = vmatprep.subr.mxu0 0.0
      %1282 = vmatpush1.msra.mxu0 0.0
      %1283 = vmatprep.subr.mxu0 0.0
      %1284 = vmatpush1.msra.mxu0 0.0
      %1285 = vmatprep.subr.mxu0 0.0
      %1286 = vmatpush1.msra.mxu0 0.0
      %1287 = vmatprep.subr.mxu0 0.0
      %1288 = vmatpush1.msra.mxu0 0.0
      %1289 = vmatprep.mubr.f32.mxu0 0.0
      %1290 = vmatmul.mubr.f32.gmra.mrb[0].mxu0 %v549
      %v1291 = vpop.f32.mrb[0].mxu0
      %v1292 = vadd.f32 %v1223, %v1291
      %v1293 = vpop.f32.mrb[0].mxu0
      %1294 = vmatprep.mubr.f32.mxu0 0.0
      %1295 = vmatmul.mubr.f32.gmra.mrb[0].mxu0 %v550
      %v1296 = vpop.f32.mrb[0].mxu0
      %v1297 = vadd.f32 %v1223, %v1296
      %v1298 = vpop.f32.mrb[0].mxu0
      %1299 = vmatprep.mubr.f32.mxu0 0.0
      %1300 = vmatmul.mubr.f32.gmra.mrb[0].mxu0 %v551
      %v1301 = vpop.f32.mrb[0].mxu0
      %v1302 = vadd.f32 %v1223, %v1301
      %v1303 = vpop.f32.mrb[0].mxu0
      %1304 = vdwg.mxu0
      %s1305 = scalar_lea.vmem %s5, 128
      %v1306 = vld [vmem:[%s1305] sm:$0xff]
      %v1307 = vld [vmem:[%s1305 + $0x8] sm:$0xff]
      %v1308 = vld [vmem:[%s1305 + $0x10] sm:$0xff]
      %v1309 = vld [vmem:[%s1305 + $0x18] sm:$0xff]
      %v1310 = vld [vmem:[%s1305 + $0x20] sm:$0xff]
      %v1311 = vld [vmem:[%s1305 + $0x28] sm:$0xff]
      %v1312 = vld [vmem:[%s1305 + $0x30] sm:$0xff]
      %v1313 = vld [vmem:[%s1305 + $0x38] sm:$0xff]
      %v1314 = vld [vmem:[%s1305 + $0x40] sm:$0xff]
      %v1315 = vld [vmem:[%s1305 + $0x48] sm:$0xff]
      %v1316 = vld [vmem:[%s1305 + $0x50] sm:$0xff]
      %v1317 = vld [vmem:[%s1305 + $0x58] sm:$0xff]
      %v1318 = vld [vmem:[%s1305 + $0x60] sm:$0xff]
      %v1319 = vld [vmem:[%s1305 + $0x68] sm:$0xff]
      %v1320 = vld [vmem:[%s1305 + $0x70] sm:$0xff]
      %v1321 = vld [vmem:[%s1305 + $0x78] sm:$0xff]
      %s1322 = scalar_lea.vmem %s6, 1
      %v1323 = vld [vmem:[%s1322] sm:$0x1]
      %v1325 = vlaneseq
      %v1326 = vshrl.u32 %v1325, 7
      %v1327 = vsub.s32 0, %v1326
      %v1328 = vrot.slane %v1323, %v1327
      %1330 = vmatprep.subr.mxu0 0.0
      %1331 = vmatpush1.msra.mxu0 %v1306
      %1332 = vmatprep.subr.mxu0 0.0
      %1333 = vmatpush1.msra.mxu0 %v1307
      %1334 = vmatprep.subr.mxu0 0.0
      %1335 = vmatpush1.msra.mxu0 %v1308
      %1336 = vmatprep.subr.mxu0 0.0
      %1337 = vmatpush1.msra.mxu0 %v1309
      %1338 = vmatprep.subr.mxu0 0.0
      %1339 = vmatpush1.msra.mxu0 %v1310
      %1340 = vmatprep.subr.mxu0 0.0
      %1341 = vmatpush1.msra.mxu0 %v1311
      %1342 = vmatprep.subr.mxu0 0.0
      %1343 = vmatpush1.msra.mxu0 %v1312
      %1344 = vmatprep.subr.mxu0 0.0
      %1345 = vmatpush1.msra.mxu0 %v1313
      %1346 = vmatprep.subr.mxu0 0.0
      %1347 = vmatpush1.msra.mxu0 %v1314
      %1348 = vmatprep.subr.mxu0 0.0
      %1349 = vmatpush1.msra.mxu0 %v1315
      %1350 = vmatprep.subr.mxu0 0.0
      %1351 = vmatpush1.msra.mxu0 %v1316
      %1352 = vmatprep.subr.mxu0 0.0
      %1353 = vmatpush1.msra.mxu0 %v1317
      %1354 = vmatprep.subr.mxu0 0.0
      %1355 = vmatpush1.msra.mxu0 %v1318
      %1356 = vmatprep.subr.mxu0 0.0
      %1357 = vmatpush1.msra.mxu0 %v1319
      %1358 = vmatprep.subr.mxu0 0.0
      %1359 = vmatpush1.msra.mxu0 %v1320
      %1360 = vmatprep.subr.mxu0 0.0
      %1361 = vmatpush1.msra.mxu0 %v1321
      %1362 = vmatprep.subr.mxu0 0.0
      %1363 = vmatpush1.msra.mxu0 0.0
      %1364 = vmatprep.subr.mxu0 0.0
      %1365 = vmatpush1.msra.mxu0 0.0
      %1366 = vmatprep.subr.mxu0 0.0
      %1367 = vmatpush1.msra.mxu0 0.0
      %1368 = vmatprep.subr.mxu0 0.0
      %1369 = vmatpush1.msra.mxu0 0.0
      %1370 = vmatprep.subr.mxu0 0.0
      %1371 = vmatpush1.msra.mxu0 0.0
      %1372 = vmatprep.subr.mxu0 0.0
      %1373 = vmatpush1.msra.mxu0 0.0
      %1374 = vmatprep.subr.mxu0 0.0
      %1375 = vmatpush1.msra.mxu0 0.0
      %1376 = vmatprep.subr.mxu0 0.0
      %1377 = vmatpush1.msra.mxu0 0.0
      %1378 = vmatprep.subr.mxu0 0.0
      %1379 = vmatpush1.msra.mxu0 0.0
      %1380 = vmatprep.subr.mxu0 0.0
      %1381 = vmatpush1.msra.mxu0 0.0
      %1382 = vmatprep.subr.mxu0 0.0
      %1383 = vmatpush1.msra.mxu0 0.0
      %1384 = vmatprep.subr.mxu0 0.0
      %1385 = vmatpush1.msra.mxu0 0.0
      %1386 = vmatprep.subr.mxu0 0.0
      %1387 = vmatpush1.msra.mxu0 0.0
      %1388 = vmatprep.subr.mxu0 0.0
      %1389 = vmatpush1.msra.mxu0 0.0
      %1390 = vmatprep.subr.mxu0 0.0
      %1391 = vmatpush1.msra.mxu0 0.0
      %1392 = vmatprep.subr.mxu0 0.0
      %1393 = vmatpush1.msra.mxu0 0.0
      %1394 = vmatprep.mubr.f32.mxu0 0.0
      %1395 = vmatmul.mubr.f32.gmra.mrb[0].mxu0 %v549
      %v1396 = vpop.f32.mrb[0].mxu0
      %v1397 = vadd.f32 %v1328, %v1396
      %v1398 = vpop.f32.mrb[0].mxu0
      %1399 = vmatprep.mubr.f32.mxu0 0.0
      %1400 = vmatmul.mubr.f32.gmra.mrb[0].mxu0 %v550
      %v1401 = vpop.f32.mrb[0].mxu0
      %v1402 = vadd.f32 %v1328, %v1401
      %v1403 = vpop.f32.mrb[0].mxu0
      %1404 = vmatprep.mubr.f32.mxu0 0.0
      %1405 = vmatmul.mubr.f32.gmra.mrb[0].mxu0 %v551
      %v1406 = vpop.f32.mrb[0].mxu0
      %v1407 = vadd.f32 %v1328, %v1406
      %v1408 = vpop.f32.mrb[0].mxu0
      %1409 = vdwg.mxu0
      %v1411 = vsel %vm861, %v1187, 0
      %v1414 = vsel %vm861, %v1192, 0
      %v1417 = vsel %vm861, %v1197, 0
      %v1420 = vsel %vm861, %v1292, 0
      %v1423 = vsel %vm861, %v1297, 0
      %v1426 = vsel %vm861, %v1302, 0
      %1428 = vmatprep.subr.mxu0 0.0
      %1429 = vmatpush1.xpose.msra.mxu0 %v1420
      %1430 = vmatprep.subr.mxu0 0.0
      %1431 = vmatpush1.xpose.msra.mxu0 %v1423
      %1432 = vmatprep.subr.mxu0 0.0
      %1433 = vmatpush1.xpose.msra.mxu0 %v1426
      %1434 = vmatprep.subr.mxu0 0.0
      %1435 = vmatpush1.xpose.msra.mxu0 0.0
      %1436 = vmatprep.subr.mxu0 0.0
      %1437 = vmatpush1.xpose.msra.mxu0 0.0
      %1438 = vmatprep.subr.mxu0 0.0
      %1439 = vmatpush1.xpose.msra.mxu0 0.0
      %1440 = vmatprep.subr.mxu0 0.0
      %1441 = vmatpush1.xpose.msra.mxu0 0.0
      %1442 = vmatprep.subr.mxu0 0.0
      %1443 = vmatpush1.xpose.msra.mxu0 0.0
      %1444 = vmatprep.subr.mxu0 0.0
      %1445 = vmatpush1.xpose.msra.mxu0 0.0
      %1446 = vmatprep.subr.mxu0 0.0
      %1447 = vmatpush1.xpose.msra.mxu0 0.0
      %1448 = vmatprep.subr.mxu0 0.0
      %1449 = vmatpush1.xpose.msra.mxu0 0.0
      %1450 = vmatprep.subr.mxu0 0.0
      %1451 = vmatpush1.xpose.msra.mxu0 0.0
      %1452 = vmatprep.subr.mxu0 0.0
      %1453 = vmatpush1.xpose.msra.mxu0 0.0
      %1454 = vmatprep.subr.mxu0 0.0
      %1455 = vmatpush1.xpose.msra.mxu0 0.0
      %1456 = vmatprep.subr.mxu0 0.0
      %1457 = vmatpush1.xpose.msra.mxu0 0.0
      %1458 = vmatprep.subr.mxu0 0.0
      %1459 = vmatpush1.xpose.msra.mxu0 0.0
      %1460 = vmatprep.subr.mxu0 0.0
      %1461 = vmatpush1.xpose.msra.mxu0 0.0
      %1462 = vmatprep.subr.mxu0 0.0
      %1463 = vmatpush1.xpose.msra.mxu0 0.0
      %1464 = vmatprep.subr.mxu0 0.0
      %1465 = vmatpush1.xpose.msra.mxu0 0.0
      %1466 = vmatprep.subr.mxu0 0.0
      %1467 = vmatpush1.xpose.msra.mxu0 0.0
      %1468 = vmatprep.subr.mxu0 0.0
      %1469 = vmatpush1.xpose.msra.mxu0 0.0
      %1470 = vmatprep.subr.mxu0 0.0
      %1471 = vmatpush1.xpose.msra.mxu0 0.0
      %1472 = vmatprep.subr.mxu0 0.0
      %1473 = vmatpush1.xpose.msra.mxu0 0.0
      %1474 = vmatprep.subr.mxu0 0.0
      %1475 = vmatpush1.xpose.msra.mxu0 0.0
      %1476 = vmatprep.subr.mxu0 0.0
      %1477 = vmatpush1.xpose.msra.mxu0 0.0
      %1478 = vmatprep.subr.mxu0 0.0
      %1479 = vmatpush1.xpose.msra.mxu0 0.0
      %1480 = vmatprep.subr.mxu0 0.0
      %1481 = vmatpush1.xpose.msra.mxu0 0.0
      %1482 = vmatprep.subr.mxu0 0.0
      %1483 = vmatpush1.xpose.msra.mxu0 0.0
      %1484 = vmatprep.subr.mxu0 0.0
      %1485 = vmatpush1.xpose.msra.mxu0 0.0
      %1486 = vmatprep.subr.mxu0 0.0
      %1487 = vmatpush1.xpose.msra.mxu0 0.0
      %1488 = vmatprep.subr.mxu0 0.0
      %1489 = vmatpush1.xpose.msra.mxu0 0.0
      %1490 = vmatprep.subr.mxu0 0.0
      %1491 = vmatpush1.xpose.msra.mxu0 0.0
      %1492 = vmatprep.mubr.f32.mxu0 0.0
      %1493 = vmatmul.mubr.f32.gmra.mrb[0].mxu0 %v1411
      %v1494 = vpop.f32.mrb[0].mxu0
      %v1495 = vadd.f32 0.0, %v1494
      %v1496 = vpop.f32.mrb[0].mxu0
      %1497 = vmatprep.mubr.f32.mxu0 0.0
      %1498 = vmatmul.mubr.f32.gmra.mrb[0].mxu0 %v1414
      %v1499 = vpop.f32.mrb[0].mxu0
      %v1500 = vadd.f32 0.0, %v1499
      %v1501 = vpop.f32.mrb[0].mxu0
      %1502 = vmatprep.mubr.f32.mxu0 0.0
      %1503 = vmatmul.mubr.f32.gmra.mrb[0].mxu0 %v1417
      %v1504 = vpop.f32.mrb[0].mxu0
      %v1505 = vadd.f32 0.0, %v1504
      %v1506 = vpop.f32.mrb[0].mxu0
      %1507 = vdwg.mxu0
      %v1508 = vmul.f32 %v1495, 0.17677669
      %v1509 = vmul.f32 %v1500, 0.17677669
      %v1510 = vmul.f32 %v1505, 0.17677669
      %v1511 = vsel %vm963, %v1508, -inf
      %1512 = vmax.xlane.f32.xlu0 %v1511
      %v1513 = vpop.xlane.xlu0 %1512
      %v1514 = vsel %vm963, %v1509, -inf
      %1515 = vmax.xlane.f32.xlu0 %v1514
      %v1516 = vpop.xlane.xlu0 %1515
      %v1517 = vsel %vm970, %v1510, -inf
      %1518 = vmax.xlane.f32.xlu0 %v1517
      %v1519 = vpop.xlane.xlu0 %1518
      %v1520 = vsub.f32 %v1508, %v1513
      %v1521 = vsub.f32 %v1509, %v1516
      %v1522 = vsub.f32 %v1510, %v1519
      %v1523 = vmul.f32 %v1520, 1.442695
      %v1524 = vpow.pop %v1523
      %v1525 = vmul.f32 %v1521, 1.442695
      %v1526 = vpow.pop %v1525
      %v1527 = vmul.f32 %v1522, 1.442695
      %v1528 = vpow.pop %v1527
      %v1529 = vsel %vm963, %v1524, 0.0
      %1530 = vadd.xlane.f32.xlu0 %v1529
      %v1531 = vpop.xlane.xlu0 %1530
      %v1532 = vsel %vm963, %v1526, 0.0
      %1533 = vadd.xlane.f32.xlu0 %v1532
      %v1534 = vpop.xlane.xlu0 %1533
      %v1535 = vsel %vm970, %v1528, 0.0
      %1536 = vadd.xlane.f32.xlu0 %v1535
      %v1537 = vpop.xlane.xlu0 %1536
      %v1538 = vrcp.pop %v1531
      %v1539 = vmul.f32 %v1524, %v1538
      %v1540 = vrcp.pop %v1534
      %v1541 = vmul.f32 %v1526, %v1540
      %v1542 = vrcp.pop %v1537
      %v1543 = vmul.f32 %v1528, %v1542
      %v1545 = vsel %vm963, %v1539, 0
      %v1548 = vsel %vm963, %v1541, 0
      %v1551 = vsel %vm963, %v1543, 0
      %v1554 = vsel %vm1007, %v1407, 0
      %1556 = vmatprep.subr.mxu0 0.0
      %1557 = vmatpush1.msra.mxu0 %v1397
      %1558 = vmatprep.subr.mxu0 0.0
      %1559 = vmatpush1.msra.mxu0 %v1402
      %1560 = vmatprep.subr.mxu0 0.0
      %1561 = vmatpush1.msra.mxu0 %v1554
      %1562 = vmatprep.subr.mxu0 0.0
      %1563 = vmatpush1.msra.mxu0 0.0
      %1564 = vmatprep.subr.mxu0 0.0
      %1565 = vmatpush1.msra.mxu0 0.0
      %1566 = vmatprep.subr.mxu0 0.0
      %1567 = vmatpush1.msra.mxu0 0.0
      %1568 = vmatprep.subr.mxu0 0.0
      %1569 = vmatpush1.msra.mxu0 0.0
      %1570 = vmatprep.subr.mxu0 0.0
      %1571 = vmatpush1.msra.mxu0 0.0
      %1572 = vmatprep.subr.mxu0 0.0
      %1573 = vmatpush1.msra.mxu0 0.0
      %1574 = vmatprep.subr.mxu0 0.0
      %1575 = vmatpush1.msra.mxu0 0.0
      %1576 = vmatprep.subr.mxu0 0.0
      %1577 = vmatpush1.msra.mxu0 0.0
      %1578 = vmatprep.subr.mxu0 0.0
      %1579 = vmatpush1.msra.mxu0 0.0
      %1580 = vmatprep.subr.mxu0 0.0
      %1581 = vmatpush1.msra.mxu0 0.0
      %1582 = vmatprep.subr.mxu0 0.0
      %1583 = vmatpush1.msra.mxu0 0.0
      %1584 = vmatprep.subr.mxu0 0.0
      %1585 = vmatpush1.msra.mxu0 0.0
      %1586 = vmatprep.subr.mxu0 0.0
      %1587 = vmatpush1.msra.mxu0 0.0
      %1588 = vmatprep.subr.mxu0 0.0
      %1589 = vmatpush1.msra.mxu0 0.0
      %1590 = vmatprep.subr.mxu0 0.0
      %1591 = vmatpush1.msra.mxu0 0.0
      %1592 = vmatprep.subr.mxu0 0.0
      %1593 = vmatpush1.msra.mxu0 0.0
      %1594 = vmatprep.subr.mxu0 0.0
      %1595 = vmatpush1.msra.mxu0 0.0
      %1596 = vmatprep.subr.mxu0 0.0
      %1597 = vmatpush1.msra.mxu0 0.0
      %1598 = vmatprep.subr.mxu0 0.0
      %1599 = vmatpush1.msra.mxu0 0.0
      %1600 = vmatprep.subr.mxu0 0.0
      %1601 = vmatpush1.msra.mxu0 0.0
      %1602 = vmatprep.subr.mxu0 0.0
      %1603 = vmatpush1.msra.mxu0 0.0
      %1604 = vmatprep.subr.mxu0 0.0
      %1605 = vmatpush1.msra.mxu0 0.0
      %1606 = vmatprep.subr.mxu0 0.0
      %1607 = vmatpush1.msra.mxu0 0.0
      %1608 = vmatprep.subr.mxu0 0.0
      %1609 = vmatpush1.msra.mxu0 0.0
      %1610 = vmatprep.subr.mxu0 0.0
      %1611 = vmatpush1.msra.mxu0 0.0
      %1612 = vmatprep.subr.mxu0 0.0
      %1613 = vmatpush1.msra.mxu0 0.0
      %1614 = vmatprep.subr.mxu0 0.0
      %1615 = vmatpush1.msra.mxu0 0.0
      %1616 = vmatprep.subr.mxu0 0.0
      %1617 = vmatpush1.msra.mxu0 0.0
      %1618 = vmatprep.subr.mxu0 0.0
      %1619 = vmatpush1.msra.mxu0 0.0
      %1620 = vmatprep.mubr.f32.mxu0 0.0
      %1621 = vmatmul.mubr.f32.gmra.mrb[0].mxu0 %v1545
      %v1622 = vpop.f32.mrb[0].mxu0
      %v1623 = vadd.f32 0.0, %v1622
      %v1624 = vpop.f32.mrb[0].mxu0
      %1625 = vmatprep.mubr.f32.mxu0 0.0
      %1626 = vmatmul.mubr.f32.gmra.mrb[0].mxu0 %v1548
      %v1627 = vpop.f32.mrb[0].mxu0
      %v1628 = vadd.f32 0.0, %v1627
      %v1629 = vpop.f32.mrb[0].mxu0
      %1630 = vmatprep.mubr.f32.mxu0 0.0
      %1631 = vmatmul.mubr.f32.gmra.mrb[0].mxu0 %v1551
      %v1632 = vpop.f32.mrb[0].mxu0
      %v1633 = vadd.f32 0.0, %v1632
      %v1634 = vpop.f32.mrb[0].mxu0
      %1635 = vdwg.mxu0
      %s1636 = scalar_lea.vmem %s7, 32
      %v1637 = vld [vmem:[%s1636] sm:$0xff]
      %v1638 = vld [vmem:[%s1636 + $0x8] sm:$0xff]
      %v1639 = vld [vmem:[%s1636 + $0x10] sm:$0xff]
      %v1640 = vld [vmem:[%s1636 + $0x18] sm:$0xff]
      %v1642 = vsel %vm861, %v1623, 0
      %v1645 = vsel %vm861, %v1628, 0
      %v1648 = vsel %vm861, %v1633, 0
      %1650 = vmatprep.subr.mxu0 0.0
      %1651 = vmatpush1.msra.mxu0 %v1637
      %1652 = vmatprep.subr.mxu0 0.0
      %1653 = vmatpush1.msra.mxu0 %v1638
      %1654 = vmatprep.subr.mxu0 0.0
      %1655 = vmatpush1.msra.mxu0 %v1639
      %1656 = vmatprep.subr.mxu0 0.0
      %1657 = vmatpush1.msra.mxu0 %v1640
      %1658 = vmatprep.subr.mxu0 0.0
      %1659 = vmatpush1.msra.mxu0 0.0
      %1660 = vmatprep.subr.mxu0 0.0
      %1661 = vmatpush1.msra.mxu0 0.0
      %1662 = vmatprep.subr.mxu0 0.0
      %1663 = vmatpush1.msra.mxu0 0.0
      %1664 = vmatprep.subr.mxu0 0.0
      %1665 = vmatpush1.msra.mxu0 0.0
      %1666 = vmatprep.subr.mxu0 0.0
      %1667 = vmatpush1.msra.mxu0 0.0
      %1668 = vmatprep.subr.mxu0 0.0
      %1669 = vmatpush1.msra.mxu0 0.0
      %1670 = vmatprep.subr.mxu0 0.0
      %1671 = vmatpush1.msra.mxu0 0.0
      %1672 = vmatprep.subr.mxu0 0.0
      %1673 = vmatpush1.msra.mxu0 0.0
      %1674 = vmatprep.subr.mxu0 0.0
      %1675 = vmatpush1.msra.mxu0 0.0
      %1676 = vmatprep.subr.mxu0 0.0
      %1677 = vmatpush1.msra.mxu0 0.0
      %1678 = vmatprep.subr.mxu0 0.0
      %1679 = vmatpush1.msra.mxu0 0.0
      %1680 = vmatprep.subr.mxu0 0.0
      %1681 = vmatpush1.msra.mxu0 0.0
      %1682 = vmatprep.subr.mxu0 0.0
      %1683 = vmatpush1.msra.mxu0 0.0
      %1684 = vmatprep.subr.mxu0 0.0
      %1685 = vmatpush1.msra.mxu0 0.0
      %1686 = vmatprep.subr.mxu0 0.0
      %1687 = vmatpush1.msra.mxu0 0.0
      %1688 = vmatprep.subr.mxu0 0.0
      %1689 = vmatpush1.msra.mxu0 0.0
      %1690 = vmatprep.subr.mxu0 0.0
      %1691 = vmatpush1.msra.mxu0 0.0
      %1692 = vmatprep.subr.mxu0 0.0
      %1693 = vmatpush1.msra.mxu0 0.0
      %1694 = vmatprep.subr.mxu0 0.0
      %1695 = vmatpush1.msra.mxu0 0.0
      %1696 = vmatprep.subr.mxu0 0.0
      %1697 = vmatpush1.msra.mxu0 0.0
      %1698 = vmatprep.subr.mxu0 0.0
      %1699 = vmatpush1.msra.mxu0 0.0
      %1700 = vmatprep.subr.mxu0 0.0
      %1701 = vmatpush1.msra.mxu0 0.0
      %1702 = vmatprep.subr.mxu0 0.0
      %1703 = vmatpush1.msra.mxu0 0.0
      %1704 = vmatprep.subr.mxu0 0.0
      %1705 = vmatpush1.msra.mxu0 0.0
      %1706 = vmatprep.subr.mxu0 0.0
      %1707 = vmatpush1.msra.mxu0 0.0
      %1708 = vmatprep.subr.mxu0 0.0
      %1709 = vmatpush1.msra.mxu0 0.0
      %1710 = vmatprep.subr.mxu0 0.0
      %1711 = vmatpush1.msra.mxu0 0.0
      %1712 = vmatprep.subr.mxu0 0.0
      %1713 = vmatpush1.msra.mxu0 0.0
      %1714 = vmatprep.mubr.f32.mxu0 0.0
      %1715 = vmatmul.mubr.f32.gmra.mrb[0].mxu0 %v1642
      %v1716 = vpop.f32.mrb[0].mxu0
      %v1717 = vadd.f32 0.0, %v1716
      %v1718 = vpop.f32.mrb[0].mxu0
      %1719 = vmatprep.mubr.f32.mxu0 0.0
      %1720 = vmatmul.mubr.f32.gmra.mrb[0].mxu0 %v1645
      %v1721 = vpop.f32.mrb[0].mxu0
      %v1722 = vadd.f32 0.0, %v1721
      %v1723 = vpop.f32.mrb[0].mxu0
      %1724 = vmatprep.mubr.f32.mxu0 0.0
      %1725 = vmatmul.mubr.f32.gmra.mrb[0].mxu0 %v1648
      %v1726 = vpop.f32.mrb[0].mxu0
      %v1727 = vadd.f32 0.0, %v1726
      %v1728 = vpop.f32.mrb[0].mxu0
      %1729 = vdwg.mxu0
      %v1731 = vsel %vm861, %v1078, 0
      %v1734 = vsel %vm861, %v1083, 0
      %v1737 = vsel %vm861, %v1088, 0
      %1739 = vmatprep.subr.mxu0 0.0
      %1740 = vmatpush1.msra.mxu0 %v1091
      %1741 = vmatprep.subr.mxu0 0.0
      %1742 = vmatpush1.msra.mxu0 %v1092
      %1743 = vmatprep.subr.mxu0 0.0
      %1744 = vmatpush1.msra.mxu0 %v1093
      %1745 = vmatprep.subr.mxu0 0.0
      %1746 = vmatpush1.msra.mxu0 %v1094
      %1747 = vmatprep.subr.mxu0 0.0
      %1748 = vmatpush1.msra.mxu0 0.0
      %1749 = vmatprep.subr.mxu0 0.0
      %1750 = vmatpush1.msra.mxu0 0.0
      %1751 = vmatprep.subr.mxu0 0.0
      %1752 = vmatpush1.msra.mxu0 0.0
      %1753 = vmatprep.subr.mxu0 0.0
      %1754 = vmatpush1.msra.mxu0 0.0
      %1755 = vmatprep.subr.mxu0 0.0
      %1756 = vmatpush1.msra.mxu0 0.0
      %1757 = vmatprep.subr.mxu0 0.0
      %1758 = vmatpush1.msra.mxu0 0.0
      %1759 = vmatprep.subr.mxu0 0.0
      %1760 = vmatpush1.msra.mxu0 0.0
      %1761 = vmatprep.subr.mxu0 0.0
      %1762 = vmatpush1.msra.mxu0 0.0
      %1763 = vmatprep.subr.mxu0 0.0
      %1764 = vmatpush1.msra.mxu0 0.0
      %1765 = vmatprep.subr.mxu0 0.0
      %1766 = vmatpush1.msra.mxu0 0.0
      %1767 = vmatprep.subr.mxu0 0.0
      %1768 = vmatpush1.msra.mxu0 0.0
      %1769 = vmatprep.subr.mxu0 0.0
      %1770 = vmatpush1.msra.mxu0 0.0
      %1771 = vmatprep.subr.mxu0 0.0
      %1772 = vmatpush1.msra.mxu0 0.0
      %1773 = vmatprep.subr.mxu0 0.0
      %1774 = vmatpush1.msra.mxu0 0.0
      %1775 = vmatprep.subr.mxu0 0.0
      %1776 = vmatpush1.msra.mxu0 0.0
      %1777 = vmatprep.subr.mxu0 0.0
      %1778 = vmatpush1.msra.mxu0 0.0
      %1779 = vmatprep.subr.mxu0 0.0
      %1780 = vmatpush1.msra.mxu0 0.0
      %1781 = vmatprep.subr.mxu0 0.0
      %1782 = vmatpush1.msra.mxu0 0.0
      %1783 = vmatprep.subr.mxu0 0.0
      %1784 = vmatpush1.msra.mxu0 0.0
      %1785 = vmatprep.subr.mxu0 0.0
      %1786 = vmatpush1.msra.mxu0 0.0
      %1787 = vmatprep.subr.mxu0 0.0
      %1788 = vmatpush1.msra.mxu0 0.0
      %1789 = vmatprep.subr.mxu0 0.0
      %1790 = vmatpush1.msra.mxu0 0.0
      %1791 = vmatprep.subr.mxu0 0.0
      %1792 = vmatpush1.msra.mxu0 0.0
      %1793 = vmatprep.subr.mxu0 0.0
      %1794 = vmatpush1.msra.mxu0 0.0
      %1795 = vmatprep.subr.mxu0 0.0
      %1796 = vmatpush1.msra.mxu0 0.0
      %1797 = vmatprep.subr.mxu0 0.0
      %1798 = vmatpush1.msra.mxu0 0.0
      %1799 = vmatprep.subr.mxu0 0.0
      %1800 = vmatpush1.msra.mxu0 0.0
      %1801 = vmatprep.subr.mxu0 0.0
      %1802 = vmatpush1.msra.mxu0 0.0
      %1803 = vmatprep.mubr.f32.mxu0 0.0
      %1804 = vmatmul.mubr.f32.gmra.mrb[0].mxu0 %v1731
      %v1805 = vpop.f32.mrb[0].mxu0
      %v1806 = vadd.f32 %v1717, %v1805
      %v1807 = vpop.f32.mrb[0].mxu0
      %1808 = vmatprep.mubr.f32.mxu0 0.0
      %1809 = vmatmul.mubr.f32.gmra.mrb[0].mxu0 %v1734
      %v1810 = vpop.f32.mrb[0].mxu0
      %v1811 = vadd.f32 %v1722, %v1810
      %v1812 = vpop.f32.mrb[0].mxu0
      %1813 = vmatprep.mubr.f32.mxu0 0.0
      %1814 = vmatmul.mubr.f32.gmra.mrb[0].mxu0 %v1737
      %v1815 = vpop.f32.mrb[0].mxu0
      %v1816 = vadd.f32 %v1727, %v1815
      %v1817 = vpop.f32.mrb[0].mxu0
      %1818 = vdwg.mxu0
      %s1819 = scalar_lea.vmem %s1, 256
      %v1820 = vld [vmem:[%s1819] sm:$0xff]
      %v1821 = vld [vmem:[%s1819 + $0x8] sm:$0xff]
      %v1822 = vld [vmem:[%s1819 + $0x10] sm:$0xff]
      %v1823 = vld [vmem:[%s1819 + $0x18] sm:$0xff]
      %v1824 = vld [vmem:[%s1819 + $0x20] sm:$0xff]
      %v1825 = vld [vmem:[%s1819 + $0x28] sm:$0xff]
      %v1826 = vld [vmem:[%s1819 + $0x30] sm:$0xff]
      %v1827 = vld [vmem:[%s1819 + $0x38] sm:$0xff]
      %v1828 = vld [vmem:[%s1819 + $0x40] sm:$0xff]
      %v1829 = vld [vmem:[%s1819 + $0x48] sm:$0xff]
      %v1830 = vld [vmem:[%s1819 + $0x50] sm:$0xff]
      %v1831 = vld [vmem:[%s1819 + $0x58] sm:$0xff]
      %v1832 = vld [vmem:[%s1819 + $0x60] sm:$0xff]
      %v1833 = vld [vmem:[%s1819 + $0x68] sm:$0xff]
      %v1834 = vld [vmem:[%s1819 + $0x70] sm:$0xff]
      %v1835 = vld [vmem:[%s1819 + $0x78] sm:$0xff]
      %s1836 = scalar_lea.vmem %s2, 2
      %v1837 = vld [vmem:[%s1836] sm:$0x1]
      %v1839 = vlaneseq
      %v1840 = vshrl.u32 %v1839, 7
      %v1841 = vsub.s32 0, %v1840
      %v1842 = vrot.slane %v1837, %v1841
      %1844 = vmatprep.subr.mxu0 0.0
      %1845 = vmatpush1.msra.mxu0 %v1820
      %1846 = vmatprep.subr.mxu0 0.0
      %1847 = vmatpush1.msra.mxu0 %v1821
      %1848 = vmatprep.subr.mxu0 0.0
      %1849 = vmatpush1.msra.mxu0 %v1822
      %1850 = vmatprep.subr.mxu0 0.0
      %1851 = vmatpush1.msra.mxu0 %v1823
      %1852 = vmatprep.subr.mxu0 0.0
      %1853 = vmatpush1.msra.mxu0 %v1824
      %1854 = vmatprep.subr.mxu0 0.0
      %1855 = vmatpush1.msra.mxu0 %v1825
      %1856 = vmatprep.subr.mxu0 0.0
      %1857 = vmatpush1.msra.mxu0 %v1826
      %1858 = vmatprep.subr.mxu0 0.0
      %1859 = vmatpush1.msra.mxu0 %v1827
      %1860 = vmatprep.subr.mxu0 0.0
      %1861 = vmatpush1.msra.mxu0 %v1828
      %1862 = vmatprep.subr.mxu0 0.0
      %1863 = vmatpush1.msra.mxu0 %v1829
      %1864 = vmatprep.subr.mxu0 0.0
      %1865 = vmatpush1.msra.mxu0 %v1830
      %1866 = vmatprep.subr.mxu0 0.0
      %1867 = vmatpush1.msra.mxu0 %v1831
      %1868 = vmatprep.subr.mxu0 0.0
      %1869 = vmatpush1.msra.mxu0 %v1832
      %1870 = vmatprep.subr.mxu0 0.0
      %1871 = vmatpush1.msra.mxu0 %v1833
      %1872 = vmatprep.subr.mxu0 0.0
      %1873 = vmatpush1.msra.mxu0 %v1834
      %1874 = vmatprep.subr.mxu0 0.0
      %1875 = vmatpush1.msra.mxu0 %v1835
      %1876 = vmatprep.subr.mxu0 0.0
      %1877 = vmatpush1.msra.mxu0 0.0
      %1878 = vmatprep.subr.mxu0 0.0
      %1879 = vmatpush1.msra.mxu0 0.0
      %1880 = vmatprep.subr.mxu0 0.0
      %1881 = vmatpush1.msra.mxu0 0.0
      %1882 = vmatprep.subr.mxu0 0.0
      %1883 = vmatpush1.msra.mxu0 0.0
      %1884 = vmatprep.subr.mxu0 0.0
      %1885 = vmatpush1.msra.mxu0 0.0
      %1886 = vmatprep.subr.mxu0 0.0
      %1887 = vmatpush1.msra.mxu0 0.0
      %1888 = vmatprep.subr.mxu0 0.0
      %1889 = vmatpush1.msra.mxu0 0.0
      %1890 = vmatprep.subr.mxu0 0.0
      %1891 = vmatpush1.msra.mxu0 0.0
      %1892 = vmatprep.subr.mxu0 0.0
      %1893 = vmatpush1.msra.mxu0 0.0
      %1894 = vmatprep.subr.mxu0 0.0
      %1895 = vmatpush1.msra.mxu0 0.0
      %1896 = vmatprep.subr.mxu0 0.0
      %1897 = vmatpush1.msra.mxu0 0.0
      %1898 = vmatprep.subr.mxu0 0.0
      %1899 = vmatpush1.msra.mxu0 0.0
      %1900 = vmatprep.subr.mxu0 0.0
      %1901 = vmatpush1.msra.mxu0 0.0
      %1902 = vmatprep.subr.mxu0 0.0
      %1903 = vmatpush1.msra.mxu0 0.0
      %1904 = vmatprep.subr.mxu0 0.0
      %1905 = vmatpush1.msra.mxu0 0.0
      %1906 = vmatprep.subr.mxu0 0.0
      %1907 = vmatpush1.msra.mxu0 0.0
      %1908 = vmatprep.mubr.f32.mxu0 0.0
      %1909 = vmatmul.mubr.f32.gmra.mrb[0].mxu0 %v549
      %v1910 = vpop.f32.mrb[0].mxu0
      %v1911 = vadd.f32 %v1842, %v1910
      %v1912 = vpop.f32.mrb[0].mxu0
      %1913 = vmatprep.mubr.f32.mxu0 0.0
      %1914 = vmatmul.mubr.f32.gmra.mrb[0].mxu0 %v550
      %v1915 = vpop.f32.mrb[0].mxu0
      %v1916 = vadd.f32 %v1842, %v1915
      %v1917 = vpop.f32.mrb[0].mxu0
      %1918 = vmatprep.mubr.f32.mxu0 0.0
      %1919 = vmatmul.mubr.f32.gmra.mrb[0].mxu0 %v551
      %v1920 = vpop.f32.mrb[0].mxu0
      %v1921 = vadd.f32 %v1842, %v1920
      %v1922 = vpop.f32.mrb[0].mxu0
      %1923 = vdwg.mxu0
      %s1924 = scalar_lea.vmem %s3, 256
      %v1925 = vld [vmem:[%s1924] sm:$0xff]
      %v1926 = vld [vmem:[%s1924 + $0x8] sm:$0xff]
      %v1927 = vld [vmem:[%s1924 + $0x10] sm:$0xff]
      %v1928 = vld [vmem:[%s1924 + $0x18] sm:$0xff]
      %v1929 = vld [vmem:[%s1924 + $0x20] sm:$0xff]
      %v1930 = vld [vmem:[%s1924 + $0x28] sm:$0xff]
      %v1931 = vld [vmem:[%s1924 + $0x30] sm:$0xff]
      %v1932 = vld [vmem:[%s1924 + $0x38] sm:$0xff]
      %v1933 = vld [vmem:[%s1924 + $0x40] sm:$0xff]
      %v1934 = vld [vmem:[%s1924 + $0x48] sm:$0xff]
      %v1935 = vld [vmem:[%s1924 + $0x50] sm:$0xff]
      %v1936 = vld [vmem:[%s1924 + $0x58] sm:$0xff]
      %v1937 = vld [vmem:[%s1924 + $0x60] sm:$0xff]
      %v1938 = vld [vmem:[%s1924 + $0x68] sm:$0xff]
      %v1939 = vld [vmem:[%s1924 + $0x70] sm:$0xff]
      %v1940 = vld [vmem:[%s1924 + $0x78] sm:$0xff]
      %s1941 = scalar_lea.vmem %s4, 2
      %v1942 = vld [vmem:[%s1941] sm:$0x1]
      %v1944 = vlaneseq
      %v1945 = vshrl.u32 %v1944, 7
      %v1946 = vsub.s32 0, %v1945
      %v1947 = vrot.slane %v1942, %v1946
      %1949 = vmatprep.subr.mxu0 0.0
      %1950 = vmatpush1.msra.mxu0 %v1925
      %1951 = vmatprep.subr.mxu0 0.0
      %1952 = vmatpush1.msra.mxu0 %v1926
      %1953 = vmatprep.subr.mxu0 0.0
      %1954 = vmatpush1.msra.mxu0 %v1927
      %1955 = vmatprep.subr.mxu0 0.0
      %1956 = vmatpush1.msra.mxu0 %v1928
      %1957 = vmatprep.subr.mxu0 0.0
      %1958 = vmatpush1.msra.mxu0 %v1929
      %1959 = vmatprep.subr.mxu0 0.0
      %1960 = vmatpush1.msra.mxu0 %v1930
      %1961 = vmatprep.subr.mxu0 0.0
      %1962 = vmatpush1.msra.mxu0 %v1931
      %1963 = vmatprep.subr.mxu0 0.0
      %1964 = vmatpush1.msra.mxu0 %v1932
      %1965 = vmatprep.subr.mxu0 0.0
      %1966 = vmatpush1.msra.mxu0 %v1933
      %1967 = vmatprep.subr.mxu0 0.0
      %1968 = vmatpush1.msra.mxu0 %v1934
      %1969 = vmatprep.subr.mxu0 0.0
      %1970 = vmatpush1.msra.mxu0 %v1935
      %1971 = vmatprep.subr.mxu0 0.0
      %1972 = vmatpush1.msra.mxu0 %v1936
      %1973 = vmatprep.subr.mxu0 0.0
      %1974 = vmatpush1.msra.mxu0 %v1937
      %1975 = vmatprep.subr.mxu0 0.0
      %1976 = vmatpush1.msra.mxu0 %v1938
      %1977 = vmatprep.subr.mxu0 0.0
      %1978 = vmatpush1.msra.mxu0 %v1939
      %1979 = vmatprep.subr.mxu0 0.0
      %1980 = vmatpush1.msra.mxu0 %v1940
      %1981 = vmatprep.subr.mxu0 0.0
      %1982 = vmatpush1.msra.mxu0 0.0
      %1983 = vmatprep.subr.mxu0 0.0
      %1984 = vmatpush1.msra.mxu0 0.0
      %1985 = vmatprep.subr.mxu0 0.0
      %1986 = vmatpush1.msra.mxu0 0.0
      %1987 = vmatprep.subr.mxu0 0.0
      %1988 = vmatpush1.msra.mxu0 0.0
      %1989 = vmatprep.subr.mxu0 0.0
      %1990 = vmatpush1.msra.mxu0 0.0
      %1991 = vmatprep.subr.mxu0 0.0
      %1992 = vmatpush1.msra.mxu0 0.0
      %1993 = vmatprep.subr.mxu0 0.0
      %1994 = vmatpush1.msra.mxu0 0.0
      %1995 = vmatprep.subr.mxu0 0.0
      %1996 = vmatpush1.msra.mxu0 0.0
      %1997 = vmatprep.subr.mxu0 0.0
      %1998 = vmatpush1.msra.mxu0 0.0
      %1999 = vmatprep.subr.mxu0 0.0
      %2000 = vmatpush1.msra.mxu0 0.0
      %2001 = vmatprep.subr.mxu0 0.0
      %2002 = vmatpush1.msra.mxu0 0.0
      %2003 = vmatprep.subr.mxu0 0.0
      %2004 = vmatpush1.msra.mxu0 0.0
      %2005 = vmatprep.subr.mxu0 0.0
      %2006 = vmatpush1.msra.mxu0 0.0
      %2007 = vmatprep.subr.mxu0 0.0
      %2008 = vmatpush1.msra.mxu0 0.0
      %2009 = vmatprep.subr.mxu0 0.0
      %2010 = vmatpush1.msra.mxu0 0.0
      %2011 = vmatprep.subr.mxu0 0.0
      %2012 = vmatpush1.msra.mxu0 0.0
      %2013 = vmatprep.mubr.f32.mxu0 0.0
      %2014 = vmatmul.mubr.f32.gmra.mrb[0].mxu0 %v549
      %v2015 = vpop.f32.mrb[0].mxu0
      %v2016 = vadd.f32 %v1947, %v2015
      %v2017 = vpop.f32.mrb[0].mxu0
      %2018 = vmatprep.mubr.f32.mxu0 0.0
      %2019 = vmatmul.mubr.f32.gmra.mrb[0].mxu0 %v550
      %v2020 = vpop.f32.mrb[0].mxu0
      %v2021 = vadd.f32 %v1947, %v2020
      %v2022 = vpop.f32.mrb[0].mxu0
      %2023 = vmatprep.mubr.f32.mxu0 0.0
      %2024 = vmatmul.mubr.f32.gmra.mrb[0].mxu0 %v551
      %v2025 = vpop.f32.mrb[0].mxu0
      %v2026 = vadd.f32 %v1947, %v2025
      %v2027 = vpop.f32.mrb[0].mxu0
      %2028 = vdwg.mxu0
      %s2029 = scalar_lea.vmem %s5, 256
      %v2030 = vld [vmem:[%s2029] sm:$0xff]
      %v2031 = vld [vmem:[%s2029 + $0x8] sm:$0xff]
      %v2032 = vld [vmem:[%s2029 + $0x10] sm:$0xff]
      %v2033 = vld [vmem:[%s2029 + $0x18] sm:$0xff]
      %v2034 = vld [vmem:[%s2029 + $0x20] sm:$0xff]
      %v2035 = vld [vmem:[%s2029 + $0x28] sm:$0xff]
      %v2036 = vld [vmem:[%s2029 + $0x30] sm:$0xff]
      %v2037 = vld [vmem:[%s2029 + $0x38] sm:$0xff]
      %v2038 = vld [vmem:[%s2029 + $0x40] sm:$0xff]
      %v2039 = vld [vmem:[%s2029 + $0x48] sm:$0xff]
      %v2040 = vld [vmem:[%s2029 + $0x50] sm:$0xff]
      %v2041 = vld [vmem:[%s2029 + $0x58] sm:$0xff]
      %v2042 = vld [vmem:[%s2029 + $0x60] sm:$0xff]
      %v2043 = vld [vmem:[%s2029 + $0x68] sm:$0xff]
      %v2044 = vld [vmem:[%s2029 + $0x70] sm:$0xff]
      %v2045 = vld [vmem:[%s2029 + $0x78] sm:$0xff]
      %s2046 = scalar_lea.vmem %s6, 2
      %v2047 = vld [vmem:[%s2046] sm:$0x1]
      %v2049 = vlaneseq
      %v2050 = vshrl.u32 %v2049, 7
      %v2051 = vsub.s32 0, %v2050
      %v2052 = vrot.slane %v2047, %v2051
      %2054 = vmatprep.subr.mxu0 0.0
      %2055 = vmatpush1.msra.mxu0 %v2030
      %2056 = vmatprep.subr.mxu0 0.0
      %2057 = vmatpush1.msra.mxu0 %v2031
      %2058 = vmatprep.subr.mxu0 0.0
      %2059 = vmatpush1.msra.mxu0 %v2032
      %2060 = vmatprep.subr.mxu0 0.0
      %2061 = vmatpush1.msra.mxu0 %v2033
      %2062 = vmatprep.subr.mxu0 0.0
      %2063 = vmatpush1.msra.mxu0 %v2034
      %2064 = vmatprep.subr.mxu0 0.0
      %2065 = vmatpush1.msra.mxu0 %v2035
      %2066 = vmatprep.subr.mxu0 0.0
      %2067 = vmatpush1.msra.mxu0 %v2036
      %2068 = vmatprep.subr.mxu0 0.0
      %2069 = vmatpush1.msra.mxu0 %v2037
      %2070 = vmatprep.subr.mxu0 0.0
      %2071 = vmatpush1.msra.mxu0 %v2038
      %2072 = vmatprep.subr.mxu0 0.0
      %2073 = vmatpush1.msra.mxu0 %v2039
      %2074 = vmatprep.subr.mxu0 0.0
      %2075 = vmatpush1.msra.mxu0 %v2040
      %2076 = vmatprep.subr.mxu0 0.0
      %2077 = vmatpush1.msra.mxu0 %v2041
      %2078 = vmatprep.subr.mxu0 0.0
      %2079 = vmatpush1.msra.mxu0 %v2042
      %2080 = vmatprep.subr.mxu0 0.0
      %2081 = vmatpush1.msra.mxu0 %v2043
      %2082 = vmatprep.subr.mxu0 0.0
      %2083 = vmatpush1.msra.mxu0 %v2044
      %2084 = vmatprep.subr.mxu0 0.0
      %2085 = vmatpush1.msra.mxu0 %v2045
      %2086 = vmatprep.subr.mxu0 0.0
      %2087 = vmatpush1.msra.mxu0 0.0
      %2088 = vmatprep.subr.mxu0 0.0
      %2089 = vmatpush1.msra.mxu0 0.0
      %2090 = vmatprep.subr.mxu0 0.0
      %2091 = vmatpush1.msra.mxu0 0.0
      %2092 = vmatprep.subr.mxu0 0.0
      %2093 = vmatpush1.msra.mxu0 0.0
      %2094 = vmatprep.subr.mxu0 0.0
      %2095 = vmatpush1.msra.mxu0 0.0
      %2096 = vmatprep.subr.mxu0 0.0
      %2097 = vmatpush1.msra.mxu0 0.0
      %2098 = vmatprep.subr.mxu0 0.0
      %2099 = vmatpush1.msra.mxu0 0.0
      %2100 = vmatprep.subr.mxu0 0.0
      %2101 = vmatpush1.msra.mxu0 0.0
      %2102 = vmatprep.subr.mxu0 0.0
      %2103 = vmatpush1.msra.mxu0 0.0
      %2104 = vmatprep.subr.mxu0 0.0
      %2105 = vmatpush1.msra.mxu0 0.0
      %2106 = vmatprep.subr.mxu0 0.0
      %2107 = vmatpush1.msra.mxu0 0.0
      %2108 = vmatprep.subr.mxu0 0.0
      %2109 = vmatpush1.msra.mxu0 0.0
      %2110 = vmatprep.subr.mxu0 0.0
      %2111 = vmatpush1.msra.mxu0 0.0
      %2112 = vmatprep.subr.mxu0 0.0
      %2113 = vmatpush1.msra.mxu0 0.0
      %2114 = vmatprep.subr.mxu0 0.0
      %2115 = vmatpush1.msra.mxu0 0.0
      %2116 = vmatprep.subr.mxu0 0.0
      %2117 = vmatpush1.msra.mxu0 0.0
      %2118 = vmatprep.mubr.f32.mxu0 0.0
      %2119 = vmatmul.mubr.f32.gmra.mrb[0].mxu0 %v549
      %v2120 = vpop.f32.mrb[0].mxu0
      %v2121 = vadd.f32 %v2052, %v2120
      %v2122 = vpop.f32.mrb[0].mxu0
      %2123 = vmatprep.mubr.f32.mxu0 0.0
      %2124 = vmatmul.mubr.f32.gmra.mrb[0].mxu0 %v550
      %v2125 = vpop.f32.mrb[0].mxu0
      %v2126 = vadd.f32 %v2052, %v2125
      %v2127 = vpop.f32.mrb[0].mxu0
      %2128 = vmatprep.mubr.f32.mxu0 0.0
      %2129 = vmatmul.mubr.f32.gmra.mrb[0].mxu0 %v551
      %v2130 = vpop.f32.mrb[0].mxu0
      %v2131 = vadd.f32 %v2052, %v2130
      %v2132 = vpop.f32.mrb[0].mxu0
      %2133 = vdwg.mxu0
      %v2135 = vsel %vm861, %v1911, 0
      %v2138 = vsel %vm861, %v1916, 0
      %v2141 = vsel %vm861, %v1921, 0
      %v2144 = vsel %vm861, %v2016, 0
      %v2147 = vsel %vm861, %v2021, 0
      %v2150 = vsel %vm861, %v2026, 0
      %2152 = vmatprep.subr.mxu0 0.0
      %2153 = vmatpush1.xpose.msra.mxu0 %v2144
      %2154 = vmatprep.subr.mxu0 0.0
      %2155 = vmatpush1.xpose.msra.mxu0 %v2147
      %2156 = vmatprep.subr.mxu0 0.0
      %2157 = vmatpush1.xpose.msra.mxu0 %v2150
      %2158 = vmatprep.subr.mxu0 0.0
      %2159 = vmatpush1.xpose.msra.mxu0 0.0
      %2160 = vmatprep.subr.mxu0 0.0
      %2161 = vmatpush1.xpose.msra.mxu0 0.0
      %2162 = vmatprep.subr.mxu0 0.0
      %2163 = vmatpush1.xpose.msra.mxu0 0.0
      %2164 = vmatprep.subr.mxu0 0.0
      %2165 = vmatpush1.xpose.msra.mxu0 0.0
      %2166 = vmatprep.subr.mxu0 0.0
      %2167 = vmatpush1.xpose.msra.mxu0 0.0
      %2168 = vmatprep.subr.mxu0 0.0
      %2169 = vmatpush1.xpose.msra.mxu0 0.0
      %2170 = vmatprep.subr.mxu0 0.0
      %2171 = vmatpush1.xpose.msra.mxu0 0.0
      %2172 = vmatprep.subr.mxu0 0.0
      %2173 = vmatpush1.xpose.msra.mxu0 0.0
      %2174 = vmatprep.subr.mxu0 0.0
      %2175 = vmatpush1.xpose.msra.mxu0 0.0
      %2176 = vmatprep.subr.mxu0 0.0
      %2177 = vmatpush1.xpose.msra.mxu0 0.0
      %2178 = vmatprep.subr.mxu0 0.0
      %2179 = vmatpush1.xpose.msra.mxu0 0.0
      %2180 = vmatprep.subr.mxu0 0.0
      %2181 = vmatpush1.xpose.msra.mxu0 0.0
      %2182 = vmatprep.subr.mxu0 0.0
      %2183 = vmatpush1.xpose.msra.mxu0 0.0
      %2184 = vmatprep.subr.mxu0 0.0
      %2185 = vmatpush1.xpose.msra.mxu0 0.0
      %2186 = vmatprep.subr.mxu0 0.0
      %2187 = vmatpush1.xpose.msra.mxu0 0.0
      %2188 = vmatprep.subr.mxu0 0.0
      %2189 = vmatpush1.xpose.msra.mxu0 0.0
      %2190 = vmatprep.subr.mxu0 0.0
      %2191 = vmatpush1.xpose.msra.mxu0 0.0
      %2192 = vmatprep.subr.mxu0 0.0
      %2193 = vmatpush1.xpose.msra.mxu0 0.0
      %2194 = vmatprep.subr.mxu0 0.0
      %2195 = vmatpush1.xpose.msra.mxu0 0.0
      %2196 = vmatprep.subr.mxu0 0.0
      %2197 = vmatpush1.xpose.msra.mxu0 0.0
      %2198 = vmatprep.subr.mxu0 0.0
      %2199 = vmatpush1.xpose.msra.mxu0 0.0
      %2200 = vmatprep.subr.mxu0 0.0
      %2201 = vmatpush1.xpose.msra.mxu0 0.0
      %2202 = vmatprep.subr.mxu0 0.0
      %2203 = vmatpush1.xpose.msra.mxu0 0.0
      %2204 = vmatprep.subr.mxu0 0.0
      %2205 = vmatpush1.xpose.msra.mxu0 0.0
      %2206 = vmatprep.subr.mxu0 0.0
      %2207 = vmatpush1.xpose.msra.mxu0 0.0
      %2208 = vmatprep.subr.mxu0 0.0
      %2209 = vmatpush1.xpose.msra.mxu0 0.0
      %2210 = vmatprep.subr.mxu0 0.0
      %2211 = vmatpush1.xpose.msra.mxu0 0.0
      %2212 = vmatprep.subr.mxu0 0.0
      %2213 = vmatpush1.xpose.msra.mxu0 0.0
      %2214 = vmatprep.subr.mxu0 0.0
      %2215 = vmatpush1.xpose.msra.mxu0 0.0
      %2216 = vmatprep.mubr.f32.mxu0 0.0
      %2217 = vmatmul.mubr.f32.gmra.mrb[0].mxu0 %v2135
      %v2218 = vpop.f32.mrb[0].mxu0
      %v2219 = vadd.f32 0.0, %v2218
      %v2220 = vpop.f32.mrb[0].mxu0
      %2221 = vmatprep.mubr.f32.mxu0 0.0
      %2222 = vmatmul.mubr.f32.gmra.mrb[0].mxu0 %v2138
      %v2223 = vpop.f32.mrb[0].mxu0
      %v2224 = vadd.f32 0.0, %v2223
      %v2225 = vpop.f32.mrb[0].mxu0
      %2226 = vmatprep.mubr.f32.mxu0 0.0
      %2227 = vmatmul.mubr.f32.gmra.mrb[0].mxu0 %v2141
      %v2228 = vpop.f32.mrb[0].mxu0
      %v2229 = vadd.f32 0.0, %v2228
      %v2230 = vpop.f32.mrb[0].mxu0
      %2231 = vdwg.mxu0
      %v2232 = vmul.f32 %v2219, 0.17677669
      %v2233 = vmul.f32 %v2224, 0.17677669
      %v2234 = vmul.f32 %v2229, 0.17677669
      %v2235 = vsel %vm963, %v2232, -inf
      %2236 = vmax.xlane.f32.xlu0 %v2235
      %v2237 = vpop.xlane.xlu0 %2236
      %v2238 = vsel %vm963, %v2233, -inf
      %2239 = vmax.xlane.f32.xlu0 %v2238
      %v2240 = vpop.xlane.xlu0 %2239
      %v2241 = vsel %vm970, %v2234, -inf
      %2242 = vmax.xlane.f32.xlu0 %v2241
      %v2243 = vpop.xlane.xlu0 %2242
      %v2244 = vsub.f32 %v2232, %v2237
      %v2245 = vsub.f32 %v2233, %v2240
      %v2246 = vsub.f32 %v2234, %v2243
      %v2247 = vmul.f32 %v2244, 1.442695
      %v2248 = vpow.pop %v2247
      %v2249 = vmul.f32 %v2245, 1.442695
      %v2250 = vpow.pop %v2249
      %v2251 = vmul.f32 %v2246, 1.442695
      %v2252 = vpow.pop %v2251
      %v2253 = vsel %vm963, %v2248, 0.0
      %2254 = vadd.xlane.f32.xlu0 %v2253
      %v2255 = vpop.xlane.xlu0 %2254
      %v2256 = vsel %vm963, %v2250, 0.0
      %2257 = vadd.xlane.f32.xlu0 %v2256
      %v2258 = vpop.xlane.xlu0 %2257
      %v2259 = vsel %vm970, %v2252, 0.0
      %2260 = vadd.xlane.f32.xlu0 %v2259
      %v2261 = vpop.xlane.xlu0 %2260
      %v2262 = vrcp.pop %v2255
      %v2263 = vmul.f32 %v2248, %v2262
      %v2264 = vrcp.pop %v2258
      %v2265 = vmul.f32 %v2250, %v2264
      %v2266 = vrcp.pop %v2261
      %v2267 = vmul.f32 %v2252, %v2266
      %v2269 = vsel %vm963, %v2263, 0
      %v2272 = vsel %vm963, %v2265, 0
      %v2275 = vsel %vm963, %v2267, 0
      %v2278 = vsel %vm1007, %v2131, 0
      %2280 = vmatprep.subr.mxu0 0.0
      %2281 = vmatpush1.msra.mxu0 %v2121
      %2282 = vmatprep.subr.mxu0 0.0
      %2283 = vmatpush1.msra.mxu0 %v2126
      %2284 = vmatprep.subr.mxu0 0.0
      %2285 = vmatpush1.msra.mxu0 %v2278
      %2286 = vmatprep.subr.mxu0 0.0
      %2287 = vmatpush1.msra.mxu0 0.0
      %2288 = vmatprep.subr.mxu0 0.0
      %2289 = vmatpush1.msra.mxu0 0.0
      %2290 = vmatprep.subr.mxu0 0.0
      %2291 = vmatpush1.msra.mxu0 0.0
      %2292 = vmatprep.subr.mxu0 0.0
      %2293 = vmatpush1.msra.mxu0 0.0
      %2294 = vmatprep.subr.mxu0 0.0
      %2295 = vmatpush1.msra.mxu0 0.0
      %2296 = vmatprep.subr.mxu0 0.0
      %2297 = vmatpush1.msra.mxu0 0.0
      %2298 = vmatprep.subr.mxu0 0.0
      %2299 = vmatpush1.msra.mxu0 0.0
      %2300 = vmatprep.subr.mxu0 0.0
      %2301 = vmatpush1.msra.mxu0 0.0
      %2302 = vmatprep.subr.mxu0 0.0
      %2303 = vmatpush1.msra.mxu0 0.0
      %2304 = vmatprep.subr.mxu0 0.0
      %2305 = vmatpush1.msra.mxu0 0.0
      %2306 = vmatprep.subr.mxu0 0.0
      %2307 = vmatpush1.msra.mxu0 0.0
      %2308 = vmatprep.subr.mxu0 0.0
      %2309 = vmatpush1.msra.mxu0 0.0
      %2310 = vmatprep.subr.mxu0 0.0
      %2311 = vmatpush1.msra.mxu0 0.0
      %2312 = vmatprep.subr.mxu0 0.0
      %2313 = vmatpush1.msra.mxu0 0.0
      %2314 = vmatprep.subr.mxu0 0.0
      %2315 = vmatpush1.msra.mxu0 0.0
      %2316 = vmatprep.subr.mxu0 0.0
      %2317 = vmatpush1.msra.mxu0 0.0
      %2318 = vmatprep.subr.mxu0 0.0
      %2319 = vmatpush1.msra.mxu0 0.0
      %2320 = vmatprep.subr.mxu0 0.0
      %2321 = vmatpush1.msra.mxu0 0.0
      %2322 = vmatprep.subr.mxu0 0.0
      %2323 = vmatpush1.msra.mxu0 0.0
      %2324 = vmatprep.subr.mxu0 0.0
      %2325 = vmatpush1.msra.mxu0 0.0
      %2326 = vmatprep.subr.mxu0 0.0
      %2327 = vmatpush1.msra.mxu0 0.0
      %2328 = vmatprep.subr.mxu0 0.0
      %2329 = vmatpush1.msra.mxu0 0.0
      %2330 = vmatprep.subr.mxu0 0.0
      %2331 = vmatpush1.msra.mxu0 0.0
      %2332 = vmatprep.subr.mxu0 0.0
      %2333 = vmatpush1.msra.mxu0 0.0
      %2334 = vmatprep.subr.mxu0 0.0
      %2335 = vmatpush1.msra.mxu0 0.0
      %2336 = vmatprep.subr.mxu0 0.0
      %2337 = vmatpush1.msra.mxu0 0.0
      %2338 = vmatprep.subr.mxu0 0.0
      %2339 = vmatpush1.msra.mxu0 0.0
      %2340 = vmatprep.subr.mxu0 0.0
      %2341 = vmatpush1.msra.mxu0 0.0
      %2342 = vmatprep.subr.mxu0 0.0
      %2343 = vmatpush1.msra.mxu0 0.0
      %2344 = vmatprep.mubr.f32.mxu0 0.0
      %2345 = vmatmul.mubr.f32.gmra.mrb[0].mxu0 %v2269
      %v2346 = vpop.f32.mrb[0].mxu0
      %v2347 = vadd.f32 0.0, %v2346
      %v2348 = vpop.f32.mrb[0].mxu0
      %2349 = vmatprep.mubr.f32.mxu0 0.0
      %2350 = vmatmul.mubr.f32.gmra.mrb[0].mxu0 %v2272
      %v2351 = vpop.f32.mrb[0].mxu0
      %v2352 = vadd.f32 0.0, %v2351
      %v2353 = vpop.f32.mrb[0].mxu0
      %2354 = vmatprep.mubr.f32.mxu0 0.0
      %2355 = vmatmul.mubr.f32.gmra.mrb[0].mxu0 %v2275
      %v2356 = vpop.f32.mrb[0].mxu0
      %v2357 = vadd.f32 0.0, %v2356
      %v2358 = vpop.f32.mrb[0].mxu0
      %2359 = vdwg.mxu0
      %s2360 = scalar_lea.vmem %s7, 64
      %v2361 = vld [vmem:[%s2360] sm:$0xff]
      %v2362 = vld [vmem:[%s2360 + $0x8] sm:$0xff]
      %v2363 = vld [vmem:[%s2360 + $0x10] sm:$0xff]
      %v2364 = vld [vmem:[%s2360 + $0x18] sm:$0xff]
      %v2366 = vsel %vm861, %v2347, 0
      %v2369 = vsel %vm861, %v2352, 0
      %v2372 = vsel %vm861, %v2357, 0
      %2374 = vmatprep.subr.mxu0 0.0
      %2375 = vmatpush1.msra.mxu0 %v2361
      %2376 = vmatprep.subr.mxu0 0.0
      %2377 = vmatpush1.msra.mxu0 %v2362
      %2378 = vmatprep.subr.mxu0 0.0
      %2379 = vmatpush1.msra.mxu0 %v2363
      %2380 = vmatprep.subr.mxu0 0.0
      %2381 = vmatpush1.msra.mxu0 %v2364
      %2382 = vmatprep.subr.mxu0 0.0
      %2383 = vmatpush1.msra.mxu0 0.0
      %2384 = vmatprep.subr.mxu0 0.0
      %2385 = vmatpush1.msra.mxu0 0.0
      %2386 = vmatprep.subr.mxu0 0.0
      %2387 = vmatpush1.msra.mxu0 0.0
      %2388 = vmatprep.subr.mxu0 0.0
      %2389 = vmatpush1.msra.mxu0 0.0
      %2390 = vmatprep.subr.mxu0 0.0
      %2391 = vmatpush1.msra.mxu0 0.0
      %2392 = vmatprep.subr.mxu0 0.0
      %2393 = vmatpush1.msra.mxu0 0.0
      %2394 = vmatprep.subr.mxu0 0.0
      %2395 = vmatpush1.msra.mxu0 0.0
      %2396 = vmatprep.subr.mxu0 0.0
      %2397 = vmatpush1.msra.mxu0 0.0
      %2398 = vmatprep.subr.mxu0 0.0
      %2399 = vmatpush1.msra.mxu0 0.0
      %2400 = vmatprep.subr.mxu0 0.0
      %2401 = vmatpush1.msra.mxu0 0.0
      %2402 = vmatprep.subr.mxu0 0.0
      %2403 = vmatpush1.msra.mxu0 0.0
      %2404 = vmatprep.subr.mxu0 0.0
      %2405 = vmatpush1.msra.mxu0 0.0
      %2406 = vmatprep.subr.mxu0 0.0
      %2407 = vmatpush1.msra.mxu0 0.0
      %2408 = vmatprep.subr.mxu0 0.0
      %2409 = vmatpush1.msra.mxu0 0.0
      %2410 = vmatprep.subr.mxu0 0.0
      %2411 = vmatpush1.msra.mxu0 0.0
      %2412 = vmatprep.subr.mxu0 0.0
      %2413 = vmatpush1.msra.mxu0 0.0
      %2414 = vmatprep.subr.mxu0 0.0
      %2415 = vmatpush1.msra.mxu0 0.0
      %2416 = vmatprep.subr.mxu0 0.0
      %2417 = vmatpush1.msra.mxu0 0.0
      %2418 = vmatprep.subr.mxu0 0.0
      %2419 = vmatpush1.msra.mxu0 0.0
      %2420 = vmatprep.subr.mxu0 0.0
      %2421 = vmatpush1.msra.mxu0 0.0
      %2422 = vmatprep.subr.mxu0 0.0
      %2423 = vmatpush1.msra.mxu0 0.0
      %2424 = vmatprep.subr.mxu0 0.0
      %2425 = vmatpush1.msra.mxu0 0.0
      %2426 = vmatprep.subr.mxu0 0.0
      %2427 = vmatpush1.msra.mxu0 0.0
      %2428 = vmatprep.subr.mxu0 0.0
      %2429 = vmatpush1.msra.mxu0 0.0
      %2430 = vmatprep.subr.mxu0 0.0
      %2431 = vmatpush1.msra.mxu0 0.0
      %2432 = vmatprep.subr.mxu0 0.0
      %2433 = vmatpush1.msra.mxu0 0.0
      %2434 = vmatprep.subr.mxu0 0.0
      %2435 = vmatpush1.msra.mxu0 0.0
      %2436 = vmatprep.subr.mxu0 0.0
      %2437 = vmatpush1.msra.mxu0 0.0
      %2438 = vmatprep.mubr.f32.mxu0 0.0
      %2439 = vmatmul.mubr.f32.gmra.mrb[0].mxu0 %v2366
      %v2440 = vpop.f32.mrb[0].mxu0
      %v2441 = vadd.f32 0.0, %v2440
      %v2442 = vpop.f32.mrb[0].mxu0
      %2443 = vmatprep.mubr.f32.mxu0 0.0
      %2444 = vmatmul.mubr.f32.gmra.mrb[0].mxu0 %v2369
      %v2445 = vpop.f32.mrb[0].mxu0
      %v2446 = vadd.f32 0.0, %v2445
      %v2447 = vpop.f32.mrb[0].mxu0
      %2448 = vmatprep.mubr.f32.mxu0 0.0
      %2449 = vmatmul.mubr.f32.gmra.mrb[0].mxu0 %v2372
      %v2450 = vpop.f32.mrb[0].mxu0
      %v2451 = vadd.f32 0.0, %v2450
      %v2452 = vpop.f32.mrb[0].mxu0
      %2453 = vdwg.mxu0
      %v2454 = vadd.f32 %v1806, %v2441
      %v2455 = vadd.f32 %v1811, %v2446
      %v2456 = vadd.f32 %v1816, %v2451
      %s2457 = scalar_lea.vmem %s1, 384
      %v2458 = vld [vmem:[%s2457] sm:$0xff]
      %v2459 = vld [vmem:[%s2457 + $0x8] sm:$0xff]
      %v2460 = vld [vmem:[%s2457 + $0x10] sm:$0xff]
      %v2461 = vld [vmem:[%s2457 + $0x18] sm:$0xff]
      %v2462 = vld [vmem:[%s2457 + $0x20] sm:$0xff]
      %v2463 = vld [vmem:[%s2457 + $0x28] sm:$0xff]
      %v2464 = vld [vmem:[%s2457 + $0x30] sm:$0xff]
      %v2465 = vld [vmem:[%s2457 + $0x38] sm:$0xff]
      %v2466 = vld [vmem:[%s2457 + $0x40] sm:$0xff]
      %v2467 = vld [vmem:[%s2457 + $0x48] sm:$0xff]
      %v2468 = vld [vmem:[%s2457 + $0x50] sm:$0xff]
      %v2469 = vld [vmem:[%s2457 + $0x58] sm:$0xff]
      %v2470 = vld [vmem:[%s2457 + $0x60] sm:$0xff]
      %v2471 = vld [vmem:[%s2457 + $0x68] sm:$0xff]
      %v2472 = vld [vmem:[%s2457 + $0x70] sm:$0xff]
      %v2473 = vld [vmem:[%s2457 + $0x78] sm:$0xff]
      %s2474 = scalar_lea.vmem %s2, 3
      %v2475 = vld [vmem:[%s2474] sm:$0x1]
      %v2477 = vlaneseq
      %v2478 = vshrl.u32 %v2477, 7
      %v2479 = vsub.s32 0, %v2478
      %v2480 = vrot.slane %v2475, %v2479
      %2482 = vmatprep.subr.mxu0 0.0
      %2483 = vmatpush1.msra.mxu0 %v2458
      %2484 = vmatprep.subr.mxu0 0.0
      %2485 = vmatpush1.msra.mxu0 %v2459
      %2486 = vmatprep.subr.mxu0 0.0
      %2487 = vmatpush1.msra.mxu0 %v2460
      %2488 = vmatprep.subr.mxu0 0.0
      %2489 = vmatpush1.msra.mxu0 %v2461
      %2490 = vmatprep.subr.mxu0 0.0
      %2491 = vmatpush1.msra.mxu0 %v2462
      %2492 = vmatprep.subr.mxu0 0.0
      %2493 = vmatpush1.msra.mxu0 %v2463
      %2494 = vmatprep.subr.mxu0 0.0
      %2495 = vmatpush1.msra.mxu0 %v2464
      %2496 = vmatprep.subr.mxu0 0.0
      %2497 = vmatpush1.msra.mxu0 %v2465
      %2498 = vmatprep.subr.mxu0 0.0
      %2499 = vmatpush1.msra.mxu0 %v2466
      %2500 = vmatprep.subr.mxu0 0.0
      %2501 = vmatpush1.msra.mxu0 %v2467
      %2502 = vmatprep.subr.mxu0 0.0
      %2503 = vmatpush1.msra.mxu0 %v2468
      %2504 = vmatprep.subr.mxu0 0.0
      %2505 = vmatpush1.msra.mxu0 %v2469
      %2506 = vmatprep.subr.mxu0 0.0
      %2507 = vmatpush1.msra.mxu0 %v2470
      %2508 = vmatprep.subr.mxu0 0.0
      %2509 = vmatpush1.msra.mxu0 %v2471
      %2510 = vmatprep.subr.mxu0 0.0
      %2511 = vmatpush1.msra.mxu0 %v2472
      %2512 = vmatprep.subr.mxu0 0.0
      %2513 = vmatpush1.msra.mxu0 %v2473
      %2514 = vmatprep.subr.mxu0 0.0
      %2515 = vmatpush1.msra.mxu0 0.0
      %2516 = vmatprep.subr.mxu0 0.0
      %2517 = vmatpush1.msra.mxu0 0.0
      %2518 = vmatprep.subr.mxu0 0.0
      %2519 = vmatpush1.msra.mxu0 0.0
      %2520 = vmatprep.subr.mxu0 0.0
      %2521 = vmatpush1.msra.mxu0 0.0
      %2522 = vmatprep.subr.mxu0 0.0
      %2523 = vmatpush1.msra.mxu0 0.0
      %2524 = vmatprep.subr.mxu0 0.0
      %2525 = vmatpush1.msra.mxu0 0.0
      %2526 = vmatprep.subr.mxu0 0.0
      %2527 = vmatpush1.msra.mxu0 0.0
      %2528 = vmatprep.subr.mxu0 0.0
      %2529 = vmatpush1.msra.mxu0 0.0
      %2530 = vmatprep.subr.mxu0 0.0
      %2531 = vmatpush1.msra.mxu0 0.0
      %2532 = vmatprep.subr.mxu0 0.0
      %2533 = vmatpush1.msra.mxu0 0.0
      %2534 = vmatprep.subr.mxu0 0.0
      %2535 = vmatpush1.msra.mxu0 0.0
      %2536 = vmatprep.subr.mxu0 0.0
      %2537 = vmatpush1.msra.mxu0 0.0
      %2538 = vmatprep.subr.mxu0 0.0
      %2539 = vmatpush1.msra.mxu0 0.0
      %2540 = vmatprep.subr.mxu0 0.0
      %2541 = vmatpush1.msra.mxu0 0.0
      %2542 = vmatprep.subr.mxu0 0.0
      %2543 = vmatpush1.msra.mxu0 0.0
      %2544 = vmatprep.subr.mxu0 0.0
      %2545 = vmatpush1.msra.mxu0 0.0
      %2546 = vmatprep.mubr.f32.mxu0 0.0
      %2547 = vmatmul.mubr.f32.gmra.mrb[0].mxu0 %v549
      %v2548 = vpop.f32.mrb[0].mxu0
      %v2549 = vadd.f32 %v2480, %v2548
      %v2550 = vpop.f32.mrb[0].mxu0
      %2551 = vmatprep.mubr.f32.mxu0 0.0
      %2552 = vmatmul.mubr.f32.gmra.mrb[0].mxu0 %v550
      %v2553 = vpop.f32.mrb[0].mxu0
      %v2554 = vadd.f32 %v2480, %v2553
      %v2555 = vpop.f32.mrb[0].mxu0
      %2556 = vmatprep.mubr.f32.mxu0 0.0
      %2557 = vmatmul.mubr.f32.gmra.mrb[0].mxu0 %v551
      %v2558 = vpop.f32.mrb[0].mxu0
      %v2559 = vadd.f32 %v2480, %v2558
      %v2560 = vpop.f32.mrb[0].mxu0
      %2561 = vdwg.mxu0
      %s2562 = scalar_lea.vmem %s3, 384
      %v2563 = vld [vmem:[%s2562] sm:$0xff]
      %v2564 = vld [vmem:[%s2562 + $0x8] sm:$0xff]
      %v2565 = vld [vmem:[%s2562 + $0x10] sm:$0xff]
      %v2566 = vld [vmem:[%s2562 + $0x18] sm:$0xff]
      %v2567 = vld [vmem:[%s2562 + $0x20] sm:$0xff]
      %v2568 = vld [vmem:[%s2562 + $0x28] sm:$0xff]
      %v2569 = vld [vmem:[%s2562 + $0x30] sm:$0xff]
      %v2570 = vld [vmem:[%s2562 + $0x38] sm:$0xff]
      %v2571 = vld [vmem:[%s2562 + $0x40] sm:$0xff]
      %v2572 = vld [vmem:[%s2562 + $0x48] sm:$0xff]
      %v2573 = vld [vmem:[%s2562 + $0x50] sm:$0xff]
      %v2574 = vld [vmem:[%s2562 + $0x58] sm:$0xff]
      %v2575 = vld [vmem:[%s2562 + $0x60] sm:$0xff]
      %v2576 = vld [vmem:[%s2562 + $0x68] sm:$0xff]
      %v2577 = vld [vmem:[%s2562 + $0x70] sm:$0xff]
      %v2578 = vld [vmem:[%s2562 + $0x78] sm:$0xff]
      %s2579 = scalar_lea.vmem %s4, 3
      %v2580 = vld [vmem:[%s2579] sm:$0x1]
      %v2582 = vlaneseq
      %v2583 = vshrl.u32 %v2582, 7
      %v2584 = vsub.s32 0, %v2583
      %v2585 = vrot.slane %v2580, %v2584
      %2587 = vmatprep.subr.mxu0 0.0
      %2588 = vmatpush1.msra.mxu0 %v2563
      %2589 = vmatprep.subr.mxu0 0.0
      %2590 = vmatpush1.msra.mxu0 %v2564
      %2591 = vmatprep.subr.mxu0 0.0
      %2592 = vmatpush1.msra.mxu0 %v2565
      %2593 = vmatprep.subr.mxu0 0.0
      %2594 = vmatpush1.msra.mxu0 %v2566
      %2595 = vmatprep.subr.mxu0 0.0
      %2596 = vmatpush1.msra.mxu0 %v2567
      %2597 = vmatprep.subr.mxu0 0.0
      %2598 = vmatpush1.msra.mxu0 %v2568
      %2599 = vmatprep.subr.mxu0 0.0
      %2600 = vmatpush1.msra.mxu0 %v2569
      %2601 = vmatprep.subr.mxu0 0.0
      %2602 = vmatpush1.msra.mxu0 %v2570
      %2603 = vmatprep.subr.mxu0 0.0
      %2604 = vmatpush1.msra.mxu0 %v2571
      %2605 = vmatprep.subr.mxu0 0.0
      %2606 = vmatpush1.msra.mxu0 %v2572
      %2607 = vmatprep.subr.mxu0 0.0
      %2608 = vmatpush1.msra.mxu0 %v2573
      %2609 = vmatprep.subr.mxu0 0.0
      %2610 = vmatpush1.msra.mxu0 %v2574
      %2611 = vmatprep.subr.mxu0 0.0
      %2612 = vmatpush1.msra.mxu0 %v2575
      %2613 = vmatprep.subr.mxu0 0.0
      %2614 = vmatpush1.msra.mxu0 %v2576
      %2615 = vmatprep.subr.mxu0 0.0
      %2616 = vmatpush1.msra.mxu0 %v2577
      %2617 = vmatprep.subr.mxu0 0.0
      %2618 = vmatpush1.msra.mxu0 %v2578
      %2619 = vmatprep.subr.mxu0 0.0
      %2620 = vmatpush1.msra.mxu0 0.0
      %2621 = vmatprep.subr.mxu0 0.0
      %2622 = vmatpush1.msra.mxu0 0.0
      %2623 = vmatprep.subr.mxu0 0.0
      %2624 = vmatpush1.msra.mxu0 0.0
      %2625 = vmatprep.subr.mxu0 0.0
      %2626 = vmatpush1.msra.mxu0 0.0
      %2627 = vmatprep.subr.mxu0 0.0
      %2628 = vmatpush1.msra.mxu0 0.0
      %2629 = vmatprep.subr.mxu0 0.0
      %2630 = vmatpush1.msra.mxu0 0.0
      %2631 = vmatprep.subr.mxu0 0.0
      %2632 = vmatpush1.msra.mxu0 0.0
      %2633 = vmatprep.subr.mxu0 0.0
      %2634 = vmatpush1.msra.mxu0 0.0
      %2635 = vmatprep.subr.mxu0 0.0
      %2636 = vmatpush1.msra.mxu0 0.0
      %2637 = vmatprep.subr.mxu0 0.0
      %2638 = vmatpush1.msra.mxu0 0.0
      %2639 = vmatprep.subr.mxu0 0.0
      %2640 = vmatpush1.msra.mxu0 0.0
      %2641 = vmatprep.subr.mxu0 0.0
      %2642 = vmatpush1.msra.mxu0 0.0
      %2643 = vmatprep.subr.mxu0 0.0
      %2644 = vmatpush1.msra.mxu0 0.0
      %2645 = vmatprep.subr.mxu0 0.0
      %2646 = vmatpush1.msra.mxu0 0.0
      %2647 = vmatprep.subr.mxu0 0.0
      %2648 = vmatpush1.msra.mxu0 0.0
      %2649 = vmatprep.subr.mxu0 0.0
      %2650 = vmatpush1.msra.mxu0 0.0
      %2651 = vmatprep.mubr.f32.mxu0 0.0
      %2652 = vmatmul.mubr.f32.gmra.mrb[0].mxu0 %v549
      %v2653 = vpop.f32.mrb[0].mxu0
      %v2654 = vadd.f32 %v2585, %v2653
      %v2655 = vpop.f32.mrb[0].mxu0
      %2656 = vmatprep.mubr.f32.mxu0 0.0
      %2657 = vmatmul.mubr.f32.gmra.mrb[0].mxu0 %v550
      %v2658 = vpop.f32.mrb[0].mxu0
      %v2659 = vadd.f32 %v2585, %v2658
      %v2660 = vpop.f32.mrb[0].mxu0
      %2661 = vmatprep.mubr.f32.mxu0 0.0
      %2662 = vmatmul.mubr.f32.gmra.mrb[0].mxu0 %v551
      %v2663 = vpop.f32.mrb[0].mxu0
      %v2664 = vadd.f32 %v2585, %v2663
      %v2665 = vpop.f32.mrb[0].mxu0
      %2666 = vdwg.mxu0
      %s2667 = scalar_lea.vmem %s5, 384
      %v2668 = vld [vmem:[%s2667] sm:$0xff]
      %v2669 = vld [vmem:[%s2667 + $0x8] sm:$0xff]
      %v2670 = vld [vmem:[%s2667 + $0x10] sm:$0xff]
      %v2671 = vld [vmem:[%s2667 + $0x18] sm:$0xff]
      %v2672 = vld [vmem:[%s2667 + $0x20] sm:$0xff]
      %v2673 = vld [vmem:[%s2667 + $0x28] sm:$0xff]
      %v2674 = vld [vmem:[%s2667 + $0x30] sm:$0xff]
      %v2675 = vld [vmem:[%s2667 + $0x38] sm:$0xff]
      %v2676 = vld [vmem:[%s2667 + $0x40] sm:$0xff]
      %v2677 = vld [vmem:[%s2667 + $0x48] sm:$0xff]
      %v2678 = vld [vmem:[%s2667 + $0x50] sm:$0xff]
      %v2679 = vld [vmem:[%s2667 + $0x58] sm:$0xff]
      %v2680 = vld [vmem:[%s2667 + $0x60] sm:$0xff]
      %v2681 = vld [vmem:[%s2667 + $0x68] sm:$0xff]
      %v2682 = vld [vmem:[%s2667 + $0x70] sm:$0xff]
      %v2683 = vld [vmem:[%s2667 + $0x78] sm:$0xff]
      %s2684 = scalar_lea.vmem %s6, 3
      %v2685 = vld [vmem:[%s2684] sm:$0x1]
      %v2687 = vlaneseq
      %v2688 = vshrl.u32 %v2687, 7
      %v2689 = vsub.s32 0, %v2688
      %v2690 = vrot.slane %v2685, %v2689
      %2692 = vmatprep.subr.mxu0 0.0
      %2693 = vmatpush1.msra.mxu0 %v2668
      %2694 = vmatprep.subr.mxu0 0.0
      %2695 = vmatpush1.msra.mxu0 %v2669
      %2696 = vmatprep.subr.mxu0 0.0
      %2697 = vmatpush1.msra.mxu0 %v2670
      %2698 = vmatprep.subr.mxu0 0.0
      %2699 = vmatpush1.msra.mxu0 %v2671
      %2700 = vmatprep.subr.mxu0 0.0
      %2701 = vmatpush1.msra.mxu0 %v2672
      %2702 = vmatprep.subr.mxu0 0.0
      %2703 = vmatpush1.msra.mxu0 %v2673
      %2704 = vmatprep.subr.mxu0 0.0
      %2705 = vmatpush1.msra.mxu0 %v2674
      %2706 = vmatprep.subr.mxu0 0.0
      %2707 = vmatpush1.msra.mxu0 %v2675
      %2708 = vmatprep.subr.mxu0 0.0
      %2709 = vmatpush1.msra.mxu0 %v2676
      %2710 = vmatprep.subr.mxu0 0.0
      %2711 = vmatpush1.msra.mxu0 %v2677
      %2712 = vmatprep.subr.mxu0 0.0
      %2713 = vmatpush1.msra.mxu0 %v2678
      %2714 = vmatprep.subr.mxu0 0.0
      %2715 = vmatpush1.msra.mxu0 %v2679
      %2716 = vmatprep.subr.mxu0 0.0
      %2717 = vmatpush1.msra.mxu0 %v2680
      %2718 = vmatprep.subr.mxu0 0.0
      %2719 = vmatpush1.msra.mxu0 %v2681
      %2720 = vmatprep.subr.mxu0 0.0
      %2721 = vmatpush1.msra.mxu0 %v2682
      %2722 = vmatprep.subr.mxu0 0.0
      %2723 = vmatpush1.msra.mxu0 %v2683
      %2724 = vmatprep.subr.mxu0 0.0
      %2725 = vmatpush1.msra.mxu0 0.0
      %2726 = vmatprep.subr.mxu0 0.0
      %2727 = vmatpush1.msra.mxu0 0.0
      %2728 = vmatprep.subr.mxu0 0.0
      %2729 = vmatpush1.msra.mxu0 0.0
      %2730 = vmatprep.subr.mxu0 0.0
      %2731 = vmatpush1.msra.mxu0 0.0
      %2732 = vmatprep.subr.mxu0 0.0
      %2733 = vmatpush1.msra.mxu0 0.0
      %2734 = vmatprep.subr.mxu0 0.0
      %2735 = vmatpush1.msra.mxu0 0.0
      %2736 = vmatprep.subr.mxu0 0.0
      %2737 = vmatpush1.msra.mxu0 0.0
      %2738 = vmatprep.subr.mxu0 0.0
      %2739 = vmatpush1.msra.mxu0 0.0
      %2740 = vmatprep.subr.mxu0 0.0
      %2741 = vmatpush1.msra.mxu0 0.0
      %2742 = vmatprep.subr.mxu0 0.0
      %2743 = vmatpush1.msra.mxu0 0.0
      %2744 = vmatprep.subr.mxu0 0.0
      %2745 = vmatpush1.msra.mxu0 0.0
      %2746 = vmatprep.subr.mxu0 0.0
      %2747 = vmatpush1.msra.mxu0 0.0
      %2748 = vmatprep.subr.mxu0 0.0
      %2749 = vmatpush1.msra.mxu0 0.0
      %2750 = vmatprep.subr.mxu0 0.0
      %2751 = vmatpush1.msra.mxu0 0.0
      %2752 = vmatprep.subr.mxu0 0.0
      %2753 = vmatpush1.msra.mxu0 0.0
      %2754 = vmatprep.subr.mxu0 0.0
      %2755 = vmatpush1.msra.mxu0 0.0
      %2756 = vmatprep.mubr.f32.mxu0 0.0
      %2757 = vmatmul.mubr.f32.gmra.mrb[0].mxu0 %v549
      %v2758 = vpop.f32.mrb[0].mxu0
      %v2759 = vadd.f32 %v2690, %v2758
      %v2760 = vpop.f32.mrb[0].mxu0
      %2761 = vmatprep.mubr.f32.mxu0 0.0
      %2762 = vmatmul.mubr.f32.gmra.mrb[0].mxu0 %v550
      %v2763 = vpop.f32.mrb[0].mxu0
      %v2764 = vadd.f32 %v2690, %v2763
      %v2765 = vpop.f32.mrb[0].mxu0
      %2766 = vmatprep.mubr.f32.mxu0 0.0
      %2767 = vmatmul.mubr.f32.gmra.mrb[0].mxu0 %v551
      %v2768 = vpop.f32.mrb[0].mxu0
      %v2769 = vadd.f32 %v2690, %v2768
      %v2770 = vpop.f32.mrb[0].mxu0
      %2771 = vdwg.mxu0
      %v2773 = vsel %vm861, %v2549, 0
      %v2776 = vsel %vm861, %v2554, 0
      %v2779 = vsel %vm861, %v2559, 0
      %v2782 = vsel %vm861, %v2654, 0
      %v2785 = vsel %vm861, %v2659, 0
      %v2788 = vsel %vm861, %v2664, 0
      %2790 = vmatprep.subr.mxu0 0.0
      %2791 = vmatpush1.xpose.msra.mxu0 %v2782
      %2792 = vmatprep.subr.mxu0 0.0
      %2793 = vmatpush1.xpose.msra.mxu0 %v2785
      %2794 = vmatprep.subr.mxu0 0.0
      %2795 = vmatpush1.xpose.msra.mxu0 %v2788
      %2796 = vmatprep.subr.mxu0 0.0
      %2797 = vmatpush1.xpose.msra.mxu0 0.0
      %2798 = vmatprep.subr.mxu0 0.0
      %2799 = vmatpush1.xpose.msra.mxu0 0.0
      %2800 = vmatprep.subr.mxu0 0.0
      %2801 = vmatpush1.xpose.msra.mxu0 0.0
      %2802 = vmatprep.subr.mxu0 0.0
      %2803 = vmatpush1.xpose.msra.mxu0 0.0
      %2804 = vmatprep.subr.mxu0 0.0
      %2805 = vmatpush1.xpose.msra.mxu0 0.0
      %2806 = vmatprep.subr.mxu0 0.0
      %2807 = vmatpush1.xpose.msra.mxu0 0.0
      %2808 = vmatprep.subr.mxu0 0.0
      %2809 = vmatpush1.xpose.msra.mxu0 0.0
      %2810 = vmatprep.subr.mxu0 0.0
      %2811 = vmatpush1.xpose.msra.mxu0 0.0
      %2812 = vmatprep.subr.mxu0 0.0
      %2813 = vmatpush1.xpose.msra.mxu0 0.0
      %2814 = vmatprep.subr.mxu0 0.0
      %2815 = vmatpush1.xpose.msra.mxu0 0.0
      %2816 = vmatprep.subr.mxu0 0.0
      %2817 = vmatpush1.xpose.msra.mxu0 0.0
      %2818 = vmatprep.subr.mxu0 0.0
      %2819 = vmatpush1.xpose.msra.mxu0 0.0
      %2820 = vmatprep.subr.mxu0 0.0
      %2821 = vmatpush1.xpose.msra.mxu0 0.0
      %2822 = vmatprep.subr.mxu0 0.0
      %2823 = vmatpush1.xpose.msra.mxu0 0.0
      %2824 = vmatprep.subr.mxu0 0.0
      %2825 = vmatpush1.xpose.msra.mxu0 0.0
      %2826 = vmatprep.subr.mxu0 0.0
      %2827 = vmatpush1.xpose.msra.mxu0 0.0
      %2828 = vmatprep.subr.mxu0 0.0
      %2829 = vmatpush1.xpose.msra.mxu0 0.0
      %2830 = vmatprep.subr.mxu0 0.0
      %2831 = vmatpush1.xpose.msra.mxu0 0.0
      %2832 = vmatprep.subr.mxu0 0.0
      %2833 = vmatpush1.xpose.msra.mxu0 0.0
      %2834 = vmatprep.subr.mxu0 0.0
      %2835 = vmatpush1.xpose.msra.mxu0 0.0
      %2836 = vmatprep.subr.mxu0 0.0
      %2837 = vmatpush1.xpose.msra.mxu0 0.0
      %2838 = vmatprep.subr.mxu0 0.0
      %2839 = vmatpush1.xpose.msra.mxu0 0.0
      %2840 = vmatprep.subr.mxu0 0.0
      %2841 = vmatpush1.xpose.msra.mxu0 0.0
      %2842 = vmatprep.subr.mxu0 0.0
      %2843 = vmatpush1.xpose.msra.mxu0 0.0
      %2844 = vmatprep.subr.mxu0 0.0
      %2845 = vmatpush1.xpose.msra.mxu0 0.0
      %2846 = vmatprep.subr.mxu0 0.0
      %2847 = vmatpush1.xpose.msra.mxu0 0.0
      %2848 = vmatprep.subr.mxu0 0.0
      %2849 = vmatpush1.xpose.msra.mxu0 0.0
      %2850 = vmatprep.subr.mxu0 0.0
      %2851 = vmatpush1.xpose.msra.mxu0 0.0
      %2852 = vmatprep.subr.mxu0 0.0
      %2853 = vmatpush1.xpose.msra.mxu0 0.0
      %2854 = vmatprep.mubr.f32.mxu0 0.0
      %2855 = vmatmul.mubr.f32.gmra.mrb[0].mxu0 %v2773
      %v2856 = vpop.f32.mrb[0].mxu0
      %v2857 = vadd.f32 0.0, %v2856
      %v2858 = vpop.f32.mrb[0].mxu0
      %2859 = vmatprep.mubr.f32.mxu0 0.0
      %2860 = vmatmul.mubr.f32.gmra.mrb[0].mxu0 %v2776
      %v2861 = vpop.f32.mrb[0].mxu0
      %v2862 = vadd.f32 0.0, %v2861
      %v2863 = vpop.f32.mrb[0].mxu0
      %2864 = vmatprep.mubr.f32.mxu0 0.0
      %2865 = vmatmul.mubr.f32.gmra.mrb[0].mxu0 %v2779
      %v2866 = vpop.f32.mrb[0].mxu0
      %v2867 = vadd.f32 0.0, %v2866
      %v2868 = vpop.f32.mrb[0].mxu0
      %2869 = vdwg.mxu0
      %v2870 = vmul.f32 %v2857, 0.17677669
      %v2871 = vmul.f32 %v2862, 0.17677669
      %v2872 = vmul.f32 %v2867, 0.17677669
      %v2873 = vsel %vm963, %v2870, -inf
      %2874 = vmax.xlane.f32.xlu0 %v2873
      %v2875 = vpop.xlane.xlu0 %2874
      %v2876 = vsel %vm963, %v2871, -inf
      %2877 = vmax.xlane.f32.xlu0 %v2876
      %v2878 = vpop.xlane.xlu0 %2877
      %v2879 = vsel %vm970, %v2872, -inf
      %2880 = vmax.xlane.f32.xlu0 %v2879
      %v2881 = vpop.xlane.xlu0 %2880
      %v2882 = vsub.f32 %v2870, %v2875
      %v2883 = vsub.f32 %v2871, %v2878
      %v2884 = vsub.f32 %v2872, %v2881
      %v2885 = vmul.f32 %v2882, 1.442695
      %v2886 = vpow.pop %v2885
      %v2887 = vmul.f32 %v2883, 1.442695
      %v2888 = vpow.pop %v2887
      %v2889 = vmul.f32 %v2884, 1.442695
      %v2890 = vpow.pop %v2889
      %v2891 = vsel %vm963, %v2886, 0.0
      %2892 = vadd.xlane.f32.xlu0 %v2891
      %v2893 = vpop.xlane.xlu0 %2892
      %v2894 = vsel %vm963, %v2888, 0.0
      %2895 = vadd.xlane.f32.xlu0 %v2894
      %v2896 = vpop.xlane.xlu0 %2895
      %v2897 = vsel %vm970, %v2890, 0.0
      %2898 = vadd.xlane.f32.xlu0 %v2897
      %v2899 = vpop.xlane.xlu0 %2898
      %v2900 = vrcp.pop %v2893
      %v2901 = vmul.f32 %v2886, %v2900
      %v2902 = vrcp.pop %v2896
      %v2903 = vmul.f32 %v2888, %v2902
      %v2904 = vrcp.pop %v2899
      %v2905 = vmul.f32 %v2890, %v2904
      %v2907 = vsel %vm963, %v2901, 0
      %v2910 = vsel %vm963, %v2903, 0
      %v2913 = vsel %vm963, %v2905, 0
      %v2916 = vsel %vm1007, %v2769, 0
      %2918 = vmatprep.subr.mxu0 0.0
      %2919 = vmatpush1.msra.mxu0 %v2759
      %2920 = vmatprep.subr.mxu0 0.0
      %2921 = vmatpush1.msra.mxu0 %v2764
      %2922 = vmatprep.subr.mxu0 0.0
      %2923 = vmatpush1.msra.mxu0 %v2916
      %2924 = vmatprep.subr.mxu0 0.0
      %2925 = vmatpush1.msra.mxu0 0.0
      %2926 = vmatprep.subr.mxu0 0.0
      %2927 = vmatpush1.msra.mxu0 0.0
      %2928 = vmatprep.subr.mxu0 0.0
      %2929 = vmatpush1.msra.mxu0 0.0
      %2930 = vmatprep.subr.mxu0 0.0
      %2931 = vmatpush1.msra.mxu0 0.0
      %2932 = vmatprep.subr.mxu0 0.0
      %2933 = vmatpush1.msra.mxu0 0.0
      %2934 = vmatprep.subr.mxu0 0.0
      %2935 = vmatpush1.msra.mxu0 0.0
      %2936 = vmatprep.subr.mxu0 0.0
      %2937 = vmatpush1.msra.mxu0 0.0
      %2938 = vmatprep.subr.mxu0 0.0
      %2939 = vmatpush1.msra.mxu0 0.0
      %2940 = vmatprep.subr.mxu0 0.0
      %2941 = vmatpush1.msra.mxu0 0.0
      %2942 = vmatprep.subr.mxu0 0.0
      %2943 = vmatpush1.msra.mxu0 0.0
      %2944 = vmatprep.subr.mxu0 0.0
      %2945 = vmatpush1.msra.mxu0 0.0
      %2946 = vmatprep.subr.mxu0 0.0
      %2947 = vmatpush1.msra.mxu0 0.0
      %2948 = vmatprep.subr.mxu0 0.0
      %2949 = vmatpush1.msra.mxu0 0.0
      %2950 = vmatprep.subr.mxu0 0.0
      %2951 = vmatpush1.msra.mxu0 0.0
      %2952 = vmatprep.subr.mxu0 0.0
      %2953 = vmatpush1.msra.mxu0 0.0
      %2954 = vmatprep.subr.mxu0 0.0
      %2955 = vmatpush1.msra.mxu0 0.0
      %2956 = vmatprep.subr.mxu0 0.0
      %2957 = vmatpush1.msra.mxu0 0.0
      %2958 = vmatprep.subr.mxu0 0.0
      %2959 = vmatpush1.msra.mxu0 0.0
      %2960 = vmatprep.subr.mxu0 0.0
      %2961 = vmatpush1.msra.mxu0 0.0
      %2962 = vmatprep.subr.mxu0 0.0
      %2963 = vmatpush1.msra.mxu0 0.0
      %2964 = vmatprep.subr.mxu0 0.0
      %2965 = vmatpush1.msra.mxu0 0.0
      %2966 = vmatprep.subr.mxu0 0.0
      %2967 = vmatpush1.msra.mxu0 0.0
      %2968 = vmatprep.subr.mxu0 0.0
      %2969 = vmatpush1.msra.mxu0 0.0
      %2970 = vmatprep.subr.mxu0 0.0
      %2971 = vmatpush1.msra.mxu0 0.0
      %2972 = vmatprep.subr.mxu0 0.0
      %2973 = vmatpush1.msra.mxu0 0.0
      %2974 = vmatprep.subr.mxu0 0.0
      %2975 = vmatpush1.msra.mxu0 0.0
      %2976 = vmatprep.subr.mxu0 0.0
      %2977 = vmatpush1.msra.mxu0 0.0
      %2978 = vmatprep.subr.mxu0 0.0
      %2979 = vmatpush1.msra.mxu0 0.0
      %2980 = vmatprep.subr.mxu0 0.0
      %2981 = vmatpush1.msra.mxu0 0.0
      %2982 = vmatprep.mubr.f32.mxu0 0.0
      %2983 = vmatmul.mubr.f32.gmra.mrb[0].mxu0 %v2907
      %v2984 = vpop.f32.mrb[0].mxu0
      %v2985 = vadd.f32 0.0, %v2984
      %v2986 = vpop.f32.mrb[0].mxu0
      %2987 = vmatprep.mubr.f32.mxu0 0.0
      %2988 = vmatmul.mubr.f32.gmra.mrb[0].mxu0 %v2910
      %v2989 = vpop.f32.mrb[0].mxu0
      %v2990 = vadd.f32 0.0, %v2989
      %v2991 = vpop.f32.mrb[0].mxu0
      %2992 = vmatprep.mubr.f32.mxu0 0.0
      %2993 = vmatmul.mubr.f32.gmra.mrb[0].mxu0 %v2913
      %v2994 = vpop.f32.mrb[0].mxu0
      %v2995 = vadd.f32 0.0, %v2994
      %v2996 = vpop.f32.mrb[0].mxu0
      %2997 = vdwg.mxu0
      %s2998 = scalar_lea.vmem %s7, 96
      %v2999 = vld [vmem:[%s2998] sm:$0xff]
      %v3000 = vld [vmem:[%s2998 + $0x8] sm:$0xff]
      %v3001 = vld [vmem:[%s2998 + $0x10] sm:$0xff]
      %v3002 = vld [vmem:[%s2998 + $0x18] sm:$0xff]
      %v3004 = vsel %vm861, %v2985, 0
      %v3007 = vsel %vm861, %v2990, 0
      %v3010 = vsel %vm861, %v2995, 0
      %3012 = vmatprep.subr.mxu0 0.0
      %3013 = vmatpush1.msra.mxu0 %v2999
      %3014 = vmatprep.subr.mxu0 0.0
      %3015 = vmatpush1.msra.mxu0 %v3000
      %3016 = vmatprep.subr.mxu0 0.0
      %3017 = vmatpush1.msra.mxu0 %v3001
      %3018 = vmatprep.subr.mxu0 0.0
      %3019 = vmatpush1.msra.mxu0 %v3002
      %3020 = vmatprep.subr.mxu0 0.0
      %3021 = vmatpush1.msra.mxu0 0.0
      %3022 = vmatprep.subr.mxu0 0.0
      %3023 = vmatpush1.msra.mxu0 0.0
      %3024 = vmatprep.subr.mxu0 0.0
      %3025 = vmatpush1.msra.mxu0 0.0
      %3026 = vmatprep.subr.mxu0 0.0
      %3027 = vmatpush1.msra.mxu0 0.0
      %3028 = vmatprep.subr.mxu0 0.0
      %3029 = vmatpush1.msra.mxu0 0.0
      %3030 = vmatprep.subr.mxu0 0.0
      %3031 = vmatpush1.msra.mxu0 0.0
      %3032 = vmatprep.subr.mxu0 0.0
      %3033 = vmatpush1.msra.mxu0 0.0
      %3034 = vmatprep.subr.mxu0 0.0
      %3035 = vmatpush1.msra.mxu0 0.0
      %3036 = vmatprep.subr.mxu0 0.0
      %3037 = vmatpush1.msra.mxu0 0.0
      %3038 = vmatprep.subr.mxu0 0.0
      %3039 = vmatpush1.msra.mxu0 0.0
      %3040 = vmatprep.subr.mxu0 0.0
      %3041 = vmatpush1.msra.mxu0 0.0
      %3042 = vmatprep.subr.mxu0 0.0
      %3043 = vmatpush1.msra.mxu0 0.0
      %3044 = vmatprep.subr.mxu0 0.0
      %3045 = vmatpush1.msra.mxu0 0.0
      %3046 = vmatprep.subr.mxu0 0.0
      %3047 = vmatpush1.msra.mxu0 0.0
      %3048 = vmatprep.subr.mxu0 0.0
      %3049 = vmatpush1.msra.mxu0 0.0
      %3050 = vmatprep.subr.mxu0 0.0
      %3051 = vmatpush1.msra.mxu0 0.0
      %3052 = vmatprep.subr.mxu0 0.0
      %3053 = vmatpush1.msra.mxu0 0.0
      %3054 = vmatprep.subr.mxu0 0.0
      %3055 = vmatpush1.msra.mxu0 0.0
      %3056 = vmatprep.subr.mxu0 0.0
      %3057 = vmatpush1.msra.mxu0 0.0
      %3058 = vmatprep.subr.mxu0 0.0
      %3059 = vmatpush1.msra.mxu0 0.0
      %3060 = vmatprep.subr.mxu0 0.0
      %3061 = vmatpush1.msra.mxu0 0.0
      %3062 = vmatprep.subr.mxu0 0.0
      %3063 = vmatpush1.msra.mxu0 0.0
      %3064 = vmatprep.subr.mxu0 0.0
      %3065 = vmatpush1.msra.mxu0 0.0
      %3066 = vmatprep.subr.mxu0 0.0
      %3067 = vmatpush1.msra.mxu0 0.0
      %3068 = vmatprep.subr.mxu0 0.0
      %3069 = vmatpush1.msra.mxu0 0.0
      %3070 = vmatprep.subr.mxu0 0.0
      %3071 = vmatpush1.msra.mxu0 0.0
      %3072 = vmatprep.subr.mxu0 0.0
      %3073 = vmatpush1.msra.mxu0 0.0
      %3074 = vmatprep.subr.mxu0 0.0
      %3075 = vmatpush1.msra.mxu0 0.0
      %3076 = vmatprep.mubr.f32.mxu0 0.0
      %3077 = vmatmul.mubr.f32.gmra.mrb[0].mxu0 %v3004
      %v3078 = vpop.f32.mrb[0].mxu0
      %v3079 = vadd.f32 0.0, %v3078
      %v3080 = vpop.f32.mrb[0].mxu0
      %3081 = vmatprep.mubr.f32.mxu0 0.0
      %3082 = vmatmul.mubr.f32.gmra.mrb[0].mxu0 %v3007
      %v3083 = vpop.f32.mrb[0].mxu0
      %v3084 = vadd.f32 0.0, %v3083
      %v3085 = vpop.f32.mrb[0].mxu0
      %3086 = vmatprep.mubr.f32.mxu0 0.0
      %3087 = vmatmul.mubr.f32.gmra.mrb[0].mxu0 %v3010
      %v3088 = vpop.f32.mrb[0].mxu0
      %v3089 = vadd.f32 0.0, %v3088
      %v3090 = vpop.f32.mrb[0].mxu0
      %3091 = vdwg.mxu0
      %v3092 = vadd.f32 %v2454, %v3079
      %v3093 = vadd.f32 %v2455, %v3084
      %v3094 = vadd.f32 %v2456, %v3089
      %v3095 = vadd.f32 %v549, %v3092
      %v3096 = vadd.f32 %v550, %v3093
      %v3097 = vadd.f32 %v551, %v3094
      %v3098 = vld [vmem:[%s8] sm:$0x1]
      %v3100 = vlaneseq
      %v3101 = vshrl.u32 %v3100, 7
      %v3102 = vsub.s32 0, %v3101
      %v3103 = vrot.slane %v3098, %v3102
      %v3105 = vadd.f32 %v3095, %v3103
      %v3106 = vadd.f32 %v3096, %v3103
      %v3107 = vadd.f32 %v3097, %v3103
      %v3108 = vld [vmem:[%s9] sm:$0x1]
      %v3109 = vld [vmem:[%s10] sm:$0x1]
      %3110 = vadd.xlane.f32.xlu0 %v3105
      %v3111 = vpop.xlane.xlu0 %3110
      %3112 = vadd.xlane.f32.xlu0 %v3106
      %v3113 = vpop.xlane.xlu0 %3112
      %v3114 = vsel %vm1007, %v3107, 0.0
      %3115 = vadd.xlane.f32.xlu0 %v3114
      %v3116 = vpop.xlane.xlu0 %3115
      %v3117 = vrcp.pop 128.0
      %v3118 = vmul.f32 %v3111, %v3117
      %v3119 = vmul.f32 %v3113, %v3117
      %v3120 = vmul.f32 %v3116, %v3117
      %v3121 = vsub.f32 %v3105, %v3118
      %v3122 = vsub.f32 %v3106, %v3119
      %v3123 = vsub.f32 %v3107, %v3120
      %v3124 = vmul.f32 %v3121, %v3121
      %v3125 = vmul.f32 %v3122, %v3122
      %v3126 = vmul.f32 %v3123, %v3123
      %3127 = vadd.xlane.f32.xlu0 %v3124
      %v3128 = vpop.xlane.xlu0 %3127
      %3129 = vadd.xlane.f32.xlu0 %v3125
      %v3130 = vpop.xlane.xlu0 %3129
      %v3131 = vsel %vm1007, %v3126, 0.0
      %3132 = vadd.xlane.f32.xlu0 %v3131
      %v3133 = vpop.xlane.xlu0 %3132
      %v3134 = vmul.f32 %v3128, %v3117
      %v3135 = vmul.f32 %v3130, %v3117
      %v3136 = vmul.f32 %v3133, %v3117
      %v3137 = vadd.f32 %v3134, 1e-12
      %v3138 = vadd.f32 %v3135, 1e-12
      %v3139 = vadd.f32 %v3136, 1e-12
      %v3140 = vrsqrt.pop %v3137
      %v3141 = vrsqrt.pop %v3138
      %v3142 = vrsqrt.pop %v3139
      %v3143 = vmul.f32 %v3121, %v3140
      %v3144 = vmul.f32 %v3122, %v3141
      %v3145 = vmul.f32 %v3123, %v3142
      %v3147 = vlaneseq
      %v3148 = vshrl.u32 %v3147, 7
      %v3149 = vsub.s32 0, %v3148
      %v3150 = vrot.slane %v3108, %v3149
      %v3152 = vmul.f32 %v3143, %v3150
      %v3153 = vmul.f32 %v3144, %v3150
      %v3154 = vmul.f32 %v3145, %v3150
      %v3156 = vlaneseq
      %v3157 = vshrl.u32 %v3156, 7
      %v3158 = vsub.s32 0, %v3157
      %v3159 = vrot.slane %v3109, %v3158
      %v3161 = vadd.f32 %v3152, %v3159
      %v3162 = vadd.f32 %v3153, %v3159
      %v3163 = vadd.f32 %v3154, %v3159
      %v3164 = vld [vmem:[%s11] sm:$0xff]
      %v3165 = vld [vmem:[%s11 + $0x8] sm:$0xff]
      %v3166 = vld [vmem:[%s11 + $0x10] sm:$0xff]
      %v3167 = vld [vmem:[%s11 + $0x18] sm:$0xff]
      %v3168 = vld [vmem:[%s11 + $0x20] sm:$0xff]
      %v3169 = vld [vmem:[%s11 + $0x28] sm:$0xff]
      %v3170 = vld [vmem:[%s11 + $0x30] sm:$0xff]
      %v3171 = vld [vmem:[%s11 + $0x38] sm:$0xff]
      %v3172 = vld [vmem:[%s11 + $0x40] sm:$0xff]
      %v3173 = vld [vmem:[%s11 + $0x48] sm:$0xff]
      %v3174 = vld [vmem:[%s11 + $0x50] sm:$0xff]
      %v3175 = vld [vmem:[%s11 + $0x58] sm:$0xff]
      %v3176 = vld [vmem:[%s11 + $0x60] sm:$0xff]
      %v3177 = vld [vmem:[%s11 + $0x68] sm:$0xff]
      %v3178 = vld [vmem:[%s11 + $0x70] sm:$0xff]
      %v3179 = vld [vmem:[%s11 + $0x78] sm:$0xff]
      %v3180 = vld [vmem:[%s11 + $0x80] sm:$0xff]
      %v3181 = vld [vmem:[%s11 + $0x88] sm:$0xff]
      %v3182 = vld [vmem:[%s11 + $0x90] sm:$0xff]
      %v3183 = vld [vmem:[%s11 + $0x98] sm:$0xff]
      %v3184 = vld [vmem:[%s11 + $0xa0] sm:$0xff]
      %v3185 = vld [vmem:[%s11 + $0xa8] sm:$0xff]
      %v3186 = vld [vmem:[%s11 + $0xb0] sm:$0xff]
      %v3187 = vld [vmem:[%s11 + $0xb8] sm:$0xff]
      %v3188 = vld [vmem:[%s11 + $0xc0] sm:$0xff]
      %v3189 = vld [vmem:[%s11 + $0xc8] sm:$0xff]
      %v3190 = vld [vmem:[%s11 + $0xd0] sm:$0xff]
      %v3191 = vld [vmem:[%s11 + $0xd8] sm:$0xff]
      %v3192 = vld [vmem:[%s11 + $0xe0] sm:$0xff]
      %v3193 = vld [vmem:[%s11 + $0xe8] sm:$0xff]
      %v3194 = vld [vmem:[%s11 + $0xf0] sm:$0xff]
      %v3195 = vld [vmem:[%s11 + $0xf8] sm:$0xff]
      %v3196 = vld [vmem:[%s11 + $0x100] sm:$0xff]
      %v3197 = vld [vmem:[%s11 + $0x108] sm:$0xff]
      %v3198 = vld [vmem:[%s11 + $0x110] sm:$0xff]
      %v3199 = vld [vmem:[%s11 + $0x118] sm:$0xff]
      %v3200 = vld [vmem:[%s11 + $0x120] sm:$0xff]
      %v3201 = vld [vmem:[%s11 + $0x128] sm:$0xff]
      %v3202 = vld [vmem:[%s11 + $0x130] sm:$0xff]
      %v3203 = vld [vmem:[%s11 + $0x138] sm:$0xff]
      %v3204 = vld [vmem:[%s11 + $0x140] sm:$0xff]
      %v3205 = vld [vmem:[%s11 + $0x148] sm:$0xff]
      %v3206 = vld [vmem:[%s11 + $0x150] sm:$0xff]
      %v3207 = vld [vmem:[%s11 + $0x158] sm:$0xff]
      %v3208 = vld [vmem:[%s11 + $0x160] sm:$0xff]
      %v3209 = vld [vmem:[%s11 + $0x168] sm:$0xff]
      %v3210 = vld [vmem:[%s11 + $0x170] sm:$0xff]
      %v3211 = vld [vmem:[%s11 + $0x178] sm:$0xff]
      %v3212 = vld [vmem:[%s11 + $0x180] sm:$0xff]
      %v3213 = vld [vmem:[%s11 + $0x188] sm:$0xff]
      %v3214 = vld [vmem:[%s11 + $0x190] sm:$0xff]
      %v3215 = vld [vmem:[%s11 + $0x198] sm:$0xff]
      %v3216 = vld [vmem:[%s11 + $0x1a0] sm:$0xff]
      %v3217 = vld [vmem:[%s11 + $0x1a8] sm:$0xff]
      %v3218 = vld [vmem:[%s11 + $0x1b0] sm:$0xff]
      %v3219 = vld [vmem:[%s11 + $0x1b8] sm:$0xff]
      %v3220 = vld [vmem:[%s11 + $0x1c0] sm:$0xff]
      %v3221 = vld [vmem:[%s11 + $0x1c8] sm:$0xff]
      %v3222 = vld [vmem:[%s11 + $0x1d0] sm:$0xff]
      %v3223 = vld [vmem:[%s11 + $0x1d8] sm:$0xff]
      %v3224 = vld [vmem:[%s11 + $0x1e0] sm:$0xff]
      %v3225 = vld [vmem:[%s11 + $0x1e8] sm:$0xff]
      %v3226 = vld [vmem:[%s11 + $0x1f0] sm:$0xff]
      %v3227 = vld [vmem:[%s11 + $0x1f8] sm:$0xff]
      %v3228 = vld [vmem:[%s12] sm:$0xf]
      %v3230 = vlaneseq
      %v3231 = vshrl.u32 %v3230, 7
      %v3232 = vsub.s32 0, %v3231
      %v3233 = vrot.slane %v3228, %v3232
      %v3234 = vlaneseq
      %v3235 = vshrl.u32 %v3234, 7
      %v3236 = vsub.s32 1, %v3235
      %v3237 = vrot.slane %v3228, %v3236
      %v3238 = vlaneseq
      %v3239 = vshrl.u32 %v3238, 7
      %v3240 = vsub.s32 2, %v3239
      %v3241 = vrot.slane %v3228, %v3240
      %v3242 = vlaneseq
      %v3243 = vshrl.u32 %v3242, 7
      %v3244 = vsub.s32 3, %v3243
      %v3245 = vrot.slane %v3228, %v3244
      %3250 = vmatprep.subr.mxu0 %v3165
      %3251 = vmatpush1.msra.mxu0 %v3164
      %3252 = vmatprep.subr.mxu0 %v3169
      %3253 = vmatpush1.msra.mxu0 %v3168
      %3254 = vmatprep.subr.mxu0 %v3173
      %3255 = vmatpush1.msra.mxu0 %v3172
      %3256 = vmatprep.subr.mxu0 %v3177
      %3257 = vmatpush1.msra.mxu0 %v3176
      %3258 = vmatprep.subr.mxu0 %v3181
      %3259 = vmatpush1.msra.mxu0 %v3180
      %3260 = vmatprep.subr.mxu0 %v3185
      %3261 = vmatpush1.msra.mxu0 %v3184
      %3262 = vmatprep.subr.mxu0 %v3189
      %3263 = vmatpush1.msra.mxu0 %v3188
      %3264 = vmatprep.subr.mxu0 %v3193
      %3265 = vmatpush1.msra.mxu0 %v3192
      %3266 = vmatprep.subr.mxu0 %v3197
      %3267 = vmatpush1.msra.mxu0 %v3196
      %3268 = vmatprep.subr.mxu0 %v3201
      %3269 = vmatpush1.msra.mxu0 %v3200
      %3270 = vmatprep.subr.mxu0 %v3205
      %3271 = vmatpush1.msra.mxu0 %v3204
      %3272 = vmatprep.subr.mxu0 %v3209
      %3273 = vmatpush1.msra.mxu0 %v3208
      %3274 = vmatprep.subr.mxu0 %v3213
      %3275 = vmatpush1.msra.mxu0 %v3212
      %3276 = vmatprep.subr.mxu0 %v3217
      %3277 = vmatpush1.msra.mxu0 %v3216
      %3278 = vmatprep.subr.mxu0 %v3221
      %3279 = vmatpush1.msra.mxu0 %v3220
      %3280 = vmatprep.subr.mxu0 %v3225
      %3281 = vmatpush1.msra.mxu0 %v3224
      %3282 = vmatprep.subr.mxu0 0.0
      %3283 = vmatpush1.msra.mxu0 0.0
      %3284 = vmatprep.subr.mxu0 0.0
      %3285 = vmatpush1.msra.mxu0 0.0
      %3286 = vmatprep.subr.mxu0 0.0
      %3287 = vmatpush1.msra.mxu0 0.0
      %3288 = vmatprep.subr.mxu0 0.0
      %3289 = vmatpush1.msra.mxu0 0.0
      %3290 = vmatprep.subr.mxu0 0.0
      %3291 = vmatpush1.msra.mxu0 0.0
      %3292 = vmatprep.subr.mxu0 0.0
      %3293 = vmatpush1.msra.mxu0 0.0
      %3294 = vmatprep.subr.mxu0 0.0
      %3295 = vmatpush1.msra.mxu0 0.0
      %3296 = vmatprep.subr.mxu0 0.0
      %3297 = vmatpush1.msra.mxu0 0.0
      %3298 = vmatprep.subr.mxu0 0.0
      %3299 = vmatpush1.msra.mxu0 0.0
      %3300 = vmatprep.subr.mxu0 0.0
      %3301 = vmatpush1.msra.mxu0 0.0
      %3302 = vmatprep.subr.mxu0 0.0
      %3303 = vmatpush1.msra.mxu0 0.0
      %3304 = vmatprep.subr.mxu0 0.0
      %3305 = vmatpush1.msra.mxu0 0.0
      %3306 = vmatprep.subr.mxu0 0.0
      %3307 = vmatpush1.msra.mxu0 0.0
      %3308 = vmatprep.subr.mxu0 0.0
      %3309 = vmatpush1.msra.mxu0 0.0
      %3310 = vmatprep.subr.mxu0 0.0
      %3311 = vmatpush1.msra.mxu0 0.0
      %3312 = vmatprep.subr.mxu0 0.0
      %3313 = vmatpush1.msra.mxu0 0.0
      %3314 = vmatprep.mubr.f32.mxu0 0.0
      %3315 = vmatmul.mubr.f32.gmra.mrb[0].mxu0 %v3161
      %v3316 = vpop.f32.mrb[0].mxu0
      %v3317 = vadd.f32 %v3233, %v3316
      %v3318 = vpop.f32.mrb[0].mxu0
      %v3319 = vadd.f32 %v3237, %v3318
      %3320 = vmatprep.mubr.f32.mxu0 0.0
      %3321 = vmatmul.mubr.f32.gmra.mrb[0].mxu0 %v3162
      %v3322 = vpop.f32.mrb[0].mxu0
      %v3323 = vadd.f32 %v3233, %v3322
      %v3324 = vpop.f32.mrb[0].mxu0
      %v3325 = vadd.f32 %v3237, %v3324
      %3326 = vmatprep.mubr.f32.mxu0 0.0
      %3327 = vmatmul.mubr.f32.gmra.mrb[0].mxu0 %v3163
      %v3328 = vpop.f32.mrb[0].mxu0
      %v3329 = vadd.f32 %v3233, %v3328
      %v3330 = vpop.f32.mrb[0].mxu0
      %v3331 = vadd.f32 %v3237, %v3330
      %3332 = vdwg.mxu0
      %3333 = vmatprep.subr.mxu0 %v3167
      %3334 = vmatpush1.msra.mxu0 %v3166
      %3335 = vmatprep.subr.mxu0 %v3171
      %3336 = vmatpush1.msra.mxu0 %v3170
      %3337 = vmatprep.subr.mxu0 %v3175
      %3338 = vmatpush1.msra.mxu0 %v3174
      %3339 = vmatprep.subr.mxu0 %v3179
      %3340 = vmatpush1.msra.mxu0 %v3178
      %3341 = vmatprep.subr.mxu0 %v3183
      %3342 = vmatpush1.msra.mxu0 %v3182
      %3343 = vmatprep.subr.mxu0 %v3187
      %3344 = vmatpush1.msra.mxu0 %v3186
      %3345 = vmatprep.subr.mxu0 %v3191
      %3346 = vmatpush1.msra.mxu0 %v3190
      %3347 = vmatprep.subr.mxu0 %v3195
      %3348 = vmatpush1.msra.mxu0 %v3194
      %3349 = vmatprep.subr.mxu0 %v3199
      %3350 = vmatpush1.msra.mxu0 %v3198
      %3351 = vmatprep.subr.mxu0 %v3203
      %3352 = vmatpush1.msra.mxu0 %v3202
      %3353 = vmatprep.subr.mxu0 %v3207
      %3354 = vmatpush1.msra.mxu0 %v3206
      %3355 = vmatprep.subr.mxu0 %v3211
      %3356 = vmatpush1.msra.mxu0 %v3210
      %3357 = vmatprep.subr.mxu0 %v3215
      %3358 = vmatpush1.msra.mxu0 %v3214
      %3359 = vmatprep.subr.mxu0 %v3219
      %3360 = vmatpush1.msra.mxu0 %v3218
      %3361 = vmatprep.subr.mxu0 %v3223
      %3362 = vmatpush1.msra.mxu0 %v3222
      %3363 = vmatprep.subr.mxu0 %v3227
      %3364 = vmatpush1.msra.mxu0 %v3226
      %3365 = vmatprep.subr.mxu0 0.0
      %3366 = vmatpush1.msra.mxu0 0.0
      %3367 = vmatprep.subr.mxu0 0.0
      %3368 = vmatpush1.msra.mxu0 0.0
      %3369 = vmatprep.subr.mxu0 0.0
      %3370 = vmatpush1.msra.mxu0 0.0
      %3371 = vmatprep.subr.mxu0 0.0
      %3372 = vmatpush1.msra.mxu0 0.0
      %3373 = vmatprep.subr.mxu0 0.0
      %3374 = vmatpush1.msra.mxu0 0.0
      %3375 = vmatprep.subr.mxu0 0.0
      %3376 = vmatpush1.msra.mxu0 0.0
      %3377 = vmatprep.subr.mxu0 0.0
      %3378 = vmatpush1.msra.mxu0 0.0
      %3379 = vmatprep.subr.mxu0 0.0
      %3380 = vmatpush1.msra.mxu0 0.0
      %3381 = vmatprep.subr.mxu0 0.0
      %3382 = vmatpush1.msra.mxu0 0.0
      %3383 = vmatprep.subr.mxu0 0.0
      %3384 = vmatpush1.msra.mxu0 0.0
      %3385 = vmatprep.subr.mxu0 0.0
      %3386 = vmatpush1.msra.mxu0 0.0
      %3387 = vmatprep.subr.mxu0 0.0
      %3388 = vmatpush1.msra.mxu0 0.0
      %3389 = vmatprep.subr.mxu0 0.0
      %3390 = vmatpush1.msra.mxu0 0.0
      %3391 = vmatprep.subr.mxu0 0.0
      %3392 = vmatpush1.msra.mxu0 0.0
      %3393 = vmatprep.subr.mxu0 0.0
      %3394 = vmatpush1.msra.mxu0 0.0
      %3395 = vmatprep.subr.mxu0 0.0
      %3396 = vmatpush1.msra.mxu0 0.0
      %3397 = vmatprep.mubr.f32.mxu0 0.0
      %3398 = vmatmul.mubr.f32.gmra.mrb[0].mxu0 %v3161
      %v3399 = vpop.f32.mrb[0].mxu0
      %v3400 = vadd.f32 %v3241, %v3399
      %v3401 = vpop.f32.mrb[0].mxu0
      %v3402 = vadd.f32 %v3245, %v3401
      %3403 = vmatprep.mubr.f32.mxu0 0.0
      %3404 = vmatmul.mubr.f32.gmra.mrb[0].mxu0 %v3162
      %v3405 = vpop.f32.mrb[0].mxu0
      %v3406 = vadd.f32 %v3241, %v3405
      %v3407 = vpop.f32.mrb[0].mxu0
      %v3408 = vadd.f32 %v3245, %v3407
      %3409 = vmatprep.mubr.f32.mxu0 0.0
      %3410 = vmatmul.mubr.f32.gmra.mrb[0].mxu0 %v3163
      %v3411 = vpop.f32.mrb[0].mxu0
      %v3412 = vadd.f32 %v3241, %v3411
      %v3413 = vpop.f32.mrb[0].mxu0
      %v3414 = vadd.f32 %v3245, %v3413
      %3415 = vdwg.mxu0
      %v3416 = vmul.f32 %v3317, 0.5
      %v3417 = vmul.f32 %v3319, 0.5
      %v3418 = vmul.f32 %v3400, 0.5
      %v3419 = vmul.f32 %v3402, 0.5
      %v3420 = vmul.f32 %v3323, 0.5
      %v3421 = vmul.f32 %v3325, 0.5
      %v3422 = vmul.f32 %v3406, 0.5
      %v3423 = vmul.f32 %v3408, 0.5
      %v3424 = vmul.f32 %v3329, 0.5
      %v3425 = vmul.f32 %v3331, 0.5
      %v3426 = vmul.f32 %v3412, 0.5
      %v3427 = vmul.f32 %v3414, 0.5
      %v3428 = vmul.f32 %v3317, 0.70710677
      %v3429 = vmul.f32 %v3319, 0.70710677
      %v3430 = vmul.f32 %v3400, 0.70710677
      %v3431 = vmul.f32 %v3402, 0.70710677
      %v3432 = vmul.f32 %v3323, 0.70710677
      %v3433 = vmul.f32 %v3325, 0.70710677
      %v3434 = vmul.f32 %v3406, 0.70710677
      %v3435 = vmul.f32 %v3408, 0.70710677
      %v3436 = vmul.f32 %v3329, 0.70710677
      %v3437 = vmul.f32 %v3331, 0.70710677
      %v3438 = vmul.f32 %v3412, 0.70710677
      %v3439 = vmul.f32 %v3414, 0.70710677
      %v3440 = vand.u32 2147483647, %v3428
      %v3441 = vand.u32 2147483647, %v3429
      %v3442 = vand.u32 2147483647, %v3430
      %v3443 = vand.u32 2147483647, %v3431
      %v3444 = vand.u32 2147483647, %v3432
      %v3445 = vand.u32 2147483647, %v3433
      %v3446 = vand.u32 2147483647, %v3434
      %v3447 = vand.u32 2147483647, %v3435
      %v3448 = vand.u32 2147483647, %v3436
      %v3449 = vand.u32 2147483647, %v3437
      %v3450 = vand.u32 2147483647, %v3438
      %v3451 = vand.u32 2147483647, %v3439
      %v3452 = vmul.f32 %v3440, 0.3275911
      %v3453 = vmul.f32 %v3441, 0.3275911
      %v3454 = vmul.f32 %v3442, 0.3275911
      %v3455 = vmul.f32 %v3443, 0.3275911
      %v3456 = vmul.f32 %v3444, 0.3275911
      %v3457 = vmul.f32 %v3445, 0.3275911
      %v3458 = vmul.f32 %v3446, 0.3275911
      %v3459 = vmul.f32 %v3447, 0.3275911
      %v3460 = vmul.f32 %v3448, 0.3275911
      %v3461 = vmul.f32 %v3449, 0.3275911
      %v3462 = vmul.f32 %v3450, 0.3275911
      %v3463 = vmul.f32 %v3451, 0.3275911
      %v3464 = vadd.f32 %v3452, 1.0
      %v3465 = vadd.f32 %v3453, 1.0
      %v3466 = vadd.f32 %v3454, 1.0
      %v3467 = vadd.f32 %v3455, 1.0
      %v3468 = vadd.f32 %v3456, 1.0
      %v3469 = vadd.f32 %v3457, 1.0
      %v3470 = vadd.f32 %v3458, 1.0
      %v3471 = vadd.f32 %v3459, 1.0
      %v3472 = vadd.f32 %v3460, 1.0
      %v3473 = vadd.f32 %v3461, 1.0
      %v3474 = vadd.f32 %v3462, 1.0
      %v3475 = vadd.f32 %v3463, 1.0
      %v3476 = vrcp.pop %v3464
      %v3477 = vmul.f32 1.0, %v3476
      %v3478 = vrcp.pop %v3465
      %v3479 = vmul.f32 1.0, %v3478
      %v3480 = vrcp.pop %v3466
      %v3481 = vmul.f32 1.0, %v3480
      %v3482 = vrcp.pop %v3467
      %v3483 = vmul.f32 1.0, %v3482
      %v3484 = vrcp.pop %v3468
      %v3485 = vmul.f32 1.0, %v3484
      %v3486 = vrcp.pop %v3469
      %v3487 = vmul.f32 1.0, %v3486
      %v3488 = vrcp.pop %v3470
      %v3489 = vmul.f32 1.0, %v3488
      %v3490 = vrcp.pop %v3471
      %v3491 = vmul.f32 1.0, %v3490
      %v3492 = vrcp.pop %v3472
      %v3493 = vmul.f32 1.0, %v3492
      %v3494 = vrcp.pop %v3473
      %v3495 = vmul.f32 1.0, %v3494
      %v3496 = vrcp.pop %v3474
      %v3497 = vmul.f32 1.0, %v3496
      %v3498 = vrcp.pop %v3475
      %v3499 = vmul.f32 1.0, %v3498
      %v3500 = vmul.f32 %v3477, 1.0614054
      %v3501 = vmul.f32 %v3479, 1.0614054
      %v3502 = vmul.f32 %v3481, 1.0614054
      %v3503 = vmul.f32 %v3483, 1.0614054
      %v3504 = vmul.f32 %v3485, 1.0614054
      %v3505 = vmul.f32 %v3487, 1.0614054
      %v3506 = vmul.f32 %v3489, 1.0614054
      %v3507 = vmul.f32 %v3491, 1.0614054
      %v3508 = vmul.f32 %v3493, 1.0614054
      %v3509 = vmul.f32 %v3495, 1.0614054
      %v3510 = vmul.f32 %v3497, 1.0614054
      %v3511 = vmul.f32 %v3499, 1.0614054
      %v3512 = vadd.f32 %v3500, -1.4531521
      %v3513 = vadd.f32 %v3501, -1.4531521
      %v3514 = vadd.f32 %v3502, -1.4531521
      %v3515 = vadd.f32 %v3503, -1.4531521
      %v3516 = vadd.f32 %v3504, -1.4531521
      %v3517 = vadd.f32 %v3505, -1.4531521
      %v3518 = vadd.f32 %v3506, -1.4531521
      %v3519 = vadd.f32 %v3507, -1.4531521
      %v3520 = vadd.f32 %v3508, -1.4531521
      %v3521 = vadd.f32 %v3509, -1.4531521
      %v3522 = vadd.f32 %v3510, -1.4531521
      %v3523 = vadd.f32 %v3511, -1.4531521
      %v3524 = vmul.f32 %v3512, %v3477
      %v3525 = vmul.f32 %v3513, %v3479
      %v3526 = vmul.f32 %v3514, %v3481
      %v3527 = vmul.f32 %v3515, %v3483
      %v3528 = vmul.f32 %v3516, %v3485
      %v3529 = vmul.f32 %v3517, %v3487
      %v3530 = vmul.f32 %v3518, %v3489
      %v3531 = vmul.f32 %v3519, %v3491
      %v3532 = vmul.f32 %v3520, %v3493
      %v3533 = vmul.f32 %v3521, %v3495
      %v3534 = vmul.f32 %v3522, %v3497
      %v3535 = vmul.f32 %v3523, %v3499
      %v3536 = vadd.f32 %v3524, 1.4214138
      %v3537 = vadd.f32 %v3525, 1.4214138
      %v3538 = vadd.f32 %v3526, 1.4214138
      %v3539 = vadd.f32 %v3527, 1.4214138
      %v3540 = vadd.f32 %v3528, 1.4214138
      %v3541 = vadd.f32 %v3529, 1.4214138
      %v3542 = vadd.f32 %v3530, 1.4214138
      %v3543 = vadd.f32 %v3531, 1.4214138
      %v3544 = vadd.f32 %v3532, 1.4214138
      %v3545 = vadd.f32 %v3533, 1.4214138
      %v3546 = vadd.f32 %v3534, 1.4214138
      %v3547 = vadd.f32 %v3535, 1.4214138
      %v3548 = vmul.f32 %v3536, %v3477
      %v3549 = vmul.f32 %v3537, %v3479
      %v3550 = vmul.f32 %v3538, %v3481
      %v3551 = vmul.f32 %v3539, %v3483
      %v3552 = vmul.f32 %v3540, %v3485
      %v3553 = vmul.f32 %v3541, %v3487
      %v3554 = vmul.f32 %v3542, %v3489
      %v3555 = vmul.f32 %v3543, %v3491
      %v3556 = vmul.f32 %v3544, %v3493
      %v3557 = vmul.f32 %v3545, %v3495
      %v3558 = vmul.f32 %v3546, %v3497
      %v3559 = vmul.f32 %v3547, %v3499
      %v3560 = vadd.f32 %v3548, -0.28449672
      %v3561 = vadd.f32 %v3549, -0.28449672
      %v3562 = vadd.f32 %v3550, -0.28449672
      %v3563 = vadd.f32 %v3551, -0.28449672
      %v3564 = vadd.f32 %v3552, -0.28449672
      %v3565 = vadd.f32 %v3553, -0.28449672
      %v3566 = vadd.f32 %v3554, -0.28449672
      %v3567 = vadd.f32 %v3555, -0.28449672
      %v3568 = vadd.f32 %v3556, -0.28449672
      %v3569 = vadd.f32 %v3557, -0.28449672
      %v3570 = vadd.f32 %v3558, -0.28449672
      %v3571 = vadd.f32 %v3559, -0.28449672
      %v3572 = vmul.f32 %v3560, %v3477
      %v3573 = vmul.f32 %v3561, %v3479
      %v3574 = vmul.f32 %v3562, %v3481
      %v3575 = vmul.f32 %v3563, %v3483
      %v3576 = vmul.f32 %v3564, %v3485
      %v3577 = vmul.f32 %v3565, %v3487
      %v3578 = vmul.f32 %v3566, %v3489
      %v3579 = vmul.f32 %v3567, %v3491
      %v3580 = vmul.f32 %v3568, %v3493
      %v3581 = vmul.f32 %v3569, %v3495
      %v3582 = vmul.f32 %v3570, %v3497
      %v3583 = vmul.f32 %v3571, %v3499
      %v3584 = vadd.f32 %v3572, 0.2548296
      %v3585 = vadd.f32 %v3573, 0.2548296
      %v3586 = vadd.f32 %v3574, 0.2548296
      %v3587 = vadd.f32 %v3575, 0.2548296
      %v3588 = vadd.f32 %v3576, 0.2548296
      %v3589 = vadd.f32 %v3577, 0.2548296
      %v3590 = vadd.f32 %v3578, 0.2548296
      %v3591 = vadd.f32 %v3579, 0.2548296
      %v3592 = vadd.f32 %v3580, 0.2548296
      %v3593 = vadd.f32 %v3581, 0.2548296
      %v3594 = vadd.f32 %v3582, 0.2548296
      %v3595 = vadd.f32 %v3583, 0.2548296
      %v3596 = vmul.f32 %v3584, %v3477
      %v3597 = vmul.f32 %v3585, %v3479
      %v3598 = vmul.f32 %v3586, %v3481
      %v3599 = vmul.f32 %v3587, %v3483
      %v3600 = vmul.f32 %v3588, %v3485
      %v3601 = vmul.f32 %v3589, %v3487
      %v3602 = vmul.f32 %v3590, %v3489
      %v3603 = vmul.f32 %v3591, %v3491
      %v3604 = vmul.f32 %v3592, %v3493
      %v3605 = vmul.f32 %v3593, %v3495
      %v3606 = vmul.f32 %v3594, %v3497
      %v3607 = vmul.f32 %v3595, %v3499
      %v3608 = vsub.f32 0.0, %v3440
      %v3609 = vsub.f32 0.0, %v3441
      %v3610 = vsub.f32 0.0, %v3442
      %v3611 = vsub.f32 0.0, %v3443
      %v3612 = vsub.f32 0.0, %v3444
      %v3613 = vsub.f32 0.0, %v3445
      %v3614 = vsub.f32 0.0, %v3446
      %v3615 = vsub.f32 0.0, %v3447
      %v3616 = vsub.f32 0.0, %v3448
      %v3617 = vsub.f32 0.0, %v3449
      %v3618 = vsub.f32 0.0, %v3450
      %v3619 = vsub.f32 0.0, %v3451
      %v3620 = vmul.f32 %v3608, %v3440
      %v3621 = vmul.f32 %v3609, %v3441
      %v3622 = vmul.f32 %v3610, %v3442
      %v3623 = vmul.f32 %v3611, %v3443
      %v3624 = vmul.f32 %v3612, %v3444
      %v3625 = vmul.f32 %v3613, %v3445
      %v3626 = vmul.f32 %v3614, %v3446
      %v3627 = vmul.f32 %v3615, %v3447
      %v3628 = vmul.f32 %v3616, %v3448
      %v3629 = vmul.f32 %v3617, %v3449
      %v3630 = vmul.f32 %v3618, %v3450
      %v3631 = vmul.f32 %v3619, %v3451
      %v3632 = vmul.f32 %v3620, 1.442695
      %v3633 = vpow.pop %v3632
      %v3634 = vmul.f32 %v3621, 1.442695
      %v3635 = vpow.pop %v3634
      %v3636 = vmul.f32 %v3622, 1.442695
      %v3637 = vpow.pop %v3636
      %v3638 = vmul.f32 %v3623, 1.442695
      %v3639 = vpow.pop %v3638
      %v3640 = vmul.f32 %v3624, 1.442695
      %v3641 = vpow.pop %v3640
      %v3642 = vmul.f32 %v3625, 1.442695
      %v3643 = vpow.pop %v3642
      %v3644 = vmul.f32 %v3626, 1.442695
      %v3645 = vpow.pop %v3644
      %v3646 = vmul.f32 %v3627, 1.442695
      %v3647 = vpow.pop %v3646
      %v3648 = vmul.f32 %v3628, 1.442695
      %v3649 = vpow.pop %v3648
      %v3650 = vmul.f32 %v3629, 1.442695
      %v3651 = vpow.pop %v3650
      %v3652 = vmul.f32 %v3630, 1.442695
      %v3653 = vpow.pop %v3652
      %v3654 = vmul.f32 %v3631, 1.442695
      %v3655 = vpow.pop %v3654
      %v3656 = vmul.f32 %v3596, %v3633
      %v3657 = vmul.f32 %v3597, %v3635
      %v3658 = vmul.f32 %v3598, %v3637
      %v3659 = vmul.f32 %v3599, %v3639
      %v3660 = vmul.f32 %v3600, %v3641
      %v3661 = vmul.f32 %v3601, %v3643
      %v3662 = vmul.f32 %v3602, %v3645
      %v3663 = vmul.f32 %v3603, %v3647
      %v3664 = vmul.f32 %v3604, %v3649
      %v3665 = vmul.f32 %v3605, %v3651
      %v3666 = vmul.f32 %v3606, %v3653
      %v3667 = vmul.f32 %v3607, %v3655
      %v3668 = vsub.f32 1.0, %v3656
      %v3669 = vsub.f32 1.0, %v3657
      %v3670 = vsub.f32 1.0, %v3658
      %v3671 = vsub.f32 1.0, %v3659
      %v3672 = vsub.f32 1.0, %v3660
      %v3673 = vsub.f32 1.0, %v3661
      %v3674 = vsub.f32 1.0, %v3662
      %v3675 = vsub.f32 1.0, %v3663
      %v3676 = vsub.f32 1.0, %v3664
      %v3677 = vsub.f32 1.0, %v3665
      %v3678 = vsub.f32 1.0, %v3666
      %v3679 = vsub.f32 1.0, %v3667
      %vm3680 = vcmp.ge.f32.partialorder %v3428, 0.0
      %vm3681 = vcmp.ge.f32.partialorder %v3429, 0.0
      %vm3682 = vcmp.ge.f32.partialorder %v3430, 0.0
      %vm3683 = vcmp.ge.f32.partialorder %v3431, 0.0
      %vm3684 = vcmp.ge.f32.partialorder %v3432, 0.0
      %vm3685 = vcmp.ge.f32.partialorder %v3433, 0.0
      %vm3686 = vcmp.ge.f32.partialorder %v3434, 0.0
      %vm3687 = vcmp.ge.f32.partialorder %v3435, 0.0
      %vm3688 = vcmp.ge.f32.partialorder %v3436, 0.0
      %vm3689 = vcmp.ge.f32.partialorder %v3437, 0.0
      %vm3690 = vcmp.ge.f32.partialorder %v3438, 0.0
      %vm3691 = vcmp.ge.f32.partialorder %v3439, 0.0
      %v3692 = vsub.f32 0.0, %v3668
      %v3693 = vsub.f32 0.0, %v3669
      %v3694 = vsub.f32 0.0, %v3670
      %v3695 = vsub.f32 0.0, %v3671
      %v3696 = vsub.f32 0.0, %v3672
      %v3697 = vsub.f32 0.0, %v3673
      %v3698 = vsub.f32 0.0, %v3674
      %v3699 = vsub.f32 0.0, %v3675
      %v3700 = vsub.f32 0.0, %v3676
      %v3701 = vsub.f32 0.0, %v3677
      %v3702 = vsub.f32 0.0, %v3678
      %v3703 = vsub.f32 0.0, %v3679
      %v3704 = vsel %vm3680, %v3668, %v3692
      %v3705 = vsel %vm3681, %v3669, %v3693
      %v3706 = vsel %vm3682, %v3670, %v3694
      %v3707 = vsel %vm3683, %v3671, %v3695
      %v3708 = vsel %vm3684, %v3672, %v3696
      %v3709 = vsel %vm3685, %v3673, %v3697
      %v3710 = vsel %vm3686, %v3674, %v3698
      %v3711 = vsel %vm3687, %v3675, %v3699
      %v3712 = vsel %vm3688, %v3676, %v3700
      %v3713 = vsel %vm3689, %v3677, %v3701
      %v3714 = vsel %vm3690, %v3678, %v3702
      %v3715 = vsel %vm3691, %v3679, %v3703
      %v3716 = vadd.f32 %v3704, 1.0
      %v3717 = vadd.f32 %v3705, 1.0
      %v3718 = vadd.f32 %v3706, 1.0
      %v3719 = vadd.f32 %v3707, 1.0
      %v3720 = vadd.f32 %v3708, 1.0
      %v3721 = vadd.f32 %v3709, 1.0
      %v3722 = vadd.f32 %v3710, 1.0
      %v3723 = vadd.f32 %v3711, 1.0
      %v3724 = vadd.f32 %v3712, 1.0
      %v3725 = vadd.f32 %v3713, 1.0
      %v3726 = vadd.f32 %v3714, 1.0
      %v3727 = vadd.f32 %v3715, 1.0
      %v3728 = vmul.f32 %v3416, %v3716
      %v3729 = vmul.f32 %v3417, %v3717
      %v3730 = vmul.f32 %v3418, %v3718
      %v3731 = vmul.f32 %v3419, %v3719
      %v3732 = vmul.f32 %v3420, %v3720
      %v3733 = vmul.f32 %v3421, %v3721
      %v3734 = vmul.f32 %v3422, %v3722
      %v3735 = vmul.f32 %v3423, %v3723
      %v3736 = vmul.f32 %v3424, %v3724
      %v3737 = vmul.f32 %v3425, %v3725
      %v3738 = vmul.f32 %v3426, %v3726
      %v3739 = vmul.f32 %v3427, %v3727
      %v3740 = vld [vmem:[%s13] sm:$0xff]
      %v3741 = vld [vmem:[%s13 + $0x8] sm:$0xff]
      %v3742 = vld [vmem:[%s13 + $0x10] sm:$0xff]
      %v3743 = vld [vmem:[%s13 + $0x18] sm:$0xff]
      %v3744 = vld [vmem:[%s13 + $0x20] sm:$0xff]
      %v3745 = vld [vmem:[%s13 + $0x28] sm:$0xff]
      %v3746 = vld [vmem:[%s13 + $0x30] sm:$0xff]
      %v3747 = vld [vmem:[%s13 + $0x38] sm:$0xff]
      %v3748 = vld [vmem:[%s13 + $0x40] sm:$0xff]
      %v3749 = vld [vmem:[%s13 + $0x48] sm:$0xff]
      %v3750 = vld [vmem:[%s13 + $0x50] sm:$0xff]
      %v3751 = vld [vmem:[%s13 + $0x58] sm:$0xff]
      %v3752 = vld [vmem:[%s13 + $0x60] sm:$0xff]
      %v3753 = vld [vmem:[%s13 + $0x68] sm:$0xff]
      %v3754 = vld [vmem:[%s13 + $0x70] sm:$0xff]
      %v3755 = vld [vmem:[%s13 + $0x78] sm:$0xff]
      %v3756 = vld [vmem:[%s13 + $0x80] sm:$0xff]
      %v3757 = vld [vmem:[%s13 + $0x88] sm:$0xff]
      %v3758 = vld [vmem:[%s13 + $0x90] sm:$0xff]
      %v3759 = vld [vmem:[%s13 + $0x98] sm:$0xff]
      %v3760 = vld [vmem:[%s13 + $0xa0] sm:$0xff]
      %v3761 = vld [vmem:[%s13 + $0xa8] sm:$0xff]
      %v3762 = vld [vmem:[%s13 + $0xb0] sm:$0xff]
      %v3763 = vld [vmem:[%s13 + $0xb8] sm:$0xff]
      %v3764 = vld [vmem:[%s13 + $0xc0] sm:$0xff]
      %v3765 = vld [vmem:[%s13 + $0xc8] sm:$0xff]
      %v3766 = vld [vmem:[%s13 + $0xd0] sm:$0xff]
      %v3767 = vld [vmem:[%s13 + $0xd8] sm:$0xff]
      %v3768 = vld [vmem:[%s13 + $0xe0] sm:$0xff]
      %v3769 = vld [vmem:[%s13 + $0xe8] sm:$0xff]
      %v3770 = vld [vmem:[%s13 + $0xf0] sm:$0xff]
      %v3771 = vld [vmem:[%s13 + $0xf8] sm:$0xff]
      %v3772 = vld [vmem:[%s13 + $0x100] sm:$0xff]
      %v3773 = vld [vmem:[%s13 + $0x108] sm:$0xff]
      %v3774 = vld [vmem:[%s13 + $0x110] sm:$0xff]
      %v3775 = vld [vmem:[%s13 + $0x118] sm:$0xff]
      %v3776 = vld [vmem:[%s13 + $0x120] sm:$0xff]
      %v3777 = vld [vmem:[%s13 + $0x128] sm:$0xff]
      %v3778 = vld [vmem:[%s13 + $0x130] sm:$0xff]
      %v3779 = vld [vmem:[%s13 + $0x138] sm:$0xff]
      %v3780 = vld [vmem:[%s13 + $0x140] sm:$0xff]
      %v3781 = vld [vmem:[%s13 + $0x148] sm:$0xff]
      %v3782 = vld [vmem:[%s13 + $0x150] sm:$0xff]
      %v3783 = vld [vmem:[%s13 + $0x158] sm:$0xff]
      %v3784 = vld [vmem:[%s13 + $0x160] sm:$0xff]
      %v3785 = vld [vmem:[%s13 + $0x168] sm:$0xff]
      %v3786 = vld [vmem:[%s13 + $0x170] sm:$0xff]
      %v3787 = vld [vmem:[%s13 + $0x178] sm:$0xff]
      %v3788 = vld [vmem:[%s13 + $0x180] sm:$0xff]
      %v3789 = vld [vmem:[%s13 + $0x188] sm:$0xff]
      %v3790 = vld [vmem:[%s13 + $0x190] sm:$0xff]
      %v3791 = vld [vmem:[%s13 + $0x198] sm:$0xff]
      %v3792 = vld [vmem:[%s13 + $0x1a0] sm:$0xff]
      %v3793 = vld [vmem:[%s13 + $0x1a8] sm:$0xff]
      %v3794 = vld [vmem:[%s13 + $0x1b0] sm:$0xff]
      %v3795 = vld [vmem:[%s13 + $0x1b8] sm:$0xff]
      %v3796 = vld [vmem:[%s13 + $0x1c0] sm:$0xff]
      %v3797 = vld [vmem:[%s13 + $0x1c8] sm:$0xff]
      %v3798 = vld [vmem:[%s13 + $0x1d0] sm:$0xff]
      %v3799 = vld [vmem:[%s13 + $0x1d8] sm:$0xff]
      %v3800 = vld [vmem:[%s13 + $0x1e0] sm:$0xff]
      %v3801 = vld [vmem:[%s13 + $0x1e8] sm:$0xff]
      %v3802 = vld [vmem:[%s13 + $0x1f0] sm:$0xff]
      %v3803 = vld [vmem:[%s13 + $0x1f8] sm:$0xff]
      %v3804 = vld [vmem:[%s14] sm:$0x1]
      %v3806 = vlaneseq
      %v3807 = vshrl.u32 %v3806, 7
      %v3808 = vsub.s32 0, %v3807
      %v3809 = vrot.slane %v3804, %v3808
      %3811 = vmatprep.subr.mxu0 0.0
      %3812 = vmatpush1.msra.mxu0 %v3740
      %3813 = vmatprep.subr.mxu0 0.0
      %3814 = vmatpush1.msra.mxu0 %v3741
      %3815 = vmatprep.subr.mxu0 0.0
      %3816 = vmatpush1.msra.mxu0 %v3742
      %3817 = vmatprep.subr.mxu0 0.0
      %3818 = vmatpush1.msra.mxu0 %v3743
      %3819 = vmatprep.subr.mxu0 0.0
      %3820 = vmatpush1.msra.mxu0 %v3744
      %3821 = vmatprep.subr.mxu0 0.0
      %3822 = vmatpush1.msra.mxu0 %v3745
      %3823 = vmatprep.subr.mxu0 0.0
      %3824 = vmatpush1.msra.mxu0 %v3746
      %3825 = vmatprep.subr.mxu0 0.0
      %3826 = vmatpush1.msra.mxu0 %v3747
      %3827 = vmatprep.subr.mxu0 0.0
      %3828 = vmatpush1.msra.mxu0 %v3748
      %3829 = vmatprep.subr.mxu0 0.0
      %3830 = vmatpush1.msra.mxu0 %v3749
      %3831 = vmatprep.subr.mxu0 0.0
      %3832 = vmatpush1.msra.mxu0 %v3750
      %3833 = vmatprep.subr.mxu0 0.0
      %3834 = vmatpush1.msra.mxu0 %v3751
      %3835 = vmatprep.subr.mxu0 0.0
      %3836 = vmatpush1.msra.mxu0 %v3752
      %3837 = vmatprep.subr.mxu0 0.0
      %3838 = vmatpush1.msra.mxu0 %v3753
      %3839 = vmatprep.subr.mxu0 0.0
      %3840 = vmatpush1.msra.mxu0 %v3754
      %3841 = vmatprep.subr.mxu0 0.0
      %3842 = vmatpush1.msra.mxu0 %v3755
      %3843 = vmatprep.subr.mxu0 0.0
      %3844 = vmatpush1.msra.mxu0 %v3756
      %3845 = vmatprep.subr.mxu0 0.0
      %3846 = vmatpush1.msra.mxu0 %v3757
      %3847 = vmatprep.subr.mxu0 0.0
      %3848 = vmatpush1.msra.mxu0 %v3758
      %3849 = vmatprep.subr.mxu0 0.0
      %3850 = vmatpush1.msra.mxu0 %v3759
      %3851 = vmatprep.subr.mxu0 0.0
      %3852 = vmatpush1.msra.mxu0 %v3760
      %3853 = vmatprep.subr.mxu0 0.0
      %3854 = vmatpush1.msra.mxu0 %v3761
      %3855 = vmatprep.subr.mxu0 0.0
      %3856 = vmatpush1.msra.mxu0 %v3762
      %3857 = vmatprep.subr.mxu0 0.0
      %3858 = vmatpush1.msra.mxu0 %v3763
      %3859 = vmatprep.subr.mxu0 0.0
      %3860 = vmatpush1.msra.mxu0 %v3764
      %3861 = vmatprep.subr.mxu0 0.0
      %3862 = vmatpush1.msra.mxu0 %v3765
      %3863 = vmatprep.subr.mxu0 0.0
      %3864 = vmatpush1.msra.mxu0 %v3766
      %3865 = vmatprep.subr.mxu0 0.0
      %3866 = vmatpush1.msra.mxu0 %v3767
      %3867 = vmatprep.subr.mxu0 0.0
      %3868 = vmatpush1.msra.mxu0 %v3768
      %3869 = vmatprep.subr.mxu0 0.0
      %3870 = vmatpush1.msra.mxu0 %v3769
      %3871 = vmatprep.subr.mxu0 0.0
      %3872 = vmatpush1.msra.mxu0 %v3770
      %3873 = vmatprep.subr.mxu0 0.0
      %3874 = vmatpush1.msra.mxu0 %v3771
      %3875 = vmatprep.mubr.f32.mxu0 %v3729
      %3876 = vmatmul.mubr.f32.gmra.mrb[0].mxu0 %v3728
      %v3877 = vpop.f32.mrb[0].mxu0
      %v3878 = vadd.f32 %v3809, %v3877
      %v3879 = vpop.f32.mrb[0].mxu0
      %3880 = vmatprep.mubr.f32.mxu0 %v3733
      %3881 = vmatmul.mubr.f32.gmra.mrb[0].mxu0 %v3732
      %v3882 = vpop.f32.mrb[0].mxu0
      %v3883 = vadd.f32 %v3809, %v3882
      %v3884 = vpop.f32.mrb[0].mxu0
      %3885 = vmatprep.mubr.f32.mxu0 %v3737
      %3886 = vmatmul.mubr.f32.gmra.mrb[0].mxu0 %v3736
      %v3887 = vpop.f32.mrb[0].mxu0
      %v3888 = vadd.f32 %v3809, %v3887
      %v3889 = vpop.f32.mrb[0].mxu0
      %3890 = vdwg.mxu0
      %3891 = vmatprep.subr.mxu0 0.0
      %3892 = vmatpush1.msra.mxu0 %v3772
      %3893 = vmatprep.subr.mxu0 0.0
      %3894 = vmatpush1.msra.mxu0 %v3773
      %3895 = vmatprep.subr.mxu0 0.0
      %3896 = vmatpush1.msra.mxu0 %v3774
      %3897 = vmatprep.subr.mxu0 0.0
      %3898 = vmatpush1.msra.mxu0 %v3775
      %3899 = vmatprep.subr.mxu0 0.0
      %3900 = vmatpush1.msra.mxu0 %v3776
      %3901 = vmatprep.subr.mxu0 0.0
      %3902 = vmatpush1.msra.mxu0 %v3777
      %3903 = vmatprep.subr.mxu0 0.0
      %3904 = vmatpush1.msra.mxu0 %v3778
      %3905 = vmatprep.subr.mxu0 0.0
      %3906 = vmatpush1.msra.mxu0 %v3779
      %3907 = vmatprep.subr.mxu0 0.0
      %3908 = vmatpush1.msra.mxu0 %v3780
      %3909 = vmatprep.subr.mxu0 0.0
      %3910 = vmatpush1.msra.mxu0 %v3781
      %3911 = vmatprep.subr.mxu0 0.0
      %3912 = vmatpush1.msra.mxu0 %v3782
      %3913 = vmatprep.subr.mxu0 0.0
      %3914 = vmatpush1.msra.mxu0 %v3783
      %3915 = vmatprep.subr.mxu0 0.0
      %3916 = vmatpush1.msra.mxu0 %v3784
      %3917 = vmatprep.subr.mxu0 0.0
      %3918 = vmatpush1.msra.mxu0 %v3785
      %3919 = vmatprep.subr.mxu0 0.0
      %3920 = vmatpush1.msra.mxu0 %v3786
      %3921 = vmatprep.subr.mxu0 0.0
      %3922 = vmatpush1.msra.mxu0 %v3787
      %3923 = vmatprep.subr.mxu0 0.0
      %3924 = vmatpush1.msra.mxu0 %v3788
      %3925 = vmatprep.subr.mxu0 0.0
      %3926 = vmatpush1.msra.mxu0 %v3789
      %3927 = vmatprep.subr.mxu0 0.0
      %3928 = vmatpush1.msra.mxu0 %v3790
      %3929 = vmatprep.subr.mxu0 0.0
      %3930 = vmatpush1.msra.mxu0 %v3791
      %3931 = vmatprep.subr.mxu0 0.0
      %3932 = vmatpush1.msra.mxu0 %v3792
      %3933 = vmatprep.subr.mxu0 0.0
      %3934 = vmatpush1.msra.mxu0 %v3793
      %3935 = vmatprep.subr.mxu0 0.0
      %3936 = vmatpush1.msra.mxu0 %v3794
      %3937 = vmatprep.subr.mxu0 0.0
      %3938 = vmatpush1.msra.mxu0 %v3795
      %3939 = vmatprep.subr.mxu0 0.0
      %3940 = vmatpush1.msra.mxu0 %v3796
      %3941 = vmatprep.subr.mxu0 0.0
      %3942 = vmatpush1.msra.mxu0 %v3797
      %3943 = vmatprep.subr.mxu0 0.0
      %3944 = vmatpush1.msra.mxu0 %v3798
      %3945 = vmatprep.subr.mxu0 0.0
      %3946 = vmatpush1.msra.mxu0 %v3799
      %3947 = vmatprep.subr.mxu0 0.0
      %3948 = vmatpush1.msra.mxu0 %v3800
      %3949 = vmatprep.subr.mxu0 0.0
      %3950 = vmatpush1.msra.mxu0 %v3801
      %3951 = vmatprep.subr.mxu0 0.0
      %3952 = vmatpush1.msra.mxu0 %v3802
      %3953 = vmatprep.subr.mxu0 0.0
      %3954 = vmatpush1.msra.mxu0 %v3803
      %3955 = vmatprep.mubr.f32.mxu0 %v3731
      %3956 = vmatmul.mubr.f32.gmra.mrb[0].mxu0 %v3730
      %v3957 = vpop.f32.mrb[0].mxu0
      %v3958 = vadd.f32 %v3878, %v3957
      %v3959 = vpop.f32.mrb[0].mxu0
      %3960 = vmatprep.mubr.f32.mxu0 %v3735
      %3961 = vmatmul.mubr.f32.gmra.mrb[0].mxu0 %v3734
      %v3962 = vpop.f32.mrb[0].mxu0
      %v3963 = vadd.f32 %v3883, %v3962
      %v3964 = vpop.f32.mrb[0].mxu0
      %3965 = vmatprep.mubr.f32.mxu0 %v3739
      %3966 = vmatmul.mubr.f32.gmra.mrb[0].mxu0 %v3738
      %v3967 = vpop.f32.mrb[0].mxu0
      %v3968 = vadd.f32 %v3888, %v3967
      %v3969 = vpop.f32.mrb[0].mxu0
      %3970 = vdwg.mxu0
      %v3971 = vadd.f32 %v3161, %v3958
      %v3972 = vadd.f32 %v3162, %v3963
      %v3973 = vadd.f32 %v3163, %v3968
      %v3974 = vld [vmem:[%s15] sm:$0x1]
      %v3975 = vld [vmem:[%s16] sm:$0x1]
      %3976 = vadd.xlane.f32.xlu0 %v3971
      %v3977 = vpop.xlane.xlu0 %3976
      %3978 = vadd.xlane.f32.xlu0 %v3972
      %v3979 = vpop.xlane.xlu0 %3978
      %v3980 = vsel %vm1007, %v3973, 0.0
      %3981 = vadd.xlane.f32.xlu0 %v3980
      %v3982 = vpop.xlane.xlu0 %3981
      %v3983 = vmul.f32 %v3977, %v3117
      %v3984 = vmul.f32 %v3979, %v3117
      %v3985 = vmul.f32 %v3982, %v3117
      %v3986 = vsub.f32 %v3971, %v3983
      %v3987 = vsub.f32 %v3972, %v3984
      %v3988 = vsub.f32 %v3973, %v3985
      %v3989 = vmul.f32 %v3986, %v3986
      %v3990 = vmul.f32 %v3987, %v3987
      %v3991 = vmul.f32 %v3988, %v3988
      %3992 = vadd.xlane.f32.xlu0 %v3989
      %v3993 = vpop.xlane.xlu0 %3992
      %3994 = vadd.xlane.f32.xlu0 %v3990
      %v3995 = vpop.xlane.xlu0 %3994
      %v3996 = vsel %vm1007, %v3991, 0.0
      %3997 = vadd.xlane.f32.xlu0 %v3996
      %v3998 = vpop.xlane.xlu0 %3997
      %v3999 = vmul.f32 %v3993, %v3117
      %v4000 = vmul.f32 %v3995, %v3117
      %v4001 = vmul.f32 %v3998, %v3117
      %v4002 = vadd.f32 %v3999, 1e-12
      %v4003 = vadd.f32 %v4000, 1e-12
      %v4004 = vadd.f32 %v4001, 1e-12
      %v4005 = vrsqrt.pop %v4002
      %v4006 = vrsqrt.pop %v4003
      %v4007 = vrsqrt.pop %v4004
      %v4008 = vmul.f32 %v3986, %v4005
      %v4009 = vmul.f32 %v3987, %v4006
      %v4010 = vmul.f32 %v3988, %v4007
      %v4012 = vlaneseq
      %v4013 = vshrl.u32 %v4012, 7
      %v4014 = vsub.s32 0, %v4013
      %v4015 = vrot.slane %v3974, %v4014
      %v4017 = vmul.f32 %v4008, %v4015
      %v4018 = vmul.f32 %v4009, %v4015
      %v4019 = vmul.f32 %v4010, %v4015
      %v4021 = vlaneseq
      %v4022 = vshrl.u32 %v4021, 7
      %v4023 = vsub.s32 0, %v4022
      %v4024 = vrot.slane %v3975, %v4023
      %v4026 = vadd.f32 %v4017, %v4024
      %v4027 = vadd.f32 %v4018, %v4024
      %v4028 = vadd.f32 %v4019, %v4024
      %4029 = vst [vmem:[%s548] sm:$0xff] %v4026
      %4030 = vst [vmem:[%s548 + $0x8] sm:$0xff] %v4027
      %4031 = vst [vmem:[%s548 + $0x10] sm:$0x1] %v4028
      %p4032 = scmp.lt.s32.totalorder %s28, 1
      %s4033 = scalar_select %p4032, %s28, 1
      %s4034 = smul.addr %s4033, 3
      %s4035 = smul.addr %s4034, 8
      %s4036 = scalar_lea.vmem %s17, %s4035
      // Predicated region
      $region89: #{maskgit_image2rgb_forward.5} parent=87 // pred_check
        %p4037 = pneg %p408
      $region90: #{maskgit_image2rgb_forward.5} parent=87 // pred_check_branch
        %4039 = sbr.rel (%p4037) target = $region92
      $region91: #{maskgit_image2rgb_forward.5} parent=87 // pred_region
        _
      $region92: #{maskgit_image2rgb_forward.5} parent=87 // pred_fallthru
        _
    $region88: #{maskgit_image2rgb_forward.5} parent=5 // pred_fallthru
      _
    %p4040 = scmp.le.s32.totalorder 2, %s23
    // Predicated region
    $region93: #{maskgit_image2rgb_forward.5} parent=5 // pred_check
      %p4041 = pneg %p4040
    $region94: #{maskgit_image2rgb_forward.5} parent=5 // pred_check_branch
      %4043 = sbr.rel (%p4041) target = $region96
    $region95: #{maskgit_image2rgb_forward.5} parent=5 // pred_region
      %s4044 = ssub.s32 %s23, 2
      // Predicated region
      $region97: #{maskgit_image2rgb_forward.5} parent=95 // pred_check
        %p4045 = pneg %p414
      $region98: #{maskgit_image2rgb_forward.5} parent=95 // pred_check_branch
        %4047 = sbr.rel (%p4045) target = $region100
      $region99: #{maskgit_image2rgb_forward.5} parent=95 // pred_region
        %p4048 = scmp.lt.s32.totalorder %s29, 1
        %s4049 = scalar_select %p4048, %s29, 1
        %s4050 = smul.addr %s4049, 3
        %s4051 = smul.addr %s4050, 8
        %s4052 = scalar_lea.vmem %s17, %s4051
      $region100: #{maskgit_image2rgb_forward.5} parent=95 // pred_fallthru
        _
    $region96: #{maskgit_image2rgb_forward.5} parent=5 // pred_fallthru
      _
  $region6: #{maskgit_image2rgb_forward.5} parent=0 // loop_footer
    %s27 = sadd.s32 1, %s23
  $region7: #{maskgit_image2rgb_forward.5} parent=0 // loop_footer_branch
    %22 = sbr.rel target = $region3
  $region8: #{maskgit_image2rgb_forward.5} parent=0 // loop_exit
    _

</llo_original>
